<compile_context>
chip_gen: v6e
topology: v6e:2x2x1
jax: 0.10.0
libtpu: 0.0.40
codegen_flags: <defaults>
</compile_context>

<pallas_src>
import functools

import jax
import jax.numpy as jnp
from jax.experimental import pallas as pl
from jax.experimental.pallas import tpu as pltpu


def _gatv2_body(x, mask_bias, w_cat, b_cat, attn_blk, head_mask, *,
                num_heads, out_feats):
    """One GATv2Conv layer (residual=True, bias=True, negative_slope=0.2)."""
    n = x.shape[0]
    hf = num_heads * out_feats
    bf16 = jnp.bfloat16

    # Fused projection [fc_src | fc_dst | res_fc] in ONE bf16 MXU matmul,
    # f32 accumulation, three independent f32 biases added after.
    proj = jnp.dot(x.astype(bf16), w_cat,
                   preferred_element_type=jnp.float32) + b_cat    # (N, 3*H*F)
    feat_src = proj[:, :hf]                                       # (N, H*F)
    feat_dst = proj[:, hf:2 * hf]                                 # (N, H*F)
    res = proj[:, 2 * hf:]                                        # (N, H*F)

    # GATv2 score, lane-dense over channels (H*F lanes), f32 elementwise path:
    #   s[v, u, :] = leaky_relu(fd[v, :] + fs[u, :])
    s = feat_dst[:, None, :] + feat_src[None, :, :]               # (Ndst, Nsrc, H*F)
    s = jnp.maximum(s, 0.2 * s)                                   # leaky_relu(0.2)

    # All head logits from ONE MXU matmul against the block-diagonal attention
    # matrix: e[v, u, h] = sum_f attn[h, f] * s[v, u, h*F + f].
    e = jnp.dot(s.reshape(n * n, hf).astype(bf16), attn_blk,
                preferred_element_type=jnp.float32).reshape(n, n, num_heads)

    # Edge softmax with N_src on lanes: one (Ndst, Nsrc) 2-D tile per head.
    # Masked (non-edge) entries get -1e30 and underflow to exactly 0 after
    # exp; self-loops keep the row max / denominator finite (no NaN / inf).
    attn_cols = []
    for h in range(num_heads):                                    # static unroll
        e_h = e[:, :, h] + mask_bias                              # (Ndst, Nsrc)
        m_h = jnp.max(e_h, axis=-1, keepdims=True)                # (Ndst, 1) f32
        p_h = jnp.exp(e_h - m_h)                                  # lane-dense EUP
        d_h = jnp.sum(p_h, axis=-1, keepdims=True)                # (Ndst, 1) f32
        attn_cols.append(p_h * (1.0 / d_h))                       # exact divide
    attn_wide = (attn_cols[0] if num_heads == 1
                 else jnp.concatenate(attn_cols, axis=1))         # (Ndst, H*Nsrc)

    # ONE aggregation matmul: column h*Nsrc + u of attn_wide pairs with row
    # h*Nsrc + u of the head-masked source-feature expansion, so
    #   agg[v, j] = sum_u alpha_{head(j)}[v, u] * feat_src[u, j].
    if num_heads == 1:
        fs_exp = feat_src.astype(bf16)                            # (Nsrc, F)
    else:
        fs_exp = (head_mask[:, None, :] * feat_src.astype(bf16)[None, :, :]
                  ).reshape(num_heads * n, hf)                    # (H*Nsrc, H*F)
    agg = jnp.dot(attn_wide.astype(bf16), fs_exp,
                  preferred_element_type=jnp.float32)             # (Ndst, H*F)
    return agg + res


def _unit_gat3_kernel(x_ref, adj_ref,
                      w1_ref, b1_ref, a1_ref, hm1_ref,
                      w2_ref, b2_ref, a2_ref,
                      out_ref, *, heads1, heads2, out_feats):
    adj = adj_ref[...]                                    # (N, N) 0/1 mask
    # Additive mask bias (N_src on lanes), computed once, shared by both layers.
    mask_bias = (adj - 1.0) * jnp.float32(1e30)           # 0 on edges, -1e30 off
    x = x_ref[...]

    # Layer 1: Cin -> 8 heads x out_feats, head-major (N, 8*F).
    y = _gatv2_body(x, mask_bias, w1_ref[...], b1_ref[...], a1_ref[...],
                    hm1_ref[...], num_heads=heads1, out_feats=out_feats)
    y = jnp.maximum(y, 0.0)                               # F.relu between layers
    # torch: y.reshape(bh, -1) is a no-op here (already (N, 8*F) head-major).
    # Layer 2: 8*F -> 1 head x out_feats (head_mask not needed for H == 1).
    out = _gatv2_body(y, mask_bias, w2_ref[...], b2_ref[...], a2_ref[...],
                      None, num_heads=heads2, out_feats=out_feats)
    # TODO(synk): (N, 16) output is a 16-lane masked store; pack graphs on
    # lanes for a lane-dense out_spec once this op is batched.
    out_ref[...] = out


def unit_gat3_forward(adj, x, p1, p2, out_channels):
    """unit_GAT3.forward: gat(8 heads) -> relu -> reshape -> gat2(1 head)."""
    n = x.shape[0]
    kernel = functools.partial(
        _unit_gat3_kernel, heads1=8, heads2=1, out_feats=out_channels)
    y = pl.pallas_call(
        kernel,
        out_shape=jax.ShapeDtypeStruct((n, out_channels), jnp.float32),
        in_specs=[pl.BlockSpec(memory_space=pltpu.MemorySpace.VMEM)] * 9,
        out_specs=pl.BlockSpec(memory_space=pltpu.MemorySpace.VMEM),
    )(x, adj,
      p1["w_cat"], p1["b_cat"], p1["attn_blk"], p1["head_mask"],
      p2["w_cat"], p2["b_cat"], p2["attn_blk"])
    return y.reshape(n, 1, out_channels)


def init_gatv2_params(key, in_feats, out_feats, num_heads):
    """Deterministic synthetic init for one GATv2Conv, pre-packed for the kernel:
      w_cat     : (Cin, 3*H*F) bf16 = [w_src | w_dst | w_res]
      b_cat     : (1,   3*H*F) f32  = [b_src | b_dst | b_res] (independent biases)
      attn_blk  : (H*F, H) bf16 block-diagonal attention matrix
                  (head h's a-vector in rows h*F:(h+1)*F of column h)
      head_mask : (H, H*F) bf16, head_mask[h, j] = 1 iff j // F == h
    """
    d = num_heads * out_feats
    ks = jax.random.split(key, 7)
    w_scale = (2.0 / (in_feats + d)) ** 0.5
    b_scale = 1.0 / (in_feats ** 0.5)
    w_src = jax.random.normal(ks[0], (in_feats, d), jnp.float32) * w_scale
    w_dst = jax.random.normal(ks[1], (in_feats, d), jnp.float32) * w_scale
    w_res = jax.random.normal(ks[2], (in_feats, d), jnp.float32) * w_scale
    attn = jax.random.normal(ks[3], (num_heads, out_feats), jnp.float32) * 0.1
    b_src = jax.random.uniform(ks[4], (1, d), jnp.float32, -b_scale, b_scale)
    b_dst = jax.random.uniform(ks[5], (1, d), jnp.float32, -b_scale, b_scale)
    b_res = jax.random.uniform(ks[6], (1, d), jnp.float32, -b_scale, b_scale)

    w_cat = jnp.concatenate([w_src, w_dst, w_res], axis=1).astype(jnp.bfloat16)
    b_cat = jnp.concatenate([b_src, b_dst, b_res], axis=1)           # f32
    eye = jnp.eye(num_heads, dtype=jnp.float32)
    attn_blk = (attn[:, :, None] * eye[:, None, :]).reshape(d, num_heads)
    head_mask = jnp.kron(eye, jnp.ones((1, out_feats), jnp.float32))
    return {"w_cat": w_cat, "b_cat": b_cat,
            "attn_blk": attn_blk.astype(jnp.bfloat16),
            "head_mask": head_mask.astype(jnp.bfloat16)}


if __name__ == "__main__":
    key = jax.random.PRNGKey(0)
    k_x, k_adj, k_p1, k_p2 = jax.random.split(key, 4)

    N = 16            # number of nodes in the graph: x.shape[0] == bh
    in_channels = 4
    out_channels = 16

    # Node features.
    x = jax.random.normal(k_x, (N, in_channels), jnp.float32)

    # Deterministic random graph WITH self-loops (every node has >= 1 in-edge,
    # matching DGL's allow_zero_in_degree=False requirement and the masked
    # softmax precondition documented above).
    adj = (jax.random.uniform(k_adj, (N, N)) < 0.3).astype(jnp.float32)
    adj = jnp.maximum(adj, jnp.eye(N, dtype=jnp.float32))
    assert bool(jnp.all(jnp.diag(adj) == 1.0))   # self-loop precondition

    # gat : in_channels -> out_channels, 8 heads (res_fc: 4 != 8*16 -> Linear)
    p1 = init_gatv2_params(k_p1, in_channels, out_channels, num_heads=8)
    # gat2: 8*out_channels -> out_channels, 1 head (res_fc: 128 != 16 -> Linear)
    p2 = init_gatv2_params(k_p2, out_channels * 8, out_channels, num_heads=1)

    out = unit_gat3_forward(adj, x, p1, p2, out_channels)
    jax.block_until_ready(out)
    assert out.shape == (N, 1, out_channels)
    assert bool(jnp.isfinite(out).all())
    print("KERNEL_OK")
</pallas_src>

<mosaic_0001>
module attributes {stable_mosaic.version = 11 : i64} {
  func.func @_unit_gat3_kernel(%arg0: memref<16x4xf32, #tpu.memory_space<vmem>>, %arg1: memref<16x16xf32, #tpu.memory_space<vmem>>, %arg2: memref<4x384xbf16, #tpu.memory_space<vmem>>, %arg3: memref<1x384xf32, #tpu.memory_space<vmem>>, %arg4: memref<128x8xbf16, #tpu.memory_space<vmem>>, %arg5: memref<8x128xbf16, #tpu.memory_space<vmem>>, %arg6: memref<128x48xbf16, #tpu.memory_space<vmem>>, %arg7: memref<1x48xf32, #tpu.memory_space<vmem>>, %arg8: memref<16x1xbf16, #tpu.memory_space<vmem>>, %arg9: memref<16x16xf32, #tpu.memory_space<vmem>>) attributes {dimension_semantics = [], scalar_prefetch = 0 : i64, scratch_operands = 0 : i64, tpu.core_type = #tpu.core_type<tc>} {
    %c0 = arith.constant 0 : index
    %c0_0 = arith.constant 0 : index
    %0 = vector.load %arg1[%c0, %c0_0] : memref<16x16xf32, #tpu.memory_space<vmem>>, vector<16x16xf32>
    %cst = arith.constant 1.000000e+00 : f32
    %1 = vector.broadcast %cst : f32 to vector<16x16xf32>
    %2 = arith.subf %0, %1 : vector<16x16xf32>
    %cst_1 = arith.constant 1.000000e+30 : f32
    %3 = vector.broadcast %cst_1 : f32 to vector<16x16xf32>
    %4 = arith.mulf %2, %3 : vector<16x16xf32>
    %c0_2 = arith.constant 0 : index
    %c0_3 = arith.constant 0 : index
    %5 = vector.load %arg0[%c0_2, %c0_3] : memref<16x4xf32, #tpu.memory_space<vmem>>, vector<16x4xf32>
    %c0_4 = arith.constant 0 : index
    %c0_5 = arith.constant 0 : index
    %6 = vector.load %arg2[%c0_4, %c0_5] : memref<4x384xbf16, #tpu.memory_space<vmem>>, vector<4x384xbf16>
    %c0_6 = arith.constant 0 : index
    %c0_7 = arith.constant 0 : index
    %7 = vector.load %arg3[%c0_6, %c0_7] : memref<1x384xf32, #tpu.memory_space<vmem>>, vector<1x384xf32>
    %c0_8 = arith.constant 0 : index
    %c0_9 = arith.constant 0 : index
    %8 = vector.load %arg4[%c0_8, %c0_9] : memref<128x8xbf16, #tpu.memory_space<vmem>>, vector<128x8xbf16>
    %c0_10 = arith.constant 0 : index
    %c0_11 = arith.constant 0 : index
    %9 = vector.load %arg5[%c0_10, %c0_11] : memref<8x128xbf16, #tpu.memory_space<vmem>>, vector<8x128xbf16>
    %10 = arith.truncf %5 : vector<16x4xf32> to vector<16x4xbf16>
    %cst_12 = arith.constant dense<0.000000e+00> : vector<16x384xf32>
    %11 = tpu.matmul %10, %6, %cst_12 {dimension_numbers = #tpu.dot_dimension_numbers<[1], [0], [0], [1], [0, 0, 1, 1], [], []>} : vector<16x4xbf16>, vector<4x384xbf16>, vector<16x384xf32> -> vector<16x384xf32>
    %12 = vector.broadcast %7 : vector<1x384xf32> to vector<16x384xf32>
    %13 = arith.addf %11, %12 : vector<16x384xf32>
    %14 = vector.extract_strided_slice %13 {offsets = [0, 0], sizes = [16, 128], strides = [1, 1]} : vector<16x384xf32> to vector<16x128xf32>
    %15 = vector.extract_strided_slice %13 {offsets = [0, 128], sizes = [16, 128], strides = [1, 1]} : vector<16x384xf32> to vector<16x128xf32>
    %16 = vector.extract_strided_slice %13 {offsets = [0, 256], sizes = [16, 128], strides = [1, 1]} : vector<16x384xf32> to vector<16x128xf32>
    %17 = vector.shape_cast %15 : vector<16x128xf32> to vector<16x1x128xf32>
    %18 = vector.shape_cast %14 : vector<16x128xf32> to vector<1x16x128xf32>
    %19 = vector.broadcast %17 : vector<16x1x128xf32> to vector<16x16x128xf32>
    %20 = vector.broadcast %18 : vector<1x16x128xf32> to vector<16x16x128xf32>
    %21 = arith.addf %19, %20 : vector<16x16x128xf32>
    %cst_13 = arith.constant 2.000000e-01 : f32
    %22 = vector.broadcast %cst_13 : f32 to vector<16x16x128xf32>
    %23 = arith.mulf %22, %21 : vector<16x16x128xf32>
    %24 = arith.maximumf %21, %23 : vector<16x16x128xf32>
    %25 = vector.shape_cast %24 : vector<16x16x128xf32> to vector<256x128xf32>
    %26 = arith.truncf %25 : vector<256x128xf32> to vector<256x128xbf16>
    %cst_14 = arith.constant dense<0.000000e+00> : vector<256x8xf32>
    %27 = tpu.matmul %26, %8, %cst_14 {dimension_numbers = #tpu.dot_dimension_numbers<[1], [0], [0], [1], [0, 0, 1, 1], [], []>} : vector<256x128xbf16>, vector<128x8xbf16>, vector<256x8xf32> -> vector<256x8xf32>
    %28 = vector.shape_cast %27 : vector<256x8xf32> to vector<16x16x8xf32>
    %29 = vector.extract_strided_slice %28 {offsets = [0, 0, 0], sizes = [16, 16, 1], strides = [1, 1, 1]} : vector<16x16x8xf32> to vector<16x16x1xf32>
    %30 = vector.shape_cast %29 : vector<16x16x1xf32> to vector<16x16xf32>
    %31 = arith.addf %30, %4 : vector<16x16xf32>
    %cst_15 = arith.constant dense<0xFF800000> : vector<16xf32>
    %32 = vector.multi_reduction <maximumf>, %31, %cst_15 [1] : vector<16x16xf32> to vector<16xf32>
    %33 = vector.shape_cast %32 : vector<16xf32> to vector<16x1xf32>
    %34 = vector.broadcast %33 : vector<16x1xf32> to vector<16x16xf32>
    %35 = arith.subf %31, %34 : vector<16x16xf32>
    %36 = math.exp %35 : vector<16x16xf32>
    %cst_16 = arith.constant dense<0.000000e+00> : vector<16xf32>
    %37 = vector.multi_reduction <add>, %36, %cst_16 [1] : vector<16x16xf32> to vector<16xf32>
    %38 = vector.shape_cast %37 : vector<16xf32> to vector<16x1xf32>
    %cst_17 = arith.constant 1.000000e+00 : f32
    %39 = vector.broadcast %cst_17 : f32 to vector<16x1xf32>
    %40 = arith.divf %39, %38 : vector<16x1xf32>
    %41 = vector.broadcast %40 : vector<16x1xf32> to vector<16x16xf32>
    %42 = arith.mulf %36, %41 : vector<16x16xf32>
    %43 = vector.extract_strided_slice %28 {offsets = [0, 0, 1], sizes = [16, 16, 1], strides = [1, 1, 1]} : vector<16x16x8xf32> to vector<16x16x1xf32>
    %44 = vector.shape_cast %43 : vector<16x16x1xf32> to vector<16x16xf32>
    %45 = arith.addf %44, %4 : vector<16x16xf32>
    %cst_18 = arith.constant dense<0xFF800000> : vector<16xf32>
    %46 = vector.multi_reduction <maximumf>, %45, %cst_18 [1] : vector<16x16xf32> to vector<16xf32>
    %47 = vector.shape_cast %46 : vector<16xf32> to vector<16x1xf32>
    %48 = vector.broadcast %47 : vector<16x1xf32> to vector<16x16xf32>
    %49 = arith.subf %45, %48 : vector<16x16xf32>
    %50 = math.exp %49 : vector<16x16xf32>
    %cst_19 = arith.constant dense<0.000000e+00> : vector<16xf32>
    %51 = vector.multi_reduction <add>, %50, %cst_19 [1] : vector<16x16xf32> to vector<16xf32>
    %52 = vector.shape_cast %51 : vector<16xf32> to vector<16x1xf32>
    %cst_20 = arith.constant 1.000000e+00 : f32
    %53 = vector.broadcast %cst_20 : f32 to vector<16x1xf32>
    %54 = arith.divf %53, %52 : vector<16x1xf32>
    %55 = vector.broadcast %54 : vector<16x1xf32> to vector<16x16xf32>
    %56 = arith.mulf %50, %55 : vector<16x16xf32>
    %57 = vector.extract_strided_slice %28 {offsets = [0, 0, 2], sizes = [16, 16, 1], strides = [1, 1, 1]} : vector<16x16x8xf32> to vector<16x16x1xf32>
    %58 = vector.shape_cast %57 : vector<16x16x1xf32> to vector<16x16xf32>
    %59 = arith.addf %58, %4 : vector<16x16xf32>
    %cst_21 = arith.constant dense<0xFF800000> : vector<16xf32>
    %60 = vector.multi_reduction <maximumf>, %59, %cst_21 [1] : vector<16x16xf32> to vector<16xf32>
    %61 = vector.shape_cast %60 : vector<16xf32> to vector<16x1xf32>
    %62 = vector.broadcast %61 : vector<16x1xf32> to vector<16x16xf32>
    %63 = arith.subf %59, %62 : vector<16x16xf32>
    %64 = math.exp %63 : vector<16x16xf32>
    %cst_22 = arith.constant dense<0.000000e+00> : vector<16xf32>
    %65 = vector.multi_reduction <add>, %64, %cst_22 [1] : vector<16x16xf32> to vector<16xf32>
    %66 = vector.shape_cast %65 : vector<16xf32> to vector<16x1xf32>
    %cst_23 = arith.constant 1.000000e+00 : f32
    %67 = vector.broadcast %cst_23 : f32 to vector<16x1xf32>
    %68 = arith.divf %67, %66 : vector<16x1xf32>
    %69 = vector.broadcast %68 : vector<16x1xf32> to vector<16x16xf32>
    %70 = arith.mulf %64, %69 : vector<16x16xf32>
    %71 = vector.extract_strided_slice %28 {offsets = [0, 0, 3], sizes = [16, 16, 1], strides = [1, 1, 1]} : vector<16x16x8xf32> to vector<16x16x1xf32>
    %72 = vector.shape_cast %71 : vector<16x16x1xf32> to vector<16x16xf32>
    %73 = arith.addf %72, %4 : vector<16x16xf32>
    %cst_24 = arith.constant dense<0xFF800000> : vector<16xf32>
    %74 = vector.multi_reduction <maximumf>, %73, %cst_24 [1] : vector<16x16xf32> to vector<16xf32>
    %75 = vector.shape_cast %74 : vector<16xf32> to vector<16x1xf32>
    %76 = vector.broadcast %75 : vector<16x1xf32> to vector<16x16xf32>
    %77 = arith.subf %73, %76 : vector<16x16xf32>
    %78 = math.exp %77 : vector<16x16xf32>
    %cst_25 = arith.constant dense<0.000000e+00> : vector<16xf32>
    %79 = vector.multi_reduction <add>, %78, %cst_25 [1] : vector<16x16xf32> to vector<16xf32>
    %80 = vector.shape_cast %79 : vector<16xf32> to vector<16x1xf32>
    %cst_26 = arith.constant 1.000000e+00 : f32
    %81 = vector.broadcast %cst_26 : f32 to vector<16x1xf32>
    %82 = arith.divf %81, %80 : vector<16x1xf32>
    %83 = vector.broadcast %82 : vector<16x1xf32> to vector<16x16xf32>
    %84 = arith.mulf %78, %83 : vector<16x16xf32>
    %85 = vector.extract_strided_slice %28 {offsets = [0, 0, 4], sizes = [16, 16, 1], strides = [1, 1, 1]} : vector<16x16x8xf32> to vector<16x16x1xf32>
    %86 = vector.shape_cast %85 : vector<16x16x1xf32> to vector<16x16xf32>
    %87 = arith.addf %86, %4 : vector<16x16xf32>
    %cst_27 = arith.constant dense<0xFF800000> : vector<16xf32>
    %88 = vector.multi_reduction <maximumf>, %87, %cst_27 [1] : vector<16x16xf32> to vector<16xf32>
    %89 = vector.shape_cast %88 : vector<16xf32> to vector<16x1xf32>
    %90 = vector.broadcast %89 : vector<16x1xf32> to vector<16x16xf32>
    %91 = arith.subf %87, %90 : vector<16x16xf32>
    %92 = math.exp %91 : vector<16x16xf32>
    %cst_28 = arith.constant dense<0.000000e+00> : vector<16xf32>
    %93 = vector.multi_reduction <add>, %92, %cst_28 [1] : vector<16x16xf32> to vector<16xf32>
    %94 = vector.shape_cast %93 : vector<16xf32> to vector<16x1xf32>
    %cst_29 = arith.constant 1.000000e+00 : f32
    %95 = vector.broadcast %cst_29 : f32 to vector<16x1xf32>
    %96 = arith.divf %95, %94 : vector<16x1xf32>
    %97 = vector.broadcast %96 : vector<16x1xf32> to vector<16x16xf32>
    %98 = arith.mulf %92, %97 : vector<16x16xf32>
    %99 = vector.extract_strided_slice %28 {offsets = [0, 0, 5], sizes = [16, 16, 1], strides = [1, 1, 1]} : vector<16x16x8xf32> to vector<16x16x1xf32>
    %100 = vector.shape_cast %99 : vector<16x16x1xf32> to vector<16x16xf32>
    %101 = arith.addf %100, %4 : vector<16x16xf32>
    %cst_30 = arith.constant dense<0xFF800000> : vector<16xf32>
    %102 = vector.multi_reduction <maximumf>, %101, %cst_30 [1] : vector<16x16xf32> to vector<16xf32>
    %103 = vector.shape_cast %102 : vector<16xf32> to vector<16x1xf32>
    %104 = vector.broadcast %103 : vector<16x1xf32> to vector<16x16xf32>
    %105 = arith.subf %101, %104 : vector<16x16xf32>
    %106 = math.exp %105 : vector<16x16xf32>
    %cst_31 = arith.constant dense<0.000000e+00> : vector<16xf32>
    %107 = vector.multi_reduction <add>, %106, %cst_31 [1] : vector<16x16xf32> to vector<16xf32>
    %108 = vector.shape_cast %107 : vector<16xf32> to vector<16x1xf32>
    %cst_32 = arith.constant 1.000000e+00 : f32
    %109 = vector.broadcast %cst_32 : f32 to vector<16x1xf32>
    %110 = arith.divf %109, %108 : vector<16x1xf32>
    %111 = vector.broadcast %110 : vector<16x1xf32> to vector<16x16xf32>
    %112 = arith.mulf %106, %111 : vector<16x16xf32>
    %113 = vector.extract_strided_slice %28 {offsets = [0, 0, 6], sizes = [16, 16, 1], strides = [1, 1, 1]} : vector<16x16x8xf32> to vector<16x16x1xf32>
    %114 = vector.shape_cast %113 : vector<16x16x1xf32> to vector<16x16xf32>
    %115 = arith.addf %114, %4 : vector<16x16xf32>
    %cst_33 = arith.constant dense<0xFF800000> : vector<16xf32>
    %116 = vector.multi_reduction <maximumf>, %115, %cst_33 [1] : vector<16x16xf32> to vector<16xf32>
    %117 = vector.shape_cast %116 : vector<16xf32> to vector<16x1xf32>
    %118 = vector.broadcast %117 : vector<16x1xf32> to vector<16x16xf32>
    %119 = arith.subf %115, %118 : vector<16x16xf32>
    %120 = math.exp %119 : vector<16x16xf32>
    %cst_34 = arith.constant dense<0.000000e+00> : vector<16xf32>
    %121 = vector.multi_reduction <add>, %120, %cst_34 [1] : vector<16x16xf32> to vector<16xf32>
    %122 = vector.shape_cast %121 : vector<16xf32> to vector<16x1xf32>
    %cst_35 = arith.constant 1.000000e+00 : f32
    %123 = vector.broadcast %cst_35 : f32 to vector<16x1xf32>
    %124 = arith.divf %123, %122 : vector<16x1xf32>
    %125 = vector.broadcast %124 : vector<16x1xf32> to vector<16x16xf32>
    %126 = arith.mulf %120, %125 : vector<16x16xf32>
    %127 = vector.extract_strided_slice %28 {offsets = [0, 0, 7], sizes = [16, 16, 1], strides = [1, 1, 1]} : vector<16x16x8xf32> to vector<16x16x1xf32>
    %128 = vector.shape_cast %127 : vector<16x16x1xf32> to vector<16x16xf32>
    %129 = arith.addf %128, %4 : vector<16x16xf32>
    %cst_36 = arith.constant dense<0xFF800000> : vector<16xf32>
    %130 = vector.multi_reduction <maximumf>, %129, %cst_36 [1] : vector<16x16xf32> to vector<16xf32>
    %131 = vector.shape_cast %130 : vector<16xf32> to vector<16x1xf32>
    %132 = vector.broadcast %131 : vector<16x1xf32> to vector<16x16xf32>
    %133 = arith.subf %129, %132 : vector<16x16xf32>
    %134 = math.exp %133 : vector<16x16xf32>
    %cst_37 = arith.constant dense<0.000000e+00> : vector<16xf32>
    %135 = vector.multi_reduction <add>, %134, %cst_37 [1] : vector<16x16xf32> to vector<16xf32>
    %136 = vector.shape_cast %135 : vector<16xf32> to vector<16x1xf32>
    %cst_38 = arith.constant 1.000000e+00 : f32
    %137 = vector.broadcast %cst_38 : f32 to vector<16x1xf32>
    %138 = arith.divf %137, %136 : vector<16x1xf32>
    %139 = vector.broadcast %138 : vector<16x1xf32> to vector<16x16xf32>
    %140 = arith.mulf %134, %139 : vector<16x16xf32>
    %141 = tpu.concatenate %42, %56, %70, %84, %98, %112, %126, %140 in 1 : vector<16x16xf32>, vector<16x16xf32>, vector<16x16xf32>, vector<16x16xf32>, vector<16x16xf32>, vector<16x16xf32>, vector<16x16xf32>, vector<16x16xf32> -> vector<16x128xf32>
    %142 = vector.shape_cast %9 : vector<8x128xbf16> to vector<8x1x128xbf16>
    %143 = arith.truncf %14 : vector<16x128xf32> to vector<16x128xbf16>
    %144 = vector.shape_cast %143 : vector<16x128xbf16> to vector<1x16x128xbf16>
    %145 = vector.broadcast %142 : vector<8x1x128xbf16> to vector<8x16x128xbf16>
    %146 = vector.broadcast %144 : vector<1x16x128xbf16> to vector<8x16x128xbf16>
    %147 = arith.mulf %145, %146 : vector<8x16x128xbf16>
    %148 = vector.shape_cast %147 : vector<8x16x128xbf16> to vector<128x128xbf16>
    %149 = arith.truncf %141 : vector<16x128xf32> to vector<16x128xbf16>
    %cst_39 = arith.constant dense<0.000000e+00> : vector<16x128xf32>
    %150 = tpu.matmul %149, %148, %cst_39 {dimension_numbers = #tpu.dot_dimension_numbers<[1], [0], [0], [1], [0, 0, 1, 1], [], []>} : vector<16x128xbf16>, vector<128x128xbf16>, vector<16x128xf32> -> vector<16x128xf32>
    %151 = arith.addf %150, %16 : vector<16x128xf32>
    %cst_40 = arith.constant 0.000000e+00 : f32
    %152 = vector.broadcast %cst_40 : f32 to vector<16x128xf32>
    %153 = arith.maximumf %151, %152 : vector<16x128xf32>
    %c0_41 = arith.constant 0 : index
    %c0_42 = arith.constant 0 : index
    %154 = vector.load %arg6[%c0_41, %c0_42] : memref<128x48xbf16, #tpu.memory_space<vmem>>, vector<128x48xbf16>
    %c0_43 = arith.constant 0 : index
    %c0_44 = arith.constant 0 : index
    %155 = vector.load %arg7[%c0_43, %c0_44] : memref<1x48xf32, #tpu.memory_space<vmem>>, vector<1x48xf32>
    %c0_45 = arith.constant 0 : index
    %c0_46 = arith.constant 0 : index
    %156 = vector.load %arg8[%c0_45, %c0_46] : memref<16x1xbf16, #tpu.memory_space<vmem>>, vector<16x1xbf16>
    %157 = arith.truncf %153 : vector<16x128xf32> to vector<16x128xbf16>
    %cst_47 = arith.constant dense<0.000000e+00> : vector<16x48xf32>
    %158 = tpu.matmul %157, %154, %cst_47 {dimension_numbers = #tpu.dot_dimension_numbers<[1], [0], [0], [1], [0, 0, 1, 1], [], []>} : vector<16x128xbf16>, vector<128x48xbf16>, vector<16x48xf32> -> vector<16x48xf32>
    %159 = vector.broadcast %155 : vector<1x48xf32> to vector<16x48xf32>
    %160 = arith.addf %158, %159 : vector<16x48xf32>
    %161 = vector.extract_strided_slice %160 {offsets = [0, 0], sizes = [16, 16], strides = [1, 1]} : vector<16x48xf32> to vector<16x16xf32>
    %162 = vector.extract_strided_slice %160 {offsets = [0, 16], sizes = [16, 16], strides = [1, 1]} : vector<16x48xf32> to vector<16x16xf32>
    %163 = vector.extract_strided_slice %160 {offsets = [0, 32], sizes = [16, 16], strides = [1, 1]} : vector<16x48xf32> to vector<16x16xf32>
    %164 = vector.shape_cast %162 : vector<16x16xf32> to vector<16x1x16xf32>
    %165 = vector.shape_cast %161 : vector<16x16xf32> to vector<1x16x16xf32>
    %166 = vector.broadcast %164 : vector<16x1x16xf32> to vector<16x16x16xf32>
    %167 = vector.broadcast %165 : vector<1x16x16xf32> to vector<16x16x16xf32>
    %168 = arith.addf %166, %167 : vector<16x16x16xf32>
    %cst_48 = arith.constant 2.000000e-01 : f32
    %169 = vector.broadcast %cst_48 : f32 to vector<16x16x16xf32>
    %170 = arith.mulf %169, %168 : vector<16x16x16xf32>
    %171 = arith.maximumf %168, %170 : vector<16x16x16xf32>
    %172 = vector.shape_cast %171 : vector<16x16x16xf32> to vector<256x16xf32>
    %173 = arith.truncf %172 : vector<256x16xf32> to vector<256x16xbf16>
    %cst_49 = arith.constant dense<0.000000e+00> : vector<256x1xf32>
    %174 = tpu.matmul %173, %156, %cst_49 {dimension_numbers = #tpu.dot_dimension_numbers<[1], [0], [0], [1], [0, 0, 1, 1], [], []>} : vector<256x16xbf16>, vector<16x1xbf16>, vector<256x1xf32> -> vector<256x1xf32>
    %175 = vector.shape_cast %174 : vector<256x1xf32> to vector<16x16x1xf32>
    %176 = vector.shape_cast %175 : vector<16x16x1xf32> to vector<16x16xf32>
    %177 = arith.addf %176, %4 : vector<16x16xf32>
    %cst_50 = arith.constant dense<0xFF800000> : vector<16xf32>
    %178 = vector.multi_reduction <maximumf>, %177, %cst_50 [1] : vector<16x16xf32> to vector<16xf32>
    %179 = vector.shape_cast %178 : vector<16xf32> to vector<16x1xf32>
    %180 = vector.broadcast %179 : vector<16x1xf32> to vector<16x16xf32>
    %181 = arith.subf %177, %180 : vector<16x16xf32>
    %182 = math.exp %181 : vector<16x16xf32>
    %cst_51 = arith.constant dense<0.000000e+00> : vector<16xf32>
    %183 = vector.multi_reduction <add>, %182, %cst_51 [1] : vector<16x16xf32> to vector<16xf32>
    %184 = vector.shape_cast %183 : vector<16xf32> to vector<16x1xf32>
    %cst_52 = arith.constant 1.000000e+00 : f32
    %185 = vector.broadcast %cst_52 : f32 to vector<16x1xf32>
    %186 = arith.divf %185, %184 : vector<16x1xf32>
    %187 = vector.broadcast %186 : vector<16x1xf32> to vector<16x16xf32>
    %188 = arith.mulf %182, %187 : vector<16x16xf32>
    %189 = arith.truncf %161 : vector<16x16xf32> to vector<16x16xbf16>
    %190 = arith.truncf %188 : vector<16x16xf32> to vector<16x16xbf16>
    %cst_53 = arith.constant dense<0.000000e+00> : vector<16x16xf32>
    %191 = tpu.matmul %190, %189, %cst_53 {dimension_numbers = #tpu.dot_dimension_numbers<[1], [0], [0], [1], [0, 0, 1, 1], [], []>} : vector<16x16xbf16>, vector<16x16xbf16>, vector<16x16xf32> -> vector<16x16xf32>
    %192 = arith.addf %191, %163 : vector<16x16xf32>
    %c0_54 = arith.constant 0 : index
    %c0_55 = arith.constant 0 : index
    %193 = vector.load %arg9[%c0_54, %c0_55] : memref<16x16xf32, #tpu.memory_space<vmem>>, vector<16x16xf32>
    tpu.vector_store %arg9[%c0_54, %c0_55], %192 {strides = array<i32>} : memref<16x16xf32, #tpu.memory_space<vmem>>, vector<16x16xf32>,
    return
  }
}

</mosaic_0001>

<llo_original>
// kernel: tpu_custom_call.1
$region0: #{tpu_custom_call.1}
  #allocation0 [shape = 'u32[]', space=smem, size = 0x4, offset = 0x4, fixed_abs, tag = 'smem constant byte address 0x4 - core index']
  #allocation1 [shape = 'u32[144,128]{1,0:T(1,128)}', space=vmem, size = 0x12000, scoped, tag = 'internal scratch']
  %s0 = inlined_call_operand.vmem [shape: f32[16,4], index: 0, kind: input, shape index: {}]
  %s1 = inlined_call_operand.vmem [shape: f32[16,16], index: 1, kind: input, shape index: {}]
  %s2 = inlined_call_operand.vmem [shape: bf16[4,384], index: 2, kind: input, shape index: {}]
  %s3 = inlined_call_operand.vmem [shape: f32[1,384], index: 3, kind: input, shape index: {}]
  %s4 = inlined_call_operand.vmem [shape: bf16[128,8], index: 4, kind: input, shape index: {}]
  %s5 = inlined_call_operand.vmem [shape: bf16[8,128], index: 5, kind: input, shape index: {}]
  %s6 = inlined_call_operand.vmem [shape: bf16[128,48], index: 6, kind: input, shape index: {}]
  %s7 = inlined_call_operand.vmem [shape: f32[1,48], index: 7, kind: input, shape index: {}]
  %s8 = inlined_call_operand.vmem [shape: bf16[16,1], index: 8, kind: input, shape index: {}]
  %s9 = inlined_call_operand.hbm [shape: f32[16,16], index: 9, kind: output, shape index: {}]
  %s10 = sld [smem:[#allocation0]]
  $region46: #{tpu_custom_call.1} parent=0
    _
  %s12 = ssub.s32 1, %s10
  %s13 = scalar_select 0, %s12, %s10
  $region1: #{tpu_custom_call.1} parent=0
    #allocation2 [shape = 'u8[8192]{0}', space=vmem, size = 0x2000, scoped, tag = 'output window, operand 0, single buffered']
    #allocation3 [shape = 's32[1]{0}', space=sflag, size = 0x4, scoped, tag = 'scoped memory for tpu_custom_call.1']
    %14 = vsyncpa [#allocation3], 0
    // Predicated region
    $region2: #{tpu_custom_call.1} parent=1 // pred_check
      _
    $region3: #{tpu_custom_call.1} parent=1 // pred_check_branch
      %16 = sbr.rel (0) target = $region5
    $region4: #{tpu_custom_call.1} parent=1 // pred_region
      _
    $region5: #{tpu_custom_call.1} parent=1 // pred_fallthru
      _
    // Predicated region
    $region6: #{tpu_custom_call.1} parent=1 // pred_check
      _
    $region7: #{tpu_custom_call.1} parent=1 // pred_check_branch
      %18 = sbr.rel (0) target = $region9
    $region8: #{tpu_custom_call.1} parent=1 // pred_region
      _
    $region9: #{tpu_custom_call.1} parent=1 // pred_fallthru
      _
    // Predicated region
    $region10: #{tpu_custom_call.1} parent=1 // pred_check
      _
    $region11: #{tpu_custom_call.1} parent=1 // pred_check_branch
      %20 = sbr.rel (0) target = $region13
    $region12: #{tpu_custom_call.1} parent=1 // pred_region
      _
    $region13: #{tpu_custom_call.1} parent=1 // pred_fallthru
      _
    // Predicated region
    $region14: #{tpu_custom_call.1} parent=1 // pred_check
      _
    $region15: #{tpu_custom_call.1} parent=1 // pred_check_branch
      %22 = sbr.rel (0) target = $region17
    $region16: #{tpu_custom_call.1} parent=1 // pred_region
      _
    $region17: #{tpu_custom_call.1} parent=1 // pred_fallthru
      _
    // Predicated region
    $region18: #{tpu_custom_call.1} parent=1 // pred_check
      _
    $region19: #{tpu_custom_call.1} parent=1 // pred_check_branch
      %24 = sbr.rel (0) target = $region21
    $region20: #{tpu_custom_call.1} parent=1 // pred_region
      _
    $region21: #{tpu_custom_call.1} parent=1 // pred_fallthru
      _
    // Predicated region
    $region22: #{tpu_custom_call.1} parent=1 // pred_check
      _
    $region23: #{tpu_custom_call.1} parent=1 // pred_check_branch
      %26 = sbr.rel (0) target = $region25
    $region24: #{tpu_custom_call.1} parent=1 // pred_region
      _
    $region25: #{tpu_custom_call.1} parent=1 // pred_fallthru
      _
    // Predicated region
    $region26: #{tpu_custom_call.1} parent=1 // pred_check
      _
    $region27: #{tpu_custom_call.1} parent=1 // pred_check_branch
      %28 = sbr.rel (0) target = $region29
    $region28: #{tpu_custom_call.1} parent=1 // pred_region
      _
    $region29: #{tpu_custom_call.1} parent=1 // pred_fallthru
      _
    // Predicated region
    $region30: #{tpu_custom_call.1} parent=1 // pred_check
      _
    $region31: #{tpu_custom_call.1} parent=1 // pred_check_branch
      %30 = sbr.rel (0) target = $region33
    $region32: #{tpu_custom_call.1} parent=1 // pred_region
      _
    $region33: #{tpu_custom_call.1} parent=1 // pred_fallthru
      _
    // Predicated region
    $region34: #{tpu_custom_call.1} parent=1 // pred_check
      _
    $region35: #{tpu_custom_call.1} parent=1 // pred_check_branch
      %32 = sbr.rel (0) target = $region37
    $region36: #{tpu_custom_call.1} parent=1 // pred_region
      _
    $region37: #{tpu_custom_call.1} parent=1 // pred_fallthru
      _
    %v34 = vld [vmem:[%s1] sm:$0xff]
    %v35 = vld [vmem:[%s1 + $0x8] sm:$0xff]
    %v36 = vsub.f32 %v34, 1.0
    %v37 = vsub.f32 %v35, 1.0
    %v38 = vmul.f32 %v36, 1e+30
    %v39 = vmul.f32 %v37, 1e+30
    %v40 = vld [vmem:[%s0] sm:$0xff]
    %v41 = vld [vmem:[%s0 + $0x8] sm:$0xff]
    %v42 = vld [vmem:[%s2] sm:$0x3f]
    %v43 = vld [vmem:[%s3] sm:$0x7]
    %v44 = vld [vmem:[%s4] sm:$0xf]
    %v45 = vld [vmem:[%s4 + $0x4] sm:$0xf]
    %v46 = vld [vmem:[%s4 + $0x8] sm:$0xf]
    %v47 = vld [vmem:[%s4 + $0xc] sm:$0xf]
    %v48 = vld [vmem:[%s4 + $0x10] sm:$0xf]
    %v49 = vld [vmem:[%s4 + $0x14] sm:$0xf]
    %v50 = vld [vmem:[%s4 + $0x18] sm:$0xf]
    %v51 = vld [vmem:[%s4 + $0x1c] sm:$0xf]
    %v52 = vld [vmem:[%s4 + $0x20] sm:$0xf]
    %v53 = vld [vmem:[%s4 + $0x24] sm:$0xf]
    %v54 = vld [vmem:[%s4 + $0x28] sm:$0xf]
    %v55 = vld [vmem:[%s4 + $0x2c] sm:$0xf]
    %v56 = vld [vmem:[%s4 + $0x30] sm:$0xf]
    %v57 = vld [vmem:[%s4 + $0x34] sm:$0xf]
    %v58 = vld [vmem:[%s4 + $0x38] sm:$0xf]
    %v59 = vld [vmem:[%s4 + $0x3c] sm:$0xf]
    %v60 = vld [vmem:[%s5] sm:$0xf]
    %v61 = vpack.c.bf16 %v41, %v40
    %v63 = vlaneseq
    %v64 = vshrl.u32 %v63, 7
    %v65 = vsub.s32 0, %v64
    %v66 = vrot.slane %v43, %v65
    %v67 = vlaneseq
    %v68 = vshrl.u32 %v67, 7
    %v69 = vsub.s32 1, %v68
    %v70 = vrot.slane %v43, %v69
    %v71 = vlaneseq
    %v72 = vshrl.u32 %v71, 7
    %v73 = vsub.s32 2, %v72
    %v74 = vrot.slane %v43, %v73
    %v79 = vcombine.high %v42, %v42
    %v81 = vunpack.c.l.s4 1983009808
    %v82 = vunpack.c.0.s8 %v81
    %v83 = vlaneseq
    %v84 = vshrl.u32 %v83, 7
    %v85 = vsub.s32 %v82, %v84
    %v86 = vrot.slane %v42, %v85
    %v88 = vunpack.c.l.s4 1983009808
    %v89 = vunpack.c.0.s8 %v88
    %v90 = vlaneseq
    %v91 = vshrl.u32 %v90, 7
    %v92 = vsub.s32 %v89, %v91
    %v93 = vrot.slane %v79, %v92
    %v94 = vcombine.high %v86, %v86
    %vm95 = vcmask 31744
    %v97 = vsel %vm95, %v61, 0
    %vm99 = vcmask 1041408
    %v101 = vsel %vm99, %v86, 0
    %v104 = vsel %vm99, %v94, 0
    %v107 = vsel %vm99, %v93, 0
    %109 = vmatprep.subr.bf16.mxu0 0
    %110 = vmatpush1.bf16.msra.mxu0 0
    %111 = vmatprep.subr.bf16.mxu0 0
    %112 = vmatpush1.bf16.msra.mxu0 0
    %113 = vmatprep.subr.bf16.mxu0 0
    %114 = vmatpush1.bf16.msra.mxu0 0
    %115 = vmatprep.subr.bf16.mxu0 0
    %116 = vmatpush1.bf16.msra.mxu0 0
    %117 = vmatprep.subr.bf16.mxu0 0
    %118 = vmatpush1.bf16.msra.mxu0 0
    %119 = vmatprep.subr.bf16.mxu0 0
    %120 = vmatpush1.bf16.msra.mxu0 0
    %121 = vmatprep.subr.bf16.mxu0 0
    %122 = vmatpush1.bf16.msra.mxu0 0
    %123 = vmatprep.subr.bf16.mxu0 %v104
    %124 = vmatpush1.bf16.msra.mxu0 %v101
    %125 = vmatprep.subr.bf16.mxu0 0
    %126 = vmatpush2.bf16.msra.mxu0 0
    %127 = vmatprep.subr.bf16.mxu0 0
    %128 = vmatpush2.bf16.msra.mxu0 0
    %129 = vmatprep.subr.bf16.mxu0 0
    %130 = vmatpush2.bf16.msra.mxu0 0
    %131 = vmatprep.subr.bf16.mxu0 0
    %132 = vmatpush2.bf16.msra.mxu0 0
    %133 = vmatprep.subr.bf16.mxu0 0
    %134 = vmatpush2.bf16.msra.mxu0 0
    %135 = vmatprep.subr.bf16.mxu0 0
    %136 = vmatpush2.bf16.msra.mxu0 0
    %137 = vmatprep.subr.bf16.mxu0 0
    %138 = vmatpush2.bf16.msra.mxu0 0
    %139 = vmatprep.subr.bf16.mxu0 0
    %140 = vmatpush2.bf16.msra.mxu0 0
    %141 = vmatprep.mubr.bf16.mxu0 0
    %142 = vmatmul.mubr.bf16.gmra.mxu0 %v97
    %v143 = vpop.f32.mrf.mxu0
    %v144 = vadd.f32 %v66, %v143
    %v145 = vpop.f32.mrf.mxu0
    %v146 = vadd.f32 %v70, %v145
    %v147 = vpop.f32.mrf.mxu0
    %v148 = vadd.f32 %v66, %v147
    %v149 = vpop.f32.mrf.mxu0
    %v150 = vadd.f32 %v70, %v149
    %151 = vdwg.mxu0
    %152 = vmatprep.subr.bf16.mxu0 0
    %153 = vmatpush1.bf16.msra.mxu0 0
    %154 = vmatprep.subr.bf16.mxu0 0
    %155 = vmatpush1.bf16.msra.mxu0 0
    %156 = vmatprep.subr.bf16.mxu0 0
    %157 = vmatpush1.bf16.msra.mxu0 0
    %158 = vmatprep.subr.bf16.mxu0 0
    %159 = vmatpush1.bf16.msra.mxu0 0
    %160 = vmatprep.subr.bf16.mxu0 0
    %161 = vmatpush1.bf16.msra.mxu0 0
    %162 = vmatprep.subr.bf16.mxu0 0
    %163 = vmatpush1.bf16.msra.mxu0 0
    %164 = vmatprep.subr.bf16.mxu0 0
    %165 = vmatpush1.bf16.msra.mxu0 0
    %166 = vmatprep.subr.bf16.mxu0 0
    %167 = vmatpush1.bf16.msra.mxu0 %v107
    %168 = vmatprep.subr.bf16.mxu0 0
    %169 = vmatpush2.bf16.msra.mxu0 0
    %170 = vmatprep.subr.bf16.mxu0 0
    %171 = vmatpush2.bf16.msra.mxu0 0
    %172 = vmatprep.subr.bf16.mxu0 0
    %173 = vmatpush2.bf16.msra.mxu0 0
    %174 = vmatprep.subr.bf16.mxu0 0
    %175 = vmatpush2.bf16.msra.mxu0 0
    %176 = vmatprep.subr.bf16.mxu0 0
    %177 = vmatpush2.bf16.msra.mxu0 0
    %178 = vmatprep.subr.bf16.mxu0 0
    %179 = vmatpush2.bf16.msra.mxu0 0
    %180 = vmatprep.subr.bf16.mxu0 0
    %181 = vmatpush2.bf16.msra.mxu0 0
    %182 = vmatprep.subr.bf16.mxu0 0
    %183 = vmatpush2.bf16.msra.mxu0 0
    %184 = vmatprep.mubr.bf16.mxu0 0
    %185 = vmatmul.mubr.bf16.gmra.mxu0 %v97
    %v186 = vpop.f32.mrf.mxu0
    %v187 = vadd.f32 %v74, %v186
    %v188 = vpop.f32.mrf.mxu0
    %v189 = vpop.f32.mrf.mxu0
    %v190 = vadd.f32 %v74, %v189
    %v191 = vpop.f32.mrf.mxu0
    %192 = vdwg.mxu0
    %v195 = vcombine.high %v146, %v146
    %v197 = vunpack.c.l.s4 1966171168
    %v198 = vunpack.c.0.s8 %v197
    %v199 = vlaneseq
    %v200 = vshrl.u32 %v199, 7
    %v201 = vsub.s32 %v198, %v200
    %v202 = vrot.slane %v146, %v201
    %v204 = vunpack.c.l.s4 1966171168
    %v205 = vunpack.c.0.s8 %v204
    %v206 = vlaneseq
    %v207 = vshrl.u32 %v206, 7
    %v208 = vsub.s32 %v205, %v207
    %v209 = vrot.slane %v195, %v208
    %v210 = vcombine.high %v202, %v202
    %v211 = vcombine.high %v209, %v209
    %v213 = vunpack.c.l.s4 1966171168
    %v214 = vunpack.c.0.s8 %v213
    %v215 = vlaneseq
    %v216 = vshrl.u32 %v215, 7
    %v217 = vsub.s32 %v214, %v216
    %v218 = vrot.slane %v202, %v217
    %v220 = vunpack.c.l.s4 1966171168
    %v221 = vunpack.c.0.s8 %v220
    %v222 = vlaneseq
    %v223 = vshrl.u32 %v222, 7
    %v224 = vsub.s32 %v221, %v223
    %v225 = vrot.slane %v209, %v224
    %v227 = vunpack.c.l.s4 1966171168
    %v228 = vunpack.c.0.s8 %v227
    %v229 = vlaneseq
    %v230 = vshrl.u32 %v229, 7
    %v231 = vsub.s32 %v228, %v230
    %v232 = vrot.slane %v210, %v231
    %v234 = vunpack.c.l.s4 1966171168
    %v235 = vunpack.c.0.s8 %v234
    %v236 = vlaneseq
    %v237 = vshrl.u32 %v236, 7
    %v238 = vsub.s32 %v235, %v237
    %v239 = vrot.slane %v211, %v238
    %v240 = vcombine.high %v218, %v218
    %v241 = vcombine.high %v225, %v225
    %v242 = vcombine.high %v232, %v232
    %v243 = vcombine.high %v239, %v239
    %v244 = vcombine.high %v150, %v150
    %v246 = vunpack.c.l.s4 1966171168
    %v247 = vunpack.c.0.s8 %v246
    %v248 = vlaneseq
    %v249 = vshrl.u32 %v248, 7
    %v250 = vsub.s32 %v247, %v249
    %v251 = vrot.slane %v150, %v250
    %v253 = vunpack.c.l.s4 1966171168
    %v254 = vunpack.c.0.s8 %v253
    %v255 = vlaneseq
    %v256 = vshrl.u32 %v255, 7
    %v257 = vsub.s32 %v254, %v256
    %v258 = vrot.slane %v244, %v257
    %v259 = vcombine.high %v251, %v251
    %v260 = vcombine.high %v258, %v258
    %v262 = vunpack.c.l.s4 1966171168
    %v263 = vunpack.c.0.s8 %v262
    %v264 = vlaneseq
    %v265 = vshrl.u32 %v264, 7
    %v266 = vsub.s32 %v263, %v265
    %v267 = vrot.slane %v251, %v266
    %v269 = vunpack.c.l.s4 1966171168
    %v270 = vunpack.c.0.s8 %v269
    %v271 = vlaneseq
    %v272 = vshrl.u32 %v271, 7
    %v273 = vsub.s32 %v270, %v272
    %v274 = vrot.slane %v258, %v273
    %v276 = vunpack.c.l.s4 1966171168
    %v277 = vunpack.c.0.s8 %v276
    %v278 = vlaneseq
    %v279 = vshrl.u32 %v278, 7
    %v280 = vsub.s32 %v277, %v279
    %v281 = vrot.slane %v259, %v280
    %v283 = vunpack.c.l.s4 1966171168
    %v284 = vunpack.c.0.s8 %v283
    %v285 = vlaneseq
    %v286 = vshrl.u32 %v285, 7
    %v287 = vsub.s32 %v284, %v286
    %v288 = vrot.slane %v260, %v287
    %v289 = vcombine.high %v267, %v267
    %v290 = vcombine.high %v274, %v274
    %v291 = vcombine.high %v281, %v281
    %v292 = vcombine.high %v288, %v288
    %v293 = vlaneseq
    %v294 = vshrl.u32 %v293, 7
    %v295 = vsub.s32 0, %v294
    %v296 = vrot.slane %v218, %v295
    %v297 = vlaneseq
    %v298 = vshrl.u32 %v297, 7
    %v299 = vsub.s32 0, %v298
    %v300 = vrot.slane %v232, %v299
    %v301 = vlaneseq
    %v302 = vshrl.u32 %v301, 7
    %v303 = vsub.s32 0, %v302
    %v304 = vrot.slane %v240, %v303
    %v305 = vlaneseq
    %v306 = vshrl.u32 %v305, 7
    %v307 = vsub.s32 0, %v306
    %v308 = vrot.slane %v242, %v307
    %v309 = vlaneseq
    %v310 = vshrl.u32 %v309, 7
    %v311 = vsub.s32 0, %v310
    %v312 = vrot.slane %v225, %v311
    %v313 = vlaneseq
    %v314 = vshrl.u32 %v313, 7
    %v315 = vsub.s32 0, %v314
    %v316 = vrot.slane %v239, %v315
    %v317 = vlaneseq
    %v318 = vshrl.u32 %v317, 7
    %v319 = vsub.s32 0, %v318
    %v320 = vrot.slane %v241, %v319
    %v321 = vlaneseq
    %v322 = vshrl.u32 %v321, 7
    %v323 = vsub.s32 0, %v322
    %v324 = vrot.slane %v243, %v323
    %v325 = vlaneseq
    %v326 = vshrl.u32 %v325, 7
    %v327 = vsub.s32 0, %v326
    %v328 = vrot.slane %v267, %v327
    %v329 = vlaneseq
    %v330 = vshrl.u32 %v329, 7
    %v331 = vsub.s32 0, %v330
    %v332 = vrot.slane %v281, %v331
    %v333 = vlaneseq
    %v334 = vshrl.u32 %v333, 7
    %v335 = vsub.s32 0, %v334
    %v336 = vrot.slane %v289, %v335
    %v337 = vlaneseq
    %v338 = vshrl.u32 %v337, 7
    %v339 = vsub.s32 0, %v338
    %v340 = vrot.slane %v291, %v339
    %v341 = vlaneseq
    %v342 = vshrl.u32 %v341, 7
    %v343 = vsub.s32 0, %v342
    %v344 = vrot.slane %v274, %v343
    %v345 = vlaneseq
    %v346 = vshrl.u32 %v345, 7
    %v347 = vsub.s32 0, %v346
    %v348 = vrot.slane %v288, %v347
    %v349 = vlaneseq
    %v350 = vshrl.u32 %v349, 7
    %v351 = vsub.s32 0, %v350
    %v352 = vrot.slane %v290, %v351
    %v353 = vlaneseq
    %v354 = vshrl.u32 %v353, 7
    %v355 = vsub.s32 0, %v354
    %v356 = vrot.slane %v292, %v355
    %v373 = vadd.f32 %v296, %v144
    %v374 = vadd.f32 %v296, %v148
    %v375 = vadd.f32 %v300, %v144
    %v376 = vadd.f32 %v300, %v148
    %v377 = vadd.f32 %v304, %v144
    %v378 = vadd.f32 %v304, %v148
    %v379 = vadd.f32 %v308, %v144
    %v380 = vadd.f32 %v308, %v148
    %v381 = vadd.f32 %v312, %v144
    %v382 = vadd.f32 %v312, %v148
    %v383 = vadd.f32 %v316, %v144
    %v384 = vadd.f32 %v316, %v148
    %v385 = vadd.f32 %v320, %v144
    %v386 = vadd.f32 %v320, %v148
    %v387 = vadd.f32 %v324, %v144
    %v388 = vadd.f32 %v324, %v148
    %v389 = vadd.f32 %v328, %v144
    %v390 = vadd.f32 %v328, %v148
    %v391 = vadd.f32 %v332, %v144
    %v392 = vadd.f32 %v332, %v148
    %v393 = vadd.f32 %v336, %v144
    %v394 = vadd.f32 %v336, %v148
    %v395 = vadd.f32 %v340, %v144
    %v396 = vadd.f32 %v340, %v148
    %v397 = vadd.f32 %v344, %v144
    %v398 = vadd.f32 %v344, %v148
    %v399 = vadd.f32 %v348, %v144
    %v400 = vadd.f32 %v348, %v148
    %v401 = vadd.f32 %v352, %v144
    %v402 = vadd.f32 %v352, %v148
    %v403 = vadd.f32 %v356, %v144
    %v404 = vadd.f32 %v356, %v148
    %v405 = vmul.f32 %v373, 0.2
    %v406 = vmul.f32 %v374, 0.2
    %v407 = vmul.f32 %v375, 0.2
    %v408 = vmul.f32 %v376, 0.2
    %v409 = vmul.f32 %v377, 0.2
    %v410 = vmul.f32 %v378, 0.2
    %v411 = vmul.f32 %v379, 0.2
    %v412 = vmul.f32 %v380, 0.2
    %v413 = vmul.f32 %v381, 0.2
    %v414 = vmul.f32 %v382, 0.2
    %v415 = vmul.f32 %v383, 0.2
    %v416 = vmul.f32 %v384, 0.2
    %v417 = vmul.f32 %v385, 0.2
    %v418 = vmul.f32 %v386, 0.2
    %v419 = vmul.f32 %v387, 0.2
    %v420 = vmul.f32 %v388, 0.2
    %v421 = vmul.f32 %v389, 0.2
    %v422 = vmul.f32 %v390, 0.2
    %v423 = vmul.f32 %v391, 0.2
    %v424 = vmul.f32 %v392, 0.2
    %v425 = vmul.f32 %v393, 0.2
    %v426 = vmul.f32 %v394, 0.2
    %v427 = vmul.f32 %v395, 0.2
    %v428 = vmul.f32 %v396, 0.2
    %v429 = vmul.f32 %v397, 0.2
    %v430 = vmul.f32 %v398, 0.2
    %v431 = vmul.f32 %v399, 0.2
    %v432 = vmul.f32 %v400, 0.2
    %v433 = vmul.f32 %v401, 0.2
    %v434 = vmul.f32 %v402, 0.2
    %v435 = vmul.f32 %v403, 0.2
    %v436 = vmul.f32 %v404, 0.2
    %v437 = vmax.f32 %v373, %v405
    %v438 = vmax.f32 %v374, %v406
    %v439 = vmax.f32 %v375, %v407
    %v440 = vmax.f32 %v376, %v408
    %v441 = vmax.f32 %v377, %v409
    %v442 = vmax.f32 %v378, %v410
    %v443 = vmax.f32 %v379, %v411
    %v444 = vmax.f32 %v380, %v412
    %v445 = vmax.f32 %v381, %v413
    %v446 = vmax.f32 %v382, %v414
    %v447 = vmax.f32 %v383, %v415
    %v448 = vmax.f32 %v384, %v416
    %v449 = vmax.f32 %v385, %v417
    %v450 = vmax.f32 %v386, %v418
    %v451 = vmax.f32 %v387, %v419
    %v452 = vmax.f32 %v388, %v420
    %v453 = vmax.f32 %v389, %v421
    %v454 = vmax.f32 %v390, %v422
    %v455 = vmax.f32 %v391, %v423
    %v456 = vmax.f32 %v392, %v424
    %v457 = vmax.f32 %v393, %v425
    %v458 = vmax.f32 %v394, %v426
    %v459 = vmax.f32 %v395, %v427
    %v460 = vmax.f32 %v396, %v428
    %v461 = vmax.f32 %v397, %v429
    %v462 = vmax.f32 %v398, %v430
    %v463 = vmax.f32 %v399, %v431
    %v464 = vmax.f32 %v400, %v432
    %v465 = vmax.f32 %v401, %v433
    %v466 = vmax.f32 %v402, %v434
    %v467 = vmax.f32 %v403, %v435
    %v468 = vmax.f32 %v404, %v436
    %v469 = vpack.c.bf16 %v438, %v437
    %v470 = vpack.c.bf16 %v440, %v439
    %v471 = vpack.c.bf16 %v442, %v441
    %v472 = vpack.c.bf16 %v444, %v443
    %v473 = vpack.c.bf16 %v446, %v445
    %v474 = vpack.c.bf16 %v448, %v447
    %v475 = vpack.c.bf16 %v450, %v449
    %v476 = vpack.c.bf16 %v452, %v451
    %v477 = vpack.c.bf16 %v454, %v453
    %v478 = vpack.c.bf16 %v456, %v455
    %v479 = vpack.c.bf16 %v458, %v457
    %v480 = vpack.c.bf16 %v460, %v459
    %v481 = vpack.c.bf16 %v462, %v461
    %v482 = vpack.c.bf16 %v464, %v463
    %v483 = vpack.c.bf16 %v466, %v465
    %v484 = vpack.c.bf16 %v468, %v467
    %v501 = vunpack.c.l.b16 %v44
    %v502 = vunpack.c.l.b16 %v45
    %v503 = vunpack.c.l.b16 %v46
    %v504 = vunpack.c.l.b16 %v47
    %v505 = vunpack.c.l.b16 %v48
    %v506 = vunpack.c.l.b16 %v49
    %v507 = vunpack.c.l.b16 %v50
    %v508 = vunpack.c.l.b16 %v51
    %v509 = vunpack.c.l.b16 %v52
    %v510 = vunpack.c.l.b16 %v53
    %v511 = vunpack.c.l.b16 %v54
    %v512 = vunpack.c.l.b16 %v55
    %v513 = vunpack.c.l.b16 %v56
    %v514 = vunpack.c.l.b16 %v57
    %v515 = vunpack.c.l.b16 %v58
    %v516 = vunpack.c.l.b16 %v59
    %v517 = vpack.c.b16 %v502, %v501
    %v518 = vpack.c.b16 %v504, %v503
    %v519 = vpack.c.b16 %v506, %v505
    %v520 = vpack.c.b16 %v508, %v507
    %v521 = vpack.c.b16 %v510, %v509
    %v522 = vpack.c.b16 %v512, %v511
    %v523 = vpack.c.b16 %v514, %v513
    %v524 = vpack.c.b16 %v516, %v515
    %533 = vmatprep.subr.bf16.mxu0 0
    %534 = vmatpush1.bf16.msra.mxu0 %v524
    %535 = vmatprep.subr.bf16.mxu0 0
    %536 = vmatpush1.bf16.msra.mxu0 %v523
    %537 = vmatprep.subr.bf16.mxu0 0
    %538 = vmatpush1.bf16.msra.mxu0 %v522
    %539 = vmatprep.subr.bf16.mxu0 0
    %540 = vmatpush1.bf16.msra.mxu0 %v521
    %541 = vmatprep.subr.bf16.mxu0 0
    %542 = vmatpush1.bf16.msra.mxu0 %v520
    %543 = vmatprep.subr.bf16.mxu0 0
    %544 = vmatpush1.bf16.msra.mxu0 %v519
    %545 = vmatprep.subr.bf16.mxu0 0
    %546 = vmatpush1.bf16.msra.mxu0 %v518
    %547 = vmatprep.subr.bf16.mxu0 0
    %548 = vmatpush1.bf16.msra.mxu0 %v517
    %549 = vmatprep.subr.bf16.mxu0 0
    %550 = vmatpush2.bf16.msra.mxu0 0
    %551 = vmatprep.subr.bf16.mxu0 0
    %552 = vmatpush2.bf16.msra.mxu0 0
    %553 = vmatprep.subr.bf16.mxu0 0
    %554 = vmatpush2.bf16.msra.mxu0 0
    %555 = vmatprep.subr.bf16.mxu0 0
    %556 = vmatpush2.bf16.msra.mxu0 0
    %557 = vmatprep.subr.bf16.mxu0 0
    %558 = vmatpush2.bf16.msra.mxu0 0
    %559 = vmatprep.subr.bf16.mxu0 0
    %560 = vmatpush2.bf16.msra.mxu0 0
    %561 = vmatprep.subr.bf16.mxu0 0
    %562 = vmatpush2.bf16.msra.mxu0 0
    %563 = vmatprep.subr.bf16.mxu0 0
    %564 = vmatpush2.bf16.msra.mxu0 0
    %565 = vmatprep.mubr.bf16.mxu0 0
    %566 = vmatmul.mubr.bf16.gmra.mxu0 %v469
    %v567 = vpop.f32.mrf.mxu0
    %v568 = vadd.f32 0.0, %v567
    %v569 = vpop.f32.mrf.mxu0
    %v570 = vpop.f32.mrf.mxu0
    %v571 = vadd.f32 0.0, %v570
    %v572 = vpop.f32.mrf.mxu0
    %573 = vmatprep.mubr.bf16.mxu0 0
    %574 = vmatmul.mubr.bf16.gmra.mxu0 %v470
    %v575 = vpop.f32.mrf.mxu0
    %v576 = vadd.f32 0.0, %v575
    %v577 = vpop.f32.mrf.mxu0
    %v578 = vpop.f32.mrf.mxu0
    %v579 = vadd.f32 0.0, %v578
    %v580 = vpop.f32.mrf.mxu0
    %581 = vmatprep.mubr.bf16.mxu0 0
    %582 = vmatmul.mubr.bf16.gmra.mxu0 %v471
    %v583 = vpop.f32.mrf.mxu0
    %v584 = vadd.f32 0.0, %v583
    %v585 = vpop.f32.mrf.mxu0
    %v586 = vpop.f32.mrf.mxu0
    %v587 = vadd.f32 0.0, %v586
    %v588 = vpop.f32.mrf.mxu0
    %589 = vmatprep.mubr.bf16.mxu0 0
    %590 = vmatmul.mubr.bf16.gmra.mxu0 %v472
    %v591 = vpop.f32.mrf.mxu0
    %v592 = vadd.f32 0.0, %v591
    %v593 = vpop.f32.mrf.mxu0
    %v594 = vpop.f32.mrf.mxu0
    %v595 = vadd.f32 0.0, %v594
    %v596 = vpop.f32.mrf.mxu0
    %597 = vmatprep.mubr.bf16.mxu0 0
    %598 = vmatmul.mubr.bf16.gmra.mxu0 %v473
    %v599 = vpop.f32.mrf.mxu0
    %v600 = vadd.f32 0.0, %v599
    %v601 = vpop.f32.mrf.mxu0
    %v602 = vpop.f32.mrf.mxu0
    %v603 = vadd.f32 0.0, %v602
    %v604 = vpop.f32.mrf.mxu0
    %605 = vmatprep.mubr.bf16.mxu0 0
    %606 = vmatmul.mubr.bf16.gmra.mxu0 %v474
    %v607 = vpop.f32.mrf.mxu0
    %v608 = vadd.f32 0.0, %v607
    %v609 = vpop.f32.mrf.mxu0
    %v610 = vpop.f32.mrf.mxu0
    %v611 = vadd.f32 0.0, %v610
    %v612 = vpop.f32.mrf.mxu0
    %613 = vmatprep.mubr.bf16.mxu0 0
    %614 = vmatmul.mubr.bf16.gmra.mxu0 %v475
    %v615 = vpop.f32.mrf.mxu0
    %v616 = vadd.f32 0.0, %v615
    %v617 = vpop.f32.mrf.mxu0
    %v618 = vpop.f32.mrf.mxu0
    %v619 = vadd.f32 0.0, %v618
    %v620 = vpop.f32.mrf.mxu0
    %621 = vmatprep.mubr.bf16.mxu0 0
    %622 = vmatmul.mubr.bf16.gmra.mxu0 %v476
    %v623 = vpop.f32.mrf.mxu0
    %v624 = vadd.f32 0.0, %v623
    %v625 = vpop.f32.mrf.mxu0
    %v626 = vpop.f32.mrf.mxu0
    %v627 = vadd.f32 0.0, %v626
    %v628 = vpop.f32.mrf.mxu0
    %629 = vmatprep.mubr.bf16.mxu0 0
    %630 = vmatmul.mubr.bf16.gmra.mxu0 %v477
    %v631 = vpop.f32.mrf.mxu0
    %v632 = vadd.f32 0.0, %v631
    %v633 = vpop.f32.mrf.mxu0
    %v634 = vpop.f32.mrf.mxu0
    %v635 = vadd.f32 0.0, %v634
    %v636 = vpop.f32.mrf.mxu0
    %637 = vmatprep.mubr.bf16.mxu0 0
    %638 = vmatmul.mubr.bf16.gmra.mxu0 %v478
    %v639 = vpop.f32.mrf.mxu0
    %v640 = vadd.f32 0.0, %v639
    %v641 = vpop.f32.mrf.mxu0
    %v642 = vpop.f32.mrf.mxu0
    %v643 = vadd.f32 0.0, %v642
    %v644 = vpop.f32.mrf.mxu0
    %645 = vmatprep.mubr.bf16.mxu0 0
    %646 = vmatmul.mubr.bf16.gmra.mxu0 %v479
    %v647 = vpop.f32.mrf.mxu0
    %v648 = vadd.f32 0.0, %v647
    %v649 = vpop.f32.mrf.mxu0
    %v650 = vpop.f32.mrf.mxu0
    %v651 = vadd.f32 0.0, %v650
    %v652 = vpop.f32.mrf.mxu0
    %653 = vmatprep.mubr.bf16.mxu0 0
    %654 = vmatmul.mubr.bf16.gmra.mxu0 %v480
    %v655 = vpop.f32.mrf.mxu0
    %v656 = vadd.f32 0.0, %v655
    %v657 = vpop.f32.mrf.mxu0
    %v658 = vpop.f32.mrf.mxu0
    %v659 = vadd.f32 0.0, %v658
    %v660 = vpop.f32.mrf.mxu0
    %661 = vmatprep.mubr.bf16.mxu0 0
    %662 = vmatmul.mubr.bf16.gmra.mxu0 %v481
    %v663 = vpop.f32.mrf.mxu0
    %v664 = vadd.f32 0.0, %v663
    %v665 = vpop.f32.mrf.mxu0
    %v666 = vpop.f32.mrf.mxu0
    %v667 = vadd.f32 0.0, %v666
    %v668 = vpop.f32.mrf.mxu0
    %669 = vmatprep.mubr.bf16.mxu0 0
    %670 = vmatmul.mubr.bf16.gmra.mxu0 %v482
    %v671 = vpop.f32.mrf.mxu0
    %v672 = vadd.f32 0.0, %v671
    %v673 = vpop.f32.mrf.mxu0
    %v674 = vpop.f32.mrf.mxu0
    %v675 = vadd.f32 0.0, %v674
    %v676 = vpop.f32.mrf.mxu0
    %677 = vmatprep.mubr.bf16.mxu0 0
    %678 = vmatmul.mubr.bf16.gmra.mxu0 %v483
    %v679 = vpop.f32.mrf.mxu0
    %v680 = vadd.f32 0.0, %v679
    %v681 = vpop.f32.mrf.mxu0
    %v682 = vpop.f32.mrf.mxu0
    %v683 = vadd.f32 0.0, %v682
    %v684 = vpop.f32.mrf.mxu0
    %685 = vmatprep.mubr.bf16.mxu0 0
    %686 = vmatmul.mubr.bf16.gmra.mxu0 %v484
    %v687 = vpop.f32.mrf.mxu0
    %v688 = vadd.f32 0.0, %v687
    %v689 = vpop.f32.mrf.mxu0
    %v690 = vpop.f32.mrf.mxu0
    %v691 = vadd.f32 0.0, %v690
    %v692 = vpop.f32.mrf.mxu0
    %693 = vdwg.mxu0
    %v696 = vlaneseq
    %v697 = vshrl.u32 %v696, 7
    %v698 = vsub.s32 0, %v697
    %v699 = vrot.slane %v38, %v698
    %701 = vbcast.lane.b32.xlu0 %v699, 256
    %v702 = vpop.permute.xlu0 %701
    %s704 = sor.u32 256, 8
    %705 = vbcast.lane.b32.xlu0 %v699, %s704
    %v706 = vpop.permute.xlu0 %705
    %v707 = vlaneseq
    %v708 = vshrl.u32 %v707, 7
    %v709 = vsub.s32 1, %v708
    %v710 = vrot.slane %v38, %v709
    %712 = vbcast.lane.b32.xlu0 %v710, 256
    %v713 = vpop.permute.xlu0 %712
    %s715 = sor.u32 256, 8
    %716 = vbcast.lane.b32.xlu0 %v710, %s715
    %v717 = vpop.permute.xlu0 %716
    %v718 = vlaneseq
    %v719 = vshrl.u32 %v718, 7
    %v720 = vsub.s32 2, %v719
    %v721 = vrot.slane %v38, %v720
    %723 = vbcast.lane.b32.xlu0 %v721, 256
    %v724 = vpop.permute.xlu0 %723
    %s726 = sor.u32 256, 8
    %727 = vbcast.lane.b32.xlu0 %v721, %s726
    %v728 = vpop.permute.xlu0 %727
    %v729 = vlaneseq
    %v730 = vshrl.u32 %v729, 7
    %v731 = vsub.s32 3, %v730
    %v732 = vrot.slane %v38, %v731
    %734 = vbcast.lane.b32.xlu0 %v732, 256
    %v735 = vpop.permute.xlu0 %734
    %s737 = sor.u32 256, 8
    %738 = vbcast.lane.b32.xlu0 %v732, %s737
    %v739 = vpop.permute.xlu0 %738
    %v740 = vlaneseq
    %v741 = vshrl.u32 %v740, 7
    %v742 = vsub.s32 4, %v741
    %v743 = vrot.slane %v38, %v742
    %745 = vbcast.lane.b32.xlu0 %v743, 256
    %v746 = vpop.permute.xlu0 %745
    %s748 = sor.u32 256, 8
    %749 = vbcast.lane.b32.xlu0 %v743, %s748
    %v750 = vpop.permute.xlu0 %749
    %v751 = vlaneseq
    %v752 = vshrl.u32 %v751, 7
    %v753 = vsub.s32 5, %v752
    %v754 = vrot.slane %v38, %v753
    %756 = vbcast.lane.b32.xlu0 %v754, 256
    %v757 = vpop.permute.xlu0 %756
    %s759 = sor.u32 256, 8
    %760 = vbcast.lane.b32.xlu0 %v754, %s759
    %v761 = vpop.permute.xlu0 %760
    %v762 = vlaneseq
    %v763 = vshrl.u32 %v762, 7
    %v764 = vsub.s32 6, %v763
    %v765 = vrot.slane %v38, %v764
    %767 = vbcast.lane.b32.xlu0 %v765, 256
    %v768 = vpop.permute.xlu0 %767
    %s770 = sor.u32 256, 8
    %771 = vbcast.lane.b32.xlu0 %v765, %s770
    %v772 = vpop.permute.xlu0 %771
    %v773 = vlaneseq
    %v774 = vshrl.u32 %v773, 7
    %v775 = vsub.s32 7, %v774
    %v776 = vrot.slane %v38, %v775
    %778 = vbcast.lane.b32.xlu0 %v776, 256
    %v779 = vpop.permute.xlu0 %778
    %s781 = sor.u32 256, 8
    %782 = vbcast.lane.b32.xlu0 %v776, %s781
    %v783 = vpop.permute.xlu0 %782
    %v784 = vlaneseq
    %v785 = vshrl.u32 %v784, 7
    %v786 = vsub.s32 0, %v785
    %v787 = vrot.slane %v39, %v786
    %789 = vbcast.lane.b32.xlu0 %v787, 256
    %v790 = vpop.permute.xlu0 %789
    %s792 = sor.u32 256, 8
    %793 = vbcast.lane.b32.xlu0 %v787, %s792
    %v794 = vpop.permute.xlu0 %793
    %v795 = vlaneseq
    %v796 = vshrl.u32 %v795, 7
    %v797 = vsub.s32 1, %v796
    %v798 = vrot.slane %v39, %v797
    %800 = vbcast.lane.b32.xlu0 %v798, 256
    %v801 = vpop.permute.xlu0 %800
    %s803 = sor.u32 256, 8
    %804 = vbcast.lane.b32.xlu0 %v798, %s803
    %v805 = vpop.permute.xlu0 %804
    %v806 = vlaneseq
    %v807 = vshrl.u32 %v806, 7
    %v808 = vsub.s32 2, %v807
    %v809 = vrot.slane %v39, %v808
    %811 = vbcast.lane.b32.xlu0 %v809, 256
    %v812 = vpop.permute.xlu0 %811
    %s814 = sor.u32 256, 8
    %815 = vbcast.lane.b32.xlu0 %v809, %s814
    %v816 = vpop.permute.xlu0 %815
    %v817 = vlaneseq
    %v818 = vshrl.u32 %v817, 7
    %v819 = vsub.s32 3, %v818
    %v820 = vrot.slane %v39, %v819
    %822 = vbcast.lane.b32.xlu0 %v820, 256
    %v823 = vpop.permute.xlu0 %822
    %s825 = sor.u32 256, 8
    %826 = vbcast.lane.b32.xlu0 %v820, %s825
    %v827 = vpop.permute.xlu0 %826
    %v828 = vlaneseq
    %v829 = vshrl.u32 %v828, 7
    %v830 = vsub.s32 4, %v829
    %v831 = vrot.slane %v39, %v830
    %833 = vbcast.lane.b32.xlu0 %v831, 256
    %v834 = vpop.permute.xlu0 %833
    %s836 = sor.u32 256, 8
    %837 = vbcast.lane.b32.xlu0 %v831, %s836
    %v838 = vpop.permute.xlu0 %837
    %v839 = vlaneseq
    %v840 = vshrl.u32 %v839, 7
    %v841 = vsub.s32 5, %v840
    %v842 = vrot.slane %v39, %v841
    %844 = vbcast.lane.b32.xlu0 %v842, 256
    %v845 = vpop.permute.xlu0 %844
    %s847 = sor.u32 256, 8
    %848 = vbcast.lane.b32.xlu0 %v842, %s847
    %v849 = vpop.permute.xlu0 %848
    %v850 = vlaneseq
    %v851 = vshrl.u32 %v850, 7
    %v852 = vsub.s32 6, %v851
    %v853 = vrot.slane %v39, %v852
    %855 = vbcast.lane.b32.xlu0 %v853, 256
    %v856 = vpop.permute.xlu0 %855
    %s858 = sor.u32 256, 8
    %859 = vbcast.lane.b32.xlu0 %v853, %s858
    %v860 = vpop.permute.xlu0 %859
    %v861 = vlaneseq
    %v862 = vshrl.u32 %v861, 7
    %v863 = vsub.s32 7, %v862
    %v864 = vrot.slane %v39, %v863
    %866 = vbcast.lane.b32.xlu0 %v864, 256
    %v867 = vpop.permute.xlu0 %866
    %s869 = sor.u32 256, 8
    %870 = vbcast.lane.b32.xlu0 %v864, %s869
    %v871 = vpop.permute.xlu0 %870
    %v904 = vadd.f32 %v568, %v702
    %v905 = vadd.f32 %v571, %v706
    %v906 = vadd.f32 %v576, %v713
    %v907 = vadd.f32 %v579, %v717
    %v908 = vadd.f32 %v584, %v724
    %v909 = vadd.f32 %v587, %v728
    %v910 = vadd.f32 %v592, %v735
    %v911 = vadd.f32 %v595, %v739
    %v912 = vadd.f32 %v600, %v746
    %v913 = vadd.f32 %v603, %v750
    %v914 = vadd.f32 %v608, %v757
    %v915 = vadd.f32 %v611, %v761
    %v916 = vadd.f32 %v616, %v768
    %v917 = vadd.f32 %v619, %v772
    %v918 = vadd.f32 %v624, %v779
    %v919 = vadd.f32 %v627, %v783
    %v920 = vadd.f32 %v632, %v790
    %v921 = vadd.f32 %v635, %v794
    %v922 = vadd.f32 %v640, %v801
    %v923 = vadd.f32 %v643, %v805
    %v924 = vadd.f32 %v648, %v812
    %v925 = vadd.f32 %v651, %v816
    %v926 = vadd.f32 %v656, %v823
    %v927 = vadd.f32 %v659, %v827
    %v928 = vadd.f32 %v664, %v834
    %v929 = vadd.f32 %v667, %v838
    %v930 = vadd.f32 %v672, %v845
    %v931 = vadd.f32 %v675, %v849
    %v932 = vadd.f32 %v680, %v856
    %v933 = vadd.f32 %v683, %v860
    %v934 = vadd.f32 %v688, %v867
    %v935 = vadd.f32 %v691, %v871
    %968 = vset.pattern.permute.xlu0 0
    %969 = vperm.xlu0 %968, %v904
    %v970 = vpop.permute.xlu0 %969
    %971 = vset.pattern.permute.xlu0 0
    %972 = vperm.xlu0 %971, %v905
    %v973 = vpop.permute.xlu0 %972
    %974 = vset.pattern.permute.xlu0 0
    %975 = vperm.xlu0 %974, %v906
    %v976 = vpop.permute.xlu0 %975
    %977 = vset.pattern.permute.xlu0 0
    %978 = vperm.xlu0 %977, %v907
    %v979 = vpop.permute.xlu0 %978
    %980 = vset.pattern.permute.xlu0 0
    %981 = vperm.xlu0 %980, %v908
    %v982 = vpop.permute.xlu0 %981
    %983 = vset.pattern.permute.xlu0 0
    %984 = vperm.xlu0 %983, %v909
    %v985 = vpop.permute.xlu0 %984
    %986 = vset.pattern.permute.xlu0 0
    %987 = vperm.xlu0 %986, %v910
    %v988 = vpop.permute.xlu0 %987
    %989 = vset.pattern.permute.xlu0 0
    %990 = vperm.xlu0 %989, %v911
    %v991 = vpop.permute.xlu0 %990
    %992 = vset.pattern.permute.xlu0 0
    %993 = vperm.xlu0 %992, %v912
    %v994 = vpop.permute.xlu0 %993
    %995 = vset.pattern.permute.xlu0 0
    %996 = vperm.xlu0 %995, %v913
    %v997 = vpop.permute.xlu0 %996
    %998 = vset.pattern.permute.xlu0 0
    %999 = vperm.xlu0 %998, %v914
    %v1000 = vpop.permute.xlu0 %999
    %1001 = vset.pattern.permute.xlu0 0
    %1002 = vperm.xlu0 %1001, %v915
    %v1003 = vpop.permute.xlu0 %1002
    %1004 = vset.pattern.permute.xlu0 0
    %1005 = vperm.xlu0 %1004, %v916
    %v1006 = vpop.permute.xlu0 %1005
    %1007 = vset.pattern.permute.xlu0 0
    %1008 = vperm.xlu0 %1007, %v917
    %v1009 = vpop.permute.xlu0 %1008
    %1010 = vset.pattern.permute.xlu0 0
    %1011 = vperm.xlu0 %1010, %v918
    %v1012 = vpop.permute.xlu0 %1011
    %1013 = vset.pattern.permute.xlu0 0
    %1014 = vperm.xlu0 %1013, %v919
    %v1015 = vpop.permute.xlu0 %1014
    %1016 = vset.pattern.permute.xlu0 0
    %1017 = vperm.xlu0 %1016, %v920
    %v1018 = vpop.permute.xlu0 %1017
    %1019 = vset.pattern.permute.xlu0 0
    %1020 = vperm.xlu0 %1019, %v921
    %v1021 = vpop.permute.xlu0 %1020
    %1022 = vset.pattern.permute.xlu0 0
    %1023 = vperm.xlu0 %1022, %v922
    %v1024 = vpop.permute.xlu0 %1023
    %1025 = vset.pattern.permute.xlu0 0
    %1026 = vperm.xlu0 %1025, %v923
    %v1027 = vpop.permute.xlu0 %1026
    %1028 = vset.pattern.permute.xlu0 0
    %1029 = vperm.xlu0 %1028, %v924
    %v1030 = vpop.permute.xlu0 %1029
    %1031 = vset.pattern.permute.xlu0 0
    %1032 = vperm.xlu0 %1031, %v925
    %v1033 = vpop.permute.xlu0 %1032
    %1034 = vset.pattern.permute.xlu0 0
    %1035 = vperm.xlu0 %1034, %v926
    %v1036 = vpop.permute.xlu0 %1035
    %1037 = vset.pattern.permute.xlu0 0
    %1038 = vperm.xlu0 %1037, %v927
    %v1039 = vpop.permute.xlu0 %1038
    %1040 = vset.pattern.permute.xlu0 0
    %1041 = vperm.xlu0 %1040, %v928
    %v1042 = vpop.permute.xlu0 %1041
    %1043 = vset.pattern.permute.xlu0 0
    %1044 = vperm.xlu0 %1043, %v929
    %v1045 = vpop.permute.xlu0 %1044
    %1046 = vset.pattern.permute.xlu0 0
    %1047 = vperm.xlu0 %1046, %v930
    %v1048 = vpop.permute.xlu0 %1047
    %1049 = vset.pattern.permute.xlu0 0
    %1050 = vperm.xlu0 %1049, %v931
    %v1051 = vpop.permute.xlu0 %1050
    %1052 = vset.pattern.permute.xlu0 0
    %1053 = vperm.xlu0 %1052, %v932
    %v1054 = vpop.permute.xlu0 %1053
    %1055 = vset.pattern.permute.xlu0 0
    %1056 = vperm.xlu0 %1055, %v933
    %v1057 = vpop.permute.xlu0 %1056
    %1058 = vset.pattern.permute.xlu0 0
    %1059 = vperm.xlu0 %1058, %v934
    %v1060 = vpop.permute.xlu0 %1059
    %1061 = vset.pattern.permute.xlu0 0
    %1062 = vperm.xlu0 %1061, %v935
    %v1063 = vpop.permute.xlu0 %1062
    %v1064 = vlaneseq
    %v1065 = vand.u32 %v1064, 127
    %v1066 = vlaneseq
    %v1067 = vshrl.u32 %v1066, 7
    %v1068 = vsub.s32 %v1065, %v1067
    %v1069 = vrot.slane %v970, %v1068
    %v1070 = vadd.s32 %v1065, 4294967288
    %v1071 = vlaneseq
    %v1072 = vshrl.u32 %v1071, 7
    %v1073 = vsub.s32 %v1070, %v1072
    %v1074 = vrot.slane %v973, %v1073
    %vm1075 = vcmask 130112
    %v1076 = vsel %vm1075, %v1074, %v1069
    %v1077 = vlaneseq
    %v1078 = vshrl.u32 %v1077, 7
    %v1079 = vsub.s32 %v1065, %v1078
    %v1080 = vrot.slane %v976, %v1079
    %v1081 = vlaneseq
    %v1082 = vshrl.u32 %v1081, 7
    %v1083 = vsub.s32 %v1070, %v1082
    %v1084 = vrot.slane %v979, %v1083
    %v1085 = vsel %vm1075, %v1084, %v1080
    %v1086 = vlaneseq
    %v1087 = vshrl.u32 %v1086, 7
    %v1088 = vsub.s32 %v1065, %v1087
    %v1089 = vrot.slane %v982, %v1088
    %v1090 = vlaneseq
    %v1091 = vshrl.u32 %v1090, 7
    %v1092 = vsub.s32 %v1070, %v1091
    %v1093 = vrot.slane %v985, %v1092
    %v1094 = vsel %vm1075, %v1093, %v1089
    %v1095 = vlaneseq
    %v1096 = vshrl.u32 %v1095, 7
    %v1097 = vsub.s32 %v1065, %v1096
    %v1098 = vrot.slane %v988, %v1097
    %v1099 = vlaneseq
    %v1100 = vshrl.u32 %v1099, 7
    %v1101 = vsub.s32 %v1070, %v1100
    %v1102 = vrot.slane %v991, %v1101
    %v1103 = vsel %vm1075, %v1102, %v1098
    %v1104 = vlaneseq
    %v1105 = vshrl.u32 %v1104, 7
    %v1106 = vsub.s32 %v1065, %v1105
    %v1107 = vrot.slane %v994, %v1106
    %v1108 = vlaneseq
    %v1109 = vshrl.u32 %v1108, 7
    %v1110 = vsub.s32 %v1070, %v1109
    %v1111 = vrot.slane %v997, %v1110
    %v1112 = vsel %vm1075, %v1111, %v1107
    %v1113 = vlaneseq
    %v1114 = vshrl.u32 %v1113, 7
    %v1115 = vsub.s32 %v1065, %v1114
    %v1116 = vrot.slane %v1000, %v1115
    %v1117 = vlaneseq
    %v1118 = vshrl.u32 %v1117, 7
    %v1119 = vsub.s32 %v1070, %v1118
    %v1120 = vrot.slane %v1003, %v1119
    %v1121 = vsel %vm1075, %v1120, %v1116
    %v1122 = vlaneseq
    %v1123 = vshrl.u32 %v1122, 7
    %v1124 = vsub.s32 %v1065, %v1123
    %v1125 = vrot.slane %v1006, %v1124
    %v1126 = vlaneseq
    %v1127 = vshrl.u32 %v1126, 7
    %v1128 = vsub.s32 %v1070, %v1127
    %v1129 = vrot.slane %v1009, %v1128
    %v1130 = vsel %vm1075, %v1129, %v1125
    %v1131 = vlaneseq
    %v1132 = vshrl.u32 %v1131, 7
    %v1133 = vsub.s32 %v1065, %v1132
    %v1134 = vrot.slane %v1012, %v1133
    %v1135 = vlaneseq
    %v1136 = vshrl.u32 %v1135, 7
    %v1137 = vsub.s32 %v1070, %v1136
    %v1138 = vrot.slane %v1015, %v1137
    %v1139 = vsel %vm1075, %v1138, %v1134
    %v1140 = vlaneseq
    %v1141 = vshrl.u32 %v1140, 7
    %v1142 = vsub.s32 %v1065, %v1141
    %v1143 = vrot.slane %v1018, %v1142
    %v1144 = vlaneseq
    %v1145 = vshrl.u32 %v1144, 7
    %v1146 = vsub.s32 %v1070, %v1145
    %v1147 = vrot.slane %v1021, %v1146
    %v1148 = vsel %vm1075, %v1147, %v1143
    %v1149 = vlaneseq
    %v1150 = vshrl.u32 %v1149, 7
    %v1151 = vsub.s32 %v1065, %v1150
    %v1152 = vrot.slane %v1024, %v1151
    %v1153 = vlaneseq
    %v1154 = vshrl.u32 %v1153, 7
    %v1155 = vsub.s32 %v1070, %v1154
    %v1156 = vrot.slane %v1027, %v1155
    %v1157 = vsel %vm1075, %v1156, %v1152
    %v1158 = vlaneseq
    %v1159 = vshrl.u32 %v1158, 7
    %v1160 = vsub.s32 %v1065, %v1159
    %v1161 = vrot.slane %v1030, %v1160
    %v1162 = vlaneseq
    %v1163 = vshrl.u32 %v1162, 7
    %v1164 = vsub.s32 %v1070, %v1163
    %v1165 = vrot.slane %v1033, %v1164
    %v1166 = vsel %vm1075, %v1165, %v1161
    %v1167 = vlaneseq
    %v1168 = vshrl.u32 %v1167, 7
    %v1169 = vsub.s32 %v1065, %v1168
    %v1170 = vrot.slane %v1036, %v1169
    %v1171 = vlaneseq
    %v1172 = vshrl.u32 %v1171, 7
    %v1173 = vsub.s32 %v1070, %v1172
    %v1174 = vrot.slane %v1039, %v1173
    %v1175 = vsel %vm1075, %v1174, %v1170
    %v1176 = vlaneseq
    %v1177 = vshrl.u32 %v1176, 7
    %v1178 = vsub.s32 %v1065, %v1177
    %v1179 = vrot.slane %v1042, %v1178
    %v1180 = vlaneseq
    %v1181 = vshrl.u32 %v1180, 7
    %v1182 = vsub.s32 %v1070, %v1181
    %v1183 = vrot.slane %v1045, %v1182
    %v1184 = vsel %vm1075, %v1183, %v1179
    %v1185 = vlaneseq
    %v1186 = vshrl.u32 %v1185, 7
    %v1187 = vsub.s32 %v1065, %v1186
    %v1188 = vrot.slane %v1048, %v1187
    %v1189 = vlaneseq
    %v1190 = vshrl.u32 %v1189, 7
    %v1191 = vsub.s32 %v1070, %v1190
    %v1192 = vrot.slane %v1051, %v1191
    %v1193 = vsel %vm1075, %v1192, %v1188
    %v1194 = vlaneseq
    %v1195 = vshrl.u32 %v1194, 7
    %v1196 = vsub.s32 %v1065, %v1195
    %v1197 = vrot.slane %v1054, %v1196
    %v1198 = vlaneseq
    %v1199 = vshrl.u32 %v1198, 7
    %v1200 = vsub.s32 %v1070, %v1199
    %v1201 = vrot.slane %v1057, %v1200
    %v1202 = vsel %vm1075, %v1201, %v1197
    %v1203 = vlaneseq
    %v1204 = vshrl.u32 %v1203, 7
    %v1205 = vsub.s32 %v1065, %v1204
    %v1206 = vrot.slane %v1060, %v1205
    %v1207 = vlaneseq
    %v1208 = vshrl.u32 %v1207, 7
    %v1209 = vsub.s32 %v1070, %v1208
    %v1210 = vrot.slane %v1063, %v1209
    %v1211 = vsel %vm1075, %v1210, %v1206
    %vm1212 = vcmask 1041409
    %v1213 = vsel %vm1212, %v1085, %v1076
    %vm1214 = vcmask 1042434
    %v1215 = vsel %vm1214, %v1094, %v1213
    %vm1216 = vcmask 1043459
    %v1217 = vsel %vm1216, %v1103, %v1215
    %vm1218 = vcmask 1044484
    %v1219 = vsel %vm1218, %v1112, %v1217
    %vm1220 = vcmask 1045509
    %v1221 = vsel %vm1220, %v1121, %v1219
    %vm1222 = vcmask 1046534
    %v1223 = vsel %vm1222, %v1130, %v1221
    %vm1224 = vcmask 1047559
    %v1225 = vsel %vm1224, %v1139, %v1223
    %v1226 = vsel %vm1212, %v1157, %v1148
    %v1227 = vsel %vm1214, %v1166, %v1226
    %v1228 = vsel %vm1216, %v1175, %v1227
    %v1229 = vsel %vm1218, %v1184, %v1228
    %v1230 = vsel %vm1220, %v1193, %v1229
    %v1231 = vsel %vm1222, %v1202, %v1230
    %v1232 = vsel %vm1224, %v1211, %v1231
    %vm1235 = vcmask 130048
    %v1236 = vsel %vm1235, %v1225, -inf
    %1237 = vmax.xlane.f32.xlu0 %v1236
    %v1238 = vpop.xlane.xlu0 %1237
    %v1239 = vsel %vm1235, %v1232, -inf
    %1240 = vmax.xlane.f32.xlu0 %v1239
    %v1241 = vpop.xlane.xlu0 %1240
    %v1244 = vlaneseq
    %v1245 = vshrl.u32 %v1244, 7
    %v1246 = vsub.s32 0, %v1245
    %v1247 = vrot.slane %v1238, %v1246
    %v1248 = vlaneseq
    %v1249 = vshrl.u32 %v1248, 7
    %v1250 = vsub.s32 1, %v1249
    %v1251 = vrot.slane %v1238, %v1250
    %v1252 = vlaneseq
    %v1253 = vshrl.u32 %v1252, 7
    %v1254 = vsub.s32 2, %v1253
    %v1255 = vrot.slane %v1238, %v1254
    %v1256 = vlaneseq
    %v1257 = vshrl.u32 %v1256, 7
    %v1258 = vsub.s32 3, %v1257
    %v1259 = vrot.slane %v1238, %v1258
    %v1260 = vlaneseq
    %v1261 = vshrl.u32 %v1260, 7
    %v1262 = vsub.s32 4, %v1261
    %v1263 = vrot.slane %v1238, %v1262
    %v1264 = vlaneseq
    %v1265 = vshrl.u32 %v1264, 7
    %v1266 = vsub.s32 5, %v1265
    %v1267 = vrot.slane %v1238, %v1266
    %v1268 = vlaneseq
    %v1269 = vshrl.u32 %v1268, 7
    %v1270 = vsub.s32 6, %v1269
    %v1271 = vrot.slane %v1238, %v1270
    %v1272 = vlaneseq
    %v1273 = vshrl.u32 %v1272, 7
    %v1274 = vsub.s32 7, %v1273
    %v1275 = vrot.slane %v1238, %v1274
    %v1276 = vlaneseq
    %v1277 = vshrl.u32 %v1276, 7
    %v1278 = vsub.s32 0, %v1277
    %v1279 = vrot.slane %v1241, %v1278
    %v1280 = vlaneseq
    %v1281 = vshrl.u32 %v1280, 7
    %v1282 = vsub.s32 1, %v1281
    %v1283 = vrot.slane %v1241, %v1282
    %v1284 = vlaneseq
    %v1285 = vshrl.u32 %v1284, 7
    %v1286 = vsub.s32 2, %v1285
    %v1287 = vrot.slane %v1241, %v1286
    %v1288 = vlaneseq
    %v1289 = vshrl.u32 %v1288, 7
    %v1290 = vsub.s32 3, %v1289
    %v1291 = vrot.slane %v1241, %v1290
    %v1292 = vlaneseq
    %v1293 = vshrl.u32 %v1292, 7
    %v1294 = vsub.s32 4, %v1293
    %v1295 = vrot.slane %v1241, %v1294
    %v1296 = vlaneseq
    %v1297 = vshrl.u32 %v1296, 7
    %v1298 = vsub.s32 5, %v1297
    %v1299 = vrot.slane %v1241, %v1298
    %v1300 = vlaneseq
    %v1301 = vshrl.u32 %v1300, 7
    %v1302 = vsub.s32 6, %v1301
    %v1303 = vrot.slane %v1241, %v1302
    %v1304 = vlaneseq
    %v1305 = vshrl.u32 %v1304, 7
    %v1306 = vsub.s32 7, %v1305
    %v1307 = vrot.slane %v1241, %v1306
    %v1324 = vsub.f32 %v904, %v1247
    %v1325 = vsub.f32 %v905, %v1247
    %v1326 = vsub.f32 %v906, %v1251
    %v1327 = vsub.f32 %v907, %v1251
    %v1328 = vsub.f32 %v908, %v1255
    %v1329 = vsub.f32 %v909, %v1255
    %v1330 = vsub.f32 %v910, %v1259
    %v1331 = vsub.f32 %v911, %v1259
    %v1332 = vsub.f32 %v912, %v1263
    %v1333 = vsub.f32 %v913, %v1263
    %v1334 = vsub.f32 %v914, %v1267
    %v1335 = vsub.f32 %v915, %v1267
    %v1336 = vsub.f32 %v916, %v1271
    %v1337 = vsub.f32 %v917, %v1271
    %v1338 = vsub.f32 %v918, %v1275
    %v1339 = vsub.f32 %v919, %v1275
    %v1340 = vsub.f32 %v920, %v1279
    %v1341 = vsub.f32 %v921, %v1279
    %v1342 = vsub.f32 %v922, %v1283
    %v1343 = vsub.f32 %v923, %v1283
    %v1344 = vsub.f32 %v924, %v1287
    %v1345 = vsub.f32 %v925, %v1287
    %v1346 = vsub.f32 %v926, %v1291
    %v1347 = vsub.f32 %v927, %v1291
    %v1348 = vsub.f32 %v928, %v1295
    %v1349 = vsub.f32 %v929, %v1295
    %v1350 = vsub.f32 %v930, %v1299
    %v1351 = vsub.f32 %v931, %v1299
    %v1352 = vsub.f32 %v932, %v1303
    %v1353 = vsub.f32 %v933, %v1303
    %v1354 = vsub.f32 %v934, %v1307
    %v1355 = vsub.f32 %v935, %v1307
    %v1356 = vmul.f32 %v1324, 1.442695
    %v1357 = vpow.pop %v1356
    %v1358 = vmul.f32 %v1325, 1.442695
    %v1359 = vpow.pop %v1358
    %v1360 = vmul.f32 %v1326, 1.442695
    %v1361 = vpow.pop %v1360
    %v1362 = vmul.f32 %v1327, 1.442695
    %v1363 = vpow.pop %v1362
    %v1364 = vmul.f32 %v1328, 1.442695
    %v1365 = vpow.pop %v1364
    %v1366 = vmul.f32 %v1329, 1.442695
    %v1367 = vpow.pop %v1366
    %v1368 = vmul.f32 %v1330, 1.442695
    %v1369 = vpow.pop %v1368
    %v1370 = vmul.f32 %v1331, 1.442695
    %v1371 = vpow.pop %v1370
    %v1372 = vmul.f32 %v1332, 1.442695
    %v1373 = vpow.pop %v1372
    %v1374 = vmul.f32 %v1333, 1.442695
    %v1375 = vpow.pop %v1374
    %v1376 = vmul.f32 %v1334, 1.442695
    %v1377 = vpow.pop %v1376
    %v1378 = vmul.f32 %v1335, 1.442695
    %v1379 = vpow.pop %v1378
    %v1380 = vmul.f32 %v1336, 1.442695
    %v1381 = vpow.pop %v1380
    %v1382 = vmul.f32 %v1337, 1.442695
    %v1383 = vpow.pop %v1382
    %v1384 = vmul.f32 %v1338, 1.442695
    %v1385 = vpow.pop %v1384
    %v1386 = vmul.f32 %v1339, 1.442695
    %v1387 = vpow.pop %v1386
    %v1388 = vmul.f32 %v1340, 1.442695
    %v1389 = vpow.pop %v1388
    %v1390 = vmul.f32 %v1341, 1.442695
    %v1391 = vpow.pop %v1390
    %v1392 = vmul.f32 %v1342, 1.442695
    %v1393 = vpow.pop %v1392
    %v1394 = vmul.f32 %v1343, 1.442695
    %v1395 = vpow.pop %v1394
    %v1396 = vmul.f32 %v1344, 1.442695
    %v1397 = vpow.pop %v1396
    %v1398 = vmul.f32 %v1345, 1.442695
    %v1399 = vpow.pop %v1398
    %v1400 = vmul.f32 %v1346, 1.442695
    %v1401 = vpow.pop %v1400
    %v1402 = vmul.f32 %v1347, 1.442695
    %v1403 = vpow.pop %v1402
    %v1404 = vmul.f32 %v1348, 1.442695
    %v1405 = vpow.pop %v1404
    %v1406 = vmul.f32 %v1349, 1.442695
    %v1407 = vpow.pop %v1406
    %v1408 = vmul.f32 %v1350, 1.442695
    %v1409 = vpow.pop %v1408
    %v1410 = vmul.f32 %v1351, 1.442695
    %v1411 = vpow.pop %v1410
    %v1412 = vmul.f32 %v1352, 1.442695
    %v1413 = vpow.pop %v1412
    %v1414 = vmul.f32 %v1353, 1.442695
    %v1415 = vpow.pop %v1414
    %v1416 = vmul.f32 %v1354, 1.442695
    %v1417 = vpow.pop %v1416
    %v1418 = vmul.f32 %v1355, 1.442695
    %v1419 = vpow.pop %v1418
    %1452 = vset.pattern.permute.xlu0 0
    %1453 = vperm.xlu0 %1452, %v1357
    %v1454 = vpop.permute.xlu0 %1453
    %1455 = vset.pattern.permute.xlu0 0
    %1456 = vperm.xlu0 %1455, %v1359
    %v1457 = vpop.permute.xlu0 %1456
    %1458 = vset.pattern.permute.xlu0 0
    %1459 = vperm.xlu0 %1458, %v1361
    %v1460 = vpop.permute.xlu0 %1459
    %1461 = vset.pattern.permute.xlu0 0
    %1462 = vperm.xlu0 %1461, %v1363
    %v1463 = vpop.permute.xlu0 %1462
    %1464 = vset.pattern.permute.xlu0 0
    %1465 = vperm.xlu0 %1464, %v1365
    %v1466 = vpop.permute.xlu0 %1465
    %1467 = vset.pattern.permute.xlu0 0
    %1468 = vperm.xlu0 %1467, %v1367
    %v1469 = vpop.permute.xlu0 %1468
    %1470 = vset.pattern.permute.xlu0 0
    %1471 = vperm.xlu0 %1470, %v1369
    %v1472 = vpop.permute.xlu0 %1471
    %1473 = vset.pattern.permute.xlu0 0
    %1474 = vperm.xlu0 %1473, %v1371
    %v1475 = vpop.permute.xlu0 %1474
    %1476 = vset.pattern.permute.xlu0 0
    %1477 = vperm.xlu0 %1476, %v1373
    %v1478 = vpop.permute.xlu0 %1477
    %1479 = vset.pattern.permute.xlu0 0
    %1480 = vperm.xlu0 %1479, %v1375
    %v1481 = vpop.permute.xlu0 %1480
    %1482 = vset.pattern.permute.xlu0 0
    %1483 = vperm.xlu0 %1482, %v1377
    %v1484 = vpop.permute.xlu0 %1483
    %1485 = vset.pattern.permute.xlu0 0
    %1486 = vperm.xlu0 %1485, %v1379
    %v1487 = vpop.permute.xlu0 %1486
    %1488 = vset.pattern.permute.xlu0 0
    %1489 = vperm.xlu0 %1488, %v1381
    %v1490 = vpop.permute.xlu0 %1489
    %1491 = vset.pattern.permute.xlu0 0
    %1492 = vperm.xlu0 %1491, %v1383
    %v1493 = vpop.permute.xlu0 %1492
    %1494 = vset.pattern.permute.xlu0 0
    %1495 = vperm.xlu0 %1494, %v1385
    %v1496 = vpop.permute.xlu0 %1495
    %1497 = vset.pattern.permute.xlu0 0
    %1498 = vperm.xlu0 %1497, %v1387
    %v1499 = vpop.permute.xlu0 %1498
    %1500 = vset.pattern.permute.xlu0 0
    %1501 = vperm.xlu0 %1500, %v1389
    %v1502 = vpop.permute.xlu0 %1501
    %1503 = vset.pattern.permute.xlu0 0
    %1504 = vperm.xlu0 %1503, %v1391
    %v1505 = vpop.permute.xlu0 %1504
    %1506 = vset.pattern.permute.xlu0 0
    %1507 = vperm.xlu0 %1506, %v1393
    %v1508 = vpop.permute.xlu0 %1507
    %1509 = vset.pattern.permute.xlu0 0
    %1510 = vperm.xlu0 %1509, %v1395
    %v1511 = vpop.permute.xlu0 %1510
    %1512 = vset.pattern.permute.xlu0 0
    %1513 = vperm.xlu0 %1512, %v1397
    %v1514 = vpop.permute.xlu0 %1513
    %1515 = vset.pattern.permute.xlu0 0
    %1516 = vperm.xlu0 %1515, %v1399
    %v1517 = vpop.permute.xlu0 %1516
    %1518 = vset.pattern.permute.xlu0 0
    %1519 = vperm.xlu0 %1518, %v1401
    %v1520 = vpop.permute.xlu0 %1519
    %1521 = vset.pattern.permute.xlu0 0
    %1522 = vperm.xlu0 %1521, %v1403
    %v1523 = vpop.permute.xlu0 %1522
    %1524 = vset.pattern.permute.xlu0 0
    %1525 = vperm.xlu0 %1524, %v1405
    %v1526 = vpop.permute.xlu0 %1525
    %1527 = vset.pattern.permute.xlu0 0
    %1528 = vperm.xlu0 %1527, %v1407
    %v1529 = vpop.permute.xlu0 %1528
    %1530 = vset.pattern.permute.xlu0 0
    %1531 = vperm.xlu0 %1530, %v1409
    %v1532 = vpop.permute.xlu0 %1531
    %1533 = vset.pattern.permute.xlu0 0
    %1534 = vperm.xlu0 %1533, %v1411
    %v1535 = vpop.permute.xlu0 %1534
    %1536 = vset.pattern.permute.xlu0 0
    %1537 = vperm.xlu0 %1536, %v1413
    %v1538 = vpop.permute.xlu0 %1537
    %1539 = vset.pattern.permute.xlu0 0
    %1540 = vperm.xlu0 %1539, %v1415
    %v1541 = vpop.permute.xlu0 %1540
    %1542 = vset.pattern.permute.xlu0 0
    %1543 = vperm.xlu0 %1542, %v1417
    %v1544 = vpop.permute.xlu0 %1543
    %1545 = vset.pattern.permute.xlu0 0
    %1546 = vperm.xlu0 %1545, %v1419
    %v1547 = vpop.permute.xlu0 %1546
    %v1548 = vlaneseq
    %v1549 = vshrl.u32 %v1548, 7
    %v1550 = vsub.s32 %v1065, %v1549
    %v1551 = vrot.slane %v1454, %v1550
    %v1552 = vlaneseq
    %v1553 = vshrl.u32 %v1552, 7
    %v1554 = vsub.s32 %v1070, %v1553
    %v1555 = vrot.slane %v1457, %v1554
    %v1556 = vsel %vm1075, %v1555, %v1551
    %v1557 = vlaneseq
    %v1558 = vshrl.u32 %v1557, 7
    %v1559 = vsub.s32 %v1065, %v1558
    %v1560 = vrot.slane %v1460, %v1559
    %v1561 = vlaneseq
    %v1562 = vshrl.u32 %v1561, 7
    %v1563 = vsub.s32 %v1070, %v1562
    %v1564 = vrot.slane %v1463, %v1563
    %v1565 = vsel %vm1075, %v1564, %v1560
    %v1566 = vlaneseq
    %v1567 = vshrl.u32 %v1566, 7
    %v1568 = vsub.s32 %v1065, %v1567
    %v1569 = vrot.slane %v1466, %v1568
    %v1570 = vlaneseq
    %v1571 = vshrl.u32 %v1570, 7
    %v1572 = vsub.s32 %v1070, %v1571
    %v1573 = vrot.slane %v1469, %v1572
    %v1574 = vsel %vm1075, %v1573, %v1569
    %v1575 = vlaneseq
    %v1576 = vshrl.u32 %v1575, 7
    %v1577 = vsub.s32 %v1065, %v1576
    %v1578 = vrot.slane %v1472, %v1577
    %v1579 = vlaneseq
    %v1580 = vshrl.u32 %v1579, 7
    %v1581 = vsub.s32 %v1070, %v1580
    %v1582 = vrot.slane %v1475, %v1581
    %v1583 = vsel %vm1075, %v1582, %v1578
    %v1584 = vlaneseq
    %v1585 = vshrl.u32 %v1584, 7
    %v1586 = vsub.s32 %v1065, %v1585
    %v1587 = vrot.slane %v1478, %v1586
    %v1588 = vlaneseq
    %v1589 = vshrl.u32 %v1588, 7
    %v1590 = vsub.s32 %v1070, %v1589
    %v1591 = vrot.slane %v1481, %v1590
    %v1592 = vsel %vm1075, %v1591, %v1587
    %v1593 = vlaneseq
    %v1594 = vshrl.u32 %v1593, 7
    %v1595 = vsub.s32 %v1065, %v1594
    %v1596 = vrot.slane %v1484, %v1595
    %v1597 = vlaneseq
    %v1598 = vshrl.u32 %v1597, 7
    %v1599 = vsub.s32 %v1070, %v1598
    %v1600 = vrot.slane %v1487, %v1599
    %v1601 = vsel %vm1075, %v1600, %v1596
    %v1602 = vlaneseq
    %v1603 = vshrl.u32 %v1602, 7
    %v1604 = vsub.s32 %v1065, %v1603
    %v1605 = vrot.slane %v1490, %v1604
    %v1606 = vlaneseq
    %v1607 = vshrl.u32 %v1606, 7
    %v1608 = vsub.s32 %v1070, %v1607
    %v1609 = vrot.slane %v1493, %v1608
    %v1610 = vsel %vm1075, %v1609, %v1605
    %v1611 = vlaneseq
    %v1612 = vshrl.u32 %v1611, 7
    %v1613 = vsub.s32 %v1065, %v1612
    %v1614 = vrot.slane %v1496, %v1613
    %v1615 = vlaneseq
    %v1616 = vshrl.u32 %v1615, 7
    %v1617 = vsub.s32 %v1070, %v1616
    %v1618 = vrot.slane %v1499, %v1617
    %v1619 = vsel %vm1075, %v1618, %v1614
    %v1620 = vlaneseq
    %v1621 = vshrl.u32 %v1620, 7
    %v1622 = vsub.s32 %v1065, %v1621
    %v1623 = vrot.slane %v1502, %v1622
    %v1624 = vlaneseq
    %v1625 = vshrl.u32 %v1624, 7
    %v1626 = vsub.s32 %v1070, %v1625
    %v1627 = vrot.slane %v1505, %v1626
    %v1628 = vsel %vm1075, %v1627, %v1623
    %v1629 = vlaneseq
    %v1630 = vshrl.u32 %v1629, 7
    %v1631 = vsub.s32 %v1065, %v1630
    %v1632 = vrot.slane %v1508, %v1631
    %v1633 = vlaneseq
    %v1634 = vshrl.u32 %v1633, 7
    %v1635 = vsub.s32 %v1070, %v1634
    %v1636 = vrot.slane %v1511, %v1635
    %v1637 = vsel %vm1075, %v1636, %v1632
    %v1638 = vlaneseq
    %v1639 = vshrl.u32 %v1638, 7
    %v1640 = vsub.s32 %v1065, %v1639
    %v1641 = vrot.slane %v1514, %v1640
    %v1642 = vlaneseq
    %v1643 = vshrl.u32 %v1642, 7
    %v1644 = vsub.s32 %v1070, %v1643
    %v1645 = vrot.slane %v1517, %v1644
    %v1646 = vsel %vm1075, %v1645, %v1641
    %v1647 = vlaneseq
    %v1648 = vshrl.u32 %v1647, 7
    %v1649 = vsub.s32 %v1065, %v1648
    %v1650 = vrot.slane %v1520, %v1649
    %v1651 = vlaneseq
    %v1652 = vshrl.u32 %v1651, 7
    %v1653 = vsub.s32 %v1070, %v1652
    %v1654 = vrot.slane %v1523, %v1653
    %v1655 = vsel %vm1075, %v1654, %v1650
    %v1656 = vlaneseq
    %v1657 = vshrl.u32 %v1656, 7
    %v1658 = vsub.s32 %v1065, %v1657
    %v1659 = vrot.slane %v1526, %v1658
    %v1660 = vlaneseq
    %v1661 = vshrl.u32 %v1660, 7
    %v1662 = vsub.s32 %v1070, %v1661
    %v1663 = vrot.slane %v1529, %v1662
    %v1664 = vsel %vm1075, %v1663, %v1659
    %v1665 = vlaneseq
    %v1666 = vshrl.u32 %v1665, 7
    %v1667 = vsub.s32 %v1065, %v1666
    %v1668 = vrot.slane %v1532, %v1667
    %v1669 = vlaneseq
    %v1670 = vshrl.u32 %v1669, 7
    %v1671 = vsub.s32 %v1070, %v1670
    %v1672 = vrot.slane %v1535, %v1671
    %v1673 = vsel %vm1075, %v1672, %v1668
    %v1674 = vlaneseq
    %v1675 = vshrl.u32 %v1674, 7
    %v1676 = vsub.s32 %v1065, %v1675
    %v1677 = vrot.slane %v1538, %v1676
    %v1678 = vlaneseq
    %v1679 = vshrl.u32 %v1678, 7
    %v1680 = vsub.s32 %v1070, %v1679
    %v1681 = vrot.slane %v1541, %v1680
    %v1682 = vsel %vm1075, %v1681, %v1677
    %v1683 = vlaneseq
    %v1684 = vshrl.u32 %v1683, 7
    %v1685 = vsub.s32 %v1065, %v1684
    %v1686 = vrot.slane %v1544, %v1685
    %v1687 = vlaneseq
    %v1688 = vshrl.u32 %v1687, 7
    %v1689 = vsub.s32 %v1070, %v1688
    %v1690 = vrot.slane %v1547, %v1689
    %v1691 = vsel %vm1075, %v1690, %v1686
    %v1692 = vsel %vm1212, %v1565, %v1556
    %v1693 = vsel %vm1214, %v1574, %v1692
    %v1694 = vsel %vm1216, %v1583, %v1693
    %v1695 = vsel %vm1218, %v1592, %v1694
    %v1696 = vsel %vm1220, %v1601, %v1695
    %v1697 = vsel %vm1222, %v1610, %v1696
    %v1698 = vsel %vm1224, %v1619, %v1697
    %v1699 = vsel %vm1212, %v1637, %v1628
    %v1700 = vsel %vm1214, %v1646, %v1699
    %v1701 = vsel %vm1216, %v1655, %v1700
    %v1702 = vsel %vm1218, %v1664, %v1701
    %v1703 = vsel %vm1220, %v1673, %v1702
    %v1704 = vsel %vm1222, %v1682, %v1703
    %v1705 = vsel %vm1224, %v1691, %v1704
    %v1708 = vsel %vm1235, %v1698, 0.0
    %1709 = vadd.xlane.f32.xlu0 %v1708
    %v1710 = vpop.xlane.xlu0 %1709
    %v1711 = vsel %vm1235, %v1705, 0.0
    %1712 = vadd.xlane.f32.xlu0 %v1711
    %v1713 = vpop.xlane.xlu0 %1712
    %v1714 = vrcp.pop %v1710
    %v1715 = vmul.f32 1.0, %v1714
    %v1716 = vrcp.pop %v1713
    %v1717 = vmul.f32 1.0, %v1716
    %v1720 = vlaneseq
    %v1721 = vshrl.u32 %v1720, 7
    %v1722 = vsub.s32 0, %v1721
    %v1723 = vrot.slane %v1715, %v1722
    %v1724 = vlaneseq
    %v1725 = vshrl.u32 %v1724, 7
    %v1726 = vsub.s32 1, %v1725
    %v1727 = vrot.slane %v1715, %v1726
    %v1728 = vlaneseq
    %v1729 = vshrl.u32 %v1728, 7
    %v1730 = vsub.s32 2, %v1729
    %v1731 = vrot.slane %v1715, %v1730
    %v1732 = vlaneseq
    %v1733 = vshrl.u32 %v1732, 7
    %v1734 = vsub.s32 3, %v1733
    %v1735 = vrot.slane %v1715, %v1734
    %v1736 = vlaneseq
    %v1737 = vshrl.u32 %v1736, 7
    %v1738 = vsub.s32 4, %v1737
    %v1739 = vrot.slane %v1715, %v1738
    %v1740 = vlaneseq
    %v1741 = vshrl.u32 %v1740, 7
    %v1742 = vsub.s32 5, %v1741
    %v1743 = vrot.slane %v1715, %v1742
    %v1744 = vlaneseq
    %v1745 = vshrl.u32 %v1744, 7
    %v1746 = vsub.s32 6, %v1745
    %v1747 = vrot.slane %v1715, %v1746
    %v1748 = vlaneseq
    %v1749 = vshrl.u32 %v1748, 7
    %v1750 = vsub.s32 7, %v1749
    %v1751 = vrot.slane %v1715, %v1750
    %v1752 = vlaneseq
    %v1753 = vshrl.u32 %v1752, 7
    %v1754 = vsub.s32 0, %v1753
    %v1755 = vrot.slane %v1717, %v1754
    %v1756 = vlaneseq
    %v1757 = vshrl.u32 %v1756, 7
    %v1758 = vsub.s32 1, %v1757
    %v1759 = vrot.slane %v1717, %v1758
    %v1760 = vlaneseq
    %v1761 = vshrl.u32 %v1760, 7
    %v1762 = vsub.s32 2, %v1761
    %v1763 = vrot.slane %v1717, %v1762
    %v1764 = vlaneseq
    %v1765 = vshrl.u32 %v1764, 7
    %v1766 = vsub.s32 3, %v1765
    %v1767 = vrot.slane %v1717, %v1766
    %v1768 = vlaneseq
    %v1769 = vshrl.u32 %v1768, 7
    %v1770 = vsub.s32 4, %v1769
    %v1771 = vrot.slane %v1717, %v1770
    %v1772 = vlaneseq
    %v1773 = vshrl.u32 %v1772, 7
    %v1774 = vsub.s32 5, %v1773
    %v1775 = vrot.slane %v1717, %v1774
    %v1776 = vlaneseq
    %v1777 = vshrl.u32 %v1776, 7
    %v1778 = vsub.s32 6, %v1777
    %v1779 = vrot.slane %v1717, %v1778
    %v1780 = vlaneseq
    %v1781 = vshrl.u32 %v1780, 7
    %v1782 = vsub.s32 7, %v1781
    %v1783 = vrot.slane %v1717, %v1782
    %v1800 = vmul.f32 %v1357, %v1723
    %v1801 = vmul.f32 %v1359, %v1723
    %v1802 = vmul.f32 %v1361, %v1727
    %v1803 = vmul.f32 %v1363, %v1727
    %v1804 = vmul.f32 %v1365, %v1731
    %v1805 = vmul.f32 %v1367, %v1731
    %v1806 = vmul.f32 %v1369, %v1735
    %v1807 = vmul.f32 %v1371, %v1735
    %v1808 = vmul.f32 %v1373, %v1739
    %v1809 = vmul.f32 %v1375, %v1739
    %v1810 = vmul.f32 %v1377, %v1743
    %v1811 = vmul.f32 %v1379, %v1743
    %v1812 = vmul.f32 %v1381, %v1747
    %v1813 = vmul.f32 %v1383, %v1747
    %v1814 = vmul.f32 %v1385, %v1751
    %v1815 = vmul.f32 %v1387, %v1751
    %v1816 = vmul.f32 %v1389, %v1755
    %v1817 = vmul.f32 %v1391, %v1755
    %v1818 = vmul.f32 %v1393, %v1759
    %v1819 = vmul.f32 %v1395, %v1759
    %v1820 = vmul.f32 %v1397, %v1763
    %v1821 = vmul.f32 %v1399, %v1763
    %v1822 = vmul.f32 %v1401, %v1767
    %v1823 = vmul.f32 %v1403, %v1767
    %v1824 = vmul.f32 %v1405, %v1771
    %v1825 = vmul.f32 %v1407, %v1771
    %v1826 = vmul.f32 %v1409, %v1775
    %v1827 = vmul.f32 %v1411, %v1775
    %v1828 = vmul.f32 %v1413, %v1779
    %v1829 = vmul.f32 %v1415, %v1779
    %v1830 = vmul.f32 %v1417, %v1783
    %v1831 = vmul.f32 %v1419, %v1783
    %1832 = vset.pattern.permute.xlu0 1
    %1833 = vperm.xlu0 %1832, %v904
    %v1834 = vpop.permute.xlu0 %1833
    %1835 = vset.pattern.permute.xlu0 1
    %1836 = vperm.xlu0 %1835, %v905
    %v1837 = vpop.permute.xlu0 %1836
    %1838 = vset.pattern.permute.xlu0 1
    %1839 = vperm.xlu0 %1838, %v906
    %v1840 = vpop.permute.xlu0 %1839
    %1841 = vset.pattern.permute.xlu0 1
    %1842 = vperm.xlu0 %1841, %v907
    %v1843 = vpop.permute.xlu0 %1842
    %1844 = vset.pattern.permute.xlu0 1
    %1845 = vperm.xlu0 %1844, %v908
    %v1846 = vpop.permute.xlu0 %1845
    %1847 = vset.pattern.permute.xlu0 1
    %1848 = vperm.xlu0 %1847, %v909
    %v1849 = vpop.permute.xlu0 %1848
    %1850 = vset.pattern.permute.xlu0 1
    %1851 = vperm.xlu0 %1850, %v910
    %v1852 = vpop.permute.xlu0 %1851
    %1853 = vset.pattern.permute.xlu0 1
    %1854 = vperm.xlu0 %1853, %v911
    %v1855 = vpop.permute.xlu0 %1854
    %1856 = vset.pattern.permute.xlu0 1
    %1857 = vperm.xlu0 %1856, %v912
    %v1858 = vpop.permute.xlu0 %1857
    %1859 = vset.pattern.permute.xlu0 1
    %1860 = vperm.xlu0 %1859, %v913
    %v1861 = vpop.permute.xlu0 %1860
    %1862 = vset.pattern.permute.xlu0 1
    %1863 = vperm.xlu0 %1862, %v914
    %v1864 = vpop.permute.xlu0 %1863
    %1865 = vset.pattern.permute.xlu0 1
    %1866 = vperm.xlu0 %1865, %v915
    %v1867 = vpop.permute.xlu0 %1866
    %1868 = vset.pattern.permute.xlu0 1
    %1869 = vperm.xlu0 %1868, %v916
    %v1870 = vpop.permute.xlu0 %1869
    %1871 = vset.pattern.permute.xlu0 1
    %1872 = vperm.xlu0 %1871, %v917
    %v1873 = vpop.permute.xlu0 %1872
    %1874 = vset.pattern.permute.xlu0 1
    %1875 = vperm.xlu0 %1874, %v918
    %v1876 = vpop.permute.xlu0 %1875
    %1877 = vset.pattern.permute.xlu0 1
    %1878 = vperm.xlu0 %1877, %v919
    %v1879 = vpop.permute.xlu0 %1878
    %1880 = vset.pattern.permute.xlu0 1
    %1881 = vperm.xlu0 %1880, %v920
    %v1882 = vpop.permute.xlu0 %1881
    %1883 = vset.pattern.permute.xlu0 1
    %1884 = vperm.xlu0 %1883, %v921
    %v1885 = vpop.permute.xlu0 %1884
    %1886 = vset.pattern.permute.xlu0 1
    %1887 = vperm.xlu0 %1886, %v922
    %v1888 = vpop.permute.xlu0 %1887
    %1889 = vset.pattern.permute.xlu0 1
    %1890 = vperm.xlu0 %1889, %v923
    %v1891 = vpop.permute.xlu0 %1890
    %1892 = vset.pattern.permute.xlu0 1
    %1893 = vperm.xlu0 %1892, %v924
    %v1894 = vpop.permute.xlu0 %1893
    %1895 = vset.pattern.permute.xlu0 1
    %1896 = vperm.xlu0 %1895, %v925
    %v1897 = vpop.permute.xlu0 %1896
    %1898 = vset.pattern.permute.xlu0 1
    %1899 = vperm.xlu0 %1898, %v926
    %v1900 = vpop.permute.xlu0 %1899
    %1901 = vset.pattern.permute.xlu0 1
    %1902 = vperm.xlu0 %1901, %v927
    %v1903 = vpop.permute.xlu0 %1902
    %1904 = vset.pattern.permute.xlu0 1
    %1905 = vperm.xlu0 %1904, %v928
    %v1906 = vpop.permute.xlu0 %1905
    %1907 = vset.pattern.permute.xlu0 1
    %1908 = vperm.xlu0 %1907, %v929
    %v1909 = vpop.permute.xlu0 %1908
    %1910 = vset.pattern.permute.xlu0 1
    %1911 = vperm.xlu0 %1910, %v930
    %v1912 = vpop.permute.xlu0 %1911
    %1913 = vset.pattern.permute.xlu0 1
    %1914 = vperm.xlu0 %1913, %v931
    %v1915 = vpop.permute.xlu0 %1914
    %1916 = vset.pattern.permute.xlu0 1
    %1917 = vperm.xlu0 %1916, %v932
    %v1918 = vpop.permute.xlu0 %1917
    %1919 = vset.pattern.permute.xlu0 1
    %1920 = vperm.xlu0 %1919, %v933
    %v1921 = vpop.permute.xlu0 %1920
    %1922 = vset.pattern.permute.xlu0 1
    %1923 = vperm.xlu0 %1922, %v934
    %v1924 = vpop.permute.xlu0 %1923
    %1925 = vset.pattern.permute.xlu0 1
    %1926 = vperm.xlu0 %1925, %v935
    %v1927 = vpop.permute.xlu0 %1926
    %v1928 = vlaneseq
    %v1929 = vshrl.u32 %v1928, 7
    %v1930 = vsub.s32 %v1065, %v1929
    %v1931 = vrot.slane %v1834, %v1930
    %v1932 = vlaneseq
    %v1933 = vshrl.u32 %v1932, 7
    %v1934 = vsub.s32 %v1070, %v1933
    %v1935 = vrot.slane %v1837, %v1934
    %v1936 = vsel %vm1075, %v1935, %v1931
    %v1937 = vlaneseq
    %v1938 = vshrl.u32 %v1937, 7
    %v1939 = vsub.s32 %v1065, %v1938
    %v1940 = vrot.slane %v1840, %v1939
    %v1941 = vlaneseq
    %v1942 = vshrl.u32 %v1941, 7
    %v1943 = vsub.s32 %v1070, %v1942
    %v1944 = vrot.slane %v1843, %v1943
    %v1945 = vsel %vm1075, %v1944, %v1940
    %v1946 = vlaneseq
    %v1947 = vshrl.u32 %v1946, 7
    %v1948 = vsub.s32 %v1065, %v1947
    %v1949 = vrot.slane %v1846, %v1948
    %v1950 = vlaneseq
    %v1951 = vshrl.u32 %v1950, 7
    %v1952 = vsub.s32 %v1070, %v1951
    %v1953 = vrot.slane %v1849, %v1952
    %v1954 = vsel %vm1075, %v1953, %v1949
    %v1955 = vlaneseq
    %v1956 = vshrl.u32 %v1955, 7
    %v1957 = vsub.s32 %v1065, %v1956
    %v1958 = vrot.slane %v1852, %v1957
    %v1959 = vlaneseq
    %v1960 = vshrl.u32 %v1959, 7
    %v1961 = vsub.s32 %v1070, %v1960
    %v1962 = vrot.slane %v1855, %v1961
    %v1963 = vsel %vm1075, %v1962, %v1958
    %v1964 = vlaneseq
    %v1965 = vshrl.u32 %v1964, 7
    %v1966 = vsub.s32 %v1065, %v1965
    %v1967 = vrot.slane %v1858, %v1966
    %v1968 = vlaneseq
    %v1969 = vshrl.u32 %v1968, 7
    %v1970 = vsub.s32 %v1070, %v1969
    %v1971 = vrot.slane %v1861, %v1970
    %v1972 = vsel %vm1075, %v1971, %v1967
    %v1973 = vlaneseq
    %v1974 = vshrl.u32 %v1973, 7
    %v1975 = vsub.s32 %v1065, %v1974
    %v1976 = vrot.slane %v1864, %v1975
    %v1977 = vlaneseq
    %v1978 = vshrl.u32 %v1977, 7
    %v1979 = vsub.s32 %v1070, %v1978
    %v1980 = vrot.slane %v1867, %v1979
    %v1981 = vsel %vm1075, %v1980, %v1976
    %v1982 = vlaneseq
    %v1983 = vshrl.u32 %v1982, 7
    %v1984 = vsub.s32 %v1065, %v1983
    %v1985 = vrot.slane %v1870, %v1984
    %v1986 = vlaneseq
    %v1987 = vshrl.u32 %v1986, 7
    %v1988 = vsub.s32 %v1070, %v1987
    %v1989 = vrot.slane %v1873, %v1988
    %v1990 = vsel %vm1075, %v1989, %v1985
    %v1991 = vlaneseq
    %v1992 = vshrl.u32 %v1991, 7
    %v1993 = vsub.s32 %v1065, %v1992
    %v1994 = vrot.slane %v1876, %v1993
    %v1995 = vlaneseq
    %v1996 = vshrl.u32 %v1995, 7
    %v1997 = vsub.s32 %v1070, %v1996
    %v1998 = vrot.slane %v1879, %v1997
    %v1999 = vsel %vm1075, %v1998, %v1994
    %v2000 = vlaneseq
    %v2001 = vshrl.u32 %v2000, 7
    %v2002 = vsub.s32 %v1065, %v2001
    %v2003 = vrot.slane %v1882, %v2002
    %v2004 = vlaneseq
    %v2005 = vshrl.u32 %v2004, 7
    %v2006 = vsub.s32 %v1070, %v2005
    %v2007 = vrot.slane %v1885, %v2006
    %v2008 = vsel %vm1075, %v2007, %v2003
    %v2009 = vlaneseq
    %v2010 = vshrl.u32 %v2009, 7
    %v2011 = vsub.s32 %v1065, %v2010
    %v2012 = vrot.slane %v1888, %v2011
    %v2013 = vlaneseq
    %v2014 = vshrl.u32 %v2013, 7
    %v2015 = vsub.s32 %v1070, %v2014
    %v2016 = vrot.slane %v1891, %v2015
    %v2017 = vsel %vm1075, %v2016, %v2012
    %v2018 = vlaneseq
    %v2019 = vshrl.u32 %v2018, 7
    %v2020 = vsub.s32 %v1065, %v2019
    %v2021 = vrot.slane %v1894, %v2020
    %v2022 = vlaneseq
    %v2023 = vshrl.u32 %v2022, 7
    %v2024 = vsub.s32 %v1070, %v2023
    %v2025 = vrot.slane %v1897, %v2024
    %v2026 = vsel %vm1075, %v2025, %v2021
    %v2027 = vlaneseq
    %v2028 = vshrl.u32 %v2027, 7
    %v2029 = vsub.s32 %v1065, %v2028
    %v2030 = vrot.slane %v1900, %v2029
    %v2031 = vlaneseq
    %v2032 = vshrl.u32 %v2031, 7
    %v2033 = vsub.s32 %v1070, %v2032
    %v2034 = vrot.slane %v1903, %v2033
    %v2035 = vsel %vm1075, %v2034, %v2030
    %v2036 = vlaneseq
    %v2037 = vshrl.u32 %v2036, 7
    %v2038 = vsub.s32 %v1065, %v2037
    %v2039 = vrot.slane %v1906, %v2038
    %v2040 = vlaneseq
    %v2041 = vshrl.u32 %v2040, 7
    %v2042 = vsub.s32 %v1070, %v2041
    %v2043 = vrot.slane %v1909, %v2042
    %v2044 = vsel %vm1075, %v2043, %v2039
    %v2045 = vlaneseq
    %v2046 = vshrl.u32 %v2045, 7
    %v2047 = vsub.s32 %v1065, %v2046
    %v2048 = vrot.slane %v1912, %v2047
    %v2049 = vlaneseq
    %v2050 = vshrl.u32 %v2049, 7
    %v2051 = vsub.s32 %v1070, %v2050
    %v2052 = vrot.slane %v1915, %v2051
    %v2053 = vsel %vm1075, %v2052, %v2048
    %v2054 = vlaneseq
    %v2055 = vshrl.u32 %v2054, 7
    %v2056 = vsub.s32 %v1065, %v2055
    %v2057 = vrot.slane %v1918, %v2056
    %v2058 = vlaneseq
    %v2059 = vshrl.u32 %v2058, 7
    %v2060 = vsub.s32 %v1070, %v2059
    %v2061 = vrot.slane %v1921, %v2060
    %v2062 = vsel %vm1075, %v2061, %v2057
    %v2063 = vlaneseq
    %v2064 = vshrl.u32 %v2063, 7
    %v2065 = vsub.s32 %v1065, %v2064
    %v2066 = vrot.slane %v1924, %v2065
    %v2067 = vlaneseq
    %v2068 = vshrl.u32 %v2067, 7
    %v2069 = vsub.s32 %v1070, %v2068
    %v2070 = vrot.slane %v1927, %v2069
    %v2071 = vsel %vm1075, %v2070, %v2066
    %v2072 = vsel %vm1212, %v1945, %v1936
    %v2073 = vsel %vm1214, %v1954, %v2072
    %v2074 = vsel %vm1216, %v1963, %v2073
    %v2075 = vsel %vm1218, %v1972, %v2074
    %v2076 = vsel %vm1220, %v1981, %v2075
    %v2077 = vsel %vm1222, %v1990, %v2076
    %v2078 = vsel %vm1224, %v1999, %v2077
    %v2079 = vsel %vm1212, %v2017, %v2008
    %v2080 = vsel %vm1214, %v2026, %v2079
    %v2081 = vsel %vm1216, %v2035, %v2080
    %v2082 = vsel %vm1218, %v2044, %v2081
    %v2083 = vsel %vm1220, %v2053, %v2082
    %v2084 = vsel %vm1222, %v2062, %v2083
    %v2085 = vsel %vm1224, %v2071, %v2084
    %v2088 = vsel %vm1235, %v2078, -inf
    %2089 = vmax.xlane.f32.xlu0 %v2088
    %v2090 = vpop.xlane.xlu0 %2089
    %v2091 = vsel %vm1235, %v2085, -inf
    %2092 = vmax.xlane.f32.xlu0 %v2091
    %v2093 = vpop.xlane.xlu0 %2092
    %v2096 = vlaneseq
    %v2097 = vshrl.u32 %v2096, 7
    %v2098 = vsub.s32 0, %v2097
    %v2099 = vrot.slane %v2090, %v2098
    %v2100 = vlaneseq
    %v2101 = vshrl.u32 %v2100, 7
    %v2102 = vsub.s32 1, %v2101
    %v2103 = vrot.slane %v2090, %v2102
    %v2104 = vlaneseq
    %v2105 = vshrl.u32 %v2104, 7
    %v2106 = vsub.s32 2, %v2105
    %v2107 = vrot.slane %v2090, %v2106
    %v2108 = vlaneseq
    %v2109 = vshrl.u32 %v2108, 7
    %v2110 = vsub.s32 3, %v2109
    %v2111 = vrot.slane %v2090, %v2110
    %v2112 = vlaneseq
    %v2113 = vshrl.u32 %v2112, 7
    %v2114 = vsub.s32 4, %v2113
    %v2115 = vrot.slane %v2090, %v2114
    %v2116 = vlaneseq
    %v2117 = vshrl.u32 %v2116, 7
    %v2118 = vsub.s32 5, %v2117
    %v2119 = vrot.slane %v2090, %v2118
    %v2120 = vlaneseq
    %v2121 = vshrl.u32 %v2120, 7
    %v2122 = vsub.s32 6, %v2121
    %v2123 = vrot.slane %v2090, %v2122
    %v2124 = vlaneseq
    %v2125 = vshrl.u32 %v2124, 7
    %v2126 = vsub.s32 7, %v2125
    %v2127 = vrot.slane %v2090, %v2126
    %v2128 = vlaneseq
    %v2129 = vshrl.u32 %v2128, 7
    %v2130 = vsub.s32 0, %v2129
    %v2131 = vrot.slane %v2093, %v2130
    %v2132 = vlaneseq
    %v2133 = vshrl.u32 %v2132, 7
    %v2134 = vsub.s32 1, %v2133
    %v2135 = vrot.slane %v2093, %v2134
    %v2136 = vlaneseq
    %v2137 = vshrl.u32 %v2136, 7
    %v2138 = vsub.s32 2, %v2137
    %v2139 = vrot.slane %v2093, %v2138
    %v2140 = vlaneseq
    %v2141 = vshrl.u32 %v2140, 7
    %v2142 = vsub.s32 3, %v2141
    %v2143 = vrot.slane %v2093, %v2142
    %v2144 = vlaneseq
    %v2145 = vshrl.u32 %v2144, 7
    %v2146 = vsub.s32 4, %v2145
    %v2147 = vrot.slane %v2093, %v2146
    %v2148 = vlaneseq
    %v2149 = vshrl.u32 %v2148, 7
    %v2150 = vsub.s32 5, %v2149
    %v2151 = vrot.slane %v2093, %v2150
    %v2152 = vlaneseq
    %v2153 = vshrl.u32 %v2152, 7
    %v2154 = vsub.s32 6, %v2153
    %v2155 = vrot.slane %v2093, %v2154
    %v2156 = vlaneseq
    %v2157 = vshrl.u32 %v2156, 7
    %v2158 = vsub.s32 7, %v2157
    %v2159 = vrot.slane %v2093, %v2158
    %v2176 = vsub.f32 %v904, %v2099
    %v2177 = vsub.f32 %v905, %v2099
    %v2178 = vsub.f32 %v906, %v2103
    %v2179 = vsub.f32 %v907, %v2103
    %v2180 = vsub.f32 %v908, %v2107
    %v2181 = vsub.f32 %v909, %v2107
    %v2182 = vsub.f32 %v910, %v2111
    %v2183 = vsub.f32 %v911, %v2111
    %v2184 = vsub.f32 %v912, %v2115
    %v2185 = vsub.f32 %v913, %v2115
    %v2186 = vsub.f32 %v914, %v2119
    %v2187 = vsub.f32 %v915, %v2119
    %v2188 = vsub.f32 %v916, %v2123
    %v2189 = vsub.f32 %v917, %v2123
    %v2190 = vsub.f32 %v918, %v2127
    %v2191 = vsub.f32 %v919, %v2127
    %v2192 = vsub.f32 %v920, %v2131
    %v2193 = vsub.f32 %v921, %v2131
    %v2194 = vsub.f32 %v922, %v2135
    %v2195 = vsub.f32 %v923, %v2135
    %v2196 = vsub.f32 %v924, %v2139
    %v2197 = vsub.f32 %v925, %v2139
    %v2198 = vsub.f32 %v926, %v2143
    %v2199 = vsub.f32 %v927, %v2143
    %v2200 = vsub.f32 %v928, %v2147
    %v2201 = vsub.f32 %v929, %v2147
    %v2202 = vsub.f32 %v930, %v2151
    %v2203 = vsub.f32 %v931, %v2151
    %v2204 = vsub.f32 %v932, %v2155
    %v2205 = vsub.f32 %v933, %v2155
    %v2206 = vsub.f32 %v934, %v2159
    %v2207 = vsub.f32 %v935, %v2159
    %v2208 = vmul.f32 %v2176, 1.442695
    %v2209 = vpow.pop %v2208
    %v2210 = vmul.f32 %v2177, 1.442695
    %v2211 = vpow.pop %v2210
    %v2212 = vmul.f32 %v2178, 1.442695
    %v2213 = vpow.pop %v2212
    %v2214 = vmul.f32 %v2179, 1.442695
    %v2215 = vpow.pop %v2214
    %v2216 = vmul.f32 %v2180, 1.442695
    %v2217 = vpow.pop %v2216
    %v2218 = vmul.f32 %v2181, 1.442695
    %v2219 = vpow.pop %v2218
    %v2220 = vmul.f32 %v2182, 1.442695
    %v2221 = vpow.pop %v2220
    %v2222 = vmul.f32 %v2183, 1.442695
    %v2223 = vpow.pop %v2222
    %v2224 = vmul.f32 %v2184, 1.442695
    %v2225 = vpow.pop %v2224
    %v2226 = vmul.f32 %v2185, 1.442695
    %v2227 = vpow.pop %v2226
    %v2228 = vmul.f32 %v2186, 1.442695
    %v2229 = vpow.pop %v2228
    %v2230 = vmul.f32 %v2187, 1.442695
    %v2231 = vpow.pop %v2230
    %v2232 = vmul.f32 %v2188, 1.442695
    %v2233 = vpow.pop %v2232
    %v2234 = vmul.f32 %v2189, 1.442695
    %v2235 = vpow.pop %v2234
    %v2236 = vmul.f32 %v2190, 1.442695
    %v2237 = vpow.pop %v2236
    %v2238 = vmul.f32 %v2191, 1.442695
    %v2239 = vpow.pop %v2238
    %v2240 = vmul.f32 %v2192, 1.442695
    %v2241 = vpow.pop %v2240
    %v2242 = vmul.f32 %v2193, 1.442695
    %v2243 = vpow.pop %v2242
    %v2244 = vmul.f32 %v2194, 1.442695
    %v2245 = vpow.pop %v2244
    %v2246 = vmul.f32 %v2195, 1.442695
    %v2247 = vpow.pop %v2246
    %v2248 = vmul.f32 %v2196, 1.442695
    %v2249 = vpow.pop %v2248
    %v2250 = vmul.f32 %v2197, 1.442695
    %v2251 = vpow.pop %v2250
    %v2252 = vmul.f32 %v2198, 1.442695
    %v2253 = vpow.pop %v2252
    %v2254 = vmul.f32 %v2199, 1.442695
    %v2255 = vpow.pop %v2254
    %v2256 = vmul.f32 %v2200, 1.442695
    %v2257 = vpow.pop %v2256
    %v2258 = vmul.f32 %v2201, 1.442695
    %v2259 = vpow.pop %v2258
    %v2260 = vmul.f32 %v2202, 1.442695
    %v2261 = vpow.pop %v2260
    %v2262 = vmul.f32 %v2203, 1.442695
    %v2263 = vpow.pop %v2262
    %v2264 = vmul.f32 %v2204, 1.442695
    %v2265 = vpow.pop %v2264
    %v2266 = vmul.f32 %v2205, 1.442695
    %v2267 = vpow.pop %v2266
    %v2268 = vmul.f32 %v2206, 1.442695
    %v2269 = vpow.pop %v2268
    %v2270 = vmul.f32 %v2207, 1.442695
    %v2271 = vpow.pop %v2270
    %2304 = vset.pattern.permute.xlu0 1
    %2305 = vperm.xlu0 %2304, %v2209
    %v2306 = vpop.permute.xlu0 %2305
    %2307 = vset.pattern.permute.xlu0 1
    %2308 = vperm.xlu0 %2307, %v2211
    %v2309 = vpop.permute.xlu0 %2308
    %2310 = vset.pattern.permute.xlu0 1
    %2311 = vperm.xlu0 %2310, %v2213
    %v2312 = vpop.permute.xlu0 %2311
    %2313 = vset.pattern.permute.xlu0 1
    %2314 = vperm.xlu0 %2313, %v2215
    %v2315 = vpop.permute.xlu0 %2314
    %2316 = vset.pattern.permute.xlu0 1
    %2317 = vperm.xlu0 %2316, %v2217
    %v2318 = vpop.permute.xlu0 %2317
    %2319 = vset.pattern.permute.xlu0 1
    %2320 = vperm.xlu0 %2319, %v2219
    %v2321 = vpop.permute.xlu0 %2320
    %2322 = vset.pattern.permute.xlu0 1
    %2323 = vperm.xlu0 %2322, %v2221
    %v2324 = vpop.permute.xlu0 %2323
    %2325 = vset.pattern.permute.xlu0 1
    %2326 = vperm.xlu0 %2325, %v2223
    %v2327 = vpop.permute.xlu0 %2326
    %2328 = vset.pattern.permute.xlu0 1
    %2329 = vperm.xlu0 %2328, %v2225
    %v2330 = vpop.permute.xlu0 %2329
    %2331 = vset.pattern.permute.xlu0 1
    %2332 = vperm.xlu0 %2331, %v2227
    %v2333 = vpop.permute.xlu0 %2332
    %2334 = vset.pattern.permute.xlu0 1
    %2335 = vperm.xlu0 %2334, %v2229
    %v2336 = vpop.permute.xlu0 %2335
    %2337 = vset.pattern.permute.xlu0 1
    %2338 = vperm.xlu0 %2337, %v2231
    %v2339 = vpop.permute.xlu0 %2338
    %2340 = vset.pattern.permute.xlu0 1
    %2341 = vperm.xlu0 %2340, %v2233
    %v2342 = vpop.permute.xlu0 %2341
    %2343 = vset.pattern.permute.xlu0 1
    %2344 = vperm.xlu0 %2343, %v2235
    %v2345 = vpop.permute.xlu0 %2344
    %2346 = vset.pattern.permute.xlu0 1
    %2347 = vperm.xlu0 %2346, %v2237
    %v2348 = vpop.permute.xlu0 %2347
    %2349 = vset.pattern.permute.xlu0 1
    %2350 = vperm.xlu0 %2349, %v2239
    %v2351 = vpop.permute.xlu0 %2350
    %2352 = vset.pattern.permute.xlu0 1
    %2353 = vperm.xlu0 %2352, %v2241
    %v2354 = vpop.permute.xlu0 %2353
    %2355 = vset.pattern.permute.xlu0 1
    %2356 = vperm.xlu0 %2355, %v2243
    %v2357 = vpop.permute.xlu0 %2356
    %2358 = vset.pattern.permute.xlu0 1
    %2359 = vperm.xlu0 %2358, %v2245
    %v2360 = vpop.permute.xlu0 %2359
    %2361 = vset.pattern.permute.xlu0 1
    %2362 = vperm.xlu0 %2361, %v2247
    %v2363 = vpop.permute.xlu0 %2362
    %2364 = vset.pattern.permute.xlu0 1
    %2365 = vperm.xlu0 %2364, %v2249
    %v2366 = vpop.permute.xlu0 %2365
    %2367 = vset.pattern.permute.xlu0 1
    %2368 = vperm.xlu0 %2367, %v2251
    %v2369 = vpop.permute.xlu0 %2368
    %2370 = vset.pattern.permute.xlu0 1
    %2371 = vperm.xlu0 %2370, %v2253
    %v2372 = vpop.permute.xlu0 %2371
    %2373 = vset.pattern.permute.xlu0 1
    %2374 = vperm.xlu0 %2373, %v2255
    %v2375 = vpop.permute.xlu0 %2374
    %2376 = vset.pattern.permute.xlu0 1
    %2377 = vperm.xlu0 %2376, %v2257
    %v2378 = vpop.permute.xlu0 %2377
    %2379 = vset.pattern.permute.xlu0 1
    %2380 = vperm.xlu0 %2379, %v2259
    %v2381 = vpop.permute.xlu0 %2380
    %2382 = vset.pattern.permute.xlu0 1
    %2383 = vperm.xlu0 %2382, %v2261
    %v2384 = vpop.permute.xlu0 %2383
    %2385 = vset.pattern.permute.xlu0 1
    %2386 = vperm.xlu0 %2385, %v2263
    %v2387 = vpop.permute.xlu0 %2386
    %2388 = vset.pattern.permute.xlu0 1
    %2389 = vperm.xlu0 %2388, %v2265
    %v2390 = vpop.permute.xlu0 %2389
    %2391 = vset.pattern.permute.xlu0 1
    %2392 = vperm.xlu0 %2391, %v2267
    %v2393 = vpop.permute.xlu0 %2392
    %2394 = vset.pattern.permute.xlu0 1
    %2395 = vperm.xlu0 %2394, %v2269
    %v2396 = vpop.permute.xlu0 %2395
    %2397 = vset.pattern.permute.xlu0 1
    %2398 = vperm.xlu0 %2397, %v2271
    %v2399 = vpop.permute.xlu0 %2398
    %v2400 = vlaneseq
    %v2401 = vshrl.u32 %v2400, 7
    %v2402 = vsub.s32 %v1065, %v2401
    %v2403 = vrot.slane %v2306, %v2402
    %v2404 = vlaneseq
    %v2405 = vshrl.u32 %v2404, 7
    %v2406 = vsub.s32 %v1070, %v2405
    %v2407 = vrot.slane %v2309, %v2406
    %v2408 = vsel %vm1075, %v2407, %v2403
    %v2409 = vlaneseq
    %v2410 = vshrl.u32 %v2409, 7
    %v2411 = vsub.s32 %v1065, %v2410
    %v2412 = vrot.slane %v2312, %v2411
    %v2413 = vlaneseq
    %v2414 = vshrl.u32 %v2413, 7
    %v2415 = vsub.s32 %v1070, %v2414
    %v2416 = vrot.slane %v2315, %v2415
    %v2417 = vsel %vm1075, %v2416, %v2412
    %v2418 = vlaneseq
    %v2419 = vshrl.u32 %v2418, 7
    %v2420 = vsub.s32 %v1065, %v2419
    %v2421 = vrot.slane %v2318, %v2420
    %v2422 = vlaneseq
    %v2423 = vshrl.u32 %v2422, 7
    %v2424 = vsub.s32 %v1070, %v2423
    %v2425 = vrot.slane %v2321, %v2424
    %v2426 = vsel %vm1075, %v2425, %v2421
    %v2427 = vlaneseq
    %v2428 = vshrl.u32 %v2427, 7
    %v2429 = vsub.s32 %v1065, %v2428
    %v2430 = vrot.slane %v2324, %v2429
    %v2431 = vlaneseq
    %v2432 = vshrl.u32 %v2431, 7
    %v2433 = vsub.s32 %v1070, %v2432
    %v2434 = vrot.slane %v2327, %v2433
    %v2435 = vsel %vm1075, %v2434, %v2430
    %v2436 = vlaneseq
    %v2437 = vshrl.u32 %v2436, 7
    %v2438 = vsub.s32 %v1065, %v2437
    %v2439 = vrot.slane %v2330, %v2438
    %v2440 = vlaneseq
    %v2441 = vshrl.u32 %v2440, 7
    %v2442 = vsub.s32 %v1070, %v2441
    %v2443 = vrot.slane %v2333, %v2442
    %v2444 = vsel %vm1075, %v2443, %v2439
    %v2445 = vlaneseq
    %v2446 = vshrl.u32 %v2445, 7
    %v2447 = vsub.s32 %v1065, %v2446
    %v2448 = vrot.slane %v2336, %v2447
    %v2449 = vlaneseq
    %v2450 = vshrl.u32 %v2449, 7
    %v2451 = vsub.s32 %v1070, %v2450
    %v2452 = vrot.slane %v2339, %v2451
    %v2453 = vsel %vm1075, %v2452, %v2448
    %v2454 = vlaneseq
    %v2455 = vshrl.u32 %v2454, 7
    %v2456 = vsub.s32 %v1065, %v2455
    %v2457 = vrot.slane %v2342, %v2456
    %v2458 = vlaneseq
    %v2459 = vshrl.u32 %v2458, 7
    %v2460 = vsub.s32 %v1070, %v2459
    %v2461 = vrot.slane %v2345, %v2460
    %v2462 = vsel %vm1075, %v2461, %v2457
    %v2463 = vlaneseq
    %v2464 = vshrl.u32 %v2463, 7
    %v2465 = vsub.s32 %v1065, %v2464
    %v2466 = vrot.slane %v2348, %v2465
    %v2467 = vlaneseq
    %v2468 = vshrl.u32 %v2467, 7
    %v2469 = vsub.s32 %v1070, %v2468
    %v2470 = vrot.slane %v2351, %v2469
    %v2471 = vsel %vm1075, %v2470, %v2466
    %v2472 = vlaneseq
    %v2473 = vshrl.u32 %v2472, 7
    %v2474 = vsub.s32 %v1065, %v2473
    %v2475 = vrot.slane %v2354, %v2474
    %v2476 = vlaneseq
    %v2477 = vshrl.u32 %v2476, 7
    %v2478 = vsub.s32 %v1070, %v2477
    %v2479 = vrot.slane %v2357, %v2478
    %v2480 = vsel %vm1075, %v2479, %v2475
    %v2481 = vlaneseq
    %v2482 = vshrl.u32 %v2481, 7
    %v2483 = vsub.s32 %v1065, %v2482
    %v2484 = vrot.slane %v2360, %v2483
    %v2485 = vlaneseq
    %v2486 = vshrl.u32 %v2485, 7
    %v2487 = vsub.s32 %v1070, %v2486
    %v2488 = vrot.slane %v2363, %v2487
    %v2489 = vsel %vm1075, %v2488, %v2484
    %v2490 = vlaneseq
    %v2491 = vshrl.u32 %v2490, 7
    %v2492 = vsub.s32 %v1065, %v2491
    %v2493 = vrot.slane %v2366, %v2492
    %v2494 = vlaneseq
    %v2495 = vshrl.u32 %v2494, 7
    %v2496 = vsub.s32 %v1070, %v2495
    %v2497 = vrot.slane %v2369, %v2496
    %v2498 = vsel %vm1075, %v2497, %v2493
    %v2499 = vlaneseq
    %v2500 = vshrl.u32 %v2499, 7
    %v2501 = vsub.s32 %v1065, %v2500
    %v2502 = vrot.slane %v2372, %v2501
    %v2503 = vlaneseq
    %v2504 = vshrl.u32 %v2503, 7
    %v2505 = vsub.s32 %v1070, %v2504
    %v2506 = vrot.slane %v2375, %v2505
    %v2507 = vsel %vm1075, %v2506, %v2502
    %v2508 = vlaneseq
    %v2509 = vshrl.u32 %v2508, 7
    %v2510 = vsub.s32 %v1065, %v2509
    %v2511 = vrot.slane %v2378, %v2510
    %v2512 = vlaneseq
    %v2513 = vshrl.u32 %v2512, 7
    %v2514 = vsub.s32 %v1070, %v2513
    %v2515 = vrot.slane %v2381, %v2514
    %v2516 = vsel %vm1075, %v2515, %v2511
    %v2517 = vlaneseq
    %v2518 = vshrl.u32 %v2517, 7
    %v2519 = vsub.s32 %v1065, %v2518
    %v2520 = vrot.slane %v2384, %v2519
    %v2521 = vlaneseq
    %v2522 = vshrl.u32 %v2521, 7
    %v2523 = vsub.s32 %v1070, %v2522
    %v2524 = vrot.slane %v2387, %v2523
    %v2525 = vsel %vm1075, %v2524, %v2520
    %v2526 = vlaneseq
    %v2527 = vshrl.u32 %v2526, 7
    %v2528 = vsub.s32 %v1065, %v2527
    %v2529 = vrot.slane %v2390, %v2528
    %v2530 = vlaneseq
    %v2531 = vshrl.u32 %v2530, 7
    %v2532 = vsub.s32 %v1070, %v2531
    %v2533 = vrot.slane %v2393, %v2532
    %v2534 = vsel %vm1075, %v2533, %v2529
    %v2535 = vlaneseq
    %v2536 = vshrl.u32 %v2535, 7
    %v2537 = vsub.s32 %v1065, %v2536
    %v2538 = vrot.slane %v2396, %v2537
    %v2539 = vlaneseq
    %v2540 = vshrl.u32 %v2539, 7
    %v2541 = vsub.s32 %v1070, %v2540
    %v2542 = vrot.slane %v2399, %v2541
    %v2543 = vsel %vm1075, %v2542, %v2538
    %v2544 = vsel %vm1212, %v2417, %v2408
    %v2545 = vsel %vm1214, %v2426, %v2544
    %v2546 = vsel %vm1216, %v2435, %v2545
    %v2547 = vsel %vm1218, %v2444, %v2546
    %v2548 = vsel %vm1220, %v2453, %v2547
    %v2549 = vsel %vm1222, %v2462, %v2548
    %v2550 = vsel %vm1224, %v2471, %v2549
    %v2551 = vsel %vm1212, %v2489, %v2480
    %v2552 = vsel %vm1214, %v2498, %v2551
    %v2553 = vsel %vm1216, %v2507, %v2552
    %v2554 = vsel %vm1218, %v2516, %v2553
    %v2555 = vsel %vm1220, %v2525, %v2554
    %v2556 = vsel %vm1222, %v2534, %v2555
    %v2557 = vsel %vm1224, %v2543, %v2556
    %v2560 = vsel %vm1235, %v2550, 0.0
    %2561 = vadd.xlane.f32.xlu0 %v2560
    %v2562 = vpop.xlane.xlu0 %2561
    %v2563 = vsel %vm1235, %v2557, 0.0
    %2564 = vadd.xlane.f32.xlu0 %v2563
    %v2565 = vpop.xlane.xlu0 %2564
    %v2566 = vrcp.pop %v2562
    %v2567 = vmul.f32 1.0, %v2566
    %v2568 = vrcp.pop %v2565
    %v2569 = vmul.f32 1.0, %v2568
    %v2572 = vlaneseq
    %v2573 = vshrl.u32 %v2572, 7
    %v2574 = vsub.s32 0, %v2573
    %v2575 = vrot.slane %v2567, %v2574
    %v2576 = vlaneseq
    %v2577 = vshrl.u32 %v2576, 7
    %v2578 = vsub.s32 1, %v2577
    %v2579 = vrot.slane %v2567, %v2578
    %v2580 = vlaneseq
    %v2581 = vshrl.u32 %v2580, 7
    %v2582 = vsub.s32 2, %v2581
    %v2583 = vrot.slane %v2567, %v2582
    %v2584 = vlaneseq
    %v2585 = vshrl.u32 %v2584, 7
    %v2586 = vsub.s32 3, %v2585
    %v2587 = vrot.slane %v2567, %v2586
    %v2588 = vlaneseq
    %v2589 = vshrl.u32 %v2588, 7
    %v2590 = vsub.s32 4, %v2589
    %v2591 = vrot.slane %v2567, %v2590
    %v2592 = vlaneseq
    %v2593 = vshrl.u32 %v2592, 7
    %v2594 = vsub.s32 5, %v2593
    %v2595 = vrot.slane %v2567, %v2594
    %v2596 = vlaneseq
    %v2597 = vshrl.u32 %v2596, 7
    %v2598 = vsub.s32 6, %v2597
    %v2599 = vrot.slane %v2567, %v2598
    %v2600 = vlaneseq
    %v2601 = vshrl.u32 %v2600, 7
    %v2602 = vsub.s32 7, %v2601
    %v2603 = vrot.slane %v2567, %v2602
    %v2604 = vlaneseq
    %v2605 = vshrl.u32 %v2604, 7
    %v2606 = vsub.s32 0, %v2605
    %v2607 = vrot.slane %v2569, %v2606
    %v2608 = vlaneseq
    %v2609 = vshrl.u32 %v2608, 7
    %v2610 = vsub.s32 1, %v2609
    %v2611 = vrot.slane %v2569, %v2610
    %v2612 = vlaneseq
    %v2613 = vshrl.u32 %v2612, 7
    %v2614 = vsub.s32 2, %v2613
    %v2615 = vrot.slane %v2569, %v2614
    %v2616 = vlaneseq
    %v2617 = vshrl.u32 %v2616, 7
    %v2618 = vsub.s32 3, %v2617
    %v2619 = vrot.slane %v2569, %v2618
    %v2620 = vlaneseq
    %v2621 = vshrl.u32 %v2620, 7
    %v2622 = vsub.s32 4, %v2621
    %v2623 = vrot.slane %v2569, %v2622
    %v2624 = vlaneseq
    %v2625 = vshrl.u32 %v2624, 7
    %v2626 = vsub.s32 5, %v2625
    %v2627 = vrot.slane %v2569, %v2626
    %v2628 = vlaneseq
    %v2629 = vshrl.u32 %v2628, 7
    %v2630 = vsub.s32 6, %v2629
    %v2631 = vrot.slane %v2569, %v2630
    %v2632 = vlaneseq
    %v2633 = vshrl.u32 %v2632, 7
    %v2634 = vsub.s32 7, %v2633
    %v2635 = vrot.slane %v2569, %v2634
    %v2652 = vmul.f32 %v2209, %v2575
    %v2653 = vmul.f32 %v2211, %v2575
    %v2654 = vmul.f32 %v2213, %v2579
    %v2655 = vmul.f32 %v2215, %v2579
    %v2656 = vmul.f32 %v2217, %v2583
    %v2657 = vmul.f32 %v2219, %v2583
    %v2658 = vmul.f32 %v2221, %v2587
    %v2659 = vmul.f32 %v2223, %v2587
    %v2660 = vmul.f32 %v2225, %v2591
    %v2661 = vmul.f32 %v2227, %v2591
    %v2662 = vmul.f32 %v2229, %v2595
    %v2663 = vmul.f32 %v2231, %v2595
    %v2664 = vmul.f32 %v2233, %v2599
    %v2665 = vmul.f32 %v2235, %v2599
    %v2666 = vmul.f32 %v2237, %v2603
    %v2667 = vmul.f32 %v2239, %v2603
    %v2668 = vmul.f32 %v2241, %v2607
    %v2669 = vmul.f32 %v2243, %v2607
    %v2670 = vmul.f32 %v2245, %v2611
    %v2671 = vmul.f32 %v2247, %v2611
    %v2672 = vmul.f32 %v2249, %v2615
    %v2673 = vmul.f32 %v2251, %v2615
    %v2674 = vmul.f32 %v2253, %v2619
    %v2675 = vmul.f32 %v2255, %v2619
    %v2676 = vmul.f32 %v2257, %v2623
    %v2677 = vmul.f32 %v2259, %v2623
    %v2678 = vmul.f32 %v2261, %v2627
    %v2679 = vmul.f32 %v2263, %v2627
    %v2680 = vmul.f32 %v2265, %v2631
    %v2681 = vmul.f32 %v2267, %v2631
    %v2682 = vmul.f32 %v2269, %v2635
    %v2683 = vmul.f32 %v2271, %v2635
    %2684 = vset.pattern.permute.xlu0 2
    %2685 = vperm.xlu0 %2684, %v904
    %v2686 = vpop.permute.xlu0 %2685
    %2687 = vset.pattern.permute.xlu0 2
    %2688 = vperm.xlu0 %2687, %v905
    %v2689 = vpop.permute.xlu0 %2688
    %2690 = vset.pattern.permute.xlu0 2
    %2691 = vperm.xlu0 %2690, %v906
    %v2692 = vpop.permute.xlu0 %2691
    %2693 = vset.pattern.permute.xlu0 2
    %2694 = vperm.xlu0 %2693, %v907
    %v2695 = vpop.permute.xlu0 %2694
    %2696 = vset.pattern.permute.xlu0 2
    %2697 = vperm.xlu0 %2696, %v908
    %v2698 = vpop.permute.xlu0 %2697
    %2699 = vset.pattern.permute.xlu0 2
    %2700 = vperm.xlu0 %2699, %v909
    %v2701 = vpop.permute.xlu0 %2700
    %2702 = vset.pattern.permute.xlu0 2
    %2703 = vperm.xlu0 %2702, %v910
    %v2704 = vpop.permute.xlu0 %2703
    %2705 = vset.pattern.permute.xlu0 2
    %2706 = vperm.xlu0 %2705, %v911
    %v2707 = vpop.permute.xlu0 %2706
    %2708 = vset.pattern.permute.xlu0 2
    %2709 = vperm.xlu0 %2708, %v912
    %v2710 = vpop.permute.xlu0 %2709
    %2711 = vset.pattern.permute.xlu0 2
    %2712 = vperm.xlu0 %2711, %v913
    %v2713 = vpop.permute.xlu0 %2712
    %2714 = vset.pattern.permute.xlu0 2
    %2715 = vperm.xlu0 %2714, %v914
    %v2716 = vpop.permute.xlu0 %2715
    %2717 = vset.pattern.permute.xlu0 2
    %2718 = vperm.xlu0 %2717, %v915
    %v2719 = vpop.permute.xlu0 %2718
    %2720 = vset.pattern.permute.xlu0 2
    %2721 = vperm.xlu0 %2720, %v916
    %v2722 = vpop.permute.xlu0 %2721
    %2723 = vset.pattern.permute.xlu0 2
    %2724 = vperm.xlu0 %2723, %v917
    %v2725 = vpop.permute.xlu0 %2724
    %2726 = vset.pattern.permute.xlu0 2
    %2727 = vperm.xlu0 %2726, %v918
    %v2728 = vpop.permute.xlu0 %2727
    %2729 = vset.pattern.permute.xlu0 2
    %2730 = vperm.xlu0 %2729, %v919
    %v2731 = vpop.permute.xlu0 %2730
    %2732 = vset.pattern.permute.xlu0 2
    %2733 = vperm.xlu0 %2732, %v920
    %v2734 = vpop.permute.xlu0 %2733
    %2735 = vset.pattern.permute.xlu0 2
    %2736 = vperm.xlu0 %2735, %v921
    %v2737 = vpop.permute.xlu0 %2736
    %2738 = vset.pattern.permute.xlu0 2
    %2739 = vperm.xlu0 %2738, %v922
    %v2740 = vpop.permute.xlu0 %2739
    %2741 = vset.pattern.permute.xlu0 2
    %2742 = vperm.xlu0 %2741, %v923
    %v2743 = vpop.permute.xlu0 %2742
    %2744 = vset.pattern.permute.xlu0 2
    %2745 = vperm.xlu0 %2744, %v924
    %v2746 = vpop.permute.xlu0 %2745
    %2747 = vset.pattern.permute.xlu0 2
    %2748 = vperm.xlu0 %2747, %v925
    %v2749 = vpop.permute.xlu0 %2748
    %2750 = vset.pattern.permute.xlu0 2
    %2751 = vperm.xlu0 %2750, %v926
    %v2752 = vpop.permute.xlu0 %2751
    %2753 = vset.pattern.permute.xlu0 2
    %2754 = vperm.xlu0 %2753, %v927
    %v2755 = vpop.permute.xlu0 %2754
    %2756 = vset.pattern.permute.xlu0 2
    %2757 = vperm.xlu0 %2756, %v928
    %v2758 = vpop.permute.xlu0 %2757
    %2759 = vset.pattern.permute.xlu0 2
    %2760 = vperm.xlu0 %2759, %v929
    %v2761 = vpop.permute.xlu0 %2760
    %2762 = vset.pattern.permute.xlu0 2
    %2763 = vperm.xlu0 %2762, %v930
    %v2764 = vpop.permute.xlu0 %2763
    %2765 = vset.pattern.permute.xlu0 2
    %2766 = vperm.xlu0 %2765, %v931
    %v2767 = vpop.permute.xlu0 %2766
    %2768 = vset.pattern.permute.xlu0 2
    %2769 = vperm.xlu0 %2768, %v932
    %v2770 = vpop.permute.xlu0 %2769
    %2771 = vset.pattern.permute.xlu0 2
    %2772 = vperm.xlu0 %2771, %v933
    %v2773 = vpop.permute.xlu0 %2772
    %2774 = vset.pattern.permute.xlu0 2
    %2775 = vperm.xlu0 %2774, %v934
    %v2776 = vpop.permute.xlu0 %2775
    %2777 = vset.pattern.permute.xlu0 2
    %2778 = vperm.xlu0 %2777, %v935
    %v2779 = vpop.permute.xlu0 %2778
    %v2780 = vlaneseq
    %v2781 = vshrl.u32 %v2780, 7
    %v2782 = vsub.s32 %v1065, %v2781
    %v2783 = vrot.slane %v2686, %v2782
    %v2784 = vlaneseq
    %v2785 = vshrl.u32 %v2784, 7
    %v2786 = vsub.s32 %v1070, %v2785
    %v2787 = vrot.slane %v2689, %v2786
    %v2788 = vsel %vm1075, %v2787, %v2783
    %v2789 = vlaneseq
    %v2790 = vshrl.u32 %v2789, 7
    %v2791 = vsub.s32 %v1065, %v2790
    %v2792 = vrot.slane %v2692, %v2791
    %v2793 = vlaneseq
    %v2794 = vshrl.u32 %v2793, 7
    %v2795 = vsub.s32 %v1070, %v2794
    %v2796 = vrot.slane %v2695, %v2795
    %v2797 = vsel %vm1075, %v2796, %v2792
    %v2798 = vlaneseq
    %v2799 = vshrl.u32 %v2798, 7
    %v2800 = vsub.s32 %v1065, %v2799
    %v2801 = vrot.slane %v2698, %v2800
    %v2802 = vlaneseq
    %v2803 = vshrl.u32 %v2802, 7
    %v2804 = vsub.s32 %v1070, %v2803
    %v2805 = vrot.slane %v2701, %v2804
    %v2806 = vsel %vm1075, %v2805, %v2801
    %v2807 = vlaneseq
    %v2808 = vshrl.u32 %v2807, 7
    %v2809 = vsub.s32 %v1065, %v2808
    %v2810 = vrot.slane %v2704, %v2809
    %v2811 = vlaneseq
    %v2812 = vshrl.u32 %v2811, 7
    %v2813 = vsub.s32 %v1070, %v2812
    %v2814 = vrot.slane %v2707, %v2813
    %v2815 = vsel %vm1075, %v2814, %v2810
    %v2816 = vlaneseq
    %v2817 = vshrl.u32 %v2816, 7
    %v2818 = vsub.s32 %v1065, %v2817
    %v2819 = vrot.slane %v2710, %v2818
    %v2820 = vlaneseq
    %v2821 = vshrl.u32 %v2820, 7
    %v2822 = vsub.s32 %v1070, %v2821
    %v2823 = vrot.slane %v2713, %v2822
    %v2824 = vsel %vm1075, %v2823, %v2819
    %v2825 = vlaneseq
    %v2826 = vshrl.u32 %v2825, 7
    %v2827 = vsub.s32 %v1065, %v2826
    %v2828 = vrot.slane %v2716, %v2827
    %v2829 = vlaneseq
    %v2830 = vshrl.u32 %v2829, 7
    %v2831 = vsub.s32 %v1070, %v2830
    %v2832 = vrot.slane %v2719, %v2831
    %v2833 = vsel %vm1075, %v2832, %v2828
    %v2834 = vlaneseq
    %v2835 = vshrl.u32 %v2834, 7
    %v2836 = vsub.s32 %v1065, %v2835
    %v2837 = vrot.slane %v2722, %v2836
    %v2838 = vlaneseq
    %v2839 = vshrl.u32 %v2838, 7
    %v2840 = vsub.s32 %v1070, %v2839
    %v2841 = vrot.slane %v2725, %v2840
    %v2842 = vsel %vm1075, %v2841, %v2837
    %v2843 = vlaneseq
    %v2844 = vshrl.u32 %v2843, 7
    %v2845 = vsub.s32 %v1065, %v2844
    %v2846 = vrot.slane %v2728, %v2845
    %v2847 = vlaneseq
    %v2848 = vshrl.u32 %v2847, 7
    %v2849 = vsub.s32 %v1070, %v2848
    %v2850 = vrot.slane %v2731, %v2849
    %v2851 = vsel %vm1075, %v2850, %v2846
    %v2852 = vlaneseq
    %v2853 = vshrl.u32 %v2852, 7
    %v2854 = vsub.s32 %v1065, %v2853
    %v2855 = vrot.slane %v2734, %v2854
    %v2856 = vlaneseq
    %v2857 = vshrl.u32 %v2856, 7
    %v2858 = vsub.s32 %v1070, %v2857
    %v2859 = vrot.slane %v2737, %v2858
    %v2860 = vsel %vm1075, %v2859, %v2855
    %v2861 = vlaneseq
    %v2862 = vshrl.u32 %v2861, 7
    %v2863 = vsub.s32 %v1065, %v2862
    %v2864 = vrot.slane %v2740, %v2863
    %v2865 = vlaneseq
    %v2866 = vshrl.u32 %v2865, 7
    %v2867 = vsub.s32 %v1070, %v2866
    %v2868 = vrot.slane %v2743, %v2867
    %v2869 = vsel %vm1075, %v2868, %v2864
    %v2870 = vlaneseq
    %v2871 = vshrl.u32 %v2870, 7
    %v2872 = vsub.s32 %v1065, %v2871
    %v2873 = vrot.slane %v2746, %v2872
    %v2874 = vlaneseq
    %v2875 = vshrl.u32 %v2874, 7
    %v2876 = vsub.s32 %v1070, %v2875
    %v2877 = vrot.slane %v2749, %v2876
    %v2878 = vsel %vm1075, %v2877, %v2873
    %v2879 = vlaneseq
    %v2880 = vshrl.u32 %v2879, 7
    %v2881 = vsub.s32 %v1065, %v2880
    %v2882 = vrot.slane %v2752, %v2881
    %v2883 = vlaneseq
    %v2884 = vshrl.u32 %v2883, 7
    %v2885 = vsub.s32 %v1070, %v2884
    %v2886 = vrot.slane %v2755, %v2885
    %v2887 = vsel %vm1075, %v2886, %v2882
    %v2888 = vlaneseq
    %v2889 = vshrl.u32 %v2888, 7
    %v2890 = vsub.s32 %v1065, %v2889
    %v2891 = vrot.slane %v2758, %v2890
    %v2892 = vlaneseq
    %v2893 = vshrl.u32 %v2892, 7
    %v2894 = vsub.s32 %v1070, %v2893
    %v2895 = vrot.slane %v2761, %v2894
    %v2896 = vsel %vm1075, %v2895, %v2891
    %v2897 = vlaneseq
    %v2898 = vshrl.u32 %v2897, 7
    %v2899 = vsub.s32 %v1065, %v2898
    %v2900 = vrot.slane %v2764, %v2899
    %v2901 = vlaneseq
    %v2902 = vshrl.u32 %v2901, 7
    %v2903 = vsub.s32 %v1070, %v2902
    %v2904 = vrot.slane %v2767, %v2903
    %v2905 = vsel %vm1075, %v2904, %v2900
    %v2906 = vlaneseq
    %v2907 = vshrl.u32 %v2906, 7
    %v2908 = vsub.s32 %v1065, %v2907
    %v2909 = vrot.slane %v2770, %v2908
    %v2910 = vlaneseq
    %v2911 = vshrl.u32 %v2910, 7
    %v2912 = vsub.s32 %v1070, %v2911
    %v2913 = vrot.slane %v2773, %v2912
    %v2914 = vsel %vm1075, %v2913, %v2909
    %v2915 = vlaneseq
    %v2916 = vshrl.u32 %v2915, 7
    %v2917 = vsub.s32 %v1065, %v2916
    %v2918 = vrot.slane %v2776, %v2917
    %v2919 = vlaneseq
    %v2920 = vshrl.u32 %v2919, 7
    %v2921 = vsub.s32 %v1070, %v2920
    %v2922 = vrot.slane %v2779, %v2921
    %v2923 = vsel %vm1075, %v2922, %v2918
    %v2924 = vsel %vm1212, %v2797, %v2788
    %v2925 = vsel %vm1214, %v2806, %v2924
    %v2926 = vsel %vm1216, %v2815, %v2925
    %v2927 = vsel %vm1218, %v2824, %v2926
    %v2928 = vsel %vm1220, %v2833, %v2927
    %v2929 = vsel %vm1222, %v2842, %v2928
    %v2930 = vsel %vm1224, %v2851, %v2929
    %v2931 = vsel %vm1212, %v2869, %v2860
    %v2932 = vsel %vm1214, %v2878, %v2931
    %v2933 = vsel %vm1216, %v2887, %v2932
    %v2934 = vsel %vm1218, %v2896, %v2933
    %v2935 = vsel %vm1220, %v2905, %v2934
    %v2936 = vsel %vm1222, %v2914, %v2935
    %v2937 = vsel %vm1224, %v2923, %v2936
    %v2940 = vsel %vm1235, %v2930, -inf
    %2941 = vmax.xlane.f32.xlu0 %v2940
    %v2942 = vpop.xlane.xlu0 %2941
    %v2943 = vsel %vm1235, %v2937, -inf
    %2944 = vmax.xlane.f32.xlu0 %v2943
    %v2945 = vpop.xlane.xlu0 %2944
    %v2948 = vlaneseq
    %v2949 = vshrl.u32 %v2948, 7
    %v2950 = vsub.s32 0, %v2949
    %v2951 = vrot.slane %v2942, %v2950
    %v2952 = vlaneseq
    %v2953 = vshrl.u32 %v2952, 7
    %v2954 = vsub.s32 1, %v2953
    %v2955 = vrot.slane %v2942, %v2954
    %v2956 = vlaneseq
    %v2957 = vshrl.u32 %v2956, 7
    %v2958 = vsub.s32 2, %v2957
    %v2959 = vrot.slane %v2942, %v2958
    %v2960 = vlaneseq
    %v2961 = vshrl.u32 %v2960, 7
    %v2962 = vsub.s32 3, %v2961
    %v2963 = vrot.slane %v2942, %v2962
    %v2964 = vlaneseq
    %v2965 = vshrl.u32 %v2964, 7
    %v2966 = vsub.s32 4, %v2965
    %v2967 = vrot.slane %v2942, %v2966
    %v2968 = vlaneseq
    %v2969 = vshrl.u32 %v2968, 7
    %v2970 = vsub.s32 5, %v2969
    %v2971 = vrot.slane %v2942, %v2970
    %v2972 = vlaneseq
    %v2973 = vshrl.u32 %v2972, 7
    %v2974 = vsub.s32 6, %v2973
    %v2975 = vrot.slane %v2942, %v2974
    %v2976 = vlaneseq
    %v2977 = vshrl.u32 %v2976, 7
    %v2978 = vsub.s32 7, %v2977
    %v2979 = vrot.slane %v2942, %v2978
    %v2980 = vlaneseq
    %v2981 = vshrl.u32 %v2980, 7
    %v2982 = vsub.s32 0, %v2981
    %v2983 = vrot.slane %v2945, %v2982
    %v2984 = vlaneseq
    %v2985 = vshrl.u32 %v2984, 7
    %v2986 = vsub.s32 1, %v2985
    %v2987 = vrot.slane %v2945, %v2986
    %v2988 = vlaneseq
    %v2989 = vshrl.u32 %v2988, 7
    %v2990 = vsub.s32 2, %v2989
    %v2991 = vrot.slane %v2945, %v2990
    %v2992 = vlaneseq
    %v2993 = vshrl.u32 %v2992, 7
    %v2994 = vsub.s32 3, %v2993
    %v2995 = vrot.slane %v2945, %v2994
    %v2996 = vlaneseq
    %v2997 = vshrl.u32 %v2996, 7
    %v2998 = vsub.s32 4, %v2997
    %v2999 = vrot.slane %v2945, %v2998
    %v3000 = vlaneseq
    %v3001 = vshrl.u32 %v3000, 7
    %v3002 = vsub.s32 5, %v3001
    %v3003 = vrot.slane %v2945, %v3002
    %v3004 = vlaneseq
    %v3005 = vshrl.u32 %v3004, 7
    %v3006 = vsub.s32 6, %v3005
    %v3007 = vrot.slane %v2945, %v3006
    %v3008 = vlaneseq
    %v3009 = vshrl.u32 %v3008, 7
    %v3010 = vsub.s32 7, %v3009
    %v3011 = vrot.slane %v2945, %v3010
    %v3028 = vsub.f32 %v904, %v2951
    %v3029 = vsub.f32 %v905, %v2951
    %v3030 = vsub.f32 %v906, %v2955
    %v3031 = vsub.f32 %v907, %v2955
    %v3032 = vsub.f32 %v908, %v2959
    %v3033 = vsub.f32 %v909, %v2959
    %v3034 = vsub.f32 %v910, %v2963
    %v3035 = vsub.f32 %v911, %v2963
    %v3036 = vsub.f32 %v912, %v2967
    %v3037 = vsub.f32 %v913, %v2967
    %v3038 = vsub.f32 %v914, %v2971
    %v3039 = vsub.f32 %v915, %v2971
    %v3040 = vsub.f32 %v916, %v2975
    %v3041 = vsub.f32 %v917, %v2975
    %v3042 = vsub.f32 %v918, %v2979
    %v3043 = vsub.f32 %v919, %v2979
    %v3044 = vsub.f32 %v920, %v2983
    %v3045 = vsub.f32 %v921, %v2983
    %v3046 = vsub.f32 %v922, %v2987
    %v3047 = vsub.f32 %v923, %v2987
    %v3048 = vsub.f32 %v924, %v2991
    %v3049 = vsub.f32 %v925, %v2991
    %v3050 = vsub.f32 %v926, %v2995
    %v3051 = vsub.f32 %v927, %v2995
    %v3052 = vsub.f32 %v928, %v2999
    %v3053 = vsub.f32 %v929, %v2999
    %v3054 = vsub.f32 %v930, %v3003
    %v3055 = vsub.f32 %v931, %v3003
    %v3056 = vsub.f32 %v932, %v3007
    %v3057 = vsub.f32 %v933, %v3007
    %v3058 = vsub.f32 %v934, %v3011
    %v3059 = vsub.f32 %v935, %v3011
    %v3060 = vmul.f32 %v3028, 1.442695
    %v3061 = vpow.pop %v3060
    %v3062 = vmul.f32 %v3029, 1.442695
    %v3063 = vpow.pop %v3062
    %v3064 = vmul.f32 %v3030, 1.442695
    %v3065 = vpow.pop %v3064
    %v3066 = vmul.f32 %v3031, 1.442695
    %v3067 = vpow.pop %v3066
    %v3068 = vmul.f32 %v3032, 1.442695
    %v3069 = vpow.pop %v3068
    %v3070 = vmul.f32 %v3033, 1.442695
    %v3071 = vpow.pop %v3070
    %v3072 = vmul.f32 %v3034, 1.442695
    %v3073 = vpow.pop %v3072
    %v3074 = vmul.f32 %v3035, 1.442695
    %v3075 = vpow.pop %v3074
    %v3076 = vmul.f32 %v3036, 1.442695
    %v3077 = vpow.pop %v3076
    %v3078 = vmul.f32 %v3037, 1.442695
    %v3079 = vpow.pop %v3078
    %v3080 = vmul.f32 %v3038, 1.442695
    %v3081 = vpow.pop %v3080
    %v3082 = vmul.f32 %v3039, 1.442695
    %v3083 = vpow.pop %v3082
    %v3084 = vmul.f32 %v3040, 1.442695
    %v3085 = vpow.pop %v3084
    %v3086 = vmul.f32 %v3041, 1.442695
    %v3087 = vpow.pop %v3086
    %v3088 = vmul.f32 %v3042, 1.442695
    %v3089 = vpow.pop %v3088
    %v3090 = vmul.f32 %v3043, 1.442695
    %v3091 = vpow.pop %v3090
    %v3092 = vmul.f32 %v3044, 1.442695
    %v3093 = vpow.pop %v3092
    %v3094 = vmul.f32 %v3045, 1.442695
    %v3095 = vpow.pop %v3094
    %v3096 = vmul.f32 %v3046, 1.442695
    %v3097 = vpow.pop %v3096
    %v3098 = vmul.f32 %v3047, 1.442695
    %v3099 = vpow.pop %v3098
    %v3100 = vmul.f32 %v3048, 1.442695
    %v3101 = vpow.pop %v3100
    %v3102 = vmul.f32 %v3049, 1.442695
    %v3103 = vpow.pop %v3102
    %v3104 = vmul.f32 %v3050, 1.442695
    %v3105 = vpow.pop %v3104
    %v3106 = vmul.f32 %v3051, 1.442695
    %v3107 = vpow.pop %v3106
    %v3108 = vmul.f32 %v3052, 1.442695
    %v3109 = vpow.pop %v3108
    %v3110 = vmul.f32 %v3053, 1.442695
    %v3111 = vpow.pop %v3110
    %v3112 = vmul.f32 %v3054, 1.442695
    %v3113 = vpow.pop %v3112
    %v3114 = vmul.f32 %v3055, 1.442695
    %v3115 = vpow.pop %v3114
    %v3116 = vmul.f32 %v3056, 1.442695
    %v3117 = vpow.pop %v3116
    %v3118 = vmul.f32 %v3057, 1.442695
    %v3119 = vpow.pop %v3118
    %v3120 = vmul.f32 %v3058, 1.442695
    %v3121 = vpow.pop %v3120
    %v3122 = vmul.f32 %v3059, 1.442695
    %v3123 = vpow.pop %v3122
    %3156 = vset.pattern.permute.xlu0 2
    %3157 = vperm.xlu0 %3156, %v3061
    %v3158 = vpop.permute.xlu0 %3157
    %3159 = vset.pattern.permute.xlu0 2
    %3160 = vperm.xlu0 %3159, %v3063
    %v3161 = vpop.permute.xlu0 %3160
    %3162 = vset.pattern.permute.xlu0 2
    %3163 = vperm.xlu0 %3162, %v3065
    %v3164 = vpop.permute.xlu0 %3163
    %3165 = vset.pattern.permute.xlu0 2
    %3166 = vperm.xlu0 %3165, %v3067
    %v3167 = vpop.permute.xlu0 %3166
    %3168 = vset.pattern.permute.xlu0 2
    %3169 = vperm.xlu0 %3168, %v3069
    %v3170 = vpop.permute.xlu0 %3169
    %3171 = vset.pattern.permute.xlu0 2
    %3172 = vperm.xlu0 %3171, %v3071
    %v3173 = vpop.permute.xlu0 %3172
    %3174 = vset.pattern.permute.xlu0 2
    %3175 = vperm.xlu0 %3174, %v3073
    %v3176 = vpop.permute.xlu0 %3175
    %3177 = vset.pattern.permute.xlu0 2
    %3178 = vperm.xlu0 %3177, %v3075
    %v3179 = vpop.permute.xlu0 %3178
    %3180 = vset.pattern.permute.xlu0 2
    %3181 = vperm.xlu0 %3180, %v3077
    %v3182 = vpop.permute.xlu0 %3181
    %3183 = vset.pattern.permute.xlu0 2
    %3184 = vperm.xlu0 %3183, %v3079
    %v3185 = vpop.permute.xlu0 %3184
    %3186 = vset.pattern.permute.xlu0 2
    %3187 = vperm.xlu0 %3186, %v3081
    %v3188 = vpop.permute.xlu0 %3187
    %3189 = vset.pattern.permute.xlu0 2
    %3190 = vperm.xlu0 %3189, %v3083
    %v3191 = vpop.permute.xlu0 %3190
    %3192 = vset.pattern.permute.xlu0 2
    %3193 = vperm.xlu0 %3192, %v3085
    %v3194 = vpop.permute.xlu0 %3193
    %3195 = vset.pattern.permute.xlu0 2
    %3196 = vperm.xlu0 %3195, %v3087
    %v3197 = vpop.permute.xlu0 %3196
    %3198 = vset.pattern.permute.xlu0 2
    %3199 = vperm.xlu0 %3198, %v3089
    %v3200 = vpop.permute.xlu0 %3199
    %3201 = vset.pattern.permute.xlu0 2
    %3202 = vperm.xlu0 %3201, %v3091
    %v3203 = vpop.permute.xlu0 %3202
    %3204 = vset.pattern.permute.xlu0 2
    %3205 = vperm.xlu0 %3204, %v3093
    %v3206 = vpop.permute.xlu0 %3205
    %3207 = vset.pattern.permute.xlu0 2
    %3208 = vperm.xlu0 %3207, %v3095
    %v3209 = vpop.permute.xlu0 %3208
    %3210 = vset.pattern.permute.xlu0 2
    %3211 = vperm.xlu0 %3210, %v3097
    %v3212 = vpop.permute.xlu0 %3211
    %3213 = vset.pattern.permute.xlu0 2
    %3214 = vperm.xlu0 %3213, %v3099
    %v3215 = vpop.permute.xlu0 %3214
    %3216 = vset.pattern.permute.xlu0 2
    %3217 = vperm.xlu0 %3216, %v3101
    %v3218 = vpop.permute.xlu0 %3217
    %3219 = vset.pattern.permute.xlu0 2
    %3220 = vperm.xlu0 %3219, %v3103
    %v3221 = vpop.permute.xlu0 %3220
    %3222 = vset.pattern.permute.xlu0 2
    %3223 = vperm.xlu0 %3222, %v3105
    %v3224 = vpop.permute.xlu0 %3223
    %3225 = vset.pattern.permute.xlu0 2
    %3226 = vperm.xlu0 %3225, %v3107
    %v3227 = vpop.permute.xlu0 %3226
    %3228 = vset.pattern.permute.xlu0 2
    %3229 = vperm.xlu0 %3228, %v3109
    %v3230 = vpop.permute.xlu0 %3229
    %3231 = vset.pattern.permute.xlu0 2
    %3232 = vperm.xlu0 %3231, %v3111
    %v3233 = vpop.permute.xlu0 %3232
    %3234 = vset.pattern.permute.xlu0 2
    %3235 = vperm.xlu0 %3234, %v3113
    %v3236 = vpop.permute.xlu0 %3235
    %3237 = vset.pattern.permute.xlu0 2
    %3238 = vperm.xlu0 %3237, %v3115
    %v3239 = vpop.permute.xlu0 %3238
    %3240 = vset.pattern.permute.xlu0 2
    %3241 = vperm.xlu0 %3240, %v3117
    %v3242 = vpop.permute.xlu0 %3241
    %3243 = vset.pattern.permute.xlu0 2
    %3244 = vperm.xlu0 %3243, %v3119
    %v3245 = vpop.permute.xlu0 %3244
    %3246 = vset.pattern.permute.xlu0 2
    %3247 = vperm.xlu0 %3246, %v3121
    %v3248 = vpop.permute.xlu0 %3247
    %3249 = vset.pattern.permute.xlu0 2
    %3250 = vperm.xlu0 %3249, %v3123
    %v3251 = vpop.permute.xlu0 %3250
    %v3252 = vlaneseq
    %v3253 = vshrl.u32 %v3252, 7
    %v3254 = vsub.s32 %v1065, %v3253
    %v3255 = vrot.slane %v3158, %v3254
    %v3256 = vlaneseq
    %v3257 = vshrl.u32 %v3256, 7
    %v3258 = vsub.s32 %v1070, %v3257
    %v3259 = vrot.slane %v3161, %v3258
    %v3260 = vsel %vm1075, %v3259, %v3255
    %v3261 = vlaneseq
    %v3262 = vshrl.u32 %v3261, 7
    %v3263 = vsub.s32 %v1065, %v3262
    %v3264 = vrot.slane %v3164, %v3263
    %v3265 = vlaneseq
    %v3266 = vshrl.u32 %v3265, 7
    %v3267 = vsub.s32 %v1070, %v3266
    %v3268 = vrot.slane %v3167, %v3267
    %v3269 = vsel %vm1075, %v3268, %v3264
    %v3270 = vlaneseq
    %v3271 = vshrl.u32 %v3270, 7
    %v3272 = vsub.s32 %v1065, %v3271
    %v3273 = vrot.slane %v3170, %v3272
    %v3274 = vlaneseq
    %v3275 = vshrl.u32 %v3274, 7
    %v3276 = vsub.s32 %v1070, %v3275
    %v3277 = vrot.slane %v3173, %v3276
    %v3278 = vsel %vm1075, %v3277, %v3273
    %v3279 = vlaneseq
    %v3280 = vshrl.u32 %v3279, 7
    %v3281 = vsub.s32 %v1065, %v3280
    %v3282 = vrot.slane %v3176, %v3281
    %v3283 = vlaneseq
    %v3284 = vshrl.u32 %v3283, 7
    %v3285 = vsub.s32 %v1070, %v3284
    %v3286 = vrot.slane %v3179, %v3285
    %v3287 = vsel %vm1075, %v3286, %v3282
    %v3288 = vlaneseq
    %v3289 = vshrl.u32 %v3288, 7
    %v3290 = vsub.s32 %v1065, %v3289
    %v3291 = vrot.slane %v3182, %v3290
    %v3292 = vlaneseq
    %v3293 = vshrl.u32 %v3292, 7
    %v3294 = vsub.s32 %v1070, %v3293
    %v3295 = vrot.slane %v3185, %v3294
    %v3296 = vsel %vm1075, %v3295, %v3291
    %v3297 = vlaneseq
    %v3298 = vshrl.u32 %v3297, 7
    %v3299 = vsub.s32 %v1065, %v3298
    %v3300 = vrot.slane %v3188, %v3299
    %v3301 = vlaneseq
    %v3302 = vshrl.u32 %v3301, 7
    %v3303 = vsub.s32 %v1070, %v3302
    %v3304 = vrot.slane %v3191, %v3303
    %v3305 = vsel %vm1075, %v3304, %v3300
    %v3306 = vlaneseq
    %v3307 = vshrl.u32 %v3306, 7
    %v3308 = vsub.s32 %v1065, %v3307
    %v3309 = vrot.slane %v3194, %v3308
    %v3310 = vlaneseq
    %v3311 = vshrl.u32 %v3310, 7
    %v3312 = vsub.s32 %v1070, %v3311
    %v3313 = vrot.slane %v3197, %v3312
    %v3314 = vsel %vm1075, %v3313, %v3309
    %v3315 = vlaneseq
    %v3316 = vshrl.u32 %v3315, 7
    %v3317 = vsub.s32 %v1065, %v3316
    %v3318 = vrot.slane %v3200, %v3317
    %v3319 = vlaneseq
    %v3320 = vshrl.u32 %v3319, 7
    %v3321 = vsub.s32 %v1070, %v3320
    %v3322 = vrot.slane %v3203, %v3321
    %v3323 = vsel %vm1075, %v3322, %v3318
    %v3324 = vlaneseq
    %v3325 = vshrl.u32 %v3324, 7
    %v3326 = vsub.s32 %v1065, %v3325
    %v3327 = vrot.slane %v3206, %v3326
    %v3328 = vlaneseq
    %v3329 = vshrl.u32 %v3328, 7
    %v3330 = vsub.s32 %v1070, %v3329
    %v3331 = vrot.slane %v3209, %v3330
    %v3332 = vsel %vm1075, %v3331, %v3327
    %v3333 = vlaneseq
    %v3334 = vshrl.u32 %v3333, 7
    %v3335 = vsub.s32 %v1065, %v3334
    %v3336 = vrot.slane %v3212, %v3335
    %v3337 = vlaneseq
    %v3338 = vshrl.u32 %v3337, 7
    %v3339 = vsub.s32 %v1070, %v3338
    %v3340 = vrot.slane %v3215, %v3339
    %v3341 = vsel %vm1075, %v3340, %v3336
    %v3342 = vlaneseq
    %v3343 = vshrl.u32 %v3342, 7
    %v3344 = vsub.s32 %v1065, %v3343
    %v3345 = vrot.slane %v3218, %v3344
    %v3346 = vlaneseq
    %v3347 = vshrl.u32 %v3346, 7
    %v3348 = vsub.s32 %v1070, %v3347
    %v3349 = vrot.slane %v3221, %v3348
    %v3350 = vsel %vm1075, %v3349, %v3345
    %v3351 = vlaneseq
    %v3352 = vshrl.u32 %v3351, 7
    %v3353 = vsub.s32 %v1065, %v3352
    %v3354 = vrot.slane %v3224, %v3353
    %v3355 = vlaneseq
    %v3356 = vshrl.u32 %v3355, 7
    %v3357 = vsub.s32 %v1070, %v3356
    %v3358 = vrot.slane %v3227, %v3357
    %v3359 = vsel %vm1075, %v3358, %v3354
    %v3360 = vlaneseq
    %v3361 = vshrl.u32 %v3360, 7
    %v3362 = vsub.s32 %v1065, %v3361
    %v3363 = vrot.slane %v3230, %v3362
    %v3364 = vlaneseq
    %v3365 = vshrl.u32 %v3364, 7
    %v3366 = vsub.s32 %v1070, %v3365
    %v3367 = vrot.slane %v3233, %v3366
    %v3368 = vsel %vm1075, %v3367, %v3363
    %v3369 = vlaneseq
    %v3370 = vshrl.u32 %v3369, 7
    %v3371 = vsub.s32 %v1065, %v3370
    %v3372 = vrot.slane %v3236, %v3371
    %v3373 = vlaneseq
    %v3374 = vshrl.u32 %v3373, 7
    %v3375 = vsub.s32 %v1070, %v3374
    %v3376 = vrot.slane %v3239, %v3375
    %v3377 = vsel %vm1075, %v3376, %v3372
    %v3378 = vlaneseq
    %v3379 = vshrl.u32 %v3378, 7
    %v3380 = vsub.s32 %v1065, %v3379
    %v3381 = vrot.slane %v3242, %v3380
    %v3382 = vlaneseq
    %v3383 = vshrl.u32 %v3382, 7
    %v3384 = vsub.s32 %v1070, %v3383
    %v3385 = vrot.slane %v3245, %v3384
    %v3386 = vsel %vm1075, %v3385, %v3381
    %v3387 = vlaneseq
    %v3388 = vshrl.u32 %v3387, 7
    %v3389 = vsub.s32 %v1065, %v3388
    %v3390 = vrot.slane %v3248, %v3389
    %v3391 = vlaneseq
    %v3392 = vshrl.u32 %v3391, 7
    %v3393 = vsub.s32 %v1070, %v3392
    %v3394 = vrot.slane %v3251, %v3393
    %v3395 = vsel %vm1075, %v3394, %v3390
    %v3396 = vsel %vm1212, %v3269, %v3260
    %v3397 = vsel %vm1214, %v3278, %v3396
    %v3398 = vsel %vm1216, %v3287, %v3397
    %v3399 = vsel %vm1218, %v3296, %v3398
    %v3400 = vsel %vm1220, %v3305, %v3399
    %v3401 = vsel %vm1222, %v3314, %v3400
    %v3402 = vsel %vm1224, %v3323, %v3401
    %v3403 = vsel %vm1212, %v3341, %v3332
    %v3404 = vsel %vm1214, %v3350, %v3403
    %v3405 = vsel %vm1216, %v3359, %v3404
    %v3406 = vsel %vm1218, %v3368, %v3405
    %v3407 = vsel %vm1220, %v3377, %v3406
    %v3408 = vsel %vm1222, %v3386, %v3407
    %v3409 = vsel %vm1224, %v3395, %v3408
    %v3412 = vsel %vm1235, %v3402, 0.0
    %3413 = vadd.xlane.f32.xlu0 %v3412
    %v3414 = vpop.xlane.xlu0 %3413
    %v3415 = vsel %vm1235, %v3409, 0.0
    %3416 = vadd.xlane.f32.xlu0 %v3415
    %v3417 = vpop.xlane.xlu0 %3416
    %v3418 = vrcp.pop %v3414
    %v3419 = vmul.f32 1.0, %v3418
    %v3420 = vrcp.pop %v3417
    %v3421 = vmul.f32 1.0, %v3420
    %v3424 = vlaneseq
    %v3425 = vshrl.u32 %v3424, 7
    %v3426 = vsub.s32 0, %v3425
    %v3427 = vrot.slane %v3419, %v3426
    %v3428 = vlaneseq
    %v3429 = vshrl.u32 %v3428, 7
    %v3430 = vsub.s32 1, %v3429
    %v3431 = vrot.slane %v3419, %v3430
    %v3432 = vlaneseq
    %v3433 = vshrl.u32 %v3432, 7
    %v3434 = vsub.s32 2, %v3433
    %v3435 = vrot.slane %v3419, %v3434
    %v3436 = vlaneseq
    %v3437 = vshrl.u32 %v3436, 7
    %v3438 = vsub.s32 3, %v3437
    %v3439 = vrot.slane %v3419, %v3438
    %v3440 = vlaneseq
    %v3441 = vshrl.u32 %v3440, 7
    %v3442 = vsub.s32 4, %v3441
    %v3443 = vrot.slane %v3419, %v3442
    %v3444 = vlaneseq
    %v3445 = vshrl.u32 %v3444, 7
    %v3446 = vsub.s32 5, %v3445
    %v3447 = vrot.slane %v3419, %v3446
    %v3448 = vlaneseq
    %v3449 = vshrl.u32 %v3448, 7
    %v3450 = vsub.s32 6, %v3449
    %v3451 = vrot.slane %v3419, %v3450
    %v3452 = vlaneseq
    %v3453 = vshrl.u32 %v3452, 7
    %v3454 = vsub.s32 7, %v3453
    %v3455 = vrot.slane %v3419, %v3454
    %v3456 = vlaneseq
    %v3457 = vshrl.u32 %v3456, 7
    %v3458 = vsub.s32 0, %v3457
    %v3459 = vrot.slane %v3421, %v3458
    %v3460 = vlaneseq
    %v3461 = vshrl.u32 %v3460, 7
    %v3462 = vsub.s32 1, %v3461
    %v3463 = vrot.slane %v3421, %v3462
    %v3464 = vlaneseq
    %v3465 = vshrl.u32 %v3464, 7
    %v3466 = vsub.s32 2, %v3465
    %v3467 = vrot.slane %v3421, %v3466
    %v3468 = vlaneseq
    %v3469 = vshrl.u32 %v3468, 7
    %v3470 = vsub.s32 3, %v3469
    %v3471 = vrot.slane %v3421, %v3470
    %v3472 = vlaneseq
    %v3473 = vshrl.u32 %v3472, 7
    %v3474 = vsub.s32 4, %v3473
    %v3475 = vrot.slane %v3421, %v3474
    %v3476 = vlaneseq
    %v3477 = vshrl.u32 %v3476, 7
    %v3478 = vsub.s32 5, %v3477
    %v3479 = vrot.slane %v3421, %v3478
    %v3480 = vlaneseq
    %v3481 = vshrl.u32 %v3480, 7
    %v3482 = vsub.s32 6, %v3481
    %v3483 = vrot.slane %v3421, %v3482
    %v3484 = vlaneseq
    %v3485 = vshrl.u32 %v3484, 7
    %v3486 = vsub.s32 7, %v3485
    %v3487 = vrot.slane %v3421, %v3486
    %v3504 = vmul.f32 %v3061, %v3427
    %v3505 = vmul.f32 %v3063, %v3427
    %v3506 = vmul.f32 %v3065, %v3431
    %v3507 = vmul.f32 %v3067, %v3431
    %v3508 = vmul.f32 %v3069, %v3435
    %v3509 = vmul.f32 %v3071, %v3435
    %v3510 = vmul.f32 %v3073, %v3439
    %v3511 = vmul.f32 %v3075, %v3439
    %v3512 = vmul.f32 %v3077, %v3443
    %v3513 = vmul.f32 %v3079, %v3443
    %v3514 = vmul.f32 %v3081, %v3447
    %v3515 = vmul.f32 %v3083, %v3447
    %v3516 = vmul.f32 %v3085, %v3451
    %v3517 = vmul.f32 %v3087, %v3451
    %v3518 = vmul.f32 %v3089, %v3455
    %v3519 = vmul.f32 %v3091, %v3455
    %v3520 = vmul.f32 %v3093, %v3459
    %v3521 = vmul.f32 %v3095, %v3459
    %v3522 = vmul.f32 %v3097, %v3463
    %v3523 = vmul.f32 %v3099, %v3463
    %v3524 = vmul.f32 %v3101, %v3467
    %v3525 = vmul.f32 %v3103, %v3467
    %v3526 = vmul.f32 %v3105, %v3471
    %v3527 = vmul.f32 %v3107, %v3471
    %v3528 = vmul.f32 %v3109, %v3475
    %v3529 = vmul.f32 %v3111, %v3475
    %v3530 = vmul.f32 %v3113, %v3479
    %v3531 = vmul.f32 %v3115, %v3479
    %v3532 = vmul.f32 %v3117, %v3483
    %v3533 = vmul.f32 %v3119, %v3483
    %v3534 = vmul.f32 %v3121, %v3487
    %v3535 = vmul.f32 %v3123, %v3487
    %3536 = vset.pattern.permute.xlu0 3
    %3537 = vperm.xlu0 %3536, %v904
    %v3538 = vpop.permute.xlu0 %3537
    %3539 = vset.pattern.permute.xlu0 3
    %3540 = vperm.xlu0 %3539, %v905
    %v3541 = vpop.permute.xlu0 %3540
    %3542 = vset.pattern.permute.xlu0 3
    %3543 = vperm.xlu0 %3542, %v906
    %v3544 = vpop.permute.xlu0 %3543
    %3545 = vset.pattern.permute.xlu0 3
    %3546 = vperm.xlu0 %3545, %v907
    %v3547 = vpop.permute.xlu0 %3546
    %3548 = vset.pattern.permute.xlu0 3
    %3549 = vperm.xlu0 %3548, %v908
    %v3550 = vpop.permute.xlu0 %3549
    %3551 = vset.pattern.permute.xlu0 3
    %3552 = vperm.xlu0 %3551, %v909
    %v3553 = vpop.permute.xlu0 %3552
    %3554 = vset.pattern.permute.xlu0 3
    %3555 = vperm.xlu0 %3554, %v910
    %v3556 = vpop.permute.xlu0 %3555
    %3557 = vset.pattern.permute.xlu0 3
    %3558 = vperm.xlu0 %3557, %v911
    %v3559 = vpop.permute.xlu0 %3558
    %3560 = vset.pattern.permute.xlu0 3
    %3561 = vperm.xlu0 %3560, %v912
    %v3562 = vpop.permute.xlu0 %3561
    %3563 = vset.pattern.permute.xlu0 3
    %3564 = vperm.xlu0 %3563, %v913
    %v3565 = vpop.permute.xlu0 %3564
    %3566 = vset.pattern.permute.xlu0 3
    %3567 = vperm.xlu0 %3566, %v914
    %v3568 = vpop.permute.xlu0 %3567
    %3569 = vset.pattern.permute.xlu0 3
    %3570 = vperm.xlu0 %3569, %v915
    %v3571 = vpop.permute.xlu0 %3570
    %3572 = vset.pattern.permute.xlu0 3
    %3573 = vperm.xlu0 %3572, %v916
    %v3574 = vpop.permute.xlu0 %3573
    %3575 = vset.pattern.permute.xlu0 3
    %3576 = vperm.xlu0 %3575, %v917
    %v3577 = vpop.permute.xlu0 %3576
    %3578 = vset.pattern.permute.xlu0 3
    %3579 = vperm.xlu0 %3578, %v918
    %v3580 = vpop.permute.xlu0 %3579
    %3581 = vset.pattern.permute.xlu0 3
    %3582 = vperm.xlu0 %3581, %v919
    %v3583 = vpop.permute.xlu0 %3582
    %3584 = vset.pattern.permute.xlu0 3
    %3585 = vperm.xlu0 %3584, %v920
    %v3586 = vpop.permute.xlu0 %3585
    %3587 = vset.pattern.permute.xlu0 3
    %3588 = vperm.xlu0 %3587, %v921
    %v3589 = vpop.permute.xlu0 %3588
    %3590 = vset.pattern.permute.xlu0 3
    %3591 = vperm.xlu0 %3590, %v922
    %v3592 = vpop.permute.xlu0 %3591
    %3593 = vset.pattern.permute.xlu0 3
    %3594 = vperm.xlu0 %3593, %v923
    %v3595 = vpop.permute.xlu0 %3594
    %3596 = vset.pattern.permute.xlu0 3
    %3597 = vperm.xlu0 %3596, %v924
    %v3598 = vpop.permute.xlu0 %3597
    %3599 = vset.pattern.permute.xlu0 3
    %3600 = vperm.xlu0 %3599, %v925
    %v3601 = vpop.permute.xlu0 %3600
    %3602 = vset.pattern.permute.xlu0 3
    %3603 = vperm.xlu0 %3602, %v926
    %v3604 = vpop.permute.xlu0 %3603
    %3605 = vset.pattern.permute.xlu0 3
    %3606 = vperm.xlu0 %3605, %v927
    %v3607 = vpop.permute.xlu0 %3606
    %3608 = vset.pattern.permute.xlu0 3
    %3609 = vperm.xlu0 %3608, %v928
    %v3610 = vpop.permute.xlu0 %3609
    %3611 = vset.pattern.permute.xlu0 3
    %3612 = vperm.xlu0 %3611, %v929
    %v3613 = vpop.permute.xlu0 %3612
    %3614 = vset.pattern.permute.xlu0 3
    %3615 = vperm.xlu0 %3614, %v930
    %v3616 = vpop.permute.xlu0 %3615
    %3617 = vset.pattern.permute.xlu0 3
    %3618 = vperm.xlu0 %3617, %v931
    %v3619 = vpop.permute.xlu0 %3618
    %3620 = vset.pattern.permute.xlu0 3
    %3621 = vperm.xlu0 %3620, %v932
    %v3622 = vpop.permute.xlu0 %3621
    %3623 = vset.pattern.permute.xlu0 3
    %3624 = vperm.xlu0 %3623, %v933
    %v3625 = vpop.permute.xlu0 %3624
    %3626 = vset.pattern.permute.xlu0 3
    %3627 = vperm.xlu0 %3626, %v934
    %v3628 = vpop.permute.xlu0 %3627
    %3629 = vset.pattern.permute.xlu0 3
    %3630 = vperm.xlu0 %3629, %v935
    %v3631 = vpop.permute.xlu0 %3630
    %v3632 = vlaneseq
    %v3633 = vshrl.u32 %v3632, 7
    %v3634 = vsub.s32 %v1065, %v3633
    %v3635 = vrot.slane %v3538, %v3634
    %v3636 = vlaneseq
    %v3637 = vshrl.u32 %v3636, 7
    %v3638 = vsub.s32 %v1070, %v3637
    %v3639 = vrot.slane %v3541, %v3638
    %v3640 = vsel %vm1075, %v3639, %v3635
    %v3641 = vlaneseq
    %v3642 = vshrl.u32 %v3641, 7
    %v3643 = vsub.s32 %v1065, %v3642
    %v3644 = vrot.slane %v3544, %v3643
    %v3645 = vlaneseq
    %v3646 = vshrl.u32 %v3645, 7
    %v3647 = vsub.s32 %v1070, %v3646
    %v3648 = vrot.slane %v3547, %v3647
    %v3649 = vsel %vm1075, %v3648, %v3644
    %v3650 = vlaneseq
    %v3651 = vshrl.u32 %v3650, 7
    %v3652 = vsub.s32 %v1065, %v3651
    %v3653 = vrot.slane %v3550, %v3652
    %v3654 = vlaneseq
    %v3655 = vshrl.u32 %v3654, 7
    %v3656 = vsub.s32 %v1070, %v3655
    %v3657 = vrot.slane %v3553, %v3656
    %v3658 = vsel %vm1075, %v3657, %v3653
    %v3659 = vlaneseq
    %v3660 = vshrl.u32 %v3659, 7
    %v3661 = vsub.s32 %v1065, %v3660
    %v3662 = vrot.slane %v3556, %v3661
    %v3663 = vlaneseq
    %v3664 = vshrl.u32 %v3663, 7
    %v3665 = vsub.s32 %v1070, %v3664
    %v3666 = vrot.slane %v3559, %v3665
    %v3667 = vsel %vm1075, %v3666, %v3662
    %v3668 = vlaneseq
    %v3669 = vshrl.u32 %v3668, 7
    %v3670 = vsub.s32 %v1065, %v3669
    %v3671 = vrot.slane %v3562, %v3670
    %v3672 = vlaneseq
    %v3673 = vshrl.u32 %v3672, 7
    %v3674 = vsub.s32 %v1070, %v3673
    %v3675 = vrot.slane %v3565, %v3674
    %v3676 = vsel %vm1075, %v3675, %v3671
    %v3677 = vlaneseq
    %v3678 = vshrl.u32 %v3677, 7
    %v3679 = vsub.s32 %v1065, %v3678
    %v3680 = vrot.slane %v3568, %v3679
    %v3681 = vlaneseq
    %v3682 = vshrl.u32 %v3681, 7
    %v3683 = vsub.s32 %v1070, %v3682
    %v3684 = vrot.slane %v3571, %v3683
    %v3685 = vsel %vm1075, %v3684, %v3680
    %v3686 = vlaneseq
    %v3687 = vshrl.u32 %v3686, 7
    %v3688 = vsub.s32 %v1065, %v3687
    %v3689 = vrot.slane %v3574, %v3688
    %v3690 = vlaneseq
    %v3691 = vshrl.u32 %v3690, 7
    %v3692 = vsub.s32 %v1070, %v3691
    %v3693 = vrot.slane %v3577, %v3692
    %v3694 = vsel %vm1075, %v3693, %v3689
    %v3695 = vlaneseq
    %v3696 = vshrl.u32 %v3695, 7
    %v3697 = vsub.s32 %v1065, %v3696
    %v3698 = vrot.slane %v3580, %v3697
    %v3699 = vlaneseq
    %v3700 = vshrl.u32 %v3699, 7
    %v3701 = vsub.s32 %v1070, %v3700
    %v3702 = vrot.slane %v3583, %v3701
    %v3703 = vsel %vm1075, %v3702, %v3698
    %v3704 = vlaneseq
    %v3705 = vshrl.u32 %v3704, 7
    %v3706 = vsub.s32 %v1065, %v3705
    %v3707 = vrot.slane %v3586, %v3706
    %v3708 = vlaneseq
    %v3709 = vshrl.u32 %v3708, 7
    %v3710 = vsub.s32 %v1070, %v3709
    %v3711 = vrot.slane %v3589, %v3710
    %v3712 = vsel %vm1075, %v3711, %v3707
    %v3713 = vlaneseq
    %v3714 = vshrl.u32 %v3713, 7
    %v3715 = vsub.s32 %v1065, %v3714
    %v3716 = vrot.slane %v3592, %v3715
    %v3717 = vlaneseq
    %v3718 = vshrl.u32 %v3717, 7
    %v3719 = vsub.s32 %v1070, %v3718
    %v3720 = vrot.slane %v3595, %v3719
    %v3721 = vsel %vm1075, %v3720, %v3716
    %v3722 = vlaneseq
    %v3723 = vshrl.u32 %v3722, 7
    %v3724 = vsub.s32 %v1065, %v3723
    %v3725 = vrot.slane %v3598, %v3724
    %v3726 = vlaneseq
    %v3727 = vshrl.u32 %v3726, 7
    %v3728 = vsub.s32 %v1070, %v3727
    %v3729 = vrot.slane %v3601, %v3728
    %v3730 = vsel %vm1075, %v3729, %v3725
    %v3731 = vlaneseq
    %v3732 = vshrl.u32 %v3731, 7
    %v3733 = vsub.s32 %v1065, %v3732
    %v3734 = vrot.slane %v3604, %v3733
    %v3735 = vlaneseq
    %v3736 = vshrl.u32 %v3735, 7
    %v3737 = vsub.s32 %v1070, %v3736
    %v3738 = vrot.slane %v3607, %v3737
    %v3739 = vsel %vm1075, %v3738, %v3734
    %v3740 = vlaneseq
    %v3741 = vshrl.u32 %v3740, 7
    %v3742 = vsub.s32 %v1065, %v3741
    %v3743 = vrot.slane %v3610, %v3742
    %v3744 = vlaneseq
    %v3745 = vshrl.u32 %v3744, 7
    %v3746 = vsub.s32 %v1070, %v3745
    %v3747 = vrot.slane %v3613, %v3746
    %v3748 = vsel %vm1075, %v3747, %v3743
    %v3749 = vlaneseq
    %v3750 = vshrl.u32 %v3749, 7
    %v3751 = vsub.s32 %v1065, %v3750
    %v3752 = vrot.slane %v3616, %v3751
    %v3753 = vlaneseq
    %v3754 = vshrl.u32 %v3753, 7
    %v3755 = vsub.s32 %v1070, %v3754
    %v3756 = vrot.slane %v3619, %v3755
    %v3757 = vsel %vm1075, %v3756, %v3752
    %v3758 = vlaneseq
    %v3759 = vshrl.u32 %v3758, 7
    %v3760 = vsub.s32 %v1065, %v3759
    %v3761 = vrot.slane %v3622, %v3760
    %v3762 = vlaneseq
    %v3763 = vshrl.u32 %v3762, 7
    %v3764 = vsub.s32 %v1070, %v3763
    %v3765 = vrot.slane %v3625, %v3764
    %v3766 = vsel %vm1075, %v3765, %v3761
    %v3767 = vlaneseq
    %v3768 = vshrl.u32 %v3767, 7
    %v3769 = vsub.s32 %v1065, %v3768
    %v3770 = vrot.slane %v3628, %v3769
    %v3771 = vlaneseq
    %v3772 = vshrl.u32 %v3771, 7
    %v3773 = vsub.s32 %v1070, %v3772
    %v3774 = vrot.slane %v3631, %v3773
    %v3775 = vsel %vm1075, %v3774, %v3770
    %v3776 = vsel %vm1212, %v3649, %v3640
    %v3777 = vsel %vm1214, %v3658, %v3776
    %v3778 = vsel %vm1216, %v3667, %v3777
    %v3779 = vsel %vm1218, %v3676, %v3778
    %v3780 = vsel %vm1220, %v3685, %v3779
    %v3781 = vsel %vm1222, %v3694, %v3780
    %v3782 = vsel %vm1224, %v3703, %v3781
    %v3783 = vsel %vm1212, %v3721, %v3712
    %v3784 = vsel %vm1214, %v3730, %v3783
    %v3785 = vsel %vm1216, %v3739, %v3784
    %v3786 = vsel %vm1218, %v3748, %v3785
    %v3787 = vsel %vm1220, %v3757, %v3786
    %v3788 = vsel %vm1222, %v3766, %v3787
    %v3789 = vsel %vm1224, %v3775, %v3788
    %v3792 = vsel %vm1235, %v3782, -inf
    %3793 = vmax.xlane.f32.xlu0 %v3792
    %v3794 = vpop.xlane.xlu0 %3793
    %v3795 = vsel %vm1235, %v3789, -inf
    %3796 = vmax.xlane.f32.xlu0 %v3795
    %v3797 = vpop.xlane.xlu0 %3796
    %v3800 = vlaneseq
    %v3801 = vshrl.u32 %v3800, 7
    %v3802 = vsub.s32 0, %v3801
    %v3803 = vrot.slane %v3794, %v3802
    %v3804 = vlaneseq
    %v3805 = vshrl.u32 %v3804, 7
    %v3806 = vsub.s32 1, %v3805
    %v3807 = vrot.slane %v3794, %v3806
    %v3808 = vlaneseq
    %v3809 = vshrl.u32 %v3808, 7
    %v3810 = vsub.s32 2, %v3809
    %v3811 = vrot.slane %v3794, %v3810
    %v3812 = vlaneseq
    %v3813 = vshrl.u32 %v3812, 7
    %v3814 = vsub.s32 3, %v3813
    %v3815 = vrot.slane %v3794, %v3814
    %v3816 = vlaneseq
    %v3817 = vshrl.u32 %v3816, 7
    %v3818 = vsub.s32 4, %v3817
    %v3819 = vrot.slane %v3794, %v3818
    %v3820 = vlaneseq
    %v3821 = vshrl.u32 %v3820, 7
    %v3822 = vsub.s32 5, %v3821
    %v3823 = vrot.slane %v3794, %v3822
    %v3824 = vlaneseq
    %v3825 = vshrl.u32 %v3824, 7
    %v3826 = vsub.s32 6, %v3825
    %v3827 = vrot.slane %v3794, %v3826
    %v3828 = vlaneseq
    %v3829 = vshrl.u32 %v3828, 7
    %v3830 = vsub.s32 7, %v3829
    %v3831 = vrot.slane %v3794, %v3830
    %v3832 = vlaneseq
    %v3833 = vshrl.u32 %v3832, 7
    %v3834 = vsub.s32 0, %v3833
    %v3835 = vrot.slane %v3797, %v3834
    %v3836 = vlaneseq
    %v3837 = vshrl.u32 %v3836, 7
    %v3838 = vsub.s32 1, %v3837
    %v3839 = vrot.slane %v3797, %v3838
    %v3840 = vlaneseq
    %v3841 = vshrl.u32 %v3840, 7
    %v3842 = vsub.s32 2, %v3841
    %v3843 = vrot.slane %v3797, %v3842
    %v3844 = vlaneseq
    %v3845 = vshrl.u32 %v3844, 7
    %v3846 = vsub.s32 3, %v3845
    %v3847 = vrot.slane %v3797, %v3846
    %v3848 = vlaneseq
    %v3849 = vshrl.u32 %v3848, 7
    %v3850 = vsub.s32 4, %v3849
    %v3851 = vrot.slane %v3797, %v3850
    %v3852 = vlaneseq
    %v3853 = vshrl.u32 %v3852, 7
    %v3854 = vsub.s32 5, %v3853
    %v3855 = vrot.slane %v3797, %v3854
    %v3856 = vlaneseq
    %v3857 = vshrl.u32 %v3856, 7
    %v3858 = vsub.s32 6, %v3857
    %v3859 = vrot.slane %v3797, %v3858
    %v3860 = vlaneseq
    %v3861 = vshrl.u32 %v3860, 7
    %v3862 = vsub.s32 7, %v3861
    %v3863 = vrot.slane %v3797, %v3862
    %v3880 = vsub.f32 %v904, %v3803
    %v3881 = vsub.f32 %v905, %v3803
    %v3882 = vsub.f32 %v906, %v3807
    %v3883 = vsub.f32 %v907, %v3807
    %v3884 = vsub.f32 %v908, %v3811
    %v3885 = vsub.f32 %v909, %v3811
    %v3886 = vsub.f32 %v910, %v3815
    %v3887 = vsub.f32 %v911, %v3815
    %v3888 = vsub.f32 %v912, %v3819
    %v3889 = vsub.f32 %v913, %v3819
    %v3890 = vsub.f32 %v914, %v3823
    %v3891 = vsub.f32 %v915, %v3823
    %v3892 = vsub.f32 %v916, %v3827
    %v3893 = vsub.f32 %v917, %v3827
    %v3894 = vsub.f32 %v918, %v3831
    %v3895 = vsub.f32 %v919, %v3831
    %v3896 = vsub.f32 %v920, %v3835
    %v3897 = vsub.f32 %v921, %v3835
    %v3898 = vsub.f32 %v922, %v3839
    %v3899 = vsub.f32 %v923, %v3839
    %v3900 = vsub.f32 %v924, %v3843
    %v3901 = vsub.f32 %v925, %v3843
    %v3902 = vsub.f32 %v926, %v3847
    %v3903 = vsub.f32 %v927, %v3847
    %v3904 = vsub.f32 %v928, %v3851
    %v3905 = vsub.f32 %v929, %v3851
    %v3906 = vsub.f32 %v930, %v3855
    %v3907 = vsub.f32 %v931, %v3855
    %v3908 = vsub.f32 %v932, %v3859
    %v3909 = vsub.f32 %v933, %v3859
    %v3910 = vsub.f32 %v934, %v3863
    %v3911 = vsub.f32 %v935, %v3863
    %v3912 = vmul.f32 %v3880, 1.442695
    %v3913 = vpow.pop %v3912
    %v3914 = vmul.f32 %v3881, 1.442695
    %v3915 = vpow.pop %v3914
    %v3916 = vmul.f32 %v3882, 1.442695
    %v3917 = vpow.pop %v3916
    %v3918 = vmul.f32 %v3883, 1.442695
    %v3919 = vpow.pop %v3918
    %v3920 = vmul.f32 %v3884, 1.442695
    %v3921 = vpow.pop %v3920
    %v3922 = vmul.f32 %v3885, 1.442695
    %v3923 = vpow.pop %v3922
    %v3924 = vmul.f32 %v3886, 1.442695
    %v3925 = vpow.pop %v3924
    %v3926 = vmul.f32 %v3887, 1.442695
    %v3927 = vpow.pop %v3926
    %v3928 = vmul.f32 %v3888, 1.442695
    %v3929 = vpow.pop %v3928
    %v3930 = vmul.f32 %v3889, 1.442695
    %v3931 = vpow.pop %v3930
    %v3932 = vmul.f32 %v3890, 1.442695
    %v3933 = vpow.pop %v3932
    %v3934 = vmul.f32 %v3891, 1.442695
    %v3935 = vpow.pop %v3934
    %v3936 = vmul.f32 %v3892, 1.442695
    %v3937 = vpow.pop %v3936
    %v3938 = vmul.f32 %v3893, 1.442695
    %v3939 = vpow.pop %v3938
    %v3940 = vmul.f32 %v3894, 1.442695
    %v3941 = vpow.pop %v3940
    %v3942 = vmul.f32 %v3895, 1.442695
    %v3943 = vpow.pop %v3942
    %v3944 = vmul.f32 %v3896, 1.442695
    %v3945 = vpow.pop %v3944
    %v3946 = vmul.f32 %v3897, 1.442695
    %v3947 = vpow.pop %v3946
    %v3948 = vmul.f32 %v3898, 1.442695
    %v3949 = vpow.pop %v3948
    %v3950 = vmul.f32 %v3899, 1.442695
    %v3951 = vpow.pop %v3950
    %v3952 = vmul.f32 %v3900, 1.442695
    %v3953 = vpow.pop %v3952
    %v3954 = vmul.f32 %v3901, 1.442695
    %v3955 = vpow.pop %v3954
    %v3956 = vmul.f32 %v3902, 1.442695
    %v3957 = vpow.pop %v3956
    %v3958 = vmul.f32 %v3903, 1.442695
    %v3959 = vpow.pop %v3958
    %v3960 = vmul.f32 %v3904, 1.442695
    %v3961 = vpow.pop %v3960
    %v3962 = vmul.f32 %v3905, 1.442695
    %v3963 = vpow.pop %v3962
    %v3964 = vmul.f32 %v3906, 1.442695
    %v3965 = vpow.pop %v3964
    %v3966 = vmul.f32 %v3907, 1.442695
    %v3967 = vpow.pop %v3966
    %v3968 = vmul.f32 %v3908, 1.442695
    %v3969 = vpow.pop %v3968
    %v3970 = vmul.f32 %v3909, 1.442695
    %v3971 = vpow.pop %v3970
    %v3972 = vmul.f32 %v3910, 1.442695
    %v3973 = vpow.pop %v3972
    %v3974 = vmul.f32 %v3911, 1.442695
    %v3975 = vpow.pop %v3974
    %4008 = vset.pattern.permute.xlu0 3
    %4009 = vperm.xlu0 %4008, %v3913
    %v4010 = vpop.permute.xlu0 %4009
    %4011 = vset.pattern.permute.xlu0 3
    %4012 = vperm.xlu0 %4011, %v3915
    %v4013 = vpop.permute.xlu0 %4012
    %4014 = vset.pattern.permute.xlu0 3
    %4015 = vperm.xlu0 %4014, %v3917
    %v4016 = vpop.permute.xlu0 %4015
    %4017 = vset.pattern.permute.xlu0 3
    %4018 = vperm.xlu0 %4017, %v3919
    %v4019 = vpop.permute.xlu0 %4018
    %4020 = vset.pattern.permute.xlu0 3
    %4021 = vperm.xlu0 %4020, %v3921
    %v4022 = vpop.permute.xlu0 %4021
    %4023 = vset.pattern.permute.xlu0 3
    %4024 = vperm.xlu0 %4023, %v3923
    %v4025 = vpop.permute.xlu0 %4024
    %4026 = vset.pattern.permute.xlu0 3
    %4027 = vperm.xlu0 %4026, %v3925
    %v4028 = vpop.permute.xlu0 %4027
    %4029 = vset.pattern.permute.xlu0 3
    %4030 = vperm.xlu0 %4029, %v3927
    %v4031 = vpop.permute.xlu0 %4030
    %4032 = vset.pattern.permute.xlu0 3
    %4033 = vperm.xlu0 %4032, %v3929
    %v4034 = vpop.permute.xlu0 %4033
    %4035 = vset.pattern.permute.xlu0 3
    %4036 = vperm.xlu0 %4035, %v3931
    %v4037 = vpop.permute.xlu0 %4036
    %4038 = vset.pattern.permute.xlu0 3
    %4039 = vperm.xlu0 %4038, %v3933
    %v4040 = vpop.permute.xlu0 %4039
    %4041 = vset.pattern.permute.xlu0 3
    %4042 = vperm.xlu0 %4041, %v3935
    %v4043 = vpop.permute.xlu0 %4042
    %4044 = vset.pattern.permute.xlu0 3
    %4045 = vperm.xlu0 %4044, %v3937
    %v4046 = vpop.permute.xlu0 %4045
    %4047 = vset.pattern.permute.xlu0 3
    %4048 = vperm.xlu0 %4047, %v3939
    %v4049 = vpop.permute.xlu0 %4048
    %4050 = vset.pattern.permute.xlu0 3
    %4051 = vperm.xlu0 %4050, %v3941
    %v4052 = vpop.permute.xlu0 %4051
    %4053 = vset.pattern.permute.xlu0 3
    %4054 = vperm.xlu0 %4053, %v3943
    %v4055 = vpop.permute.xlu0 %4054
    %4056 = vset.pattern.permute.xlu0 3
    %4057 = vperm.xlu0 %4056, %v3945
    %v4058 = vpop.permute.xlu0 %4057
    %4059 = vset.pattern.permute.xlu0 3
    %4060 = vperm.xlu0 %4059, %v3947
    %v4061 = vpop.permute.xlu0 %4060
    %4062 = vset.pattern.permute.xlu0 3
    %4063 = vperm.xlu0 %4062, %v3949
    %v4064 = vpop.permute.xlu0 %4063
    %4065 = vset.pattern.permute.xlu0 3
    %4066 = vperm.xlu0 %4065, %v3951
    %v4067 = vpop.permute.xlu0 %4066
    %4068 = vset.pattern.permute.xlu0 3
    %4069 = vperm.xlu0 %4068, %v3953
    %v4070 = vpop.permute.xlu0 %4069
    %4071 = vset.pattern.permute.xlu0 3
    %4072 = vperm.xlu0 %4071, %v3955
    %v4073 = vpop.permute.xlu0 %4072
    %4074 = vset.pattern.permute.xlu0 3
    %4075 = vperm.xlu0 %4074, %v3957
    %v4076 = vpop.permute.xlu0 %4075
    %4077 = vset.pattern.permute.xlu0 3
    %4078 = vperm.xlu0 %4077, %v3959
    %v4079 = vpop.permute.xlu0 %4078
    %4080 = vset.pattern.permute.xlu0 3
    %4081 = vperm.xlu0 %4080, %v3961
    %v4082 = vpop.permute.xlu0 %4081
    %4083 = vset.pattern.permute.xlu0 3
    %4084 = vperm.xlu0 %4083, %v3963
    %v4085 = vpop.permute.xlu0 %4084
    %4086 = vset.pattern.permute.xlu0 3
    %4087 = vperm.xlu0 %4086, %v3965
    %v4088 = vpop.permute.xlu0 %4087
    %4089 = vset.pattern.permute.xlu0 3
    %4090 = vperm.xlu0 %4089, %v3967
    %v4091 = vpop.permute.xlu0 %4090
    %4092 = vset.pattern.permute.xlu0 3
    %4093 = vperm.xlu0 %4092, %v3969
    %v4094 = vpop.permute.xlu0 %4093
    %4095 = vset.pattern.permute.xlu0 3
    %4096 = vperm.xlu0 %4095, %v3971
    %v4097 = vpop.permute.xlu0 %4096
    %4098 = vset.pattern.permute.xlu0 3
    %4099 = vperm.xlu0 %4098, %v3973
    %v4100 = vpop.permute.xlu0 %4099
    %4101 = vset.pattern.permute.xlu0 3
    %4102 = vperm.xlu0 %4101, %v3975
    %v4103 = vpop.permute.xlu0 %4102
    %v4104 = vlaneseq
    %v4105 = vshrl.u32 %v4104, 7
    %v4106 = vsub.s32 %v1065, %v4105
    %v4107 = vrot.slane %v4010, %v4106
    %v4108 = vlaneseq
    %v4109 = vshrl.u32 %v4108, 7
    %v4110 = vsub.s32 %v1070, %v4109
    %v4111 = vrot.slane %v4013, %v4110
    %v4112 = vsel %vm1075, %v4111, %v4107
    %v4113 = vlaneseq
    %v4114 = vshrl.u32 %v4113, 7
    %v4115 = vsub.s32 %v1065, %v4114
    %v4116 = vrot.slane %v4016, %v4115
    %v4117 = vlaneseq
    %v4118 = vshrl.u32 %v4117, 7
    %v4119 = vsub.s32 %v1070, %v4118
    %v4120 = vrot.slane %v4019, %v4119
    %v4121 = vsel %vm1075, %v4120, %v4116
    %v4122 = vlaneseq
    %v4123 = vshrl.u32 %v4122, 7
    %v4124 = vsub.s32 %v1065, %v4123
    %v4125 = vrot.slane %v4022, %v4124
    %v4126 = vlaneseq
    %v4127 = vshrl.u32 %v4126, 7
    %v4128 = vsub.s32 %v1070, %v4127
    %v4129 = vrot.slane %v4025, %v4128
    %v4130 = vsel %vm1075, %v4129, %v4125
    %v4131 = vlaneseq
    %v4132 = vshrl.u32 %v4131, 7
    %v4133 = vsub.s32 %v1065, %v4132
    %v4134 = vrot.slane %v4028, %v4133
    %v4135 = vlaneseq
    %v4136 = vshrl.u32 %v4135, 7
    %v4137 = vsub.s32 %v1070, %v4136
    %v4138 = vrot.slane %v4031, %v4137
    %v4139 = vsel %vm1075, %v4138, %v4134
    %v4140 = vlaneseq
    %v4141 = vshrl.u32 %v4140, 7
    %v4142 = vsub.s32 %v1065, %v4141
    %v4143 = vrot.slane %v4034, %v4142
    %v4144 = vlaneseq
    %v4145 = vshrl.u32 %v4144, 7
    %v4146 = vsub.s32 %v1070, %v4145
    %v4147 = vrot.slane %v4037, %v4146
    %v4148 = vsel %vm1075, %v4147, %v4143
    %v4149 = vlaneseq
    %v4150 = vshrl.u32 %v4149, 7
    %v4151 = vsub.s32 %v1065, %v4150
    %v4152 = vrot.slane %v4040, %v4151
    %v4153 = vlaneseq
    %v4154 = vshrl.u32 %v4153, 7
    %v4155 = vsub.s32 %v1070, %v4154
    %v4156 = vrot.slane %v4043, %v4155
    %v4157 = vsel %vm1075, %v4156, %v4152
    %v4158 = vlaneseq
    %v4159 = vshrl.u32 %v4158, 7
    %v4160 = vsub.s32 %v1065, %v4159
    %v4161 = vrot.slane %v4046, %v4160
    %v4162 = vlaneseq
    %v4163 = vshrl.u32 %v4162, 7
    %v4164 = vsub.s32 %v1070, %v4163
    %v4165 = vrot.slane %v4049, %v4164
    %v4166 = vsel %vm1075, %v4165, %v4161
    %v4167 = vlaneseq
    %v4168 = vshrl.u32 %v4167, 7
    %v4169 = vsub.s32 %v1065, %v4168
    %v4170 = vrot.slane %v4052, %v4169
    %v4171 = vlaneseq
    %v4172 = vshrl.u32 %v4171, 7
    %v4173 = vsub.s32 %v1070, %v4172
    %v4174 = vrot.slane %v4055, %v4173
    %v4175 = vsel %vm1075, %v4174, %v4170
    %v4176 = vlaneseq
    %v4177 = vshrl.u32 %v4176, 7
    %v4178 = vsub.s32 %v1065, %v4177
    %v4179 = vrot.slane %v4058, %v4178
    %v4180 = vlaneseq
    %v4181 = vshrl.u32 %v4180, 7
    %v4182 = vsub.s32 %v1070, %v4181
    %v4183 = vrot.slane %v4061, %v4182
    %v4184 = vsel %vm1075, %v4183, %v4179
    %v4185 = vlaneseq
    %v4186 = vshrl.u32 %v4185, 7
    %v4187 = vsub.s32 %v1065, %v4186
    %v4188 = vrot.slane %v4064, %v4187
    %v4189 = vlaneseq
    %v4190 = vshrl.u32 %v4189, 7
    %v4191 = vsub.s32 %v1070, %v4190
    %v4192 = vrot.slane %v4067, %v4191
    %v4193 = vsel %vm1075, %v4192, %v4188
    %v4194 = vlaneseq
    %v4195 = vshrl.u32 %v4194, 7
    %v4196 = vsub.s32 %v1065, %v4195
    %v4197 = vrot.slane %v4070, %v4196
    %v4198 = vlaneseq
    %v4199 = vshrl.u32 %v4198, 7
    %v4200 = vsub.s32 %v1070, %v4199
    %v4201 = vrot.slane %v4073, %v4200
    %v4202 = vsel %vm1075, %v4201, %v4197
    %v4203 = vlaneseq
    %v4204 = vshrl.u32 %v4203, 7
    %v4205 = vsub.s32 %v1065, %v4204
    %v4206 = vrot.slane %v4076, %v4205
    %v4207 = vlaneseq
    %v4208 = vshrl.u32 %v4207, 7
    %v4209 = vsub.s32 %v1070, %v4208
    %v4210 = vrot.slane %v4079, %v4209
    %v4211 = vsel %vm1075, %v4210, %v4206
    %v4212 = vlaneseq
    %v4213 = vshrl.u32 %v4212, 7
    %v4214 = vsub.s32 %v1065, %v4213
    %v4215 = vrot.slane %v4082, %v4214
    %v4216 = vlaneseq
    %v4217 = vshrl.u32 %v4216, 7
    %v4218 = vsub.s32 %v1070, %v4217
    %v4219 = vrot.slane %v4085, %v4218
    %v4220 = vsel %vm1075, %v4219, %v4215
    %v4221 = vlaneseq
    %v4222 = vshrl.u32 %v4221, 7
    %v4223 = vsub.s32 %v1065, %v4222
    %v4224 = vrot.slane %v4088, %v4223
    %v4225 = vlaneseq
    %v4226 = vshrl.u32 %v4225, 7
    %v4227 = vsub.s32 %v1070, %v4226
    %v4228 = vrot.slane %v4091, %v4227
    %v4229 = vsel %vm1075, %v4228, %v4224
    %v4230 = vlaneseq
    %v4231 = vshrl.u32 %v4230, 7
    %v4232 = vsub.s32 %v1065, %v4231
    %v4233 = vrot.slane %v4094, %v4232
    %v4234 = vlaneseq
    %v4235 = vshrl.u32 %v4234, 7
    %v4236 = vsub.s32 %v1070, %v4235
    %v4237 = vrot.slane %v4097, %v4236
    %v4238 = vsel %vm1075, %v4237, %v4233
    %v4239 = vlaneseq
    %v4240 = vshrl.u32 %v4239, 7
    %v4241 = vsub.s32 %v1065, %v4240
    %v4242 = vrot.slane %v4100, %v4241
    %v4243 = vlaneseq
    %v4244 = vshrl.u32 %v4243, 7
    %v4245 = vsub.s32 %v1070, %v4244
    %v4246 = vrot.slane %v4103, %v4245
    %v4247 = vsel %vm1075, %v4246, %v4242
    %v4248 = vsel %vm1212, %v4121, %v4112
    %v4249 = vsel %vm1214, %v4130, %v4248
    %v4250 = vsel %vm1216, %v4139, %v4249
    %v4251 = vsel %vm1218, %v4148, %v4250
    %v4252 = vsel %vm1220, %v4157, %v4251
    %v4253 = vsel %vm1222, %v4166, %v4252
    %v4254 = vsel %vm1224, %v4175, %v4253
    %v4255 = vsel %vm1212, %v4193, %v4184
    %v4256 = vsel %vm1214, %v4202, %v4255
    %v4257 = vsel %vm1216, %v4211, %v4256
    %v4258 = vsel %vm1218, %v4220, %v4257
    %v4259 = vsel %vm1220, %v4229, %v4258
    %v4260 = vsel %vm1222, %v4238, %v4259
    %v4261 = vsel %vm1224, %v4247, %v4260
    %v4264 = vsel %vm1235, %v4254, 0.0
    %4265 = vadd.xlane.f32.xlu0 %v4264
    %v4266 = vpop.xlane.xlu0 %4265
    %v4267 = vsel %vm1235, %v4261, 0.0
    %4268 = vadd.xlane.f32.xlu0 %v4267
    %v4269 = vpop.xlane.xlu0 %4268
    %v4270 = vrcp.pop %v4266
    %v4271 = vmul.f32 1.0, %v4270
    %v4272 = vrcp.pop %v4269
    %v4273 = vmul.f32 1.0, %v4272
    %v4276 = vlaneseq
    %v4277 = vshrl.u32 %v4276, 7
    %v4278 = vsub.s32 0, %v4277
    %v4279 = vrot.slane %v4271, %v4278
    %v4280 = vlaneseq
    %v4281 = vshrl.u32 %v4280, 7
    %v4282 = vsub.s32 1, %v4281
    %v4283 = vrot.slane %v4271, %v4282
    %v4284 = vlaneseq
    %v4285 = vshrl.u32 %v4284, 7
    %v4286 = vsub.s32 2, %v4285
    %v4287 = vrot.slane %v4271, %v4286
    %v4288 = vlaneseq
    %v4289 = vshrl.u32 %v4288, 7
    %v4290 = vsub.s32 3, %v4289
    %v4291 = vrot.slane %v4271, %v4290
    %v4292 = vlaneseq
    %v4293 = vshrl.u32 %v4292, 7
    %v4294 = vsub.s32 4, %v4293
    %v4295 = vrot.slane %v4271, %v4294
    %v4296 = vlaneseq
    %v4297 = vshrl.u32 %v4296, 7
    %v4298 = vsub.s32 5, %v4297
    %v4299 = vrot.slane %v4271, %v4298
    %v4300 = vlaneseq
    %v4301 = vshrl.u32 %v4300, 7
    %v4302 = vsub.s32 6, %v4301
    %v4303 = vrot.slane %v4271, %v4302
    %v4304 = vlaneseq
    %v4305 = vshrl.u32 %v4304, 7
    %v4306 = vsub.s32 7, %v4305
    %v4307 = vrot.slane %v4271, %v4306
    %v4308 = vlaneseq
    %v4309 = vshrl.u32 %v4308, 7
    %v4310 = vsub.s32 0, %v4309
    %v4311 = vrot.slane %v4273, %v4310
    %v4312 = vlaneseq
    %v4313 = vshrl.u32 %v4312, 7
    %v4314 = vsub.s32 1, %v4313
    %v4315 = vrot.slane %v4273, %v4314
    %v4316 = vlaneseq
    %v4317 = vshrl.u32 %v4316, 7
    %v4318 = vsub.s32 2, %v4317
    %v4319 = vrot.slane %v4273, %v4318
    %v4320 = vlaneseq
    %v4321 = vshrl.u32 %v4320, 7
    %v4322 = vsub.s32 3, %v4321
    %v4323 = vrot.slane %v4273, %v4322
    %v4324 = vlaneseq
    %v4325 = vshrl.u32 %v4324, 7
    %v4326 = vsub.s32 4, %v4325
    %v4327 = vrot.slane %v4273, %v4326
    %v4328 = vlaneseq
    %v4329 = vshrl.u32 %v4328, 7
    %v4330 = vsub.s32 5, %v4329
    %v4331 = vrot.slane %v4273, %v4330
    %v4332 = vlaneseq
    %v4333 = vshrl.u32 %v4332, 7
    %v4334 = vsub.s32 6, %v4333
    %v4335 = vrot.slane %v4273, %v4334
    %v4336 = vlaneseq
    %v4337 = vshrl.u32 %v4336, 7
    %v4338 = vsub.s32 7, %v4337
    %v4339 = vrot.slane %v4273, %v4338
    %v4356 = vmul.f32 %v3913, %v4279
    %v4357 = vmul.f32 %v3915, %v4279
    %v4358 = vmul.f32 %v3917, %v4283
    %v4359 = vmul.f32 %v3919, %v4283
    %v4360 = vmul.f32 %v3921, %v4287
    %v4361 = vmul.f32 %v3923, %v4287
    %v4362 = vmul.f32 %v3925, %v4291
    %v4363 = vmul.f32 %v3927, %v4291
    %v4364 = vmul.f32 %v3929, %v4295
    %v4365 = vmul.f32 %v3931, %v4295
    %v4366 = vmul.f32 %v3933, %v4299
    %v4367 = vmul.f32 %v3935, %v4299
    %v4368 = vmul.f32 %v3937, %v4303
    %v4369 = vmul.f32 %v3939, %v4303
    %v4370 = vmul.f32 %v3941, %v4307
    %v4371 = vmul.f32 %v3943, %v4307
    %v4372 = vmul.f32 %v3945, %v4311
    %v4373 = vmul.f32 %v3947, %v4311
    %v4374 = vmul.f32 %v3949, %v4315
    %v4375 = vmul.f32 %v3951, %v4315
    %v4376 = vmul.f32 %v3953, %v4319
    %v4377 = vmul.f32 %v3955, %v4319
    %v4378 = vmul.f32 %v3957, %v4323
    %v4379 = vmul.f32 %v3959, %v4323
    %v4380 = vmul.f32 %v3961, %v4327
    %v4381 = vmul.f32 %v3963, %v4327
    %v4382 = vmul.f32 %v3965, %v4331
    %v4383 = vmul.f32 %v3967, %v4331
    %v4384 = vmul.f32 %v3969, %v4335
    %v4385 = vmul.f32 %v3971, %v4335
    %v4386 = vmul.f32 %v3973, %v4339
    %v4387 = vmul.f32 %v3975, %v4339
    %4388 = vset.pattern.permute.xlu0 4
    %4389 = vperm.xlu0 %4388, %v904
    %v4390 = vpop.permute.xlu0 %4389
    %4391 = vset.pattern.permute.xlu0 4
    %4392 = vperm.xlu0 %4391, %v905
    %v4393 = vpop.permute.xlu0 %4392
    %4394 = vset.pattern.permute.xlu0 4
    %4395 = vperm.xlu0 %4394, %v906
    %v4396 = vpop.permute.xlu0 %4395
    %4397 = vset.pattern.permute.xlu0 4
    %4398 = vperm.xlu0 %4397, %v907
    %v4399 = vpop.permute.xlu0 %4398
    %4400 = vset.pattern.permute.xlu0 4
    %4401 = vperm.xlu0 %4400, %v908
    %v4402 = vpop.permute.xlu0 %4401
    %4403 = vset.pattern.permute.xlu0 4
    %4404 = vperm.xlu0 %4403, %v909
    %v4405 = vpop.permute.xlu0 %4404
    %4406 = vset.pattern.permute.xlu0 4
    %4407 = vperm.xlu0 %4406, %v910
    %v4408 = vpop.permute.xlu0 %4407
    %4409 = vset.pattern.permute.xlu0 4
    %4410 = vperm.xlu0 %4409, %v911
    %v4411 = vpop.permute.xlu0 %4410
    %4412 = vset.pattern.permute.xlu0 4
    %4413 = vperm.xlu0 %4412, %v912
    %v4414 = vpop.permute.xlu0 %4413
    %4415 = vset.pattern.permute.xlu0 4
    %4416 = vperm.xlu0 %4415, %v913
    %v4417 = vpop.permute.xlu0 %4416
    %4418 = vset.pattern.permute.xlu0 4
    %4419 = vperm.xlu0 %4418, %v914
    %v4420 = vpop.permute.xlu0 %4419
    %4421 = vset.pattern.permute.xlu0 4
    %4422 = vperm.xlu0 %4421, %v915
    %v4423 = vpop.permute.xlu0 %4422
    %4424 = vset.pattern.permute.xlu0 4
    %4425 = vperm.xlu0 %4424, %v916
    %v4426 = vpop.permute.xlu0 %4425
    %4427 = vset.pattern.permute.xlu0 4
    %4428 = vperm.xlu0 %4427, %v917
    %v4429 = vpop.permute.xlu0 %4428
    %4430 = vset.pattern.permute.xlu0 4
    %4431 = vperm.xlu0 %4430, %v918
    %v4432 = vpop.permute.xlu0 %4431
    %4433 = vset.pattern.permute.xlu0 4
    %4434 = vperm.xlu0 %4433, %v919
    %v4435 = vpop.permute.xlu0 %4434
    %4436 = vset.pattern.permute.xlu0 4
    %4437 = vperm.xlu0 %4436, %v920
    %v4438 = vpop.permute.xlu0 %4437
    %4439 = vset.pattern.permute.xlu0 4
    %4440 = vperm.xlu0 %4439, %v921
    %v4441 = vpop.permute.xlu0 %4440
    %4442 = vset.pattern.permute.xlu0 4
    %4443 = vperm.xlu0 %4442, %v922
    %v4444 = vpop.permute.xlu0 %4443
    %4445 = vset.pattern.permute.xlu0 4
    %4446 = vperm.xlu0 %4445, %v923
    %v4447 = vpop.permute.xlu0 %4446
    %4448 = vset.pattern.permute.xlu0 4
    %4449 = vperm.xlu0 %4448, %v924
    %v4450 = vpop.permute.xlu0 %4449
    %4451 = vset.pattern.permute.xlu0 4
    %4452 = vperm.xlu0 %4451, %v925
    %v4453 = vpop.permute.xlu0 %4452
    %4454 = vset.pattern.permute.xlu0 4
    %4455 = vperm.xlu0 %4454, %v926
    %v4456 = vpop.permute.xlu0 %4455
    %4457 = vset.pattern.permute.xlu0 4
    %4458 = vperm.xlu0 %4457, %v927
    %v4459 = vpop.permute.xlu0 %4458
    %4460 = vset.pattern.permute.xlu0 4
    %4461 = vperm.xlu0 %4460, %v928
    %v4462 = vpop.permute.xlu0 %4461
    %4463 = vset.pattern.permute.xlu0 4
    %4464 = vperm.xlu0 %4463, %v929
    %v4465 = vpop.permute.xlu0 %4464
    %4466 = vset.pattern.permute.xlu0 4
    %4467 = vperm.xlu0 %4466, %v930
    %v4468 = vpop.permute.xlu0 %4467
    %4469 = vset.pattern.permute.xlu0 4
    %4470 = vperm.xlu0 %4469, %v931
    %v4471 = vpop.permute.xlu0 %4470
    %4472 = vset.pattern.permute.xlu0 4
    %4473 = vperm.xlu0 %4472, %v932
    %v4474 = vpop.permute.xlu0 %4473
    %4475 = vset.pattern.permute.xlu0 4
    %4476 = vperm.xlu0 %4475, %v933
    %v4477 = vpop.permute.xlu0 %4476
    %4478 = vset.pattern.permute.xlu0 4
    %4479 = vperm.xlu0 %4478, %v934
    %v4480 = vpop.permute.xlu0 %4479
    %4481 = vset.pattern.permute.xlu0 4
    %4482 = vperm.xlu0 %4481, %v935
    %v4483 = vpop.permute.xlu0 %4482
    %v4484 = vlaneseq
    %v4485 = vshrl.u32 %v4484, 7
    %v4486 = vsub.s32 %v1065, %v4485
    %v4487 = vrot.slane %v4390, %v4486
    %v4488 = vlaneseq
    %v4489 = vshrl.u32 %v4488, 7
    %v4490 = vsub.s32 %v1070, %v4489
    %v4491 = vrot.slane %v4393, %v4490
    %v4492 = vsel %vm1075, %v4491, %v4487
    %v4493 = vlaneseq
    %v4494 = vshrl.u32 %v4493, 7
    %v4495 = vsub.s32 %v1065, %v4494
    %v4496 = vrot.slane %v4396, %v4495
    %v4497 = vlaneseq
    %v4498 = vshrl.u32 %v4497, 7
    %v4499 = vsub.s32 %v1070, %v4498
    %v4500 = vrot.slane %v4399, %v4499
    %v4501 = vsel %vm1075, %v4500, %v4496
    %v4502 = vlaneseq
    %v4503 = vshrl.u32 %v4502, 7
    %v4504 = vsub.s32 %v1065, %v4503
    %v4505 = vrot.slane %v4402, %v4504
    %v4506 = vlaneseq
    %v4507 = vshrl.u32 %v4506, 7
    %v4508 = vsub.s32 %v1070, %v4507
    %v4509 = vrot.slane %v4405, %v4508
    %v4510 = vsel %vm1075, %v4509, %v4505
    %v4511 = vlaneseq
    %v4512 = vshrl.u32 %v4511, 7
    %v4513 = vsub.s32 %v1065, %v4512
    %v4514 = vrot.slane %v4408, %v4513
    %v4515 = vlaneseq
    %v4516 = vshrl.u32 %v4515, 7
    %v4517 = vsub.s32 %v1070, %v4516
    %v4518 = vrot.slane %v4411, %v4517
    %v4519 = vsel %vm1075, %v4518, %v4514
    %v4520 = vlaneseq
    %v4521 = vshrl.u32 %v4520, 7
    %v4522 = vsub.s32 %v1065, %v4521
    %v4523 = vrot.slane %v4414, %v4522
    %v4524 = vlaneseq
    %v4525 = vshrl.u32 %v4524, 7
    %v4526 = vsub.s32 %v1070, %v4525
    %v4527 = vrot.slane %v4417, %v4526
    %v4528 = vsel %vm1075, %v4527, %v4523
    %v4529 = vlaneseq
    %v4530 = vshrl.u32 %v4529, 7
    %v4531 = vsub.s32 %v1065, %v4530
    %v4532 = vrot.slane %v4420, %v4531
    %v4533 = vlaneseq
    %v4534 = vshrl.u32 %v4533, 7
    %v4535 = vsub.s32 %v1070, %v4534
    %v4536 = vrot.slane %v4423, %v4535
    %v4537 = vsel %vm1075, %v4536, %v4532
    %v4538 = vlaneseq
    %v4539 = vshrl.u32 %v4538, 7
    %v4540 = vsub.s32 %v1065, %v4539
    %v4541 = vrot.slane %v4426, %v4540
    %v4542 = vlaneseq
    %v4543 = vshrl.u32 %v4542, 7
    %v4544 = vsub.s32 %v1070, %v4543
    %v4545 = vrot.slane %v4429, %v4544
    %v4546 = vsel %vm1075, %v4545, %v4541
    %v4547 = vlaneseq
    %v4548 = vshrl.u32 %v4547, 7
    %v4549 = vsub.s32 %v1065, %v4548
    %v4550 = vrot.slane %v4432, %v4549
    %v4551 = vlaneseq
    %v4552 = vshrl.u32 %v4551, 7
    %v4553 = vsub.s32 %v1070, %v4552
    %v4554 = vrot.slane %v4435, %v4553
    %v4555 = vsel %vm1075, %v4554, %v4550
    %v4556 = vlaneseq
    %v4557 = vshrl.u32 %v4556, 7
    %v4558 = vsub.s32 %v1065, %v4557
    %v4559 = vrot.slane %v4438, %v4558
    %v4560 = vlaneseq
    %v4561 = vshrl.u32 %v4560, 7
    %v4562 = vsub.s32 %v1070, %v4561
    %v4563 = vrot.slane %v4441, %v4562
    %v4564 = vsel %vm1075, %v4563, %v4559
    %v4565 = vlaneseq
    %v4566 = vshrl.u32 %v4565, 7
    %v4567 = vsub.s32 %v1065, %v4566
    %v4568 = vrot.slane %v4444, %v4567
    %v4569 = vlaneseq
    %v4570 = vshrl.u32 %v4569, 7
    %v4571 = vsub.s32 %v1070, %v4570
    %v4572 = vrot.slane %v4447, %v4571
    %v4573 = vsel %vm1075, %v4572, %v4568
    %v4574 = vlaneseq
    %v4575 = vshrl.u32 %v4574, 7
    %v4576 = vsub.s32 %v1065, %v4575
    %v4577 = vrot.slane %v4450, %v4576
    %v4578 = vlaneseq
    %v4579 = vshrl.u32 %v4578, 7
    %v4580 = vsub.s32 %v1070, %v4579
    %v4581 = vrot.slane %v4453, %v4580
    %v4582 = vsel %vm1075, %v4581, %v4577
    %v4583 = vlaneseq
    %v4584 = vshrl.u32 %v4583, 7
    %v4585 = vsub.s32 %v1065, %v4584
    %v4586 = vrot.slane %v4456, %v4585
    %v4587 = vlaneseq
    %v4588 = vshrl.u32 %v4587, 7
    %v4589 = vsub.s32 %v1070, %v4588
    %v4590 = vrot.slane %v4459, %v4589
    %v4591 = vsel %vm1075, %v4590, %v4586
    %v4592 = vlaneseq
    %v4593 = vshrl.u32 %v4592, 7
    %v4594 = vsub.s32 %v1065, %v4593
    %v4595 = vrot.slane %v4462, %v4594
    %v4596 = vlaneseq
    %v4597 = vshrl.u32 %v4596, 7
    %v4598 = vsub.s32 %v1070, %v4597
    %v4599 = vrot.slane %v4465, %v4598
    %v4600 = vsel %vm1075, %v4599, %v4595
    %v4601 = vlaneseq
    %v4602 = vshrl.u32 %v4601, 7
    %v4603 = vsub.s32 %v1065, %v4602
    %v4604 = vrot.slane %v4468, %v4603
    %v4605 = vlaneseq
    %v4606 = vshrl.u32 %v4605, 7
    %v4607 = vsub.s32 %v1070, %v4606
    %v4608 = vrot.slane %v4471, %v4607
    %v4609 = vsel %vm1075, %v4608, %v4604
    %v4610 = vlaneseq
    %v4611 = vshrl.u32 %v4610, 7
    %v4612 = vsub.s32 %v1065, %v4611
    %v4613 = vrot.slane %v4474, %v4612
    %v4614 = vlaneseq
    %v4615 = vshrl.u32 %v4614, 7
    %v4616 = vsub.s32 %v1070, %v4615
    %v4617 = vrot.slane %v4477, %v4616
    %v4618 = vsel %vm1075, %v4617, %v4613
    %v4619 = vlaneseq
    %v4620 = vshrl.u32 %v4619, 7
    %v4621 = vsub.s32 %v1065, %v4620
    %v4622 = vrot.slane %v4480, %v4621
    %v4623 = vlaneseq
    %v4624 = vshrl.u32 %v4623, 7
    %v4625 = vsub.s32 %v1070, %v4624
    %v4626 = vrot.slane %v4483, %v4625
    %v4627 = vsel %vm1075, %v4626, %v4622
    %v4628 = vsel %vm1212, %v4501, %v4492
    %v4629 = vsel %vm1214, %v4510, %v4628
    %v4630 = vsel %vm1216, %v4519, %v4629
    %v4631 = vsel %vm1218, %v4528, %v4630
    %v4632 = vsel %vm1220, %v4537, %v4631
    %v4633 = vsel %vm1222, %v4546, %v4632
    %v4634 = vsel %vm1224, %v4555, %v4633
    %v4635 = vsel %vm1212, %v4573, %v4564
    %v4636 = vsel %vm1214, %v4582, %v4635
    %v4637 = vsel %vm1216, %v4591, %v4636
    %v4638 = vsel %vm1218, %v4600, %v4637
    %v4639 = vsel %vm1220, %v4609, %v4638
    %v4640 = vsel %vm1222, %v4618, %v4639
    %v4641 = vsel %vm1224, %v4627, %v4640
    %v4644 = vsel %vm1235, %v4634, -inf
    %4645 = vmax.xlane.f32.xlu0 %v4644
    %v4646 = vpop.xlane.xlu0 %4645
    %v4647 = vsel %vm1235, %v4641, -inf
    %4648 = vmax.xlane.f32.xlu0 %v4647
    %v4649 = vpop.xlane.xlu0 %4648
    %v4652 = vlaneseq
    %v4653 = vshrl.u32 %v4652, 7
    %v4654 = vsub.s32 0, %v4653
    %v4655 = vrot.slane %v4646, %v4654
    %v4656 = vlaneseq
    %v4657 = vshrl.u32 %v4656, 7
    %v4658 = vsub.s32 1, %v4657
    %v4659 = vrot.slane %v4646, %v4658
    %v4660 = vlaneseq
    %v4661 = vshrl.u32 %v4660, 7
    %v4662 = vsub.s32 2, %v4661
    %v4663 = vrot.slane %v4646, %v4662
    %v4664 = vlaneseq
    %v4665 = vshrl.u32 %v4664, 7
    %v4666 = vsub.s32 3, %v4665
    %v4667 = vrot.slane %v4646, %v4666
    %v4668 = vlaneseq
    %v4669 = vshrl.u32 %v4668, 7
    %v4670 = vsub.s32 4, %v4669
    %v4671 = vrot.slane %v4646, %v4670
    %v4672 = vlaneseq
    %v4673 = vshrl.u32 %v4672, 7
    %v4674 = vsub.s32 5, %v4673
    %v4675 = vrot.slane %v4646, %v4674
    %v4676 = vlaneseq
    %v4677 = vshrl.u32 %v4676, 7
    %v4678 = vsub.s32 6, %v4677
    %v4679 = vrot.slane %v4646, %v4678
    %v4680 = vlaneseq
    %v4681 = vshrl.u32 %v4680, 7
    %v4682 = vsub.s32 7, %v4681
    %v4683 = vrot.slane %v4646, %v4682
    %v4684 = vlaneseq
    %v4685 = vshrl.u32 %v4684, 7
    %v4686 = vsub.s32 0, %v4685
    %v4687 = vrot.slane %v4649, %v4686
    %v4688 = vlaneseq
    %v4689 = vshrl.u32 %v4688, 7
    %v4690 = vsub.s32 1, %v4689
    %v4691 = vrot.slane %v4649, %v4690
    %v4692 = vlaneseq
    %v4693 = vshrl.u32 %v4692, 7
    %v4694 = vsub.s32 2, %v4693
    %v4695 = vrot.slane %v4649, %v4694
    %v4696 = vlaneseq
    %v4697 = vshrl.u32 %v4696, 7
    %v4698 = vsub.s32 3, %v4697
    %v4699 = vrot.slane %v4649, %v4698
    %v4700 = vlaneseq
    %v4701 = vshrl.u32 %v4700, 7
    %v4702 = vsub.s32 4, %v4701
    %v4703 = vrot.slane %v4649, %v4702
    %v4704 = vlaneseq
    %v4705 = vshrl.u32 %v4704, 7
    %v4706 = vsub.s32 5, %v4705
    %v4707 = vrot.slane %v4649, %v4706
    %v4708 = vlaneseq
    %v4709 = vshrl.u32 %v4708, 7
    %v4710 = vsub.s32 6, %v4709
    %v4711 = vrot.slane %v4649, %v4710
    %v4712 = vlaneseq
    %v4713 = vshrl.u32 %v4712, 7
    %v4714 = vsub.s32 7, %v4713
    %v4715 = vrot.slane %v4649, %v4714
    %v4732 = vsub.f32 %v904, %v4655
    %v4733 = vsub.f32 %v905, %v4655
    %v4734 = vsub.f32 %v906, %v4659
    %v4735 = vsub.f32 %v907, %v4659
    %v4736 = vsub.f32 %v908, %v4663
    %v4737 = vsub.f32 %v909, %v4663
    %v4738 = vsub.f32 %v910, %v4667
    %v4739 = vsub.f32 %v911, %v4667
    %v4740 = vsub.f32 %v912, %v4671
    %v4741 = vsub.f32 %v913, %v4671
    %v4742 = vsub.f32 %v914, %v4675
    %v4743 = vsub.f32 %v915, %v4675
    %v4744 = vsub.f32 %v916, %v4679
    %v4745 = vsub.f32 %v917, %v4679
    %v4746 = vsub.f32 %v918, %v4683
    %v4747 = vsub.f32 %v919, %v4683
    %v4748 = vsub.f32 %v920, %v4687
    %v4749 = vsub.f32 %v921, %v4687
    %v4750 = vsub.f32 %v922, %v4691
    %v4751 = vsub.f32 %v923, %v4691
    %v4752 = vsub.f32 %v924, %v4695
    %v4753 = vsub.f32 %v925, %v4695
    %v4754 = vsub.f32 %v926, %v4699
    %v4755 = vsub.f32 %v927, %v4699
    %v4756 = vsub.f32 %v928, %v4703
    %v4757 = vsub.f32 %v929, %v4703
    %v4758 = vsub.f32 %v930, %v4707
    %v4759 = vsub.f32 %v931, %v4707
    %v4760 = vsub.f32 %v932, %v4711
    %v4761 = vsub.f32 %v933, %v4711
    %v4762 = vsub.f32 %v934, %v4715
    %v4763 = vsub.f32 %v935, %v4715
    %v4764 = vmul.f32 %v4732, 1.442695
    %v4765 = vpow.pop %v4764
    %v4766 = vmul.f32 %v4733, 1.442695
    %v4767 = vpow.pop %v4766
    %v4768 = vmul.f32 %v4734, 1.442695
    %v4769 = vpow.pop %v4768
    %v4770 = vmul.f32 %v4735, 1.442695
    %v4771 = vpow.pop %v4770
    %v4772 = vmul.f32 %v4736, 1.442695
    %v4773 = vpow.pop %v4772
    %v4774 = vmul.f32 %v4737, 1.442695
    %v4775 = vpow.pop %v4774
    %v4776 = vmul.f32 %v4738, 1.442695
    %v4777 = vpow.pop %v4776
    %v4778 = vmul.f32 %v4739, 1.442695
    %v4779 = vpow.pop %v4778
    %v4780 = vmul.f32 %v4740, 1.442695
    %v4781 = vpow.pop %v4780
    %v4782 = vmul.f32 %v4741, 1.442695
    %v4783 = vpow.pop %v4782
    %v4784 = vmul.f32 %v4742, 1.442695
    %v4785 = vpow.pop %v4784
    %v4786 = vmul.f32 %v4743, 1.442695
    %v4787 = vpow.pop %v4786
    %v4788 = vmul.f32 %v4744, 1.442695
    %v4789 = vpow.pop %v4788
    %v4790 = vmul.f32 %v4745, 1.442695
    %v4791 = vpow.pop %v4790
    %v4792 = vmul.f32 %v4746, 1.442695
    %v4793 = vpow.pop %v4792
    %v4794 = vmul.f32 %v4747, 1.442695
    %v4795 = vpow.pop %v4794
    %v4796 = vmul.f32 %v4748, 1.442695
    %v4797 = vpow.pop %v4796
    %v4798 = vmul.f32 %v4749, 1.442695
    %v4799 = vpow.pop %v4798
    %v4800 = vmul.f32 %v4750, 1.442695
    %v4801 = vpow.pop %v4800
    %v4802 = vmul.f32 %v4751, 1.442695
    %v4803 = vpow.pop %v4802
    %v4804 = vmul.f32 %v4752, 1.442695
    %v4805 = vpow.pop %v4804
    %v4806 = vmul.f32 %v4753, 1.442695
    %v4807 = vpow.pop %v4806
    %v4808 = vmul.f32 %v4754, 1.442695
    %v4809 = vpow.pop %v4808
    %v4810 = vmul.f32 %v4755, 1.442695
    %v4811 = vpow.pop %v4810
    %v4812 = vmul.f32 %v4756, 1.442695
    %v4813 = vpow.pop %v4812
    %v4814 = vmul.f32 %v4757, 1.442695
    %v4815 = vpow.pop %v4814
    %v4816 = vmul.f32 %v4758, 1.442695
    %v4817 = vpow.pop %v4816
    %v4818 = vmul.f32 %v4759, 1.442695
    %v4819 = vpow.pop %v4818
    %v4820 = vmul.f32 %v4760, 1.442695
    %v4821 = vpow.pop %v4820
    %v4822 = vmul.f32 %v4761, 1.442695
    %v4823 = vpow.pop %v4822
    %v4824 = vmul.f32 %v4762, 1.442695
    %v4825 = vpow.pop %v4824
    %v4826 = vmul.f32 %v4763, 1.442695
    %v4827 = vpow.pop %v4826
    %4860 = vset.pattern.permute.xlu0 4
    %4861 = vperm.xlu0 %4860, %v4765
    %v4862 = vpop.permute.xlu0 %4861
    %4863 = vset.pattern.permute.xlu0 4
    %4864 = vperm.xlu0 %4863, %v4767
    %v4865 = vpop.permute.xlu0 %4864
    %4866 = vset.pattern.permute.xlu0 4
    %4867 = vperm.xlu0 %4866, %v4769
    %v4868 = vpop.permute.xlu0 %4867
    %4869 = vset.pattern.permute.xlu0 4
    %4870 = vperm.xlu0 %4869, %v4771
    %v4871 = vpop.permute.xlu0 %4870
    %4872 = vset.pattern.permute.xlu0 4
    %4873 = vperm.xlu0 %4872, %v4773
    %v4874 = vpop.permute.xlu0 %4873
    %4875 = vset.pattern.permute.xlu0 4
    %4876 = vperm.xlu0 %4875, %v4775
    %v4877 = vpop.permute.xlu0 %4876
    %4878 = vset.pattern.permute.xlu0 4
    %4879 = vperm.xlu0 %4878, %v4777
    %v4880 = vpop.permute.xlu0 %4879
    %4881 = vset.pattern.permute.xlu0 4
    %4882 = vperm.xlu0 %4881, %v4779
    %v4883 = vpop.permute.xlu0 %4882
    %4884 = vset.pattern.permute.xlu0 4
    %4885 = vperm.xlu0 %4884, %v4781
    %v4886 = vpop.permute.xlu0 %4885
    %4887 = vset.pattern.permute.xlu0 4
    %4888 = vperm.xlu0 %4887, %v4783
    %v4889 = vpop.permute.xlu0 %4888
    %4890 = vset.pattern.permute.xlu0 4
    %4891 = vperm.xlu0 %4890, %v4785
    %v4892 = vpop.permute.xlu0 %4891
    %4893 = vset.pattern.permute.xlu0 4
    %4894 = vperm.xlu0 %4893, %v4787
    %v4895 = vpop.permute.xlu0 %4894
    %4896 = vset.pattern.permute.xlu0 4
    %4897 = vperm.xlu0 %4896, %v4789
    %v4898 = vpop.permute.xlu0 %4897
    %4899 = vset.pattern.permute.xlu0 4
    %4900 = vperm.xlu0 %4899, %v4791
    %v4901 = vpop.permute.xlu0 %4900
    %4902 = vset.pattern.permute.xlu0 4
    %4903 = vperm.xlu0 %4902, %v4793
    %v4904 = vpop.permute.xlu0 %4903
    %4905 = vset.pattern.permute.xlu0 4
    %4906 = vperm.xlu0 %4905, %v4795
    %v4907 = vpop.permute.xlu0 %4906
    %4908 = vset.pattern.permute.xlu0 4
    %4909 = vperm.xlu0 %4908, %v4797
    %v4910 = vpop.permute.xlu0 %4909
    %4911 = vset.pattern.permute.xlu0 4
    %4912 = vperm.xlu0 %4911, %v4799
    %v4913 = vpop.permute.xlu0 %4912
    %4914 = vset.pattern.permute.xlu0 4
    %4915 = vperm.xlu0 %4914, %v4801
    %v4916 = vpop.permute.xlu0 %4915
    %4917 = vset.pattern.permute.xlu0 4
    %4918 = vperm.xlu0 %4917, %v4803
    %v4919 = vpop.permute.xlu0 %4918
    %4920 = vset.pattern.permute.xlu0 4
    %4921 = vperm.xlu0 %4920, %v4805
    %v4922 = vpop.permute.xlu0 %4921
    %4923 = vset.pattern.permute.xlu0 4
    %4924 = vperm.xlu0 %4923, %v4807
    %v4925 = vpop.permute.xlu0 %4924
    %4926 = vset.pattern.permute.xlu0 4
    %4927 = vperm.xlu0 %4926, %v4809
    %v4928 = vpop.permute.xlu0 %4927
    %4929 = vset.pattern.permute.xlu0 4
    %4930 = vperm.xlu0 %4929, %v4811
    %v4931 = vpop.permute.xlu0 %4930
    %4932 = vset.pattern.permute.xlu0 4
    %4933 = vperm.xlu0 %4932, %v4813
    %v4934 = vpop.permute.xlu0 %4933
    %4935 = vset.pattern.permute.xlu0 4
    %4936 = vperm.xlu0 %4935, %v4815
    %v4937 = vpop.permute.xlu0 %4936
    %4938 = vset.pattern.permute.xlu0 4
    %4939 = vperm.xlu0 %4938, %v4817
    %v4940 = vpop.permute.xlu0 %4939
    %4941 = vset.pattern.permute.xlu0 4
    %4942 = vperm.xlu0 %4941, %v4819
    %v4943 = vpop.permute.xlu0 %4942
    %4944 = vset.pattern.permute.xlu0 4
    %4945 = vperm.xlu0 %4944, %v4821
    %v4946 = vpop.permute.xlu0 %4945
    %4947 = vset.pattern.permute.xlu0 4
    %4948 = vperm.xlu0 %4947, %v4823
    %v4949 = vpop.permute.xlu0 %4948
    %4950 = vset.pattern.permute.xlu0 4
    %4951 = vperm.xlu0 %4950, %v4825
    %v4952 = vpop.permute.xlu0 %4951
    %4953 = vset.pattern.permute.xlu0 4
    %4954 = vperm.xlu0 %4953, %v4827
    %v4955 = vpop.permute.xlu0 %4954
    %v4956 = vlaneseq
    %v4957 = vshrl.u32 %v4956, 7
    %v4958 = vsub.s32 %v1065, %v4957
    %v4959 = vrot.slane %v4862, %v4958
    %v4960 = vlaneseq
    %v4961 = vshrl.u32 %v4960, 7
    %v4962 = vsub.s32 %v1070, %v4961
    %v4963 = vrot.slane %v4865, %v4962
    %v4964 = vsel %vm1075, %v4963, %v4959
    %v4965 = vlaneseq
    %v4966 = vshrl.u32 %v4965, 7
    %v4967 = vsub.s32 %v1065, %v4966
    %v4968 = vrot.slane %v4868, %v4967
    %v4969 = vlaneseq
    %v4970 = vshrl.u32 %v4969, 7
    %v4971 = vsub.s32 %v1070, %v4970
    %v4972 = vrot.slane %v4871, %v4971
    %v4973 = vsel %vm1075, %v4972, %v4968
    %v4974 = vlaneseq
    %v4975 = vshrl.u32 %v4974, 7
    %v4976 = vsub.s32 %v1065, %v4975
    %v4977 = vrot.slane %v4874, %v4976
    %v4978 = vlaneseq
    %v4979 = vshrl.u32 %v4978, 7
    %v4980 = vsub.s32 %v1070, %v4979
    %v4981 = vrot.slane %v4877, %v4980
    %v4982 = vsel %vm1075, %v4981, %v4977
    %v4983 = vlaneseq
    %v4984 = vshrl.u32 %v4983, 7
    %v4985 = vsub.s32 %v1065, %v4984
    %v4986 = vrot.slane %v4880, %v4985
    %v4987 = vlaneseq
    %v4988 = vshrl.u32 %v4987, 7
    %v4989 = vsub.s32 %v1070, %v4988
    %v4990 = vrot.slane %v4883, %v4989
    %v4991 = vsel %vm1075, %v4990, %v4986
    %v4992 = vlaneseq
    %v4993 = vshrl.u32 %v4992, 7
    %v4994 = vsub.s32 %v1065, %v4993
    %v4995 = vrot.slane %v4886, %v4994
    %v4996 = vlaneseq
    %v4997 = vshrl.u32 %v4996, 7
    %v4998 = vsub.s32 %v1070, %v4997
    %v4999 = vrot.slane %v4889, %v4998
    %v5000 = vsel %vm1075, %v4999, %v4995
    %v5001 = vlaneseq
    %v5002 = vshrl.u32 %v5001, 7
    %v5003 = vsub.s32 %v1065, %v5002
    %v5004 = vrot.slane %v4892, %v5003
    %v5005 = vlaneseq
    %v5006 = vshrl.u32 %v5005, 7
    %v5007 = vsub.s32 %v1070, %v5006
    %v5008 = vrot.slane %v4895, %v5007
    %v5009 = vsel %vm1075, %v5008, %v5004
    %v5010 = vlaneseq
    %v5011 = vshrl.u32 %v5010, 7
    %v5012 = vsub.s32 %v1065, %v5011
    %v5013 = vrot.slane %v4898, %v5012
    %v5014 = vlaneseq
    %v5015 = vshrl.u32 %v5014, 7
    %v5016 = vsub.s32 %v1070, %v5015
    %v5017 = vrot.slane %v4901, %v5016
    %v5018 = vsel %vm1075, %v5017, %v5013
    %v5019 = vlaneseq
    %v5020 = vshrl.u32 %v5019, 7
    %v5021 = vsub.s32 %v1065, %v5020
    %v5022 = vrot.slane %v4904, %v5021
    %v5023 = vlaneseq
    %v5024 = vshrl.u32 %v5023, 7
    %v5025 = vsub.s32 %v1070, %v5024
    %v5026 = vrot.slane %v4907, %v5025
    %v5027 = vsel %vm1075, %v5026, %v5022
    %v5028 = vlaneseq
    %v5029 = vshrl.u32 %v5028, 7
    %v5030 = vsub.s32 %v1065, %v5029
    %v5031 = vrot.slane %v4910, %v5030
    %v5032 = vlaneseq
    %v5033 = vshrl.u32 %v5032, 7
    %v5034 = vsub.s32 %v1070, %v5033
    %v5035 = vrot.slane %v4913, %v5034
    %v5036 = vsel %vm1075, %v5035, %v5031
    %v5037 = vlaneseq
    %v5038 = vshrl.u32 %v5037, 7
    %v5039 = vsub.s32 %v1065, %v5038
    %v5040 = vrot.slane %v4916, %v5039
    %v5041 = vlaneseq
    %v5042 = vshrl.u32 %v5041, 7
    %v5043 = vsub.s32 %v1070, %v5042
    %v5044 = vrot.slane %v4919, %v5043
    %v5045 = vsel %vm1075, %v5044, %v5040
    %v5046 = vlaneseq
    %v5047 = vshrl.u32 %v5046, 7
    %v5048 = vsub.s32 %v1065, %v5047
    %v5049 = vrot.slane %v4922, %v5048
    %v5050 = vlaneseq
    %v5051 = vshrl.u32 %v5050, 7
    %v5052 = vsub.s32 %v1070, %v5051
    %v5053 = vrot.slane %v4925, %v5052
    %v5054 = vsel %vm1075, %v5053, %v5049
    %v5055 = vlaneseq
    %v5056 = vshrl.u32 %v5055, 7
    %v5057 = vsub.s32 %v1065, %v5056
    %v5058 = vrot.slane %v4928, %v5057
    %v5059 = vlaneseq
    %v5060 = vshrl.u32 %v5059, 7
    %v5061 = vsub.s32 %v1070, %v5060
    %v5062 = vrot.slane %v4931, %v5061
    %v5063 = vsel %vm1075, %v5062, %v5058
    %v5064 = vlaneseq
    %v5065 = vshrl.u32 %v5064, 7
    %v5066 = vsub.s32 %v1065, %v5065
    %v5067 = vrot.slane %v4934, %v5066
    %v5068 = vlaneseq
    %v5069 = vshrl.u32 %v5068, 7
    %v5070 = vsub.s32 %v1070, %v5069
    %v5071 = vrot.slane %v4937, %v5070
    %v5072 = vsel %vm1075, %v5071, %v5067
    %v5073 = vlaneseq
    %v5074 = vshrl.u32 %v5073, 7
    %v5075 = vsub.s32 %v1065, %v5074
    %v5076 = vrot.slane %v4940, %v5075
    %v5077 = vlaneseq
    %v5078 = vshrl.u32 %v5077, 7
    %v5079 = vsub.s32 %v1070, %v5078
    %v5080 = vrot.slane %v4943, %v5079
    %v5081 = vsel %vm1075, %v5080, %v5076
    %v5082 = vlaneseq
    %v5083 = vshrl.u32 %v5082, 7
    %v5084 = vsub.s32 %v1065, %v5083
    %v5085 = vrot.slane %v4946, %v5084
    %v5086 = vlaneseq
    %v5087 = vshrl.u32 %v5086, 7
    %v5088 = vsub.s32 %v1070, %v5087
    %v5089 = vrot.slane %v4949, %v5088
    %v5090 = vsel %vm1075, %v5089, %v5085
    %v5091 = vlaneseq
    %v5092 = vshrl.u32 %v5091, 7
    %v5093 = vsub.s32 %v1065, %v5092
    %v5094 = vrot.slane %v4952, %v5093
    %v5095 = vlaneseq
    %v5096 = vshrl.u32 %v5095, 7
    %v5097 = vsub.s32 %v1070, %v5096
    %v5098 = vrot.slane %v4955, %v5097
    %v5099 = vsel %vm1075, %v5098, %v5094
    %v5100 = vsel %vm1212, %v4973, %v4964
    %v5101 = vsel %vm1214, %v4982, %v5100
    %v5102 = vsel %vm1216, %v4991, %v5101
    %v5103 = vsel %vm1218, %v5000, %v5102
    %v5104 = vsel %vm1220, %v5009, %v5103
    %v5105 = vsel %vm1222, %v5018, %v5104
    %v5106 = vsel %vm1224, %v5027, %v5105
    %v5107 = vsel %vm1212, %v5045, %v5036
    %v5108 = vsel %vm1214, %v5054, %v5107
    %v5109 = vsel %vm1216, %v5063, %v5108
    %v5110 = vsel %vm1218, %v5072, %v5109
    %v5111 = vsel %vm1220, %v5081, %v5110
    %v5112 = vsel %vm1222, %v5090, %v5111
    %v5113 = vsel %vm1224, %v5099, %v5112
    %v5116 = vsel %vm1235, %v5106, 0.0
    %5117 = vadd.xlane.f32.xlu0 %v5116
    %v5118 = vpop.xlane.xlu0 %5117
    %v5119 = vsel %vm1235, %v5113, 0.0
    %5120 = vadd.xlane.f32.xlu0 %v5119
    %v5121 = vpop.xlane.xlu0 %5120
    %v5122 = vrcp.pop %v5118
    %v5123 = vmul.f32 1.0, %v5122
    %v5124 = vrcp.pop %v5121
    %v5125 = vmul.f32 1.0, %v5124
    %v5128 = vlaneseq
    %v5129 = vshrl.u32 %v5128, 7
    %v5130 = vsub.s32 0, %v5129
    %v5131 = vrot.slane %v5123, %v5130
    %v5132 = vlaneseq
    %v5133 = vshrl.u32 %v5132, 7
    %v5134 = vsub.s32 1, %v5133
    %v5135 = vrot.slane %v5123, %v5134
    %v5136 = vlaneseq
    %v5137 = vshrl.u32 %v5136, 7
    %v5138 = vsub.s32 2, %v5137
    %v5139 = vrot.slane %v5123, %v5138
    %v5140 = vlaneseq
    %v5141 = vshrl.u32 %v5140, 7
    %v5142 = vsub.s32 3, %v5141
    %v5143 = vrot.slane %v5123, %v5142
    %v5144 = vlaneseq
    %v5145 = vshrl.u32 %v5144, 7
    %v5146 = vsub.s32 4, %v5145
    %v5147 = vrot.slane %v5123, %v5146
    %v5148 = vlaneseq
    %v5149 = vshrl.u32 %v5148, 7
    %v5150 = vsub.s32 5, %v5149
    %v5151 = vrot.slane %v5123, %v5150
    %v5152 = vlaneseq
    %v5153 = vshrl.u32 %v5152, 7
    %v5154 = vsub.s32 6, %v5153
    %v5155 = vrot.slane %v5123, %v5154
    %v5156 = vlaneseq
    %v5157 = vshrl.u32 %v5156, 7
    %v5158 = vsub.s32 7, %v5157
    %v5159 = vrot.slane %v5123, %v5158
    %v5160 = vlaneseq
    %v5161 = vshrl.u32 %v5160, 7
    %v5162 = vsub.s32 0, %v5161
    %v5163 = vrot.slane %v5125, %v5162
    %v5164 = vlaneseq
    %v5165 = vshrl.u32 %v5164, 7
    %v5166 = vsub.s32 1, %v5165
    %v5167 = vrot.slane %v5125, %v5166
    %v5168 = vlaneseq
    %v5169 = vshrl.u32 %v5168, 7
    %v5170 = vsub.s32 2, %v5169
    %v5171 = vrot.slane %v5125, %v5170
    %v5172 = vlaneseq
    %v5173 = vshrl.u32 %v5172, 7
    %v5174 = vsub.s32 3, %v5173
    %v5175 = vrot.slane %v5125, %v5174
    %v5176 = vlaneseq
    %v5177 = vshrl.u32 %v5176, 7
    %v5178 = vsub.s32 4, %v5177
    %v5179 = vrot.slane %v5125, %v5178
    %v5180 = vlaneseq
    %v5181 = vshrl.u32 %v5180, 7
    %v5182 = vsub.s32 5, %v5181
    %v5183 = vrot.slane %v5125, %v5182
    %v5184 = vlaneseq
    %v5185 = vshrl.u32 %v5184, 7
    %v5186 = vsub.s32 6, %v5185
    %v5187 = vrot.slane %v5125, %v5186
    %v5188 = vlaneseq
    %v5189 = vshrl.u32 %v5188, 7
    %v5190 = vsub.s32 7, %v5189
    %v5191 = vrot.slane %v5125, %v5190
    %v5208 = vmul.f32 %v4765, %v5131
    %v5209 = vmul.f32 %v4767, %v5131
    %v5210 = vmul.f32 %v4769, %v5135
    %v5211 = vmul.f32 %v4771, %v5135
    %v5212 = vmul.f32 %v4773, %v5139
    %v5213 = vmul.f32 %v4775, %v5139
    %v5214 = vmul.f32 %v4777, %v5143
    %v5215 = vmul.f32 %v4779, %v5143
    %v5216 = vmul.f32 %v4781, %v5147
    %v5217 = vmul.f32 %v4783, %v5147
    %v5218 = vmul.f32 %v4785, %v5151
    %v5219 = vmul.f32 %v4787, %v5151
    %v5220 = vmul.f32 %v4789, %v5155
    %v5221 = vmul.f32 %v4791, %v5155
    %v5222 = vmul.f32 %v4793, %v5159
    %v5223 = vmul.f32 %v4795, %v5159
    %v5224 = vmul.f32 %v4797, %v5163
    %v5225 = vmul.f32 %v4799, %v5163
    %v5226 = vmul.f32 %v4801, %v5167
    %v5227 = vmul.f32 %v4803, %v5167
    %v5228 = vmul.f32 %v4805, %v5171
    %v5229 = vmul.f32 %v4807, %v5171
    %v5230 = vmul.f32 %v4809, %v5175
    %v5231 = vmul.f32 %v4811, %v5175
    %v5232 = vmul.f32 %v4813, %v5179
    %v5233 = vmul.f32 %v4815, %v5179
    %v5234 = vmul.f32 %v4817, %v5183
    %v5235 = vmul.f32 %v4819, %v5183
    %v5236 = vmul.f32 %v4821, %v5187
    %v5237 = vmul.f32 %v4823, %v5187
    %v5238 = vmul.f32 %v4825, %v5191
    %v5239 = vmul.f32 %v4827, %v5191
    %5240 = vset.pattern.permute.xlu0 5
    %5241 = vperm.xlu0 %5240, %v904
    %v5242 = vpop.permute.xlu0 %5241
    %5243 = vset.pattern.permute.xlu0 5
    %5244 = vperm.xlu0 %5243, %v905
    %v5245 = vpop.permute.xlu0 %5244
    %5246 = vset.pattern.permute.xlu0 5
    %5247 = vperm.xlu0 %5246, %v906
    %v5248 = vpop.permute.xlu0 %5247
    %5249 = vset.pattern.permute.xlu0 5
    %5250 = vperm.xlu0 %5249, %v907
    %v5251 = vpop.permute.xlu0 %5250
    %5252 = vset.pattern.permute.xlu0 5
    %5253 = vperm.xlu0 %5252, %v908
    %v5254 = vpop.permute.xlu0 %5253
    %5255 = vset.pattern.permute.xlu0 5
    %5256 = vperm.xlu0 %5255, %v909
    %v5257 = vpop.permute.xlu0 %5256
    %5258 = vset.pattern.permute.xlu0 5
    %5259 = vperm.xlu0 %5258, %v910
    %v5260 = vpop.permute.xlu0 %5259
    %5261 = vset.pattern.permute.xlu0 5
    %5262 = vperm.xlu0 %5261, %v911
    %v5263 = vpop.permute.xlu0 %5262
    %5264 = vset.pattern.permute.xlu0 5
    %5265 = vperm.xlu0 %5264, %v912
    %v5266 = vpop.permute.xlu0 %5265
    %5267 = vset.pattern.permute.xlu0 5
    %5268 = vperm.xlu0 %5267, %v913
    %v5269 = vpop.permute.xlu0 %5268
    %5270 = vset.pattern.permute.xlu0 5
    %5271 = vperm.xlu0 %5270, %v914
    %v5272 = vpop.permute.xlu0 %5271
    %5273 = vset.pattern.permute.xlu0 5
    %5274 = vperm.xlu0 %5273, %v915
    %v5275 = vpop.permute.xlu0 %5274
    %5276 = vset.pattern.permute.xlu0 5
    %5277 = vperm.xlu0 %5276, %v916
    %v5278 = vpop.permute.xlu0 %5277
    %5279 = vset.pattern.permute.xlu0 5
    %5280 = vperm.xlu0 %5279, %v917
    %v5281 = vpop.permute.xlu0 %5280
    %5282 = vset.pattern.permute.xlu0 5
    %5283 = vperm.xlu0 %5282, %v918
    %v5284 = vpop.permute.xlu0 %5283
    %5285 = vset.pattern.permute.xlu0 5
    %5286 = vperm.xlu0 %5285, %v919
    %v5287 = vpop.permute.xlu0 %5286
    %5288 = vset.pattern.permute.xlu0 5
    %5289 = vperm.xlu0 %5288, %v920
    %v5290 = vpop.permute.xlu0 %5289
    %5291 = vset.pattern.permute.xlu0 5
    %5292 = vperm.xlu0 %5291, %v921
    %v5293 = vpop.permute.xlu0 %5292
    %5294 = vset.pattern.permute.xlu0 5
    %5295 = vperm.xlu0 %5294, %v922
    %v5296 = vpop.permute.xlu0 %5295
    %5297 = vset.pattern.permute.xlu0 5
    %5298 = vperm.xlu0 %5297, %v923
    %v5299 = vpop.permute.xlu0 %5298
    %5300 = vset.pattern.permute.xlu0 5
    %5301 = vperm.xlu0 %5300, %v924
    %v5302 = vpop.permute.xlu0 %5301
    %5303 = vset.pattern.permute.xlu0 5
    %5304 = vperm.xlu0 %5303, %v925
    %v5305 = vpop.permute.xlu0 %5304
    %5306 = vset.pattern.permute.xlu0 5
    %5307 = vperm.xlu0 %5306, %v926
    %v5308 = vpop.permute.xlu0 %5307
    %5309 = vset.pattern.permute.xlu0 5
    %5310 = vperm.xlu0 %5309, %v927
    %v5311 = vpop.permute.xlu0 %5310
    %5312 = vset.pattern.permute.xlu0 5
    %5313 = vperm.xlu0 %5312, %v928
    %v5314 = vpop.permute.xlu0 %5313
    %5315 = vset.pattern.permute.xlu0 5
    %5316 = vperm.xlu0 %5315, %v929
    %v5317 = vpop.permute.xlu0 %5316
    %5318 = vset.pattern.permute.xlu0 5
    %5319 = vperm.xlu0 %5318, %v930
    %v5320 = vpop.permute.xlu0 %5319
    %5321 = vset.pattern.permute.xlu0 5
    %5322 = vperm.xlu0 %5321, %v931
    %v5323 = vpop.permute.xlu0 %5322
    %5324 = vset.pattern.permute.xlu0 5
    %5325 = vperm.xlu0 %5324, %v932
    %v5326 = vpop.permute.xlu0 %5325
    %5327 = vset.pattern.permute.xlu0 5
    %5328 = vperm.xlu0 %5327, %v933
    %v5329 = vpop.permute.xlu0 %5328
    %5330 = vset.pattern.permute.xlu0 5
    %5331 = vperm.xlu0 %5330, %v934
    %v5332 = vpop.permute.xlu0 %5331
    %5333 = vset.pattern.permute.xlu0 5
    %5334 = vperm.xlu0 %5333, %v935
    %v5335 = vpop.permute.xlu0 %5334
    %v5336 = vlaneseq
    %v5337 = vshrl.u32 %v5336, 7
    %v5338 = vsub.s32 %v1065, %v5337
    %v5339 = vrot.slane %v5242, %v5338
    %v5340 = vlaneseq
    %v5341 = vshrl.u32 %v5340, 7
    %v5342 = vsub.s32 %v1070, %v5341
    %v5343 = vrot.slane %v5245, %v5342
    %v5344 = vsel %vm1075, %v5343, %v5339
    %v5345 = vlaneseq
    %v5346 = vshrl.u32 %v5345, 7
    %v5347 = vsub.s32 %v1065, %v5346
    %v5348 = vrot.slane %v5248, %v5347
    %v5349 = vlaneseq
    %v5350 = vshrl.u32 %v5349, 7
    %v5351 = vsub.s32 %v1070, %v5350
    %v5352 = vrot.slane %v5251, %v5351
    %v5353 = vsel %vm1075, %v5352, %v5348
    %v5354 = vlaneseq
    %v5355 = vshrl.u32 %v5354, 7
    %v5356 = vsub.s32 %v1065, %v5355
    %v5357 = vrot.slane %v5254, %v5356
    %v5358 = vlaneseq
    %v5359 = vshrl.u32 %v5358, 7
    %v5360 = vsub.s32 %v1070, %v5359
    %v5361 = vrot.slane %v5257, %v5360
    %v5362 = vsel %vm1075, %v5361, %v5357
    %v5363 = vlaneseq
    %v5364 = vshrl.u32 %v5363, 7
    %v5365 = vsub.s32 %v1065, %v5364
    %v5366 = vrot.slane %v5260, %v5365
    %v5367 = vlaneseq
    %v5368 = vshrl.u32 %v5367, 7
    %v5369 = vsub.s32 %v1070, %v5368
    %v5370 = vrot.slane %v5263, %v5369
    %v5371 = vsel %vm1075, %v5370, %v5366
    %v5372 = vlaneseq
    %v5373 = vshrl.u32 %v5372, 7
    %v5374 = vsub.s32 %v1065, %v5373
    %v5375 = vrot.slane %v5266, %v5374
    %v5376 = vlaneseq
    %v5377 = vshrl.u32 %v5376, 7
    %v5378 = vsub.s32 %v1070, %v5377
    %v5379 = vrot.slane %v5269, %v5378
    %v5380 = vsel %vm1075, %v5379, %v5375
    %v5381 = vlaneseq
    %v5382 = vshrl.u32 %v5381, 7
    %v5383 = vsub.s32 %v1065, %v5382
    %v5384 = vrot.slane %v5272, %v5383
    %v5385 = vlaneseq
    %v5386 = vshrl.u32 %v5385, 7
    %v5387 = vsub.s32 %v1070, %v5386
    %v5388 = vrot.slane %v5275, %v5387
    %v5389 = vsel %vm1075, %v5388, %v5384
    %v5390 = vlaneseq
    %v5391 = vshrl.u32 %v5390, 7
    %v5392 = vsub.s32 %v1065, %v5391
    %v5393 = vrot.slane %v5278, %v5392
    %v5394 = vlaneseq
    %v5395 = vshrl.u32 %v5394, 7
    %v5396 = vsub.s32 %v1070, %v5395
    %v5397 = vrot.slane %v5281, %v5396
    %v5398 = vsel %vm1075, %v5397, %v5393
    %v5399 = vlaneseq
    %v5400 = vshrl.u32 %v5399, 7
    %v5401 = vsub.s32 %v1065, %v5400
    %v5402 = vrot.slane %v5284, %v5401
    %v5403 = vlaneseq
    %v5404 = vshrl.u32 %v5403, 7
    %v5405 = vsub.s32 %v1070, %v5404
    %v5406 = vrot.slane %v5287, %v5405
    %v5407 = vsel %vm1075, %v5406, %v5402
    %v5408 = vlaneseq
    %v5409 = vshrl.u32 %v5408, 7
    %v5410 = vsub.s32 %v1065, %v5409
    %v5411 = vrot.slane %v5290, %v5410
    %v5412 = vlaneseq
    %v5413 = vshrl.u32 %v5412, 7
    %v5414 = vsub.s32 %v1070, %v5413
    %v5415 = vrot.slane %v5293, %v5414
    %v5416 = vsel %vm1075, %v5415, %v5411
    %v5417 = vlaneseq
    %v5418 = vshrl.u32 %v5417, 7
    %v5419 = vsub.s32 %v1065, %v5418
    %v5420 = vrot.slane %v5296, %v5419
    %v5421 = vlaneseq
    %v5422 = vshrl.u32 %v5421, 7
    %v5423 = vsub.s32 %v1070, %v5422
    %v5424 = vrot.slane %v5299, %v5423
    %v5425 = vsel %vm1075, %v5424, %v5420
    %v5426 = vlaneseq
    %v5427 = vshrl.u32 %v5426, 7
    %v5428 = vsub.s32 %v1065, %v5427
    %v5429 = vrot.slane %v5302, %v5428
    %v5430 = vlaneseq
    %v5431 = vshrl.u32 %v5430, 7
    %v5432 = vsub.s32 %v1070, %v5431
    %v5433 = vrot.slane %v5305, %v5432
    %v5434 = vsel %vm1075, %v5433, %v5429
    %v5435 = vlaneseq
    %v5436 = vshrl.u32 %v5435, 7
    %v5437 = vsub.s32 %v1065, %v5436
    %v5438 = vrot.slane %v5308, %v5437
    %v5439 = vlaneseq
    %v5440 = vshrl.u32 %v5439, 7
    %v5441 = vsub.s32 %v1070, %v5440
    %v5442 = vrot.slane %v5311, %v5441
    %v5443 = vsel %vm1075, %v5442, %v5438
    %v5444 = vlaneseq
    %v5445 = vshrl.u32 %v5444, 7
    %v5446 = vsub.s32 %v1065, %v5445
    %v5447 = vrot.slane %v5314, %v5446
    %v5448 = vlaneseq
    %v5449 = vshrl.u32 %v5448, 7
    %v5450 = vsub.s32 %v1070, %v5449
    %v5451 = vrot.slane %v5317, %v5450
    %v5452 = vsel %vm1075, %v5451, %v5447
    %v5453 = vlaneseq
    %v5454 = vshrl.u32 %v5453, 7
    %v5455 = vsub.s32 %v1065, %v5454
    %v5456 = vrot.slane %v5320, %v5455
    %v5457 = vlaneseq
    %v5458 = vshrl.u32 %v5457, 7
    %v5459 = vsub.s32 %v1070, %v5458
    %v5460 = vrot.slane %v5323, %v5459
    %v5461 = vsel %vm1075, %v5460, %v5456
    %v5462 = vlaneseq
    %v5463 = vshrl.u32 %v5462, 7
    %v5464 = vsub.s32 %v1065, %v5463
    %v5465 = vrot.slane %v5326, %v5464
    %v5466 = vlaneseq
    %v5467 = vshrl.u32 %v5466, 7
    %v5468 = vsub.s32 %v1070, %v5467
    %v5469 = vrot.slane %v5329, %v5468
    %v5470 = vsel %vm1075, %v5469, %v5465
    %v5471 = vlaneseq
    %v5472 = vshrl.u32 %v5471, 7
    %v5473 = vsub.s32 %v1065, %v5472
    %v5474 = vrot.slane %v5332, %v5473
    %v5475 = vlaneseq
    %v5476 = vshrl.u32 %v5475, 7
    %v5477 = vsub.s32 %v1070, %v5476
    %v5478 = vrot.slane %v5335, %v5477
    %v5479 = vsel %vm1075, %v5478, %v5474
    %v5480 = vsel %vm1212, %v5353, %v5344
    %v5481 = vsel %vm1214, %v5362, %v5480
    %v5482 = vsel %vm1216, %v5371, %v5481
    %v5483 = vsel %vm1218, %v5380, %v5482
    %v5484 = vsel %vm1220, %v5389, %v5483
    %v5485 = vsel %vm1222, %v5398, %v5484
    %v5486 = vsel %vm1224, %v5407, %v5485
    %v5487 = vsel %vm1212, %v5425, %v5416
    %v5488 = vsel %vm1214, %v5434, %v5487
    %v5489 = vsel %vm1216, %v5443, %v5488
    %v5490 = vsel %vm1218, %v5452, %v5489
    %v5491 = vsel %vm1220, %v5461, %v5490
    %v5492 = vsel %vm1222, %v5470, %v5491
    %v5493 = vsel %vm1224, %v5479, %v5492
    %v5496 = vsel %vm1235, %v5486, -inf
    %5497 = vmax.xlane.f32.xlu0 %v5496
    %v5498 = vpop.xlane.xlu0 %5497
    %v5499 = vsel %vm1235, %v5493, -inf
    %5500 = vmax.xlane.f32.xlu0 %v5499
    %v5501 = vpop.xlane.xlu0 %5500
    %v5504 = vlaneseq
    %v5505 = vshrl.u32 %v5504, 7
    %v5506 = vsub.s32 0, %v5505
    %v5507 = vrot.slane %v5498, %v5506
    %v5508 = vlaneseq
    %v5509 = vshrl.u32 %v5508, 7
    %v5510 = vsub.s32 1, %v5509
    %v5511 = vrot.slane %v5498, %v5510
    %v5512 = vlaneseq
    %v5513 = vshrl.u32 %v5512, 7
    %v5514 = vsub.s32 2, %v5513
    %v5515 = vrot.slane %v5498, %v5514
    %v5516 = vlaneseq
    %v5517 = vshrl.u32 %v5516, 7
    %v5518 = vsub.s32 3, %v5517
    %v5519 = vrot.slane %v5498, %v5518
    %v5520 = vlaneseq
    %v5521 = vshrl.u32 %v5520, 7
    %v5522 = vsub.s32 4, %v5521
    %v5523 = vrot.slane %v5498, %v5522
    %v5524 = vlaneseq
    %v5525 = vshrl.u32 %v5524, 7
    %v5526 = vsub.s32 5, %v5525
    %v5527 = vrot.slane %v5498, %v5526
    %v5528 = vlaneseq
    %v5529 = vshrl.u32 %v5528, 7
    %v5530 = vsub.s32 6, %v5529
    %v5531 = vrot.slane %v5498, %v5530
    %v5532 = vlaneseq
    %v5533 = vshrl.u32 %v5532, 7
    %v5534 = vsub.s32 7, %v5533
    %v5535 = vrot.slane %v5498, %v5534
    %v5536 = vlaneseq
    %v5537 = vshrl.u32 %v5536, 7
    %v5538 = vsub.s32 0, %v5537
    %v5539 = vrot.slane %v5501, %v5538
    %v5540 = vlaneseq
    %v5541 = vshrl.u32 %v5540, 7
    %v5542 = vsub.s32 1, %v5541
    %v5543 = vrot.slane %v5501, %v5542
    %v5544 = vlaneseq
    %v5545 = vshrl.u32 %v5544, 7
    %v5546 = vsub.s32 2, %v5545
    %v5547 = vrot.slane %v5501, %v5546
    %v5548 = vlaneseq
    %v5549 = vshrl.u32 %v5548, 7
    %v5550 = vsub.s32 3, %v5549
    %v5551 = vrot.slane %v5501, %v5550
    %v5552 = vlaneseq
    %v5553 = vshrl.u32 %v5552, 7
    %v5554 = vsub.s32 4, %v5553
    %v5555 = vrot.slane %v5501, %v5554
    %v5556 = vlaneseq
    %v5557 = vshrl.u32 %v5556, 7
    %v5558 = vsub.s32 5, %v5557
    %v5559 = vrot.slane %v5501, %v5558
    %v5560 = vlaneseq
    %v5561 = vshrl.u32 %v5560, 7
    %v5562 = vsub.s32 6, %v5561
    %v5563 = vrot.slane %v5501, %v5562
    %v5564 = vlaneseq
    %v5565 = vshrl.u32 %v5564, 7
    %v5566 = vsub.s32 7, %v5565
    %v5567 = vrot.slane %v5501, %v5566
    %v5584 = vsub.f32 %v904, %v5507
    %v5585 = vsub.f32 %v905, %v5507
    %v5586 = vsub.f32 %v906, %v5511
    %v5587 = vsub.f32 %v907, %v5511
    %v5588 = vsub.f32 %v908, %v5515
    %v5589 = vsub.f32 %v909, %v5515
    %v5590 = vsub.f32 %v910, %v5519
    %v5591 = vsub.f32 %v911, %v5519
    %v5592 = vsub.f32 %v912, %v5523
    %v5593 = vsub.f32 %v913, %v5523
    %v5594 = vsub.f32 %v914, %v5527
    %v5595 = vsub.f32 %v915, %v5527
    %v5596 = vsub.f32 %v916, %v5531
    %v5597 = vsub.f32 %v917, %v5531
    %v5598 = vsub.f32 %v918, %v5535
    %v5599 = vsub.f32 %v919, %v5535
    %v5600 = vsub.f32 %v920, %v5539
    %v5601 = vsub.f32 %v921, %v5539
    %v5602 = vsub.f32 %v922, %v5543
    %v5603 = vsub.f32 %v923, %v5543
    %v5604 = vsub.f32 %v924, %v5547
    %v5605 = vsub.f32 %v925, %v5547
    %v5606 = vsub.f32 %v926, %v5551
    %v5607 = vsub.f32 %v927, %v5551
    %v5608 = vsub.f32 %v928, %v5555
    %v5609 = vsub.f32 %v929, %v5555
    %v5610 = vsub.f32 %v930, %v5559
    %v5611 = vsub.f32 %v931, %v5559
    %v5612 = vsub.f32 %v932, %v5563
    %v5613 = vsub.f32 %v933, %v5563
    %v5614 = vsub.f32 %v934, %v5567
    %v5615 = vsub.f32 %v935, %v5567
    %v5616 = vmul.f32 %v5584, 1.442695
    %v5617 = vpow.pop %v5616
    %v5618 = vmul.f32 %v5585, 1.442695
    %v5619 = vpow.pop %v5618
    %v5620 = vmul.f32 %v5586, 1.442695
    %v5621 = vpow.pop %v5620
    %v5622 = vmul.f32 %v5587, 1.442695
    %v5623 = vpow.pop %v5622
    %v5624 = vmul.f32 %v5588, 1.442695
    %v5625 = vpow.pop %v5624
    %v5626 = vmul.f32 %v5589, 1.442695
    %v5627 = vpow.pop %v5626
    %v5628 = vmul.f32 %v5590, 1.442695
    %v5629 = vpow.pop %v5628
    %v5630 = vmul.f32 %v5591, 1.442695
    %v5631 = vpow.pop %v5630
    %v5632 = vmul.f32 %v5592, 1.442695
    %v5633 = vpow.pop %v5632
    %v5634 = vmul.f32 %v5593, 1.442695
    %v5635 = vpow.pop %v5634
    %v5636 = vmul.f32 %v5594, 1.442695
    %v5637 = vpow.pop %v5636
    %v5638 = vmul.f32 %v5595, 1.442695
    %v5639 = vpow.pop %v5638
    %v5640 = vmul.f32 %v5596, 1.442695
    %v5641 = vpow.pop %v5640
    %v5642 = vmul.f32 %v5597, 1.442695
    %v5643 = vpow.pop %v5642
    %v5644 = vmul.f32 %v5598, 1.442695
    %v5645 = vpow.pop %v5644
    %v5646 = vmul.f32 %v5599, 1.442695
    %v5647 = vpow.pop %v5646
    %v5648 = vmul.f32 %v5600, 1.442695
    %v5649 = vpow.pop %v5648
    %v5650 = vmul.f32 %v5601, 1.442695
    %v5651 = vpow.pop %v5650
    %v5652 = vmul.f32 %v5602, 1.442695
    %v5653 = vpow.pop %v5652
    %v5654 = vmul.f32 %v5603, 1.442695
    %v5655 = vpow.pop %v5654
    %v5656 = vmul.f32 %v5604, 1.442695
    %v5657 = vpow.pop %v5656
    %v5658 = vmul.f32 %v5605, 1.442695
    %v5659 = vpow.pop %v5658
    %v5660 = vmul.f32 %v5606, 1.442695
    %v5661 = vpow.pop %v5660
    %v5662 = vmul.f32 %v5607, 1.442695
    %v5663 = vpow.pop %v5662
    %v5664 = vmul.f32 %v5608, 1.442695
    %v5665 = vpow.pop %v5664
    %v5666 = vmul.f32 %v5609, 1.442695
    %v5667 = vpow.pop %v5666
    %v5668 = vmul.f32 %v5610, 1.442695
    %v5669 = vpow.pop %v5668
    %v5670 = vmul.f32 %v5611, 1.442695
    %v5671 = vpow.pop %v5670
    %v5672 = vmul.f32 %v5612, 1.442695
    %v5673 = vpow.pop %v5672
    %v5674 = vmul.f32 %v5613, 1.442695
    %v5675 = vpow.pop %v5674
    %v5676 = vmul.f32 %v5614, 1.442695
    %v5677 = vpow.pop %v5676
    %v5678 = vmul.f32 %v5615, 1.442695
    %v5679 = vpow.pop %v5678
    %5712 = vset.pattern.permute.xlu0 5
    %5713 = vperm.xlu0 %5712, %v5617
    %v5714 = vpop.permute.xlu0 %5713
    %5715 = vset.pattern.permute.xlu0 5
    %5716 = vperm.xlu0 %5715, %v5619
    %v5717 = vpop.permute.xlu0 %5716
    %5718 = vset.pattern.permute.xlu0 5
    %5719 = vperm.xlu0 %5718, %v5621
    %v5720 = vpop.permute.xlu0 %5719
    %5721 = vset.pattern.permute.xlu0 5
    %5722 = vperm.xlu0 %5721, %v5623
    %v5723 = vpop.permute.xlu0 %5722
    %5724 = vset.pattern.permute.xlu0 5
    %5725 = vperm.xlu0 %5724, %v5625
    %v5726 = vpop.permute.xlu0 %5725
    %5727 = vset.pattern.permute.xlu0 5
    %5728 = vperm.xlu0 %5727, %v5627
    %v5729 = vpop.permute.xlu0 %5728
    %5730 = vset.pattern.permute.xlu0 5
    %5731 = vperm.xlu0 %5730, %v5629
    %v5732 = vpop.permute.xlu0 %5731
    %5733 = vset.pattern.permute.xlu0 5
    %5734 = vperm.xlu0 %5733, %v5631
    %v5735 = vpop.permute.xlu0 %5734
    %5736 = vset.pattern.permute.xlu0 5
    %5737 = vperm.xlu0 %5736, %v5633
    %v5738 = vpop.permute.xlu0 %5737
    %5739 = vset.pattern.permute.xlu0 5
    %5740 = vperm.xlu0 %5739, %v5635
    %v5741 = vpop.permute.xlu0 %5740
    %5742 = vset.pattern.permute.xlu0 5
    %5743 = vperm.xlu0 %5742, %v5637
    %v5744 = vpop.permute.xlu0 %5743
    %5745 = vset.pattern.permute.xlu0 5
    %5746 = vperm.xlu0 %5745, %v5639
    %v5747 = vpop.permute.xlu0 %5746
    %5748 = vset.pattern.permute.xlu0 5
    %5749 = vperm.xlu0 %5748, %v5641
    %v5750 = vpop.permute.xlu0 %5749
    %5751 = vset.pattern.permute.xlu0 5
    %5752 = vperm.xlu0 %5751, %v5643
    %v5753 = vpop.permute.xlu0 %5752
    %5754 = vset.pattern.permute.xlu0 5
    %5755 = vperm.xlu0 %5754, %v5645
    %v5756 = vpop.permute.xlu0 %5755
    %5757 = vset.pattern.permute.xlu0 5
    %5758 = vperm.xlu0 %5757, %v5647
    %v5759 = vpop.permute.xlu0 %5758
    %5760 = vset.pattern.permute.xlu0 5
    %5761 = vperm.xlu0 %5760, %v5649
    %v5762 = vpop.permute.xlu0 %5761
    %5763 = vset.pattern.permute.xlu0 5
    %5764 = vperm.xlu0 %5763, %v5651
    %v5765 = vpop.permute.xlu0 %5764
    %5766 = vset.pattern.permute.xlu0 5
    %5767 = vperm.xlu0 %5766, %v5653
    %v5768 = vpop.permute.xlu0 %5767
    %5769 = vset.pattern.permute.xlu0 5
    %5770 = vperm.xlu0 %5769, %v5655
    %v5771 = vpop.permute.xlu0 %5770
    %5772 = vset.pattern.permute.xlu0 5
    %5773 = vperm.xlu0 %5772, %v5657
    %v5774 = vpop.permute.xlu0 %5773
    %5775 = vset.pattern.permute.xlu0 5
    %5776 = vperm.xlu0 %5775, %v5659
    %v5777 = vpop.permute.xlu0 %5776
    %5778 = vset.pattern.permute.xlu0 5
    %5779 = vperm.xlu0 %5778, %v5661
    %v5780 = vpop.permute.xlu0 %5779
    %5781 = vset.pattern.permute.xlu0 5
    %5782 = vperm.xlu0 %5781, %v5663
    %v5783 = vpop.permute.xlu0 %5782
    %5784 = vset.pattern.permute.xlu0 5
    %5785 = vperm.xlu0 %5784, %v5665
    %v5786 = vpop.permute.xlu0 %5785
    %5787 = vset.pattern.permute.xlu0 5
    %5788 = vperm.xlu0 %5787, %v5667
    %v5789 = vpop.permute.xlu0 %5788
    %5790 = vset.pattern.permute.xlu0 5
    %5791 = vperm.xlu0 %5790, %v5669
    %v5792 = vpop.permute.xlu0 %5791
    %5793 = vset.pattern.permute.xlu0 5
    %5794 = vperm.xlu0 %5793, %v5671
    %v5795 = vpop.permute.xlu0 %5794
    %5796 = vset.pattern.permute.xlu0 5
    %5797 = vperm.xlu0 %5796, %v5673
    %v5798 = vpop.permute.xlu0 %5797
    %5799 = vset.pattern.permute.xlu0 5
    %5800 = vperm.xlu0 %5799, %v5675
    %v5801 = vpop.permute.xlu0 %5800
    %5802 = vset.pattern.permute.xlu0 5
    %5803 = vperm.xlu0 %5802, %v5677
    %v5804 = vpop.permute.xlu0 %5803
    %5805 = vset.pattern.permute.xlu0 5
    %5806 = vperm.xlu0 %5805, %v5679
    %v5807 = vpop.permute.xlu0 %5806
    %v5808 = vlaneseq
    %v5809 = vshrl.u32 %v5808, 7
    %v5810 = vsub.s32 %v1065, %v5809
    %v5811 = vrot.slane %v5714, %v5810
    %v5812 = vlaneseq
    %v5813 = vshrl.u32 %v5812, 7
    %v5814 = vsub.s32 %v1070, %v5813
    %v5815 = vrot.slane %v5717, %v5814
    %v5816 = vsel %vm1075, %v5815, %v5811
    %v5817 = vlaneseq
    %v5818 = vshrl.u32 %v5817, 7
    %v5819 = vsub.s32 %v1065, %v5818
    %v5820 = vrot.slane %v5720, %v5819
    %v5821 = vlaneseq
    %v5822 = vshrl.u32 %v5821, 7
    %v5823 = vsub.s32 %v1070, %v5822
    %v5824 = vrot.slane %v5723, %v5823
    %v5825 = vsel %vm1075, %v5824, %v5820
    %v5826 = vlaneseq
    %v5827 = vshrl.u32 %v5826, 7
    %v5828 = vsub.s32 %v1065, %v5827
    %v5829 = vrot.slane %v5726, %v5828
    %v5830 = vlaneseq
    %v5831 = vshrl.u32 %v5830, 7
    %v5832 = vsub.s32 %v1070, %v5831
    %v5833 = vrot.slane %v5729, %v5832
    %v5834 = vsel %vm1075, %v5833, %v5829
    %v5835 = vlaneseq
    %v5836 = vshrl.u32 %v5835, 7
    %v5837 = vsub.s32 %v1065, %v5836
    %v5838 = vrot.slane %v5732, %v5837
    %v5839 = vlaneseq
    %v5840 = vshrl.u32 %v5839, 7
    %v5841 = vsub.s32 %v1070, %v5840
    %v5842 = vrot.slane %v5735, %v5841
    %v5843 = vsel %vm1075, %v5842, %v5838
    %v5844 = vlaneseq
    %v5845 = vshrl.u32 %v5844, 7
    %v5846 = vsub.s32 %v1065, %v5845
    %v5847 = vrot.slane %v5738, %v5846
    %v5848 = vlaneseq
    %v5849 = vshrl.u32 %v5848, 7
    %v5850 = vsub.s32 %v1070, %v5849
    %v5851 = vrot.slane %v5741, %v5850
    %v5852 = vsel %vm1075, %v5851, %v5847
    %v5853 = vlaneseq
    %v5854 = vshrl.u32 %v5853, 7
    %v5855 = vsub.s32 %v1065, %v5854
    %v5856 = vrot.slane %v5744, %v5855
    %v5857 = vlaneseq
    %v5858 = vshrl.u32 %v5857, 7
    %v5859 = vsub.s32 %v1070, %v5858
    %v5860 = vrot.slane %v5747, %v5859
    %v5861 = vsel %vm1075, %v5860, %v5856
    %v5862 = vlaneseq
    %v5863 = vshrl.u32 %v5862, 7
    %v5864 = vsub.s32 %v1065, %v5863
    %v5865 = vrot.slane %v5750, %v5864
    %v5866 = vlaneseq
    %v5867 = vshrl.u32 %v5866, 7
    %v5868 = vsub.s32 %v1070, %v5867
    %v5869 = vrot.slane %v5753, %v5868
    %v5870 = vsel %vm1075, %v5869, %v5865
    %v5871 = vlaneseq
    %v5872 = vshrl.u32 %v5871, 7
    %v5873 = vsub.s32 %v1065, %v5872
    %v5874 = vrot.slane %v5756, %v5873
    %v5875 = vlaneseq
    %v5876 = vshrl.u32 %v5875, 7
    %v5877 = vsub.s32 %v1070, %v5876
    %v5878 = vrot.slane %v5759, %v5877
    %v5879 = vsel %vm1075, %v5878, %v5874
    %v5880 = vlaneseq
    %v5881 = vshrl.u32 %v5880, 7
    %v5882 = vsub.s32 %v1065, %v5881
    %v5883 = vrot.slane %v5762, %v5882
    %v5884 = vlaneseq
    %v5885 = vshrl.u32 %v5884, 7
    %v5886 = vsub.s32 %v1070, %v5885
    %v5887 = vrot.slane %v5765, %v5886
    %v5888 = vsel %vm1075, %v5887, %v5883
    %v5889 = vlaneseq
    %v5890 = vshrl.u32 %v5889, 7
    %v5891 = vsub.s32 %v1065, %v5890
    %v5892 = vrot.slane %v5768, %v5891
    %v5893 = vlaneseq
    %v5894 = vshrl.u32 %v5893, 7
    %v5895 = vsub.s32 %v1070, %v5894
    %v5896 = vrot.slane %v5771, %v5895
    %v5897 = vsel %vm1075, %v5896, %v5892
    %v5898 = vlaneseq
    %v5899 = vshrl.u32 %v5898, 7
    %v5900 = vsub.s32 %v1065, %v5899
    %v5901 = vrot.slane %v5774, %v5900
    %v5902 = vlaneseq
    %v5903 = vshrl.u32 %v5902, 7
    %v5904 = vsub.s32 %v1070, %v5903
    %v5905 = vrot.slane %v5777, %v5904
    %v5906 = vsel %vm1075, %v5905, %v5901
    %v5907 = vlaneseq
    %v5908 = vshrl.u32 %v5907, 7
    %v5909 = vsub.s32 %v1065, %v5908
    %v5910 = vrot.slane %v5780, %v5909
    %v5911 = vlaneseq
    %v5912 = vshrl.u32 %v5911, 7
    %v5913 = vsub.s32 %v1070, %v5912
    %v5914 = vrot.slane %v5783, %v5913
    %v5915 = vsel %vm1075, %v5914, %v5910
    %v5916 = vlaneseq
    %v5917 = vshrl.u32 %v5916, 7
    %v5918 = vsub.s32 %v1065, %v5917
    %v5919 = vrot.slane %v5786, %v5918
    %v5920 = vlaneseq
    %v5921 = vshrl.u32 %v5920, 7
    %v5922 = vsub.s32 %v1070, %v5921
    %v5923 = vrot.slane %v5789, %v5922
    %v5924 = vsel %vm1075, %v5923, %v5919
    %v5925 = vlaneseq
    %v5926 = vshrl.u32 %v5925, 7
    %v5927 = vsub.s32 %v1065, %v5926
    %v5928 = vrot.slane %v5792, %v5927
    %v5929 = vlaneseq
    %v5930 = vshrl.u32 %v5929, 7
    %v5931 = vsub.s32 %v1070, %v5930
    %v5932 = vrot.slane %v5795, %v5931
    %v5933 = vsel %vm1075, %v5932, %v5928
    %v5934 = vlaneseq
    %v5935 = vshrl.u32 %v5934, 7
    %v5936 = vsub.s32 %v1065, %v5935
    %v5937 = vrot.slane %v5798, %v5936
    %v5938 = vlaneseq
    %v5939 = vshrl.u32 %v5938, 7
    %v5940 = vsub.s32 %v1070, %v5939
    %v5941 = vrot.slane %v5801, %v5940
    %v5942 = vsel %vm1075, %v5941, %v5937
    %v5943 = vlaneseq
    %v5944 = vshrl.u32 %v5943, 7
    %v5945 = vsub.s32 %v1065, %v5944
    %v5946 = vrot.slane %v5804, %v5945
    %v5947 = vlaneseq
    %v5948 = vshrl.u32 %v5947, 7
    %v5949 = vsub.s32 %v1070, %v5948
    %v5950 = vrot.slane %v5807, %v5949
    %v5951 = vsel %vm1075, %v5950, %v5946
    %v5952 = vsel %vm1212, %v5825, %v5816
    %v5953 = vsel %vm1214, %v5834, %v5952
    %v5954 = vsel %vm1216, %v5843, %v5953
    %v5955 = vsel %vm1218, %v5852, %v5954
    %v5956 = vsel %vm1220, %v5861, %v5955
    %v5957 = vsel %vm1222, %v5870, %v5956
    %v5958 = vsel %vm1224, %v5879, %v5957
    %v5959 = vsel %vm1212, %v5897, %v5888
    %v5960 = vsel %vm1214, %v5906, %v5959
    %v5961 = vsel %vm1216, %v5915, %v5960
    %v5962 = vsel %vm1218, %v5924, %v5961
    %v5963 = vsel %vm1220, %v5933, %v5962
    %v5964 = vsel %vm1222, %v5942, %v5963
    %v5965 = vsel %vm1224, %v5951, %v5964
    %v5968 = vsel %vm1235, %v5958, 0.0
    %5969 = vadd.xlane.f32.xlu0 %v5968
    %v5970 = vpop.xlane.xlu0 %5969
    %v5971 = vsel %vm1235, %v5965, 0.0
    %5972 = vadd.xlane.f32.xlu0 %v5971
    %v5973 = vpop.xlane.xlu0 %5972
    %v5974 = vrcp.pop %v5970
    %v5975 = vmul.f32 1.0, %v5974
    %v5976 = vrcp.pop %v5973
    %v5977 = vmul.f32 1.0, %v5976
    %v5980 = vlaneseq
    %v5981 = vshrl.u32 %v5980, 7
    %v5982 = vsub.s32 0, %v5981
    %v5983 = vrot.slane %v5975, %v5982
    %v5984 = vlaneseq
    %v5985 = vshrl.u32 %v5984, 7
    %v5986 = vsub.s32 1, %v5985
    %v5987 = vrot.slane %v5975, %v5986
    %v5988 = vlaneseq
    %v5989 = vshrl.u32 %v5988, 7
    %v5990 = vsub.s32 2, %v5989
    %v5991 = vrot.slane %v5975, %v5990
    %v5992 = vlaneseq
    %v5993 = vshrl.u32 %v5992, 7
    %v5994 = vsub.s32 3, %v5993
    %v5995 = vrot.slane %v5975, %v5994
    %v5996 = vlaneseq
    %v5997 = vshrl.u32 %v5996, 7
    %v5998 = vsub.s32 4, %v5997
    %v5999 = vrot.slane %v5975, %v5998
    %v6000 = vlaneseq
    %v6001 = vshrl.u32 %v6000, 7
    %v6002 = vsub.s32 5, %v6001
    %v6003 = vrot.slane %v5975, %v6002
    %v6004 = vlaneseq
    %v6005 = vshrl.u32 %v6004, 7
    %v6006 = vsub.s32 6, %v6005
    %v6007 = vrot.slane %v5975, %v6006
    %v6008 = vlaneseq
    %v6009 = vshrl.u32 %v6008, 7
    %v6010 = vsub.s32 7, %v6009
    %v6011 = vrot.slane %v5975, %v6010
    %v6012 = vlaneseq
    %v6013 = vshrl.u32 %v6012, 7
    %v6014 = vsub.s32 0, %v6013
    %v6015 = vrot.slane %v5977, %v6014
    %v6016 = vlaneseq
    %v6017 = vshrl.u32 %v6016, 7
    %v6018 = vsub.s32 1, %v6017
    %v6019 = vrot.slane %v5977, %v6018
    %v6020 = vlaneseq
    %v6021 = vshrl.u32 %v6020, 7
    %v6022 = vsub.s32 2, %v6021
    %v6023 = vrot.slane %v5977, %v6022
    %v6024 = vlaneseq
    %v6025 = vshrl.u32 %v6024, 7
    %v6026 = vsub.s32 3, %v6025
    %v6027 = vrot.slane %v5977, %v6026
    %v6028 = vlaneseq
    %v6029 = vshrl.u32 %v6028, 7
    %v6030 = vsub.s32 4, %v6029
    %v6031 = vrot.slane %v5977, %v6030
    %v6032 = vlaneseq
    %v6033 = vshrl.u32 %v6032, 7
    %v6034 = vsub.s32 5, %v6033
    %v6035 = vrot.slane %v5977, %v6034
    %v6036 = vlaneseq
    %v6037 = vshrl.u32 %v6036, 7
    %v6038 = vsub.s32 6, %v6037
    %v6039 = vrot.slane %v5977, %v6038
    %v6040 = vlaneseq
    %v6041 = vshrl.u32 %v6040, 7
    %v6042 = vsub.s32 7, %v6041
    %v6043 = vrot.slane %v5977, %v6042
    %v6060 = vmul.f32 %v5617, %v5983
    %v6061 = vmul.f32 %v5619, %v5983
    %v6062 = vmul.f32 %v5621, %v5987
    %v6063 = vmul.f32 %v5623, %v5987
    %v6064 = vmul.f32 %v5625, %v5991
    %v6065 = vmul.f32 %v5627, %v5991
    %v6066 = vmul.f32 %v5629, %v5995
    %v6067 = vmul.f32 %v5631, %v5995
    %v6068 = vmul.f32 %v5633, %v5999
    %v6069 = vmul.f32 %v5635, %v5999
    %v6070 = vmul.f32 %v5637, %v6003
    %v6071 = vmul.f32 %v5639, %v6003
    %v6072 = vmul.f32 %v5641, %v6007
    %v6073 = vmul.f32 %v5643, %v6007
    %v6074 = vmul.f32 %v5645, %v6011
    %v6075 = vmul.f32 %v5647, %v6011
    %v6076 = vmul.f32 %v5649, %v6015
    %v6077 = vmul.f32 %v5651, %v6015
    %v6078 = vmul.f32 %v5653, %v6019
    %v6079 = vmul.f32 %v5655, %v6019
    %v6080 = vmul.f32 %v5657, %v6023
    %v6081 = vmul.f32 %v5659, %v6023
    %v6082 = vmul.f32 %v5661, %v6027
    %v6083 = vmul.f32 %v5663, %v6027
    %v6084 = vmul.f32 %v5665, %v6031
    %v6085 = vmul.f32 %v5667, %v6031
    %v6086 = vmul.f32 %v5669, %v6035
    %v6087 = vmul.f32 %v5671, %v6035
    %v6088 = vmul.f32 %v5673, %v6039
    %v6089 = vmul.f32 %v5675, %v6039
    %v6090 = vmul.f32 %v5677, %v6043
    %v6091 = vmul.f32 %v5679, %v6043
    %6092 = vset.pattern.permute.xlu0 6
    %6093 = vperm.xlu0 %6092, %v904
    %v6094 = vpop.permute.xlu0 %6093
    %6095 = vset.pattern.permute.xlu0 6
    %6096 = vperm.xlu0 %6095, %v905
    %v6097 = vpop.permute.xlu0 %6096
    %6098 = vset.pattern.permute.xlu0 6
    %6099 = vperm.xlu0 %6098, %v906
    %v6100 = vpop.permute.xlu0 %6099
    %6101 = vset.pattern.permute.xlu0 6
    %6102 = vperm.xlu0 %6101, %v907
    %v6103 = vpop.permute.xlu0 %6102
    %6104 = vset.pattern.permute.xlu0 6
    %6105 = vperm.xlu0 %6104, %v908
    %v6106 = vpop.permute.xlu0 %6105
    %6107 = vset.pattern.permute.xlu0 6
    %6108 = vperm.xlu0 %6107, %v909
    %v6109 = vpop.permute.xlu0 %6108
    %6110 = vset.pattern.permute.xlu0 6
    %6111 = vperm.xlu0 %6110, %v910
    %v6112 = vpop.permute.xlu0 %6111
    %6113 = vset.pattern.permute.xlu0 6
    %6114 = vperm.xlu0 %6113, %v911
    %v6115 = vpop.permute.xlu0 %6114
    %6116 = vset.pattern.permute.xlu0 6
    %6117 = vperm.xlu0 %6116, %v912
    %v6118 = vpop.permute.xlu0 %6117
    %6119 = vset.pattern.permute.xlu0 6
    %6120 = vperm.xlu0 %6119, %v913
    %v6121 = vpop.permute.xlu0 %6120
    %6122 = vset.pattern.permute.xlu0 6
    %6123 = vperm.xlu0 %6122, %v914
    %v6124 = vpop.permute.xlu0 %6123
    %6125 = vset.pattern.permute.xlu0 6
    %6126 = vperm.xlu0 %6125, %v915
    %v6127 = vpop.permute.xlu0 %6126
    %6128 = vset.pattern.permute.xlu0 6
    %6129 = vperm.xlu0 %6128, %v916
    %v6130 = vpop.permute.xlu0 %6129
    %6131 = vset.pattern.permute.xlu0 6
    %6132 = vperm.xlu0 %6131, %v917
    %v6133 = vpop.permute.xlu0 %6132
    %6134 = vset.pattern.permute.xlu0 6
    %6135 = vperm.xlu0 %6134, %v918
    %v6136 = vpop.permute.xlu0 %6135
    %6137 = vset.pattern.permute.xlu0 6
    %6138 = vperm.xlu0 %6137, %v919
    %v6139 = vpop.permute.xlu0 %6138
    %6140 = vset.pattern.permute.xlu0 6
    %6141 = vperm.xlu0 %6140, %v920
    %v6142 = vpop.permute.xlu0 %6141
    %6143 = vset.pattern.permute.xlu0 6
    %6144 = vperm.xlu0 %6143, %v921
    %v6145 = vpop.permute.xlu0 %6144
    %6146 = vset.pattern.permute.xlu0 6
    %6147 = vperm.xlu0 %6146, %v922
    %v6148 = vpop.permute.xlu0 %6147
    %6149 = vset.pattern.permute.xlu0 6
    %6150 = vperm.xlu0 %6149, %v923
    %v6151 = vpop.permute.xlu0 %6150
    %6152 = vset.pattern.permute.xlu0 6
    %6153 = vperm.xlu0 %6152, %v924
    %v6154 = vpop.permute.xlu0 %6153
    %6155 = vset.pattern.permute.xlu0 6
    %6156 = vperm.xlu0 %6155, %v925
    %v6157 = vpop.permute.xlu0 %6156
    %6158 = vset.pattern.permute.xlu0 6
    %6159 = vperm.xlu0 %6158, %v926
    %v6160 = vpop.permute.xlu0 %6159
    %6161 = vset.pattern.permute.xlu0 6
    %6162 = vperm.xlu0 %6161, %v927
    %v6163 = vpop.permute.xlu0 %6162
    %6164 = vset.pattern.permute.xlu0 6
    %6165 = vperm.xlu0 %6164, %v928
    %v6166 = vpop.permute.xlu0 %6165
    %6167 = vset.pattern.permute.xlu0 6
    %6168 = vperm.xlu0 %6167, %v929
    %v6169 = vpop.permute.xlu0 %6168
    %6170 = vset.pattern.permute.xlu0 6
    %6171 = vperm.xlu0 %6170, %v930
    %v6172 = vpop.permute.xlu0 %6171
    %6173 = vset.pattern.permute.xlu0 6
    %6174 = vperm.xlu0 %6173, %v931
    %v6175 = vpop.permute.xlu0 %6174
    %6176 = vset.pattern.permute.xlu0 6
    %6177 = vperm.xlu0 %6176, %v932
    %v6178 = vpop.permute.xlu0 %6177
    %6179 = vset.pattern.permute.xlu0 6
    %6180 = vperm.xlu0 %6179, %v933
    %v6181 = vpop.permute.xlu0 %6180
    %6182 = vset.pattern.permute.xlu0 6
    %6183 = vperm.xlu0 %6182, %v934
    %v6184 = vpop.permute.xlu0 %6183
    %6185 = vset.pattern.permute.xlu0 6
    %6186 = vperm.xlu0 %6185, %v935
    %v6187 = vpop.permute.xlu0 %6186
    %v6188 = vlaneseq
    %v6189 = vshrl.u32 %v6188, 7
    %v6190 = vsub.s32 %v1065, %v6189
    %v6191 = vrot.slane %v6094, %v6190
    %v6192 = vlaneseq
    %v6193 = vshrl.u32 %v6192, 7
    %v6194 = vsub.s32 %v1070, %v6193
    %v6195 = vrot.slane %v6097, %v6194
    %v6196 = vsel %vm1075, %v6195, %v6191
    %v6197 = vlaneseq
    %v6198 = vshrl.u32 %v6197, 7
    %v6199 = vsub.s32 %v1065, %v6198
    %v6200 = vrot.slane %v6100, %v6199
    %v6201 = vlaneseq
    %v6202 = vshrl.u32 %v6201, 7
    %v6203 = vsub.s32 %v1070, %v6202
    %v6204 = vrot.slane %v6103, %v6203
    %v6205 = vsel %vm1075, %v6204, %v6200
    %v6206 = vlaneseq
    %v6207 = vshrl.u32 %v6206, 7
    %v6208 = vsub.s32 %v1065, %v6207
    %v6209 = vrot.slane %v6106, %v6208
    %v6210 = vlaneseq
    %v6211 = vshrl.u32 %v6210, 7
    %v6212 = vsub.s32 %v1070, %v6211
    %v6213 = vrot.slane %v6109, %v6212
    %v6214 = vsel %vm1075, %v6213, %v6209
    %v6215 = vlaneseq
    %v6216 = vshrl.u32 %v6215, 7
    %v6217 = vsub.s32 %v1065, %v6216
    %v6218 = vrot.slane %v6112, %v6217
    %v6219 = vlaneseq
    %v6220 = vshrl.u32 %v6219, 7
    %v6221 = vsub.s32 %v1070, %v6220
    %v6222 = vrot.slane %v6115, %v6221
    %v6223 = vsel %vm1075, %v6222, %v6218
    %v6224 = vlaneseq
    %v6225 = vshrl.u32 %v6224, 7
    %v6226 = vsub.s32 %v1065, %v6225
    %v6227 = vrot.slane %v6118, %v6226
    %v6228 = vlaneseq
    %v6229 = vshrl.u32 %v6228, 7
    %v6230 = vsub.s32 %v1070, %v6229
    %v6231 = vrot.slane %v6121, %v6230
    %v6232 = vsel %vm1075, %v6231, %v6227
    %v6233 = vlaneseq
    %v6234 = vshrl.u32 %v6233, 7
    %v6235 = vsub.s32 %v1065, %v6234
    %v6236 = vrot.slane %v6124, %v6235
    %v6237 = vlaneseq
    %v6238 = vshrl.u32 %v6237, 7
    %v6239 = vsub.s32 %v1070, %v6238
    %v6240 = vrot.slane %v6127, %v6239
    %v6241 = vsel %vm1075, %v6240, %v6236
    %v6242 = vlaneseq
    %v6243 = vshrl.u32 %v6242, 7
    %v6244 = vsub.s32 %v1065, %v6243
    %v6245 = vrot.slane %v6130, %v6244
    %v6246 = vlaneseq
    %v6247 = vshrl.u32 %v6246, 7
    %v6248 = vsub.s32 %v1070, %v6247
    %v6249 = vrot.slane %v6133, %v6248
    %v6250 = vsel %vm1075, %v6249, %v6245
    %v6251 = vlaneseq
    %v6252 = vshrl.u32 %v6251, 7
    %v6253 = vsub.s32 %v1065, %v6252
    %v6254 = vrot.slane %v6136, %v6253
    %v6255 = vlaneseq
    %v6256 = vshrl.u32 %v6255, 7
    %v6257 = vsub.s32 %v1070, %v6256
    %v6258 = vrot.slane %v6139, %v6257
    %v6259 = vsel %vm1075, %v6258, %v6254
    %v6260 = vlaneseq
    %v6261 = vshrl.u32 %v6260, 7
    %v6262 = vsub.s32 %v1065, %v6261
    %v6263 = vrot.slane %v6142, %v6262
    %v6264 = vlaneseq
    %v6265 = vshrl.u32 %v6264, 7
    %v6266 = vsub.s32 %v1070, %v6265
    %v6267 = vrot.slane %v6145, %v6266
    %v6268 = vsel %vm1075, %v6267, %v6263
    %v6269 = vlaneseq
    %v6270 = vshrl.u32 %v6269, 7
    %v6271 = vsub.s32 %v1065, %v6270
    %v6272 = vrot.slane %v6148, %v6271
    %v6273 = vlaneseq
    %v6274 = vshrl.u32 %v6273, 7
    %v6275 = vsub.s32 %v1070, %v6274
    %v6276 = vrot.slane %v6151, %v6275
    %v6277 = vsel %vm1075, %v6276, %v6272
    %v6278 = vlaneseq
    %v6279 = vshrl.u32 %v6278, 7
    %v6280 = vsub.s32 %v1065, %v6279
    %v6281 = vrot.slane %v6154, %v6280
    %v6282 = vlaneseq
    %v6283 = vshrl.u32 %v6282, 7
    %v6284 = vsub.s32 %v1070, %v6283
    %v6285 = vrot.slane %v6157, %v6284
    %v6286 = vsel %vm1075, %v6285, %v6281
    %v6287 = vlaneseq
    %v6288 = vshrl.u32 %v6287, 7
    %v6289 = vsub.s32 %v1065, %v6288
    %v6290 = vrot.slane %v6160, %v6289
    %v6291 = vlaneseq
    %v6292 = vshrl.u32 %v6291, 7
    %v6293 = vsub.s32 %v1070, %v6292
    %v6294 = vrot.slane %v6163, %v6293
    %v6295 = vsel %vm1075, %v6294, %v6290
    %v6296 = vlaneseq
    %v6297 = vshrl.u32 %v6296, 7
    %v6298 = vsub.s32 %v1065, %v6297
    %v6299 = vrot.slane %v6166, %v6298
    %v6300 = vlaneseq
    %v6301 = vshrl.u32 %v6300, 7
    %v6302 = vsub.s32 %v1070, %v6301
    %v6303 = vrot.slane %v6169, %v6302
    %v6304 = vsel %vm1075, %v6303, %v6299
    %v6305 = vlaneseq
    %v6306 = vshrl.u32 %v6305, 7
    %v6307 = vsub.s32 %v1065, %v6306
    %v6308 = vrot.slane %v6172, %v6307
    %v6309 = vlaneseq
    %v6310 = vshrl.u32 %v6309, 7
    %v6311 = vsub.s32 %v1070, %v6310
    %v6312 = vrot.slane %v6175, %v6311
    %v6313 = vsel %vm1075, %v6312, %v6308
    %v6314 = vlaneseq
    %v6315 = vshrl.u32 %v6314, 7
    %v6316 = vsub.s32 %v1065, %v6315
    %v6317 = vrot.slane %v6178, %v6316
    %v6318 = vlaneseq
    %v6319 = vshrl.u32 %v6318, 7
    %v6320 = vsub.s32 %v1070, %v6319
    %v6321 = vrot.slane %v6181, %v6320
    %v6322 = vsel %vm1075, %v6321, %v6317
    %v6323 = vlaneseq
    %v6324 = vshrl.u32 %v6323, 7
    %v6325 = vsub.s32 %v1065, %v6324
    %v6326 = vrot.slane %v6184, %v6325
    %v6327 = vlaneseq
    %v6328 = vshrl.u32 %v6327, 7
    %v6329 = vsub.s32 %v1070, %v6328
    %v6330 = vrot.slane %v6187, %v6329
    %v6331 = vsel %vm1075, %v6330, %v6326
    %v6332 = vsel %vm1212, %v6205, %v6196
    %v6333 = vsel %vm1214, %v6214, %v6332
    %v6334 = vsel %vm1216, %v6223, %v6333
    %v6335 = vsel %vm1218, %v6232, %v6334
    %v6336 = vsel %vm1220, %v6241, %v6335
    %v6337 = vsel %vm1222, %v6250, %v6336
    %v6338 = vsel %vm1224, %v6259, %v6337
    %v6339 = vsel %vm1212, %v6277, %v6268
    %v6340 = vsel %vm1214, %v6286, %v6339
    %v6341 = vsel %vm1216, %v6295, %v6340
    %v6342 = vsel %vm1218, %v6304, %v6341
    %v6343 = vsel %vm1220, %v6313, %v6342
    %v6344 = vsel %vm1222, %v6322, %v6343
    %v6345 = vsel %vm1224, %v6331, %v6344
    %v6348 = vsel %vm1235, %v6338, -inf
    %6349 = vmax.xlane.f32.xlu0 %v6348
    %v6350 = vpop.xlane.xlu0 %6349
    %v6351 = vsel %vm1235, %v6345, -inf
    %6352 = vmax.xlane.f32.xlu0 %v6351
    %v6353 = vpop.xlane.xlu0 %6352
    %v6356 = vlaneseq
    %v6357 = vshrl.u32 %v6356, 7
    %v6358 = vsub.s32 0, %v6357
    %v6359 = vrot.slane %v6350, %v6358
    %v6360 = vlaneseq
    %v6361 = vshrl.u32 %v6360, 7
    %v6362 = vsub.s32 1, %v6361
    %v6363 = vrot.slane %v6350, %v6362
    %v6364 = vlaneseq
    %v6365 = vshrl.u32 %v6364, 7
    %v6366 = vsub.s32 2, %v6365
    %v6367 = vrot.slane %v6350, %v6366
    %v6368 = vlaneseq
    %v6369 = vshrl.u32 %v6368, 7
    %v6370 = vsub.s32 3, %v6369
    %v6371 = vrot.slane %v6350, %v6370
    %v6372 = vlaneseq
    %v6373 = vshrl.u32 %v6372, 7
    %v6374 = vsub.s32 4, %v6373
    %v6375 = vrot.slane %v6350, %v6374
    %v6376 = vlaneseq
    %v6377 = vshrl.u32 %v6376, 7
    %v6378 = vsub.s32 5, %v6377
    %v6379 = vrot.slane %v6350, %v6378
    %v6380 = vlaneseq
    %v6381 = vshrl.u32 %v6380, 7
    %v6382 = vsub.s32 6, %v6381
    %v6383 = vrot.slane %v6350, %v6382
    %v6384 = vlaneseq
    %v6385 = vshrl.u32 %v6384, 7
    %v6386 = vsub.s32 7, %v6385
    %v6387 = vrot.slane %v6350, %v6386
    %v6388 = vlaneseq
    %v6389 = vshrl.u32 %v6388, 7
    %v6390 = vsub.s32 0, %v6389
    %v6391 = vrot.slane %v6353, %v6390
    %v6392 = vlaneseq
    %v6393 = vshrl.u32 %v6392, 7
    %v6394 = vsub.s32 1, %v6393
    %v6395 = vrot.slane %v6353, %v6394
    %v6396 = vlaneseq
    %v6397 = vshrl.u32 %v6396, 7
    %v6398 = vsub.s32 2, %v6397
    %v6399 = vrot.slane %v6353, %v6398
    %v6400 = vlaneseq
    %v6401 = vshrl.u32 %v6400, 7
    %v6402 = vsub.s32 3, %v6401
    %v6403 = vrot.slane %v6353, %v6402
    %v6404 = vlaneseq
    %v6405 = vshrl.u32 %v6404, 7
    %v6406 = vsub.s32 4, %v6405
    %v6407 = vrot.slane %v6353, %v6406
    %v6408 = vlaneseq
    %v6409 = vshrl.u32 %v6408, 7
    %v6410 = vsub.s32 5, %v6409
    %v6411 = vrot.slane %v6353, %v6410
    %v6412 = vlaneseq
    %v6413 = vshrl.u32 %v6412, 7
    %v6414 = vsub.s32 6, %v6413
    %v6415 = vrot.slane %v6353, %v6414
    %v6416 = vlaneseq
    %v6417 = vshrl.u32 %v6416, 7
    %v6418 = vsub.s32 7, %v6417
    %v6419 = vrot.slane %v6353, %v6418
    %v6436 = vsub.f32 %v904, %v6359
    %v6437 = vsub.f32 %v905, %v6359
    %v6438 = vsub.f32 %v906, %v6363
    %v6439 = vsub.f32 %v907, %v6363
    %v6440 = vsub.f32 %v908, %v6367
    %v6441 = vsub.f32 %v909, %v6367
    %v6442 = vsub.f32 %v910, %v6371
    %v6443 = vsub.f32 %v911, %v6371
    %v6444 = vsub.f32 %v912, %v6375
    %v6445 = vsub.f32 %v913, %v6375
    %v6446 = vsub.f32 %v914, %v6379
    %v6447 = vsub.f32 %v915, %v6379
    %v6448 = vsub.f32 %v916, %v6383
    %v6449 = vsub.f32 %v917, %v6383
    %v6450 = vsub.f32 %v918, %v6387
    %v6451 = vsub.f32 %v919, %v6387
    %v6452 = vsub.f32 %v920, %v6391
    %v6453 = vsub.f32 %v921, %v6391
    %v6454 = vsub.f32 %v922, %v6395
    %v6455 = vsub.f32 %v923, %v6395
    %v6456 = vsub.f32 %v924, %v6399
    %v6457 = vsub.f32 %v925, %v6399
    %v6458 = vsub.f32 %v926, %v6403
    %v6459 = vsub.f32 %v927, %v6403
    %v6460 = vsub.f32 %v928, %v6407
    %v6461 = vsub.f32 %v929, %v6407
    %v6462 = vsub.f32 %v930, %v6411
    %v6463 = vsub.f32 %v931, %v6411
    %v6464 = vsub.f32 %v932, %v6415
    %v6465 = vsub.f32 %v933, %v6415
    %v6466 = vsub.f32 %v934, %v6419
    %v6467 = vsub.f32 %v935, %v6419
    %v6468 = vmul.f32 %v6436, 1.442695
    %v6469 = vpow.pop %v6468
    %v6470 = vmul.f32 %v6437, 1.442695
    %v6471 = vpow.pop %v6470
    %v6472 = vmul.f32 %v6438, 1.442695
    %v6473 = vpow.pop %v6472
    %v6474 = vmul.f32 %v6439, 1.442695
    %v6475 = vpow.pop %v6474
    %v6476 = vmul.f32 %v6440, 1.442695
    %v6477 = vpow.pop %v6476
    %v6478 = vmul.f32 %v6441, 1.442695
    %v6479 = vpow.pop %v6478
    %v6480 = vmul.f32 %v6442, 1.442695
    %v6481 = vpow.pop %v6480
    %v6482 = vmul.f32 %v6443, 1.442695
    %v6483 = vpow.pop %v6482
    %v6484 = vmul.f32 %v6444, 1.442695
    %v6485 = vpow.pop %v6484
    %v6486 = vmul.f32 %v6445, 1.442695
    %v6487 = vpow.pop %v6486
    %v6488 = vmul.f32 %v6446, 1.442695
    %v6489 = vpow.pop %v6488
    %v6490 = vmul.f32 %v6447, 1.442695
    %v6491 = vpow.pop %v6490
    %v6492 = vmul.f32 %v6448, 1.442695
    %v6493 = vpow.pop %v6492
    %v6494 = vmul.f32 %v6449, 1.442695
    %v6495 = vpow.pop %v6494
    %v6496 = vmul.f32 %v6450, 1.442695
    %v6497 = vpow.pop %v6496
    %v6498 = vmul.f32 %v6451, 1.442695
    %v6499 = vpow.pop %v6498
    %v6500 = vmul.f32 %v6452, 1.442695
    %v6501 = vpow.pop %v6500
    %v6502 = vmul.f32 %v6453, 1.442695
    %v6503 = vpow.pop %v6502
    %v6504 = vmul.f32 %v6454, 1.442695
    %v6505 = vpow.pop %v6504
    %v6506 = vmul.f32 %v6455, 1.442695
    %v6507 = vpow.pop %v6506
    %v6508 = vmul.f32 %v6456, 1.442695
    %v6509 = vpow.pop %v6508
    %v6510 = vmul.f32 %v6457, 1.442695
    %v6511 = vpow.pop %v6510
    %v6512 = vmul.f32 %v6458, 1.442695
    %v6513 = vpow.pop %v6512
    %v6514 = vmul.f32 %v6459, 1.442695
    %v6515 = vpow.pop %v6514
    %v6516 = vmul.f32 %v6460, 1.442695
    %v6517 = vpow.pop %v6516
    %v6518 = vmul.f32 %v6461, 1.442695
    %v6519 = vpow.pop %v6518
    %v6520 = vmul.f32 %v6462, 1.442695
    %v6521 = vpow.pop %v6520
    %v6522 = vmul.f32 %v6463, 1.442695
    %v6523 = vpow.pop %v6522
    %v6524 = vmul.f32 %v6464, 1.442695
    %v6525 = vpow.pop %v6524
    %v6526 = vmul.f32 %v6465, 1.442695
    %v6527 = vpow.pop %v6526
    %v6528 = vmul.f32 %v6466, 1.442695
    %v6529 = vpow.pop %v6528
    %v6530 = vmul.f32 %v6467, 1.442695
    %v6531 = vpow.pop %v6530
    %6564 = vset.pattern.permute.xlu0 6
    %6565 = vperm.xlu0 %6564, %v6469
    %v6566 = vpop.permute.xlu0 %6565
    %6567 = vset.pattern.permute.xlu0 6
    %6568 = vperm.xlu0 %6567, %v6471
    %v6569 = vpop.permute.xlu0 %6568
    %6570 = vset.pattern.permute.xlu0 6
    %6571 = vperm.xlu0 %6570, %v6473
    %v6572 = vpop.permute.xlu0 %6571
    %6573 = vset.pattern.permute.xlu0 6
    %6574 = vperm.xlu0 %6573, %v6475
    %v6575 = vpop.permute.xlu0 %6574
    %6576 = vset.pattern.permute.xlu0 6
    %6577 = vperm.xlu0 %6576, %v6477
    %v6578 = vpop.permute.xlu0 %6577
    %6579 = vset.pattern.permute.xlu0 6
    %6580 = vperm.xlu0 %6579, %v6479
    %v6581 = vpop.permute.xlu0 %6580
    %6582 = vset.pattern.permute.xlu0 6
    %6583 = vperm.xlu0 %6582, %v6481
    %v6584 = vpop.permute.xlu0 %6583
    %6585 = vset.pattern.permute.xlu0 6
    %6586 = vperm.xlu0 %6585, %v6483
    %v6587 = vpop.permute.xlu0 %6586
    %6588 = vset.pattern.permute.xlu0 6
    %6589 = vperm.xlu0 %6588, %v6485
    %v6590 = vpop.permute.xlu0 %6589
    %6591 = vset.pattern.permute.xlu0 6
    %6592 = vperm.xlu0 %6591, %v6487
    %v6593 = vpop.permute.xlu0 %6592
    %6594 = vset.pattern.permute.xlu0 6
    %6595 = vperm.xlu0 %6594, %v6489
    %v6596 = vpop.permute.xlu0 %6595
    %6597 = vset.pattern.permute.xlu0 6
    %6598 = vperm.xlu0 %6597, %v6491
    %v6599 = vpop.permute.xlu0 %6598
    %6600 = vset.pattern.permute.xlu0 6
    %6601 = vperm.xlu0 %6600, %v6493
    %v6602 = vpop.permute.xlu0 %6601
    %6603 = vset.pattern.permute.xlu0 6
    %6604 = vperm.xlu0 %6603, %v6495
    %v6605 = vpop.permute.xlu0 %6604
    %6606 = vset.pattern.permute.xlu0 6
    %6607 = vperm.xlu0 %6606, %v6497
    %v6608 = vpop.permute.xlu0 %6607
    %6609 = vset.pattern.permute.xlu0 6
    %6610 = vperm.xlu0 %6609, %v6499
    %v6611 = vpop.permute.xlu0 %6610
    %6612 = vset.pattern.permute.xlu0 6
    %6613 = vperm.xlu0 %6612, %v6501
    %v6614 = vpop.permute.xlu0 %6613
    %6615 = vset.pattern.permute.xlu0 6
    %6616 = vperm.xlu0 %6615, %v6503
    %v6617 = vpop.permute.xlu0 %6616
    %6618 = vset.pattern.permute.xlu0 6
    %6619 = vperm.xlu0 %6618, %v6505
    %v6620 = vpop.permute.xlu0 %6619
    %6621 = vset.pattern.permute.xlu0 6
    %6622 = vperm.xlu0 %6621, %v6507
    %v6623 = vpop.permute.xlu0 %6622
    %6624 = vset.pattern.permute.xlu0 6
    %6625 = vperm.xlu0 %6624, %v6509
    %v6626 = vpop.permute.xlu0 %6625
    %6627 = vset.pattern.permute.xlu0 6
    %6628 = vperm.xlu0 %6627, %v6511
    %v6629 = vpop.permute.xlu0 %6628
    %6630 = vset.pattern.permute.xlu0 6
    %6631 = vperm.xlu0 %6630, %v6513
    %v6632 = vpop.permute.xlu0 %6631
    %6633 = vset.pattern.permute.xlu0 6
    %6634 = vperm.xlu0 %6633, %v6515
    %v6635 = vpop.permute.xlu0 %6634
    %6636 = vset.pattern.permute.xlu0 6
    %6637 = vperm.xlu0 %6636, %v6517
    %v6638 = vpop.permute.xlu0 %6637
    %6639 = vset.pattern.permute.xlu0 6
    %6640 = vperm.xlu0 %6639, %v6519
    %v6641 = vpop.permute.xlu0 %6640
    %6642 = vset.pattern.permute.xlu0 6
    %6643 = vperm.xlu0 %6642, %v6521
    %v6644 = vpop.permute.xlu0 %6643
    %6645 = vset.pattern.permute.xlu0 6
    %6646 = vperm.xlu0 %6645, %v6523
    %v6647 = vpop.permute.xlu0 %6646
    %6648 = vset.pattern.permute.xlu0 6
    %6649 = vperm.xlu0 %6648, %v6525
    %v6650 = vpop.permute.xlu0 %6649
    %6651 = vset.pattern.permute.xlu0 6
    %6652 = vperm.xlu0 %6651, %v6527
    %v6653 = vpop.permute.xlu0 %6652
    %6654 = vset.pattern.permute.xlu0 6
    %6655 = vperm.xlu0 %6654, %v6529
    %v6656 = vpop.permute.xlu0 %6655
    %6657 = vset.pattern.permute.xlu0 6
    %6658 = vperm.xlu0 %6657, %v6531
    %v6659 = vpop.permute.xlu0 %6658
    %v6660 = vlaneseq
    %v6661 = vshrl.u32 %v6660, 7
    %v6662 = vsub.s32 %v1065, %v6661
    %v6663 = vrot.slane %v6566, %v6662
    %v6664 = vlaneseq
    %v6665 = vshrl.u32 %v6664, 7
    %v6666 = vsub.s32 %v1070, %v6665
    %v6667 = vrot.slane %v6569, %v6666
    %v6668 = vsel %vm1075, %v6667, %v6663
    %v6669 = vlaneseq
    %v6670 = vshrl.u32 %v6669, 7
    %v6671 = vsub.s32 %v1065, %v6670
    %v6672 = vrot.slane %v6572, %v6671
    %v6673 = vlaneseq
    %v6674 = vshrl.u32 %v6673, 7
    %v6675 = vsub.s32 %v1070, %v6674
    %v6676 = vrot.slane %v6575, %v6675
    %v6677 = vsel %vm1075, %v6676, %v6672
    %v6678 = vlaneseq
    %v6679 = vshrl.u32 %v6678, 7
    %v6680 = vsub.s32 %v1065, %v6679
    %v6681 = vrot.slane %v6578, %v6680
    %v6682 = vlaneseq
    %v6683 = vshrl.u32 %v6682, 7
    %v6684 = vsub.s32 %v1070, %v6683
    %v6685 = vrot.slane %v6581, %v6684
    %v6686 = vsel %vm1075, %v6685, %v6681
    %v6687 = vlaneseq
    %v6688 = vshrl.u32 %v6687, 7
    %v6689 = vsub.s32 %v1065, %v6688
    %v6690 = vrot.slane %v6584, %v6689
    %v6691 = vlaneseq
    %v6692 = vshrl.u32 %v6691, 7
    %v6693 = vsub.s32 %v1070, %v6692
    %v6694 = vrot.slane %v6587, %v6693
    %v6695 = vsel %vm1075, %v6694, %v6690
    %v6696 = vlaneseq
    %v6697 = vshrl.u32 %v6696, 7
    %v6698 = vsub.s32 %v1065, %v6697
    %v6699 = vrot.slane %v6590, %v6698
    %v6700 = vlaneseq
    %v6701 = vshrl.u32 %v6700, 7
    %v6702 = vsub.s32 %v1070, %v6701
    %v6703 = vrot.slane %v6593, %v6702
    %v6704 = vsel %vm1075, %v6703, %v6699
    %v6705 = vlaneseq
    %v6706 = vshrl.u32 %v6705, 7
    %v6707 = vsub.s32 %v1065, %v6706
    %v6708 = vrot.slane %v6596, %v6707
    %v6709 = vlaneseq
    %v6710 = vshrl.u32 %v6709, 7
    %v6711 = vsub.s32 %v1070, %v6710
    %v6712 = vrot.slane %v6599, %v6711
    %v6713 = vsel %vm1075, %v6712, %v6708
    %v6714 = vlaneseq
    %v6715 = vshrl.u32 %v6714, 7
    %v6716 = vsub.s32 %v1065, %v6715
    %v6717 = vrot.slane %v6602, %v6716
    %v6718 = vlaneseq
    %v6719 = vshrl.u32 %v6718, 7
    %v6720 = vsub.s32 %v1070, %v6719
    %v6721 = vrot.slane %v6605, %v6720
    %v6722 = vsel %vm1075, %v6721, %v6717
    %v6723 = vlaneseq
    %v6724 = vshrl.u32 %v6723, 7
    %v6725 = vsub.s32 %v1065, %v6724
    %v6726 = vrot.slane %v6608, %v6725
    %v6727 = vlaneseq
    %v6728 = vshrl.u32 %v6727, 7
    %v6729 = vsub.s32 %v1070, %v6728
    %v6730 = vrot.slane %v6611, %v6729
    %v6731 = vsel %vm1075, %v6730, %v6726
    %v6732 = vlaneseq
    %v6733 = vshrl.u32 %v6732, 7
    %v6734 = vsub.s32 %v1065, %v6733
    %v6735 = vrot.slane %v6614, %v6734
    %v6736 = vlaneseq
    %v6737 = vshrl.u32 %v6736, 7
    %v6738 = vsub.s32 %v1070, %v6737
    %v6739 = vrot.slane %v6617, %v6738
    %v6740 = vsel %vm1075, %v6739, %v6735
    %v6741 = vlaneseq
    %v6742 = vshrl.u32 %v6741, 7
    %v6743 = vsub.s32 %v1065, %v6742
    %v6744 = vrot.slane %v6620, %v6743
    %v6745 = vlaneseq
    %v6746 = vshrl.u32 %v6745, 7
    %v6747 = vsub.s32 %v1070, %v6746
    %v6748 = vrot.slane %v6623, %v6747
    %v6749 = vsel %vm1075, %v6748, %v6744
    %v6750 = vlaneseq
    %v6751 = vshrl.u32 %v6750, 7
    %v6752 = vsub.s32 %v1065, %v6751
    %v6753 = vrot.slane %v6626, %v6752
    %v6754 = vlaneseq
    %v6755 = vshrl.u32 %v6754, 7
    %v6756 = vsub.s32 %v1070, %v6755
    %v6757 = vrot.slane %v6629, %v6756
    %v6758 = vsel %vm1075, %v6757, %v6753
    %v6759 = vlaneseq
    %v6760 = vshrl.u32 %v6759, 7
    %v6761 = vsub.s32 %v1065, %v6760
    %v6762 = vrot.slane %v6632, %v6761
    %v6763 = vlaneseq
    %v6764 = vshrl.u32 %v6763, 7
    %v6765 = vsub.s32 %v1070, %v6764
    %v6766 = vrot.slane %v6635, %v6765
    %v6767 = vsel %vm1075, %v6766, %v6762
    %v6768 = vlaneseq
    %v6769 = vshrl.u32 %v6768, 7
    %v6770 = vsub.s32 %v1065, %v6769
    %v6771 = vrot.slane %v6638, %v6770
    %v6772 = vlaneseq
    %v6773 = vshrl.u32 %v6772, 7
    %v6774 = vsub.s32 %v1070, %v6773
    %v6775 = vrot.slane %v6641, %v6774
    %v6776 = vsel %vm1075, %v6775, %v6771
    %v6777 = vlaneseq
    %v6778 = vshrl.u32 %v6777, 7
    %v6779 = vsub.s32 %v1065, %v6778
    %v6780 = vrot.slane %v6644, %v6779
    %v6781 = vlaneseq
    %v6782 = vshrl.u32 %v6781, 7
    %v6783 = vsub.s32 %v1070, %v6782
    %v6784 = vrot.slane %v6647, %v6783
    %v6785 = vsel %vm1075, %v6784, %v6780
    %v6786 = vlaneseq
    %v6787 = vshrl.u32 %v6786, 7
    %v6788 = vsub.s32 %v1065, %v6787
    %v6789 = vrot.slane %v6650, %v6788
    %v6790 = vlaneseq
    %v6791 = vshrl.u32 %v6790, 7
    %v6792 = vsub.s32 %v1070, %v6791
    %v6793 = vrot.slane %v6653, %v6792
    %v6794 = vsel %vm1075, %v6793, %v6789
    %v6795 = vlaneseq
    %v6796 = vshrl.u32 %v6795, 7
    %v6797 = vsub.s32 %v1065, %v6796
    %v6798 = vrot.slane %v6656, %v6797
    %v6799 = vlaneseq
    %v6800 = vshrl.u32 %v6799, 7
    %v6801 = vsub.s32 %v1070, %v6800
    %v6802 = vrot.slane %v6659, %v6801
    %v6803 = vsel %vm1075, %v6802, %v6798
    %v6804 = vsel %vm1212, %v6677, %v6668
    %v6805 = vsel %vm1214, %v6686, %v6804
    %v6806 = vsel %vm1216, %v6695, %v6805
    %v6807 = vsel %vm1218, %v6704, %v6806
    %v6808 = vsel %vm1220, %v6713, %v6807
    %v6809 = vsel %vm1222, %v6722, %v6808
    %v6810 = vsel %vm1224, %v6731, %v6809
    %v6811 = vsel %vm1212, %v6749, %v6740
    %v6812 = vsel %vm1214, %v6758, %v6811
    %v6813 = vsel %vm1216, %v6767, %v6812
    %v6814 = vsel %vm1218, %v6776, %v6813
    %v6815 = vsel %vm1220, %v6785, %v6814
    %v6816 = vsel %vm1222, %v6794, %v6815
    %v6817 = vsel %vm1224, %v6803, %v6816
    %v6820 = vsel %vm1235, %v6810, 0.0
    %6821 = vadd.xlane.f32.xlu0 %v6820
    %v6822 = vpop.xlane.xlu0 %6821
    %v6823 = vsel %vm1235, %v6817, 0.0
    %6824 = vadd.xlane.f32.xlu0 %v6823
    %v6825 = vpop.xlane.xlu0 %6824
    %v6826 = vrcp.pop %v6822
    %v6827 = vmul.f32 1.0, %v6826
    %v6828 = vrcp.pop %v6825
    %v6829 = vmul.f32 1.0, %v6828
    %v6832 = vlaneseq
    %v6833 = vshrl.u32 %v6832, 7
    %v6834 = vsub.s32 0, %v6833
    %v6835 = vrot.slane %v6827, %v6834
    %v6836 = vlaneseq
    %v6837 = vshrl.u32 %v6836, 7
    %v6838 = vsub.s32 1, %v6837
    %v6839 = vrot.slane %v6827, %v6838
    %v6840 = vlaneseq
    %v6841 = vshrl.u32 %v6840, 7
    %v6842 = vsub.s32 2, %v6841
    %v6843 = vrot.slane %v6827, %v6842
    %v6844 = vlaneseq
    %v6845 = vshrl.u32 %v6844, 7
    %v6846 = vsub.s32 3, %v6845
    %v6847 = vrot.slane %v6827, %v6846
    %v6848 = vlaneseq
    %v6849 = vshrl.u32 %v6848, 7
    %v6850 = vsub.s32 4, %v6849
    %v6851 = vrot.slane %v6827, %v6850
    %v6852 = vlaneseq
    %v6853 = vshrl.u32 %v6852, 7
    %v6854 = vsub.s32 5, %v6853
    %v6855 = vrot.slane %v6827, %v6854
    %v6856 = vlaneseq
    %v6857 = vshrl.u32 %v6856, 7
    %v6858 = vsub.s32 6, %v6857
    %v6859 = vrot.slane %v6827, %v6858
    %v6860 = vlaneseq
    %v6861 = vshrl.u32 %v6860, 7
    %v6862 = vsub.s32 7, %v6861
    %v6863 = vrot.slane %v6827, %v6862
    %v6864 = vlaneseq
    %v6865 = vshrl.u32 %v6864, 7
    %v6866 = vsub.s32 0, %v6865
    %v6867 = vrot.slane %v6829, %v6866
    %v6868 = vlaneseq
    %v6869 = vshrl.u32 %v6868, 7
    %v6870 = vsub.s32 1, %v6869
    %v6871 = vrot.slane %v6829, %v6870
    %v6872 = vlaneseq
    %v6873 = vshrl.u32 %v6872, 7
    %v6874 = vsub.s32 2, %v6873
    %v6875 = vrot.slane %v6829, %v6874
    %v6876 = vlaneseq
    %v6877 = vshrl.u32 %v6876, 7
    %v6878 = vsub.s32 3, %v6877
    %v6879 = vrot.slane %v6829, %v6878
    %v6880 = vlaneseq
    %v6881 = vshrl.u32 %v6880, 7
    %v6882 = vsub.s32 4, %v6881
    %v6883 = vrot.slane %v6829, %v6882
    %v6884 = vlaneseq
    %v6885 = vshrl.u32 %v6884, 7
    %v6886 = vsub.s32 5, %v6885
    %v6887 = vrot.slane %v6829, %v6886
    %v6888 = vlaneseq
    %v6889 = vshrl.u32 %v6888, 7
    %v6890 = vsub.s32 6, %v6889
    %v6891 = vrot.slane %v6829, %v6890
    %v6892 = vlaneseq
    %v6893 = vshrl.u32 %v6892, 7
    %v6894 = vsub.s32 7, %v6893
    %v6895 = vrot.slane %v6829, %v6894
    %v6912 = vmul.f32 %v6469, %v6835
    %v6913 = vmul.f32 %v6471, %v6835
    %v6914 = vmul.f32 %v6473, %v6839
    %v6915 = vmul.f32 %v6475, %v6839
    %v6916 = vmul.f32 %v6477, %v6843
    %v6917 = vmul.f32 %v6479, %v6843
    %v6918 = vmul.f32 %v6481, %v6847
    %v6919 = vmul.f32 %v6483, %v6847
    %v6920 = vmul.f32 %v6485, %v6851
    %v6921 = vmul.f32 %v6487, %v6851
    %v6922 = vmul.f32 %v6489, %v6855
    %v6923 = vmul.f32 %v6491, %v6855
    %v6924 = vmul.f32 %v6493, %v6859
    %v6925 = vmul.f32 %v6495, %v6859
    %v6926 = vmul.f32 %v6497, %v6863
    %v6927 = vmul.f32 %v6499, %v6863
    %v6928 = vmul.f32 %v6501, %v6867
    %v6929 = vmul.f32 %v6503, %v6867
    %v6930 = vmul.f32 %v6505, %v6871
    %v6931 = vmul.f32 %v6507, %v6871
    %v6932 = vmul.f32 %v6509, %v6875
    %v6933 = vmul.f32 %v6511, %v6875
    %v6934 = vmul.f32 %v6513, %v6879
    %v6935 = vmul.f32 %v6515, %v6879
    %v6936 = vmul.f32 %v6517, %v6883
    %v6937 = vmul.f32 %v6519, %v6883
    %v6938 = vmul.f32 %v6521, %v6887
    %v6939 = vmul.f32 %v6523, %v6887
    %v6940 = vmul.f32 %v6525, %v6891
    %v6941 = vmul.f32 %v6527, %v6891
    %v6942 = vmul.f32 %v6529, %v6895
    %v6943 = vmul.f32 %v6531, %v6895
    %6944 = vset.pattern.permute.xlu0 7
    %6945 = vperm.xlu0 %6944, %v904
    %v6946 = vpop.permute.xlu0 %6945
    %6947 = vset.pattern.permute.xlu0 7
    %6948 = vperm.xlu0 %6947, %v905
    %v6949 = vpop.permute.xlu0 %6948
    %6950 = vset.pattern.permute.xlu0 7
    %6951 = vperm.xlu0 %6950, %v906
    %v6952 = vpop.permute.xlu0 %6951
    %6953 = vset.pattern.permute.xlu0 7
    %6954 = vperm.xlu0 %6953, %v907
    %v6955 = vpop.permute.xlu0 %6954
    %6956 = vset.pattern.permute.xlu0 7
    %6957 = vperm.xlu0 %6956, %v908
    %v6958 = vpop.permute.xlu0 %6957
    %6959 = vset.pattern.permute.xlu0 7
    %6960 = vperm.xlu0 %6959, %v909
    %v6961 = vpop.permute.xlu0 %6960
    %6962 = vset.pattern.permute.xlu0 7
    %6963 = vperm.xlu0 %6962, %v910
    %v6964 = vpop.permute.xlu0 %6963
    %6965 = vset.pattern.permute.xlu0 7
    %6966 = vperm.xlu0 %6965, %v911
    %v6967 = vpop.permute.xlu0 %6966
    %6968 = vset.pattern.permute.xlu0 7
    %6969 = vperm.xlu0 %6968, %v912
    %v6970 = vpop.permute.xlu0 %6969
    %6971 = vset.pattern.permute.xlu0 7
    %6972 = vperm.xlu0 %6971, %v913
    %v6973 = vpop.permute.xlu0 %6972
    %6974 = vset.pattern.permute.xlu0 7
    %6975 = vperm.xlu0 %6974, %v914
    %v6976 = vpop.permute.xlu0 %6975
    %6977 = vset.pattern.permute.xlu0 7
    %6978 = vperm.xlu0 %6977, %v915
    %v6979 = vpop.permute.xlu0 %6978
    %6980 = vset.pattern.permute.xlu0 7
    %6981 = vperm.xlu0 %6980, %v916
    %v6982 = vpop.permute.xlu0 %6981
    %6983 = vset.pattern.permute.xlu0 7
    %6984 = vperm.xlu0 %6983, %v917
    %v6985 = vpop.permute.xlu0 %6984
    %6986 = vset.pattern.permute.xlu0 7
    %6987 = vperm.xlu0 %6986, %v918
    %v6988 = vpop.permute.xlu0 %6987
    %6989 = vset.pattern.permute.xlu0 7
    %6990 = vperm.xlu0 %6989, %v919
    %v6991 = vpop.permute.xlu0 %6990
    %6992 = vset.pattern.permute.xlu0 7
    %6993 = vperm.xlu0 %6992, %v920
    %v6994 = vpop.permute.xlu0 %6993
    %6995 = vset.pattern.permute.xlu0 7
    %6996 = vperm.xlu0 %6995, %v921
    %v6997 = vpop.permute.xlu0 %6996
    %6998 = vset.pattern.permute.xlu0 7
    %6999 = vperm.xlu0 %6998, %v922
    %v7000 = vpop.permute.xlu0 %6999
    %7001 = vset.pattern.permute.xlu0 7
    %7002 = vperm.xlu0 %7001, %v923
    %v7003 = vpop.permute.xlu0 %7002
    %7004 = vset.pattern.permute.xlu0 7
    %7005 = vperm.xlu0 %7004, %v924
    %v7006 = vpop.permute.xlu0 %7005
    %7007 = vset.pattern.permute.xlu0 7
    %7008 = vperm.xlu0 %7007, %v925
    %v7009 = vpop.permute.xlu0 %7008
    %7010 = vset.pattern.permute.xlu0 7
    %7011 = vperm.xlu0 %7010, %v926
    %v7012 = vpop.permute.xlu0 %7011
    %7013 = vset.pattern.permute.xlu0 7
    %7014 = vperm.xlu0 %7013, %v927
    %v7015 = vpop.permute.xlu0 %7014
    %7016 = vset.pattern.permute.xlu0 7
    %7017 = vperm.xlu0 %7016, %v928
    %v7018 = vpop.permute.xlu0 %7017
    %7019 = vset.pattern.permute.xlu0 7
    %7020 = vperm.xlu0 %7019, %v929
    %v7021 = vpop.permute.xlu0 %7020
    %7022 = vset.pattern.permute.xlu0 7
    %7023 = vperm.xlu0 %7022, %v930
    %v7024 = vpop.permute.xlu0 %7023
    %7025 = vset.pattern.permute.xlu0 7
    %7026 = vperm.xlu0 %7025, %v931
    %v7027 = vpop.permute.xlu0 %7026
    %7028 = vset.pattern.permute.xlu0 7
    %7029 = vperm.xlu0 %7028, %v932
    %v7030 = vpop.permute.xlu0 %7029
    %7031 = vset.pattern.permute.xlu0 7
    %7032 = vperm.xlu0 %7031, %v933
    %v7033 = vpop.permute.xlu0 %7032
    %7034 = vset.pattern.permute.xlu0 7
    %7035 = vperm.xlu0 %7034, %v934
    %v7036 = vpop.permute.xlu0 %7035
    %7037 = vset.pattern.permute.xlu0 7
    %7038 = vperm.xlu0 %7037, %v935
    %v7039 = vpop.permute.xlu0 %7038
    %v7040 = vlaneseq
    %v7041 = vshrl.u32 %v7040, 7
    %v7042 = vsub.s32 %v1065, %v7041
    %v7043 = vrot.slane %v6946, %v7042
    %v7044 = vlaneseq
    %v7045 = vshrl.u32 %v7044, 7
    %v7046 = vsub.s32 %v1070, %v7045
    %v7047 = vrot.slane %v6949, %v7046
    %v7048 = vsel %vm1075, %v7047, %v7043
    %v7049 = vlaneseq
    %v7050 = vshrl.u32 %v7049, 7
    %v7051 = vsub.s32 %v1065, %v7050
    %v7052 = vrot.slane %v6952, %v7051
    %v7053 = vlaneseq
    %v7054 = vshrl.u32 %v7053, 7
    %v7055 = vsub.s32 %v1070, %v7054
    %v7056 = vrot.slane %v6955, %v7055
    %v7057 = vsel %vm1075, %v7056, %v7052
    %v7058 = vlaneseq
    %v7059 = vshrl.u32 %v7058, 7
    %v7060 = vsub.s32 %v1065, %v7059
    %v7061 = vrot.slane %v6958, %v7060
    %v7062 = vlaneseq
    %v7063 = vshrl.u32 %v7062, 7
    %v7064 = vsub.s32 %v1070, %v7063
    %v7065 = vrot.slane %v6961, %v7064
    %v7066 = vsel %vm1075, %v7065, %v7061
    %v7067 = vlaneseq
    %v7068 = vshrl.u32 %v7067, 7
    %v7069 = vsub.s32 %v1065, %v7068
    %v7070 = vrot.slane %v6964, %v7069
    %v7071 = vlaneseq
    %v7072 = vshrl.u32 %v7071, 7
    %v7073 = vsub.s32 %v1070, %v7072
    %v7074 = vrot.slane %v6967, %v7073
    %v7075 = vsel %vm1075, %v7074, %v7070
    %v7076 = vlaneseq
    %v7077 = vshrl.u32 %v7076, 7
    %v7078 = vsub.s32 %v1065, %v7077
    %v7079 = vrot.slane %v6970, %v7078
    %v7080 = vlaneseq
    %v7081 = vshrl.u32 %v7080, 7
    %v7082 = vsub.s32 %v1070, %v7081
    %v7083 = vrot.slane %v6973, %v7082
    %v7084 = vsel %vm1075, %v7083, %v7079
    %v7085 = vlaneseq
    %v7086 = vshrl.u32 %v7085, 7
    %v7087 = vsub.s32 %v1065, %v7086
    %v7088 = vrot.slane %v6976, %v7087
    %v7089 = vlaneseq
    %v7090 = vshrl.u32 %v7089, 7
    %v7091 = vsub.s32 %v1070, %v7090
    %v7092 = vrot.slane %v6979, %v7091
    %v7093 = vsel %vm1075, %v7092, %v7088
    %v7094 = vlaneseq
    %v7095 = vshrl.u32 %v7094, 7
    %v7096 = vsub.s32 %v1065, %v7095
    %v7097 = vrot.slane %v6982, %v7096
    %v7098 = vlaneseq
    %v7099 = vshrl.u32 %v7098, 7
    %v7100 = vsub.s32 %v1070, %v7099
    %v7101 = vrot.slane %v6985, %v7100
    %v7102 = vsel %vm1075, %v7101, %v7097
    %v7103 = vlaneseq
    %v7104 = vshrl.u32 %v7103, 7
    %v7105 = vsub.s32 %v1065, %v7104
    %v7106 = vrot.slane %v6988, %v7105
    %v7107 = vlaneseq
    %v7108 = vshrl.u32 %v7107, 7
    %v7109 = vsub.s32 %v1070, %v7108
    %v7110 = vrot.slane %v6991, %v7109
    %v7111 = vsel %vm1075, %v7110, %v7106
    %v7112 = vlaneseq
    %v7113 = vshrl.u32 %v7112, 7
    %v7114 = vsub.s32 %v1065, %v7113
    %v7115 = vrot.slane %v6994, %v7114
    %v7116 = vlaneseq
    %v7117 = vshrl.u32 %v7116, 7
    %v7118 = vsub.s32 %v1070, %v7117
    %v7119 = vrot.slane %v6997, %v7118
    %v7120 = vsel %vm1075, %v7119, %v7115
    %v7121 = vlaneseq
    %v7122 = vshrl.u32 %v7121, 7
    %v7123 = vsub.s32 %v1065, %v7122
    %v7124 = vrot.slane %v7000, %v7123
    %v7125 = vlaneseq
    %v7126 = vshrl.u32 %v7125, 7
    %v7127 = vsub.s32 %v1070, %v7126
    %v7128 = vrot.slane %v7003, %v7127
    %v7129 = vsel %vm1075, %v7128, %v7124
    %v7130 = vlaneseq
    %v7131 = vshrl.u32 %v7130, 7
    %v7132 = vsub.s32 %v1065, %v7131
    %v7133 = vrot.slane %v7006, %v7132
    %v7134 = vlaneseq
    %v7135 = vshrl.u32 %v7134, 7
    %v7136 = vsub.s32 %v1070, %v7135
    %v7137 = vrot.slane %v7009, %v7136
    %v7138 = vsel %vm1075, %v7137, %v7133
    %v7139 = vlaneseq
    %v7140 = vshrl.u32 %v7139, 7
    %v7141 = vsub.s32 %v1065, %v7140
    %v7142 = vrot.slane %v7012, %v7141
    %v7143 = vlaneseq
    %v7144 = vshrl.u32 %v7143, 7
    %v7145 = vsub.s32 %v1070, %v7144
    %v7146 = vrot.slane %v7015, %v7145
    %v7147 = vsel %vm1075, %v7146, %v7142
    %v7148 = vlaneseq
    %v7149 = vshrl.u32 %v7148, 7
    %v7150 = vsub.s32 %v1065, %v7149
    %v7151 = vrot.slane %v7018, %v7150
    %v7152 = vlaneseq
    %v7153 = vshrl.u32 %v7152, 7
    %v7154 = vsub.s32 %v1070, %v7153
    %v7155 = vrot.slane %v7021, %v7154
    %v7156 = vsel %vm1075, %v7155, %v7151
    %v7157 = vlaneseq
    %v7158 = vshrl.u32 %v7157, 7
    %v7159 = vsub.s32 %v1065, %v7158
    %v7160 = vrot.slane %v7024, %v7159
    %v7161 = vlaneseq
    %v7162 = vshrl.u32 %v7161, 7
    %v7163 = vsub.s32 %v1070, %v7162
    %v7164 = vrot.slane %v7027, %v7163
    %v7165 = vsel %vm1075, %v7164, %v7160
    %v7166 = vlaneseq
    %v7167 = vshrl.u32 %v7166, 7
    %v7168 = vsub.s32 %v1065, %v7167
    %v7169 = vrot.slane %v7030, %v7168
    %v7170 = vlaneseq
    %v7171 = vshrl.u32 %v7170, 7
    %v7172 = vsub.s32 %v1070, %v7171
    %v7173 = vrot.slane %v7033, %v7172
    %v7174 = vsel %vm1075, %v7173, %v7169
    %v7175 = vlaneseq
    %v7176 = vshrl.u32 %v7175, 7
    %v7177 = vsub.s32 %v1065, %v7176
    %v7178 = vrot.slane %v7036, %v7177
    %v7179 = vlaneseq
    %v7180 = vshrl.u32 %v7179, 7
    %v7181 = vsub.s32 %v1070, %v7180
    %v7182 = vrot.slane %v7039, %v7181
    %v7183 = vsel %vm1075, %v7182, %v7178
    %v7184 = vsel %vm1212, %v7057, %v7048
    %v7185 = vsel %vm1214, %v7066, %v7184
    %v7186 = vsel %vm1216, %v7075, %v7185
    %v7187 = vsel %vm1218, %v7084, %v7186
    %v7188 = vsel %vm1220, %v7093, %v7187
    %v7189 = vsel %vm1222, %v7102, %v7188
    %v7190 = vsel %vm1224, %v7111, %v7189
    %v7191 = vsel %vm1212, %v7129, %v7120
    %v7192 = vsel %vm1214, %v7138, %v7191
    %v7193 = vsel %vm1216, %v7147, %v7192
    %v7194 = vsel %vm1218, %v7156, %v7193
    %v7195 = vsel %vm1220, %v7165, %v7194
    %v7196 = vsel %vm1222, %v7174, %v7195
    %v7197 = vsel %vm1224, %v7183, %v7196
    %v7200 = vsel %vm1235, %v7190, -inf
    %7201 = vmax.xlane.f32.xlu0 %v7200
    %v7202 = vpop.xlane.xlu0 %7201
    %v7203 = vsel %vm1235, %v7197, -inf
    %7204 = vmax.xlane.f32.xlu0 %v7203
    %v7205 = vpop.xlane.xlu0 %7204
    %v7208 = vlaneseq
    %v7209 = vshrl.u32 %v7208, 7
    %v7210 = vsub.s32 0, %v7209
    %v7211 = vrot.slane %v7202, %v7210
    %v7212 = vlaneseq
    %v7213 = vshrl.u32 %v7212, 7
    %v7214 = vsub.s32 1, %v7213
    %v7215 = vrot.slane %v7202, %v7214
    %v7216 = vlaneseq
    %v7217 = vshrl.u32 %v7216, 7
    %v7218 = vsub.s32 2, %v7217
    %v7219 = vrot.slane %v7202, %v7218
    %v7220 = vlaneseq
    %v7221 = vshrl.u32 %v7220, 7
    %v7222 = vsub.s32 3, %v7221
    %v7223 = vrot.slane %v7202, %v7222
    %v7224 = vlaneseq
    %v7225 = vshrl.u32 %v7224, 7
    %v7226 = vsub.s32 4, %v7225
    %v7227 = vrot.slane %v7202, %v7226
    %v7228 = vlaneseq
    %v7229 = vshrl.u32 %v7228, 7
    %v7230 = vsub.s32 5, %v7229
    %v7231 = vrot.slane %v7202, %v7230
    %v7232 = vlaneseq
    %v7233 = vshrl.u32 %v7232, 7
    %v7234 = vsub.s32 6, %v7233
    %v7235 = vrot.slane %v7202, %v7234
    %v7236 = vlaneseq
    %v7237 = vshrl.u32 %v7236, 7
    %v7238 = vsub.s32 7, %v7237
    %v7239 = vrot.slane %v7202, %v7238
    %v7240 = vlaneseq
    %v7241 = vshrl.u32 %v7240, 7
    %v7242 = vsub.s32 0, %v7241
    %v7243 = vrot.slane %v7205, %v7242
    %v7244 = vlaneseq
    %v7245 = vshrl.u32 %v7244, 7
    %v7246 = vsub.s32 1, %v7245
    %v7247 = vrot.slane %v7205, %v7246
    %v7248 = vlaneseq
    %v7249 = vshrl.u32 %v7248, 7
    %v7250 = vsub.s32 2, %v7249
    %v7251 = vrot.slane %v7205, %v7250
    %v7252 = vlaneseq
    %v7253 = vshrl.u32 %v7252, 7
    %v7254 = vsub.s32 3, %v7253
    %v7255 = vrot.slane %v7205, %v7254
    %v7256 = vlaneseq
    %v7257 = vshrl.u32 %v7256, 7
    %v7258 = vsub.s32 4, %v7257
    %v7259 = vrot.slane %v7205, %v7258
    %v7260 = vlaneseq
    %v7261 = vshrl.u32 %v7260, 7
    %v7262 = vsub.s32 5, %v7261
    %v7263 = vrot.slane %v7205, %v7262
    %v7264 = vlaneseq
    %v7265 = vshrl.u32 %v7264, 7
    %v7266 = vsub.s32 6, %v7265
    %v7267 = vrot.slane %v7205, %v7266
    %v7268 = vlaneseq
    %v7269 = vshrl.u32 %v7268, 7
    %v7270 = vsub.s32 7, %v7269
    %v7271 = vrot.slane %v7205, %v7270
    %v7288 = vsub.f32 %v904, %v7211
    %v7289 = vsub.f32 %v905, %v7211
    %v7290 = vsub.f32 %v906, %v7215
    %v7291 = vsub.f32 %v907, %v7215
    %v7292 = vsub.f32 %v908, %v7219
    %v7293 = vsub.f32 %v909, %v7219
    %v7294 = vsub.f32 %v910, %v7223
    %v7295 = vsub.f32 %v911, %v7223
    %v7296 = vsub.f32 %v912, %v7227
    %v7297 = vsub.f32 %v913, %v7227
    %v7298 = vsub.f32 %v914, %v7231
    %v7299 = vsub.f32 %v915, %v7231
    %v7300 = vsub.f32 %v916, %v7235
    %v7301 = vsub.f32 %v917, %v7235
    %v7302 = vsub.f32 %v918, %v7239
    %v7303 = vsub.f32 %v919, %v7239
    %v7304 = vsub.f32 %v920, %v7243
    %v7305 = vsub.f32 %v921, %v7243
    %v7306 = vsub.f32 %v922, %v7247
    %v7307 = vsub.f32 %v923, %v7247
    %v7308 = vsub.f32 %v924, %v7251
    %v7309 = vsub.f32 %v925, %v7251
    %v7310 = vsub.f32 %v926, %v7255
    %v7311 = vsub.f32 %v927, %v7255
    %v7312 = vsub.f32 %v928, %v7259
    %v7313 = vsub.f32 %v929, %v7259
    %v7314 = vsub.f32 %v930, %v7263
    %v7315 = vsub.f32 %v931, %v7263
    %v7316 = vsub.f32 %v932, %v7267
    %v7317 = vsub.f32 %v933, %v7267
    %v7318 = vsub.f32 %v934, %v7271
    %v7319 = vsub.f32 %v935, %v7271
    %v7320 = vmul.f32 %v7288, 1.442695
    %v7321 = vpow.pop %v7320
    %v7322 = vmul.f32 %v7289, 1.442695
    %v7323 = vpow.pop %v7322
    %v7324 = vmul.f32 %v7290, 1.442695
    %v7325 = vpow.pop %v7324
    %v7326 = vmul.f32 %v7291, 1.442695
    %v7327 = vpow.pop %v7326
    %v7328 = vmul.f32 %v7292, 1.442695
    %v7329 = vpow.pop %v7328
    %v7330 = vmul.f32 %v7293, 1.442695
    %v7331 = vpow.pop %v7330
    %v7332 = vmul.f32 %v7294, 1.442695
    %v7333 = vpow.pop %v7332
    %v7334 = vmul.f32 %v7295, 1.442695
    %v7335 = vpow.pop %v7334
    %v7336 = vmul.f32 %v7296, 1.442695
    %v7337 = vpow.pop %v7336
    %v7338 = vmul.f32 %v7297, 1.442695
    %v7339 = vpow.pop %v7338
    %v7340 = vmul.f32 %v7298, 1.442695
    %v7341 = vpow.pop %v7340
    %v7342 = vmul.f32 %v7299, 1.442695
    %v7343 = vpow.pop %v7342
    %v7344 = vmul.f32 %v7300, 1.442695
    %v7345 = vpow.pop %v7344
    %v7346 = vmul.f32 %v7301, 1.442695
    %v7347 = vpow.pop %v7346
    %v7348 = vmul.f32 %v7302, 1.442695
    %v7349 = vpow.pop %v7348
    %v7350 = vmul.f32 %v7303, 1.442695
    %v7351 = vpow.pop %v7350
    %v7352 = vmul.f32 %v7304, 1.442695
    %v7353 = vpow.pop %v7352
    %v7354 = vmul.f32 %v7305, 1.442695
    %v7355 = vpow.pop %v7354
    %v7356 = vmul.f32 %v7306, 1.442695
    %v7357 = vpow.pop %v7356
    %v7358 = vmul.f32 %v7307, 1.442695
    %v7359 = vpow.pop %v7358
    %v7360 = vmul.f32 %v7308, 1.442695
    %v7361 = vpow.pop %v7360
    %v7362 = vmul.f32 %v7309, 1.442695
    %v7363 = vpow.pop %v7362
    %v7364 = vmul.f32 %v7310, 1.442695
    %v7365 = vpow.pop %v7364
    %v7366 = vmul.f32 %v7311, 1.442695
    %v7367 = vpow.pop %v7366
    %v7368 = vmul.f32 %v7312, 1.442695
    %v7369 = vpow.pop %v7368
    %v7370 = vmul.f32 %v7313, 1.442695
    %v7371 = vpow.pop %v7370
    %v7372 = vmul.f32 %v7314, 1.442695
    %v7373 = vpow.pop %v7372
    %v7374 = vmul.f32 %v7315, 1.442695
    %v7375 = vpow.pop %v7374
    %v7376 = vmul.f32 %v7316, 1.442695
    %v7377 = vpow.pop %v7376
    %v7378 = vmul.f32 %v7317, 1.442695
    %v7379 = vpow.pop %v7378
    %v7380 = vmul.f32 %v7318, 1.442695
    %v7381 = vpow.pop %v7380
    %v7382 = vmul.f32 %v7319, 1.442695
    %v7383 = vpow.pop %v7382
    %7416 = vset.pattern.permute.xlu0 7
    %7417 = vperm.xlu0 %7416, %v7321
    %v7418 = vpop.permute.xlu0 %7417
    %7419 = vset.pattern.permute.xlu0 7
    %7420 = vperm.xlu0 %7419, %v7323
    %v7421 = vpop.permute.xlu0 %7420
    %7422 = vset.pattern.permute.xlu0 7
    %7423 = vperm.xlu0 %7422, %v7325
    %v7424 = vpop.permute.xlu0 %7423
    %7425 = vset.pattern.permute.xlu0 7
    %7426 = vperm.xlu0 %7425, %v7327
    %v7427 = vpop.permute.xlu0 %7426
    %7428 = vset.pattern.permute.xlu0 7
    %7429 = vperm.xlu0 %7428, %v7329
    %v7430 = vpop.permute.xlu0 %7429
    %7431 = vset.pattern.permute.xlu0 7
    %7432 = vperm.xlu0 %7431, %v7331
    %v7433 = vpop.permute.xlu0 %7432
    %7434 = vset.pattern.permute.xlu0 7
    %7435 = vperm.xlu0 %7434, %v7333
    %v7436 = vpop.permute.xlu0 %7435
    %7437 = vset.pattern.permute.xlu0 7
    %7438 = vperm.xlu0 %7437, %v7335
    %v7439 = vpop.permute.xlu0 %7438
    %7440 = vset.pattern.permute.xlu0 7
    %7441 = vperm.xlu0 %7440, %v7337
    %v7442 = vpop.permute.xlu0 %7441
    %7443 = vset.pattern.permute.xlu0 7
    %7444 = vperm.xlu0 %7443, %v7339
    %v7445 = vpop.permute.xlu0 %7444
    %7446 = vset.pattern.permute.xlu0 7
    %7447 = vperm.xlu0 %7446, %v7341
    %v7448 = vpop.permute.xlu0 %7447
    %7449 = vset.pattern.permute.xlu0 7
    %7450 = vperm.xlu0 %7449, %v7343
    %v7451 = vpop.permute.xlu0 %7450
    %7452 = vset.pattern.permute.xlu0 7
    %7453 = vperm.xlu0 %7452, %v7345
    %v7454 = vpop.permute.xlu0 %7453
    %7455 = vset.pattern.permute.xlu0 7
    %7456 = vperm.xlu0 %7455, %v7347
    %v7457 = vpop.permute.xlu0 %7456
    %7458 = vset.pattern.permute.xlu0 7
    %7459 = vperm.xlu0 %7458, %v7349
    %v7460 = vpop.permute.xlu0 %7459
    %7461 = vset.pattern.permute.xlu0 7
    %7462 = vperm.xlu0 %7461, %v7351
    %v7463 = vpop.permute.xlu0 %7462
    %7464 = vset.pattern.permute.xlu0 7
    %7465 = vperm.xlu0 %7464, %v7353
    %v7466 = vpop.permute.xlu0 %7465
    %7467 = vset.pattern.permute.xlu0 7
    %7468 = vperm.xlu0 %7467, %v7355
    %v7469 = vpop.permute.xlu0 %7468
    %7470 = vset.pattern.permute.xlu0 7
    %7471 = vperm.xlu0 %7470, %v7357
    %v7472 = vpop.permute.xlu0 %7471
    %7473 = vset.pattern.permute.xlu0 7
    %7474 = vperm.xlu0 %7473, %v7359
    %v7475 = vpop.permute.xlu0 %7474
    %7476 = vset.pattern.permute.xlu0 7
    %7477 = vperm.xlu0 %7476, %v7361
    %v7478 = vpop.permute.xlu0 %7477
    %7479 = vset.pattern.permute.xlu0 7
    %7480 = vperm.xlu0 %7479, %v7363
    %v7481 = vpop.permute.xlu0 %7480
    %7482 = vset.pattern.permute.xlu0 7
    %7483 = vperm.xlu0 %7482, %v7365
    %v7484 = vpop.permute.xlu0 %7483
    %7485 = vset.pattern.permute.xlu0 7
    %7486 = vperm.xlu0 %7485, %v7367
    %v7487 = vpop.permute.xlu0 %7486
    %7488 = vset.pattern.permute.xlu0 7
    %7489 = vperm.xlu0 %7488, %v7369
    %v7490 = vpop.permute.xlu0 %7489
    %7491 = vset.pattern.permute.xlu0 7
    %7492 = vperm.xlu0 %7491, %v7371
    %v7493 = vpop.permute.xlu0 %7492
    %7494 = vset.pattern.permute.xlu0 7
    %7495 = vperm.xlu0 %7494, %v7373
    %v7496 = vpop.permute.xlu0 %7495
    %7497 = vset.pattern.permute.xlu0 7
    %7498 = vperm.xlu0 %7497, %v7375
    %v7499 = vpop.permute.xlu0 %7498
    %7500 = vset.pattern.permute.xlu0 7
    %7501 = vperm.xlu0 %7500, %v7377
    %v7502 = vpop.permute.xlu0 %7501
    %7503 = vset.pattern.permute.xlu0 7
    %7504 = vperm.xlu0 %7503, %v7379
    %v7505 = vpop.permute.xlu0 %7504
    %7506 = vset.pattern.permute.xlu0 7
    %7507 = vperm.xlu0 %7506, %v7381
    %v7508 = vpop.permute.xlu0 %7507
    %7509 = vset.pattern.permute.xlu0 7
    %7510 = vperm.xlu0 %7509, %v7383
    %v7511 = vpop.permute.xlu0 %7510
    %v7512 = vlaneseq
    %v7513 = vshrl.u32 %v7512, 7
    %v7514 = vsub.s32 %v1065, %v7513
    %v7515 = vrot.slane %v7418, %v7514
    %v7516 = vlaneseq
    %v7517 = vshrl.u32 %v7516, 7
    %v7518 = vsub.s32 %v1070, %v7517
    %v7519 = vrot.slane %v7421, %v7518
    %v7520 = vsel %vm1075, %v7519, %v7515
    %v7521 = vlaneseq
    %v7522 = vshrl.u32 %v7521, 7
    %v7523 = vsub.s32 %v1065, %v7522
    %v7524 = vrot.slane %v7424, %v7523
    %v7525 = vlaneseq
    %v7526 = vshrl.u32 %v7525, 7
    %v7527 = vsub.s32 %v1070, %v7526
    %v7528 = vrot.slane %v7427, %v7527
    %v7529 = vsel %vm1075, %v7528, %v7524
    %v7530 = vlaneseq
    %v7531 = vshrl.u32 %v7530, 7
    %v7532 = vsub.s32 %v1065, %v7531
    %v7533 = vrot.slane %v7430, %v7532
    %v7534 = vlaneseq
    %v7535 = vshrl.u32 %v7534, 7
    %v7536 = vsub.s32 %v1070, %v7535
    %v7537 = vrot.slane %v7433, %v7536
    %v7538 = vsel %vm1075, %v7537, %v7533
    %v7539 = vlaneseq
    %v7540 = vshrl.u32 %v7539, 7
    %v7541 = vsub.s32 %v1065, %v7540
    %v7542 = vrot.slane %v7436, %v7541
    %v7543 = vlaneseq
    %v7544 = vshrl.u32 %v7543, 7
    %v7545 = vsub.s32 %v1070, %v7544
    %v7546 = vrot.slane %v7439, %v7545
    %v7547 = vsel %vm1075, %v7546, %v7542
    %v7548 = vlaneseq
    %v7549 = vshrl.u32 %v7548, 7
    %v7550 = vsub.s32 %v1065, %v7549
    %v7551 = vrot.slane %v7442, %v7550
    %v7552 = vlaneseq
    %v7553 = vshrl.u32 %v7552, 7
    %v7554 = vsub.s32 %v1070, %v7553
    %v7555 = vrot.slane %v7445, %v7554
    %v7556 = vsel %vm1075, %v7555, %v7551
    %v7557 = vlaneseq
    %v7558 = vshrl.u32 %v7557, 7
    %v7559 = vsub.s32 %v1065, %v7558
    %v7560 = vrot.slane %v7448, %v7559
    %v7561 = vlaneseq
    %v7562 = vshrl.u32 %v7561, 7
    %v7563 = vsub.s32 %v1070, %v7562
    %v7564 = vrot.slane %v7451, %v7563
    %v7565 = vsel %vm1075, %v7564, %v7560
    %v7566 = vlaneseq
    %v7567 = vshrl.u32 %v7566, 7
    %v7568 = vsub.s32 %v1065, %v7567
    %v7569 = vrot.slane %v7454, %v7568
    %v7570 = vlaneseq
    %v7571 = vshrl.u32 %v7570, 7
    %v7572 = vsub.s32 %v1070, %v7571
    %v7573 = vrot.slane %v7457, %v7572
    %v7574 = vsel %vm1075, %v7573, %v7569
    %v7575 = vlaneseq
    %v7576 = vshrl.u32 %v7575, 7
    %v7577 = vsub.s32 %v1065, %v7576
    %v7578 = vrot.slane %v7460, %v7577
    %v7579 = vlaneseq
    %v7580 = vshrl.u32 %v7579, 7
    %v7581 = vsub.s32 %v1070, %v7580
    %v7582 = vrot.slane %v7463, %v7581
    %v7583 = vsel %vm1075, %v7582, %v7578
    %v7584 = vlaneseq
    %v7585 = vshrl.u32 %v7584, 7
    %v7586 = vsub.s32 %v1065, %v7585
    %v7587 = vrot.slane %v7466, %v7586
    %v7588 = vlaneseq
    %v7589 = vshrl.u32 %v7588, 7
    %v7590 = vsub.s32 %v1070, %v7589
    %v7591 = vrot.slane %v7469, %v7590
    %v7592 = vsel %vm1075, %v7591, %v7587
    %v7593 = vlaneseq
    %v7594 = vshrl.u32 %v7593, 7
    %v7595 = vsub.s32 %v1065, %v7594
    %v7596 = vrot.slane %v7472, %v7595
    %v7597 = vlaneseq
    %v7598 = vshrl.u32 %v7597, 7
    %v7599 = vsub.s32 %v1070, %v7598
    %v7600 = vrot.slane %v7475, %v7599
    %v7601 = vsel %vm1075, %v7600, %v7596
    %v7602 = vlaneseq
    %v7603 = vshrl.u32 %v7602, 7
    %v7604 = vsub.s32 %v1065, %v7603
    %v7605 = vrot.slane %v7478, %v7604
    %v7606 = vlaneseq
    %v7607 = vshrl.u32 %v7606, 7
    %v7608 = vsub.s32 %v1070, %v7607
    %v7609 = vrot.slane %v7481, %v7608
    %v7610 = vsel %vm1075, %v7609, %v7605
    %v7611 = vlaneseq
    %v7612 = vshrl.u32 %v7611, 7
    %v7613 = vsub.s32 %v1065, %v7612
    %v7614 = vrot.slane %v7484, %v7613
    %v7615 = vlaneseq
    %v7616 = vshrl.u32 %v7615, 7
    %v7617 = vsub.s32 %v1070, %v7616
    %v7618 = vrot.slane %v7487, %v7617
    %v7619 = vsel %vm1075, %v7618, %v7614
    %v7620 = vlaneseq
    %v7621 = vshrl.u32 %v7620, 7
    %v7622 = vsub.s32 %v1065, %v7621
    %v7623 = vrot.slane %v7490, %v7622
    %v7624 = vlaneseq
    %v7625 = vshrl.u32 %v7624, 7
    %v7626 = vsub.s32 %v1070, %v7625
    %v7627 = vrot.slane %v7493, %v7626
    %v7628 = vsel %vm1075, %v7627, %v7623
    %v7629 = vlaneseq
    %v7630 = vshrl.u32 %v7629, 7
    %v7631 = vsub.s32 %v1065, %v7630
    %v7632 = vrot.slane %v7496, %v7631
    %v7633 = vlaneseq
    %v7634 = vshrl.u32 %v7633, 7
    %v7635 = vsub.s32 %v1070, %v7634
    %v7636 = vrot.slane %v7499, %v7635
    %v7637 = vsel %vm1075, %v7636, %v7632
    %v7638 = vlaneseq
    %v7639 = vshrl.u32 %v7638, 7
    %v7640 = vsub.s32 %v1065, %v7639
    %v7641 = vrot.slane %v7502, %v7640
    %v7642 = vlaneseq
    %v7643 = vshrl.u32 %v7642, 7
    %v7644 = vsub.s32 %v1070, %v7643
    %v7645 = vrot.slane %v7505, %v7644
    %v7646 = vsel %vm1075, %v7645, %v7641
    %v7647 = vlaneseq
    %v7648 = vshrl.u32 %v7647, 7
    %v7649 = vsub.s32 %v1065, %v7648
    %v7650 = vrot.slane %v7508, %v7649
    %v7651 = vlaneseq
    %v7652 = vshrl.u32 %v7651, 7
    %v7653 = vsub.s32 %v1070, %v7652
    %v7654 = vrot.slane %v7511, %v7653
    %v7655 = vsel %vm1075, %v7654, %v7650
    %v7656 = vsel %vm1212, %v7529, %v7520
    %v7657 = vsel %vm1214, %v7538, %v7656
    %v7658 = vsel %vm1216, %v7547, %v7657
    %v7659 = vsel %vm1218, %v7556, %v7658
    %v7660 = vsel %vm1220, %v7565, %v7659
    %v7661 = vsel %vm1222, %v7574, %v7660
    %v7662 = vsel %vm1224, %v7583, %v7661
    %v7663 = vsel %vm1212, %v7601, %v7592
    %v7664 = vsel %vm1214, %v7610, %v7663
    %v7665 = vsel %vm1216, %v7619, %v7664
    %v7666 = vsel %vm1218, %v7628, %v7665
    %v7667 = vsel %vm1220, %v7637, %v7666
    %v7668 = vsel %vm1222, %v7646, %v7667
    %v7669 = vsel %vm1224, %v7655, %v7668
    %v7672 = vsel %vm1235, %v7662, 0.0
    %7673 = vadd.xlane.f32.xlu0 %v7672
    %v7674 = vpop.xlane.xlu0 %7673
    %v7675 = vsel %vm1235, %v7669, 0.0
    %7676 = vadd.xlane.f32.xlu0 %v7675
    %v7677 = vpop.xlane.xlu0 %7676
    %v7678 = vrcp.pop %v7674
    %v7679 = vmul.f32 1.0, %v7678
    %v7680 = vrcp.pop %v7677
    %v7681 = vmul.f32 1.0, %v7680
    %v7684 = vlaneseq
    %v7685 = vshrl.u32 %v7684, 7
    %v7686 = vsub.s32 0, %v7685
    %v7687 = vrot.slane %v7679, %v7686
    %v7688 = vlaneseq
    %v7689 = vshrl.u32 %v7688, 7
    %v7690 = vsub.s32 1, %v7689
    %v7691 = vrot.slane %v7679, %v7690
    %v7692 = vlaneseq
    %v7693 = vshrl.u32 %v7692, 7
    %v7694 = vsub.s32 2, %v7693
    %v7695 = vrot.slane %v7679, %v7694
    %v7696 = vlaneseq
    %v7697 = vshrl.u32 %v7696, 7
    %v7698 = vsub.s32 3, %v7697
    %v7699 = vrot.slane %v7679, %v7698
    %v7700 = vlaneseq
    %v7701 = vshrl.u32 %v7700, 7
    %v7702 = vsub.s32 4, %v7701
    %v7703 = vrot.slane %v7679, %v7702
    %v7704 = vlaneseq
    %v7705 = vshrl.u32 %v7704, 7
    %v7706 = vsub.s32 5, %v7705
    %v7707 = vrot.slane %v7679, %v7706
    %v7708 = vlaneseq
    %v7709 = vshrl.u32 %v7708, 7
    %v7710 = vsub.s32 6, %v7709
    %v7711 = vrot.slane %v7679, %v7710
    %v7712 = vlaneseq
    %v7713 = vshrl.u32 %v7712, 7
    %v7714 = vsub.s32 7, %v7713
    %v7715 = vrot.slane %v7679, %v7714
    %v7716 = vlaneseq
    %v7717 = vshrl.u32 %v7716, 7
    %v7718 = vsub.s32 0, %v7717
    %v7719 = vrot.slane %v7681, %v7718
    %v7720 = vlaneseq
    %v7721 = vshrl.u32 %v7720, 7
    %v7722 = vsub.s32 1, %v7721
    %v7723 = vrot.slane %v7681, %v7722
    %v7724 = vlaneseq
    %v7725 = vshrl.u32 %v7724, 7
    %v7726 = vsub.s32 2, %v7725
    %v7727 = vrot.slane %v7681, %v7726
    %v7728 = vlaneseq
    %v7729 = vshrl.u32 %v7728, 7
    %v7730 = vsub.s32 3, %v7729
    %v7731 = vrot.slane %v7681, %v7730
    %v7732 = vlaneseq
    %v7733 = vshrl.u32 %v7732, 7
    %v7734 = vsub.s32 4, %v7733
    %v7735 = vrot.slane %v7681, %v7734
    %v7736 = vlaneseq
    %v7737 = vshrl.u32 %v7736, 7
    %v7738 = vsub.s32 5, %v7737
    %v7739 = vrot.slane %v7681, %v7738
    %v7740 = vlaneseq
    %v7741 = vshrl.u32 %v7740, 7
    %v7742 = vsub.s32 6, %v7741
    %v7743 = vrot.slane %v7681, %v7742
    %v7744 = vlaneseq
    %v7745 = vshrl.u32 %v7744, 7
    %v7746 = vsub.s32 7, %v7745
    %v7747 = vrot.slane %v7681, %v7746
    %v7764 = vmul.f32 %v7321, %v7687
    %v7765 = vmul.f32 %v7323, %v7687
    %v7766 = vmul.f32 %v7325, %v7691
    %v7767 = vmul.f32 %v7327, %v7691
    %v7768 = vmul.f32 %v7329, %v7695
    %v7769 = vmul.f32 %v7331, %v7695
    %v7770 = vmul.f32 %v7333, %v7699
    %v7771 = vmul.f32 %v7335, %v7699
    %v7772 = vmul.f32 %v7337, %v7703
    %v7773 = vmul.f32 %v7339, %v7703
    %v7774 = vmul.f32 %v7341, %v7707
    %v7775 = vmul.f32 %v7343, %v7707
    %v7776 = vmul.f32 %v7345, %v7711
    %v7777 = vmul.f32 %v7347, %v7711
    %v7778 = vmul.f32 %v7349, %v7715
    %v7779 = vmul.f32 %v7351, %v7715
    %v7780 = vmul.f32 %v7353, %v7719
    %v7781 = vmul.f32 %v7355, %v7719
    %v7782 = vmul.f32 %v7357, %v7723
    %v7783 = vmul.f32 %v7359, %v7723
    %v7784 = vmul.f32 %v7361, %v7727
    %v7785 = vmul.f32 %v7363, %v7727
    %v7786 = vmul.f32 %v7365, %v7731
    %v7787 = vmul.f32 %v7367, %v7731
    %v7788 = vmul.f32 %v7369, %v7735
    %v7789 = vmul.f32 %v7371, %v7735
    %v7790 = vmul.f32 %v7373, %v7739
    %v7791 = vmul.f32 %v7375, %v7739
    %v7792 = vmul.f32 %v7377, %v7743
    %v7793 = vmul.f32 %v7379, %v7743
    %v7794 = vmul.f32 %v7381, %v7747
    %v7795 = vmul.f32 %v7383, %v7747
    %7828 = vset.pattern.permute.xlu0 0
    %7829 = vperm.xlu0 %7828, %v1800
    %v7830 = vpop.permute.xlu0 %7829
    %7831 = vset.pattern.permute.xlu0 0
    %7832 = vperm.xlu0 %7831, %v1801
    %v7833 = vpop.permute.xlu0 %7832
    %7834 = vset.pattern.permute.xlu0 0
    %7835 = vperm.xlu0 %7834, %v1802
    %v7836 = vpop.permute.xlu0 %7835
    %7837 = vset.pattern.permute.xlu0 0
    %7838 = vperm.xlu0 %7837, %v1803
    %v7839 = vpop.permute.xlu0 %7838
    %7840 = vset.pattern.permute.xlu0 0
    %7841 = vperm.xlu0 %7840, %v1804
    %v7842 = vpop.permute.xlu0 %7841
    %7843 = vset.pattern.permute.xlu0 0
    %7844 = vperm.xlu0 %7843, %v1805
    %v7845 = vpop.permute.xlu0 %7844
    %7846 = vset.pattern.permute.xlu0 0
    %7847 = vperm.xlu0 %7846, %v1806
    %v7848 = vpop.permute.xlu0 %7847
    %7849 = vset.pattern.permute.xlu0 0
    %7850 = vperm.xlu0 %7849, %v1807
    %v7851 = vpop.permute.xlu0 %7850
    %7852 = vset.pattern.permute.xlu0 0
    %7853 = vperm.xlu0 %7852, %v1808
    %v7854 = vpop.permute.xlu0 %7853
    %7855 = vset.pattern.permute.xlu0 0
    %7856 = vperm.xlu0 %7855, %v1809
    %v7857 = vpop.permute.xlu0 %7856
    %7858 = vset.pattern.permute.xlu0 0
    %7859 = vperm.xlu0 %7858, %v1810
    %v7860 = vpop.permute.xlu0 %7859
    %7861 = vset.pattern.permute.xlu0 0
    %7862 = vperm.xlu0 %7861, %v1811
    %v7863 = vpop.permute.xlu0 %7862
    %7864 = vset.pattern.permute.xlu0 0
    %7865 = vperm.xlu0 %7864, %v1812
    %v7866 = vpop.permute.xlu0 %7865
    %7867 = vset.pattern.permute.xlu0 0
    %7868 = vperm.xlu0 %7867, %v1813
    %v7869 = vpop.permute.xlu0 %7868
    %7870 = vset.pattern.permute.xlu0 0
    %7871 = vperm.xlu0 %7870, %v1814
    %v7872 = vpop.permute.xlu0 %7871
    %7873 = vset.pattern.permute.xlu0 0
    %7874 = vperm.xlu0 %7873, %v1815
    %v7875 = vpop.permute.xlu0 %7874
    %7876 = vset.pattern.permute.xlu0 0
    %7877 = vperm.xlu0 %7876, %v1816
    %v7878 = vpop.permute.xlu0 %7877
    %7879 = vset.pattern.permute.xlu0 0
    %7880 = vperm.xlu0 %7879, %v1817
    %v7881 = vpop.permute.xlu0 %7880
    %7882 = vset.pattern.permute.xlu0 0
    %7883 = vperm.xlu0 %7882, %v1818
    %v7884 = vpop.permute.xlu0 %7883
    %7885 = vset.pattern.permute.xlu0 0
    %7886 = vperm.xlu0 %7885, %v1819
    %v7887 = vpop.permute.xlu0 %7886
    %7888 = vset.pattern.permute.xlu0 0
    %7889 = vperm.xlu0 %7888, %v1820
    %v7890 = vpop.permute.xlu0 %7889
    %7891 = vset.pattern.permute.xlu0 0
    %7892 = vperm.xlu0 %7891, %v1821
    %v7893 = vpop.permute.xlu0 %7892
    %7894 = vset.pattern.permute.xlu0 0
    %7895 = vperm.xlu0 %7894, %v1822
    %v7896 = vpop.permute.xlu0 %7895
    %7897 = vset.pattern.permute.xlu0 0
    %7898 = vperm.xlu0 %7897, %v1823
    %v7899 = vpop.permute.xlu0 %7898
    %7900 = vset.pattern.permute.xlu0 0
    %7901 = vperm.xlu0 %7900, %v1824
    %v7902 = vpop.permute.xlu0 %7901
    %7903 = vset.pattern.permute.xlu0 0
    %7904 = vperm.xlu0 %7903, %v1825
    %v7905 = vpop.permute.xlu0 %7904
    %7906 = vset.pattern.permute.xlu0 0
    %7907 = vperm.xlu0 %7906, %v1826
    %v7908 = vpop.permute.xlu0 %7907
    %7909 = vset.pattern.permute.xlu0 0
    %7910 = vperm.xlu0 %7909, %v1827
    %v7911 = vpop.permute.xlu0 %7910
    %7912 = vset.pattern.permute.xlu0 0
    %7913 = vperm.xlu0 %7912, %v1828
    %v7914 = vpop.permute.xlu0 %7913
    %7915 = vset.pattern.permute.xlu0 0
    %7916 = vperm.xlu0 %7915, %v1829
    %v7917 = vpop.permute.xlu0 %7916
    %7918 = vset.pattern.permute.xlu0 0
    %7919 = vperm.xlu0 %7918, %v1830
    %v7920 = vpop.permute.xlu0 %7919
    %7921 = vset.pattern.permute.xlu0 0
    %7922 = vperm.xlu0 %7921, %v1831
    %v7923 = vpop.permute.xlu0 %7922
    %v7924 = vlaneseq
    %v7925 = vshrl.u32 %v7924, 7
    %v7926 = vsub.s32 %v1065, %v7925
    %v7927 = vrot.slane %v7830, %v7926
    %v7928 = vlaneseq
    %v7929 = vshrl.u32 %v7928, 7
    %v7930 = vsub.s32 %v1070, %v7929
    %v7931 = vrot.slane %v7833, %v7930
    %v7932 = vsel %vm1075, %v7931, %v7927
    %v7933 = vlaneseq
    %v7934 = vshrl.u32 %v7933, 7
    %v7935 = vsub.s32 %v1065, %v7934
    %v7936 = vrot.slane %v7836, %v7935
    %v7937 = vlaneseq
    %v7938 = vshrl.u32 %v7937, 7
    %v7939 = vsub.s32 %v1070, %v7938
    %v7940 = vrot.slane %v7839, %v7939
    %v7941 = vsel %vm1075, %v7940, %v7936
    %v7942 = vlaneseq
    %v7943 = vshrl.u32 %v7942, 7
    %v7944 = vsub.s32 %v1065, %v7943
    %v7945 = vrot.slane %v7842, %v7944
    %v7946 = vlaneseq
    %v7947 = vshrl.u32 %v7946, 7
    %v7948 = vsub.s32 %v1070, %v7947
    %v7949 = vrot.slane %v7845, %v7948
    %v7950 = vsel %vm1075, %v7949, %v7945
    %v7951 = vlaneseq
    %v7952 = vshrl.u32 %v7951, 7
    %v7953 = vsub.s32 %v1065, %v7952
    %v7954 = vrot.slane %v7848, %v7953
    %v7955 = vlaneseq
    %v7956 = vshrl.u32 %v7955, 7
    %v7957 = vsub.s32 %v1070, %v7956
    %v7958 = vrot.slane %v7851, %v7957
    %v7959 = vsel %vm1075, %v7958, %v7954
    %v7960 = vlaneseq
    %v7961 = vshrl.u32 %v7960, 7
    %v7962 = vsub.s32 %v1065, %v7961
    %v7963 = vrot.slane %v7854, %v7962
    %v7964 = vlaneseq
    %v7965 = vshrl.u32 %v7964, 7
    %v7966 = vsub.s32 %v1070, %v7965
    %v7967 = vrot.slane %v7857, %v7966
    %v7968 = vsel %vm1075, %v7967, %v7963
    %v7969 = vlaneseq
    %v7970 = vshrl.u32 %v7969, 7
    %v7971 = vsub.s32 %v1065, %v7970
    %v7972 = vrot.slane %v7860, %v7971
    %v7973 = vlaneseq
    %v7974 = vshrl.u32 %v7973, 7
    %v7975 = vsub.s32 %v1070, %v7974
    %v7976 = vrot.slane %v7863, %v7975
    %v7977 = vsel %vm1075, %v7976, %v7972
    %v7978 = vlaneseq
    %v7979 = vshrl.u32 %v7978, 7
    %v7980 = vsub.s32 %v1065, %v7979
    %v7981 = vrot.slane %v7866, %v7980
    %v7982 = vlaneseq
    %v7983 = vshrl.u32 %v7982, 7
    %v7984 = vsub.s32 %v1070, %v7983
    %v7985 = vrot.slane %v7869, %v7984
    %v7986 = vsel %vm1075, %v7985, %v7981
    %v7987 = vlaneseq
    %v7988 = vshrl.u32 %v7987, 7
    %v7989 = vsub.s32 %v1065, %v7988
    %v7990 = vrot.slane %v7872, %v7989
    %v7991 = vlaneseq
    %v7992 = vshrl.u32 %v7991, 7
    %v7993 = vsub.s32 %v1070, %v7992
    %v7994 = vrot.slane %v7875, %v7993
    %v7995 = vsel %vm1075, %v7994, %v7990
    %v7996 = vlaneseq
    %v7997 = vshrl.u32 %v7996, 7
    %v7998 = vsub.s32 %v1065, %v7997
    %v7999 = vrot.slane %v7878, %v7998
    %v8000 = vlaneseq
    %v8001 = vshrl.u32 %v8000, 7
    %v8002 = vsub.s32 %v1070, %v8001
    %v8003 = vrot.slane %v7881, %v8002
    %v8004 = vsel %vm1075, %v8003, %v7999
    %v8005 = vlaneseq
    %v8006 = vshrl.u32 %v8005, 7
    %v8007 = vsub.s32 %v1065, %v8006
    %v8008 = vrot.slane %v7884, %v8007
    %v8009 = vlaneseq
    %v8010 = vshrl.u32 %v8009, 7
    %v8011 = vsub.s32 %v1070, %v8010
    %v8012 = vrot.slane %v7887, %v8011
    %v8013 = vsel %vm1075, %v8012, %v8008
    %v8014 = vlaneseq
    %v8015 = vshrl.u32 %v8014, 7
    %v8016 = vsub.s32 %v1065, %v8015
    %v8017 = vrot.slane %v7890, %v8016
    %v8018 = vlaneseq
    %v8019 = vshrl.u32 %v8018, 7
    %v8020 = vsub.s32 %v1070, %v8019
    %v8021 = vrot.slane %v7893, %v8020
    %v8022 = vsel %vm1075, %v8021, %v8017
    %v8023 = vlaneseq
    %v8024 = vshrl.u32 %v8023, 7
    %v8025 = vsub.s32 %v1065, %v8024
    %v8026 = vrot.slane %v7896, %v8025
    %v8027 = vlaneseq
    %v8028 = vshrl.u32 %v8027, 7
    %v8029 = vsub.s32 %v1070, %v8028
    %v8030 = vrot.slane %v7899, %v8029
    %v8031 = vsel %vm1075, %v8030, %v8026
    %v8032 = vlaneseq
    %v8033 = vshrl.u32 %v8032, 7
    %v8034 = vsub.s32 %v1065, %v8033
    %v8035 = vrot.slane %v7902, %v8034
    %v8036 = vlaneseq
    %v8037 = vshrl.u32 %v8036, 7
    %v8038 = vsub.s32 %v1070, %v8037
    %v8039 = vrot.slane %v7905, %v8038
    %v8040 = vsel %vm1075, %v8039, %v8035
    %v8041 = vlaneseq
    %v8042 = vshrl.u32 %v8041, 7
    %v8043 = vsub.s32 %v1065, %v8042
    %v8044 = vrot.slane %v7908, %v8043
    %v8045 = vlaneseq
    %v8046 = vshrl.u32 %v8045, 7
    %v8047 = vsub.s32 %v1070, %v8046
    %v8048 = vrot.slane %v7911, %v8047
    %v8049 = vsel %vm1075, %v8048, %v8044
    %v8050 = vlaneseq
    %v8051 = vshrl.u32 %v8050, 7
    %v8052 = vsub.s32 %v1065, %v8051
    %v8053 = vrot.slane %v7914, %v8052
    %v8054 = vlaneseq
    %v8055 = vshrl.u32 %v8054, 7
    %v8056 = vsub.s32 %v1070, %v8055
    %v8057 = vrot.slane %v7917, %v8056
    %v8058 = vsel %vm1075, %v8057, %v8053
    %v8059 = vlaneseq
    %v8060 = vshrl.u32 %v8059, 7
    %v8061 = vsub.s32 %v1065, %v8060
    %v8062 = vrot.slane %v7920, %v8061
    %v8063 = vlaneseq
    %v8064 = vshrl.u32 %v8063, 7
    %v8065 = vsub.s32 %v1070, %v8064
    %v8066 = vrot.slane %v7923, %v8065
    %v8067 = vsel %vm1075, %v8066, %v8062
    %v8068 = vsel %vm1212, %v7941, %v7932
    %v8069 = vsel %vm1214, %v7950, %v8068
    %v8070 = vsel %vm1216, %v7959, %v8069
    %v8071 = vsel %vm1218, %v7968, %v8070
    %v8072 = vsel %vm1220, %v7977, %v8071
    %v8073 = vsel %vm1222, %v7986, %v8072
    %v8074 = vsel %vm1224, %v7995, %v8073
    %v8075 = vsel %vm1212, %v8013, %v8004
    %v8076 = vsel %vm1214, %v8022, %v8075
    %v8077 = vsel %vm1216, %v8031, %v8076
    %v8078 = vsel %vm1218, %v8040, %v8077
    %v8079 = vsel %vm1220, %v8049, %v8078
    %v8080 = vsel %vm1222, %v8058, %v8079
    %v8081 = vsel %vm1224, %v8067, %v8080
    %8116 = vset.pattern.permute.xlu0 1
    %8117 = vperm.xlu0 %8116, %v2652
    %v8118 = vpop.permute.xlu0 %8117
    %8119 = vset.pattern.permute.xlu0 1
    %8120 = vperm.xlu0 %8119, %v2653
    %v8121 = vpop.permute.xlu0 %8120
    %8122 = vset.pattern.permute.xlu0 1
    %8123 = vperm.xlu0 %8122, %v2654
    %v8124 = vpop.permute.xlu0 %8123
    %8125 = vset.pattern.permute.xlu0 1
    %8126 = vperm.xlu0 %8125, %v2655
    %v8127 = vpop.permute.xlu0 %8126
    %8128 = vset.pattern.permute.xlu0 1
    %8129 = vperm.xlu0 %8128, %v2656
    %v8130 = vpop.permute.xlu0 %8129
    %8131 = vset.pattern.permute.xlu0 1
    %8132 = vperm.xlu0 %8131, %v2657
    %v8133 = vpop.permute.xlu0 %8132
    %8134 = vset.pattern.permute.xlu0 1
    %8135 = vperm.xlu0 %8134, %v2658
    %v8136 = vpop.permute.xlu0 %8135
    %8137 = vset.pattern.permute.xlu0 1
    %8138 = vperm.xlu0 %8137, %v2659
    %v8139 = vpop.permute.xlu0 %8138
    %8140 = vset.pattern.permute.xlu0 1
    %8141 = vperm.xlu0 %8140, %v2660
    %v8142 = vpop.permute.xlu0 %8141
    %8143 = vset.pattern.permute.xlu0 1
    %8144 = vperm.xlu0 %8143, %v2661
    %v8145 = vpop.permute.xlu0 %8144
    %8146 = vset.pattern.permute.xlu0 1
    %8147 = vperm.xlu0 %8146, %v2662
    %v8148 = vpop.permute.xlu0 %8147
    %8149 = vset.pattern.permute.xlu0 1
    %8150 = vperm.xlu0 %8149, %v2663
    %v8151 = vpop.permute.xlu0 %8150
    %8152 = vset.pattern.permute.xlu0 1
    %8153 = vperm.xlu0 %8152, %v2664
    %v8154 = vpop.permute.xlu0 %8153
    %8155 = vset.pattern.permute.xlu0 1
    %8156 = vperm.xlu0 %8155, %v2665
    %v8157 = vpop.permute.xlu0 %8156
    %8158 = vset.pattern.permute.xlu0 1
    %8159 = vperm.xlu0 %8158, %v2666
    %v8160 = vpop.permute.xlu0 %8159
    %8161 = vset.pattern.permute.xlu0 1
    %8162 = vperm.xlu0 %8161, %v2667
    %v8163 = vpop.permute.xlu0 %8162
    %8164 = vset.pattern.permute.xlu0 1
    %8165 = vperm.xlu0 %8164, %v2668
    %v8166 = vpop.permute.xlu0 %8165
    %8167 = vset.pattern.permute.xlu0 1
    %8168 = vperm.xlu0 %8167, %v2669
    %v8169 = vpop.permute.xlu0 %8168
    %8170 = vset.pattern.permute.xlu0 1
    %8171 = vperm.xlu0 %8170, %v2670
    %v8172 = vpop.permute.xlu0 %8171
    %8173 = vset.pattern.permute.xlu0 1
    %8174 = vperm.xlu0 %8173, %v2671
    %v8175 = vpop.permute.xlu0 %8174
    %8176 = vset.pattern.permute.xlu0 1
    %8177 = vperm.xlu0 %8176, %v2672
    %v8178 = vpop.permute.xlu0 %8177
    %8179 = vset.pattern.permute.xlu0 1
    %8180 = vperm.xlu0 %8179, %v2673
    %v8181 = vpop.permute.xlu0 %8180
    %8182 = vset.pattern.permute.xlu0 1
    %8183 = vperm.xlu0 %8182, %v2674
    %v8184 = vpop.permute.xlu0 %8183
    %8185 = vset.pattern.permute.xlu0 1
    %8186 = vperm.xlu0 %8185, %v2675
    %v8187 = vpop.permute.xlu0 %8186
    %8188 = vset.pattern.permute.xlu0 1
    %8189 = vperm.xlu0 %8188, %v2676
    %v8190 = vpop.permute.xlu0 %8189
    %8191 = vset.pattern.permute.xlu0 1
    %8192 = vperm.xlu0 %8191, %v2677
    %v8193 = vpop.permute.xlu0 %8192
    %8194 = vset.pattern.permute.xlu0 1
    %8195 = vperm.xlu0 %8194, %v2678
    %v8196 = vpop.permute.xlu0 %8195
    %8197 = vset.pattern.permute.xlu0 1
    %8198 = vperm.xlu0 %8197, %v2679
    %v8199 = vpop.permute.xlu0 %8198
    %8200 = vset.pattern.permute.xlu0 1
    %8201 = vperm.xlu0 %8200, %v2680
    %v8202 = vpop.permute.xlu0 %8201
    %8203 = vset.pattern.permute.xlu0 1
    %8204 = vperm.xlu0 %8203, %v2681
    %v8205 = vpop.permute.xlu0 %8204
    %8206 = vset.pattern.permute.xlu0 1
    %8207 = vperm.xlu0 %8206, %v2682
    %v8208 = vpop.permute.xlu0 %8207
    %8209 = vset.pattern.permute.xlu0 1
    %8210 = vperm.xlu0 %8209, %v2683
    %v8211 = vpop.permute.xlu0 %8210
    %v8212 = vadd.s32 %v1065, 4294967280
    %v8213 = vlaneseq
    %v8214 = vshrl.u32 %v8213, 7
    %v8215 = vsub.s32 %v8212, %v8214
    %v8216 = vrot.slane %v8118, %v8215
    %v8217 = vadd.s32 %v1065, 4294967272
    %v8218 = vlaneseq
    %v8219 = vshrl.u32 %v8218, 7
    %v8220 = vsub.s32 %v8217, %v8219
    %v8221 = vrot.slane %v8121, %v8220
    %vm8222 = vcmask 261312
    %v8223 = vsel %vm8222, %v8221, %v8216
    %v8224 = vlaneseq
    %v8225 = vshrl.u32 %v8224, 7
    %v8226 = vsub.s32 %v8212, %v8225
    %v8227 = vrot.slane %v8124, %v8226
    %v8228 = vlaneseq
    %v8229 = vshrl.u32 %v8228, 7
    %v8230 = vsub.s32 %v8217, %v8229
    %v8231 = vrot.slane %v8127, %v8230
    %v8232 = vsel %vm8222, %v8231, %v8227
    %v8233 = vlaneseq
    %v8234 = vshrl.u32 %v8233, 7
    %v8235 = vsub.s32 %v8212, %v8234
    %v8236 = vrot.slane %v8130, %v8235
    %v8237 = vlaneseq
    %v8238 = vshrl.u32 %v8237, 7
    %v8239 = vsub.s32 %v8217, %v8238
    %v8240 = vrot.slane %v8133, %v8239
    %v8241 = vsel %vm8222, %v8240, %v8236
    %v8242 = vlaneseq
    %v8243 = vshrl.u32 %v8242, 7
    %v8244 = vsub.s32 %v8212, %v8243
    %v8245 = vrot.slane %v8136, %v8244
    %v8246 = vlaneseq
    %v8247 = vshrl.u32 %v8246, 7
    %v8248 = vsub.s32 %v8217, %v8247
    %v8249 = vrot.slane %v8139, %v8248
    %v8250 = vsel %vm8222, %v8249, %v8245
    %v8251 = vlaneseq
    %v8252 = vshrl.u32 %v8251, 7
    %v8253 = vsub.s32 %v8212, %v8252
    %v8254 = vrot.slane %v8142, %v8253
    %v8255 = vlaneseq
    %v8256 = vshrl.u32 %v8255, 7
    %v8257 = vsub.s32 %v8217, %v8256
    %v8258 = vrot.slane %v8145, %v8257
    %v8259 = vsel %vm8222, %v8258, %v8254
    %v8260 = vlaneseq
    %v8261 = vshrl.u32 %v8260, 7
    %v8262 = vsub.s32 %v8212, %v8261
    %v8263 = vrot.slane %v8148, %v8262
    %v8264 = vlaneseq
    %v8265 = vshrl.u32 %v8264, 7
    %v8266 = vsub.s32 %v8217, %v8265
    %v8267 = vrot.slane %v8151, %v8266
    %v8268 = vsel %vm8222, %v8267, %v8263
    %v8269 = vlaneseq
    %v8270 = vshrl.u32 %v8269, 7
    %v8271 = vsub.s32 %v8212, %v8270
    %v8272 = vrot.slane %v8154, %v8271
    %v8273 = vlaneseq
    %v8274 = vshrl.u32 %v8273, 7
    %v8275 = vsub.s32 %v8217, %v8274
    %v8276 = vrot.slane %v8157, %v8275
    %v8277 = vsel %vm8222, %v8276, %v8272
    %v8278 = vlaneseq
    %v8279 = vshrl.u32 %v8278, 7
    %v8280 = vsub.s32 %v8212, %v8279
    %v8281 = vrot.slane %v8160, %v8280
    %v8282 = vlaneseq
    %v8283 = vshrl.u32 %v8282, 7
    %v8284 = vsub.s32 %v8217, %v8283
    %v8285 = vrot.slane %v8163, %v8284
    %v8286 = vsel %vm8222, %v8285, %v8281
    %v8287 = vlaneseq
    %v8288 = vshrl.u32 %v8287, 7
    %v8289 = vsub.s32 %v8212, %v8288
    %v8290 = vrot.slane %v8166, %v8289
    %v8291 = vlaneseq
    %v8292 = vshrl.u32 %v8291, 7
    %v8293 = vsub.s32 %v8217, %v8292
    %v8294 = vrot.slane %v8169, %v8293
    %v8295 = vsel %vm8222, %v8294, %v8290
    %v8296 = vlaneseq
    %v8297 = vshrl.u32 %v8296, 7
    %v8298 = vsub.s32 %v8212, %v8297
    %v8299 = vrot.slane %v8172, %v8298
    %v8300 = vlaneseq
    %v8301 = vshrl.u32 %v8300, 7
    %v8302 = vsub.s32 %v8217, %v8301
    %v8303 = vrot.slane %v8175, %v8302
    %v8304 = vsel %vm8222, %v8303, %v8299
    %v8305 = vlaneseq
    %v8306 = vshrl.u32 %v8305, 7
    %v8307 = vsub.s32 %v8212, %v8306
    %v8308 = vrot.slane %v8178, %v8307
    %v8309 = vlaneseq
    %v8310 = vshrl.u32 %v8309, 7
    %v8311 = vsub.s32 %v8217, %v8310
    %v8312 = vrot.slane %v8181, %v8311
    %v8313 = vsel %vm8222, %v8312, %v8308
    %v8314 = vlaneseq
    %v8315 = vshrl.u32 %v8314, 7
    %v8316 = vsub.s32 %v8212, %v8315
    %v8317 = vrot.slane %v8184, %v8316
    %v8318 = vlaneseq
    %v8319 = vshrl.u32 %v8318, 7
    %v8320 = vsub.s32 %v8217, %v8319
    %v8321 = vrot.slane %v8187, %v8320
    %v8322 = vsel %vm8222, %v8321, %v8317
    %v8323 = vlaneseq
    %v8324 = vshrl.u32 %v8323, 7
    %v8325 = vsub.s32 %v8212, %v8324
    %v8326 = vrot.slane %v8190, %v8325
    %v8327 = vlaneseq
    %v8328 = vshrl.u32 %v8327, 7
    %v8329 = vsub.s32 %v8217, %v8328
    %v8330 = vrot.slane %v8193, %v8329
    %v8331 = vsel %vm8222, %v8330, %v8326
    %v8332 = vlaneseq
    %v8333 = vshrl.u32 %v8332, 7
    %v8334 = vsub.s32 %v8212, %v8333
    %v8335 = vrot.slane %v8196, %v8334
    %v8336 = vlaneseq
    %v8337 = vshrl.u32 %v8336, 7
    %v8338 = vsub.s32 %v8217, %v8337
    %v8339 = vrot.slane %v8199, %v8338
    %v8340 = vsel %vm8222, %v8339, %v8335
    %v8341 = vlaneseq
    %v8342 = vshrl.u32 %v8341, 7
    %v8343 = vsub.s32 %v8212, %v8342
    %v8344 = vrot.slane %v8202, %v8343
    %v8345 = vlaneseq
    %v8346 = vshrl.u32 %v8345, 7
    %v8347 = vsub.s32 %v8217, %v8346
    %v8348 = vrot.slane %v8205, %v8347
    %v8349 = vsel %vm8222, %v8348, %v8344
    %v8350 = vlaneseq
    %v8351 = vshrl.u32 %v8350, 7
    %v8352 = vsub.s32 %v8212, %v8351
    %v8353 = vrot.slane %v8208, %v8352
    %v8354 = vlaneseq
    %v8355 = vshrl.u32 %v8354, 7
    %v8356 = vsub.s32 %v8217, %v8355
    %v8357 = vrot.slane %v8211, %v8356
    %v8358 = vsel %vm8222, %v8357, %v8353
    %v8359 = vsel %vm1212, %v8232, %v8223
    %v8360 = vsel %vm1214, %v8241, %v8359
    %v8361 = vsel %vm1216, %v8250, %v8360
    %v8362 = vsel %vm1218, %v8259, %v8361
    %v8363 = vsel %vm1220, %v8268, %v8362
    %v8364 = vsel %vm1222, %v8277, %v8363
    %v8365 = vsel %vm1224, %v8286, %v8364
    %v8366 = vsel %vm1212, %v8304, %v8295
    %v8367 = vsel %vm1214, %v8313, %v8366
    %v8368 = vsel %vm1216, %v8322, %v8367
    %v8369 = vsel %vm1218, %v8331, %v8368
    %v8370 = vsel %vm1220, %v8340, %v8369
    %v8371 = vsel %vm1222, %v8349, %v8370
    %v8372 = vsel %vm1224, %v8358, %v8371
    %8407 = vset.pattern.permute.xlu0 2
    %8408 = vperm.xlu0 %8407, %v3504
    %v8409 = vpop.permute.xlu0 %8408
    %8410 = vset.pattern.permute.xlu0 2
    %8411 = vperm.xlu0 %8410, %v3505
    %v8412 = vpop.permute.xlu0 %8411
    %8413 = vset.pattern.permute.xlu0 2
    %8414 = vperm.xlu0 %8413, %v3506
    %v8415 = vpop.permute.xlu0 %8414
    %8416 = vset.pattern.permute.xlu0 2
    %8417 = vperm.xlu0 %8416, %v3507
    %v8418 = vpop.permute.xlu0 %8417
    %8419 = vset.pattern.permute.xlu0 2
    %8420 = vperm.xlu0 %8419, %v3508
    %v8421 = vpop.permute.xlu0 %8420
    %8422 = vset.pattern.permute.xlu0 2
    %8423 = vperm.xlu0 %8422, %v3509
    %v8424 = vpop.permute.xlu0 %8423
    %8425 = vset.pattern.permute.xlu0 2
    %8426 = vperm.xlu0 %8425, %v3510
    %v8427 = vpop.permute.xlu0 %8426
    %8428 = vset.pattern.permute.xlu0 2
    %8429 = vperm.xlu0 %8428, %v3511
    %v8430 = vpop.permute.xlu0 %8429
    %8431 = vset.pattern.permute.xlu0 2
    %8432 = vperm.xlu0 %8431, %v3512
    %v8433 = vpop.permute.xlu0 %8432
    %8434 = vset.pattern.permute.xlu0 2
    %8435 = vperm.xlu0 %8434, %v3513
    %v8436 = vpop.permute.xlu0 %8435
    %8437 = vset.pattern.permute.xlu0 2
    %8438 = vperm.xlu0 %8437, %v3514
    %v8439 = vpop.permute.xlu0 %8438
    %8440 = vset.pattern.permute.xlu0 2
    %8441 = vperm.xlu0 %8440, %v3515
    %v8442 = vpop.permute.xlu0 %8441
    %8443 = vset.pattern.permute.xlu0 2
    %8444 = vperm.xlu0 %8443, %v3516
    %v8445 = vpop.permute.xlu0 %8444
    %8446 = vset.pattern.permute.xlu0 2
    %8447 = vperm.xlu0 %8446, %v3517
    %v8448 = vpop.permute.xlu0 %8447
    %8449 = vset.pattern.permute.xlu0 2
    %8450 = vperm.xlu0 %8449, %v3518
    %v8451 = vpop.permute.xlu0 %8450
    %8452 = vset.pattern.permute.xlu0 2
    %8453 = vperm.xlu0 %8452, %v3519
    %v8454 = vpop.permute.xlu0 %8453
    %8455 = vset.pattern.permute.xlu0 2
    %8456 = vperm.xlu0 %8455, %v3520
    %v8457 = vpop.permute.xlu0 %8456
    %8458 = vset.pattern.permute.xlu0 2
    %8459 = vperm.xlu0 %8458, %v3521
    %v8460 = vpop.permute.xlu0 %8459
    %8461 = vset.pattern.permute.xlu0 2
    %8462 = vperm.xlu0 %8461, %v3522
    %v8463 = vpop.permute.xlu0 %8462
    %8464 = vset.pattern.permute.xlu0 2
    %8465 = vperm.xlu0 %8464, %v3523
    %v8466 = vpop.permute.xlu0 %8465
    %8467 = vset.pattern.permute.xlu0 2
    %8468 = vperm.xlu0 %8467, %v3524
    %v8469 = vpop.permute.xlu0 %8468
    %8470 = vset.pattern.permute.xlu0 2
    %8471 = vperm.xlu0 %8470, %v3525
    %v8472 = vpop.permute.xlu0 %8471
    %8473 = vset.pattern.permute.xlu0 2
    %8474 = vperm.xlu0 %8473, %v3526
    %v8475 = vpop.permute.xlu0 %8474
    %8476 = vset.pattern.permute.xlu0 2
    %8477 = vperm.xlu0 %8476, %v3527
    %v8478 = vpop.permute.xlu0 %8477
    %8479 = vset.pattern.permute.xlu0 2
    %8480 = vperm.xlu0 %8479, %v3528
    %v8481 = vpop.permute.xlu0 %8480
    %8482 = vset.pattern.permute.xlu0 2
    %8483 = vperm.xlu0 %8482, %v3529
    %v8484 = vpop.permute.xlu0 %8483
    %8485 = vset.pattern.permute.xlu0 2
    %8486 = vperm.xlu0 %8485, %v3530
    %v8487 = vpop.permute.xlu0 %8486
    %8488 = vset.pattern.permute.xlu0 2
    %8489 = vperm.xlu0 %8488, %v3531
    %v8490 = vpop.permute.xlu0 %8489
    %8491 = vset.pattern.permute.xlu0 2
    %8492 = vperm.xlu0 %8491, %v3532
    %v8493 = vpop.permute.xlu0 %8492
    %8494 = vset.pattern.permute.xlu0 2
    %8495 = vperm.xlu0 %8494, %v3533
    %v8496 = vpop.permute.xlu0 %8495
    %8497 = vset.pattern.permute.xlu0 2
    %8498 = vperm.xlu0 %8497, %v3534
    %v8499 = vpop.permute.xlu0 %8498
    %8500 = vset.pattern.permute.xlu0 2
    %8501 = vperm.xlu0 %8500, %v3535
    %v8502 = vpop.permute.xlu0 %8501
    %v8503 = vadd.s32 %v1065, 4294967264
    %v8504 = vlaneseq
    %v8505 = vshrl.u32 %v8504, 7
    %v8506 = vsub.s32 %v8503, %v8505
    %v8507 = vrot.slane %v8409, %v8506
    %v8508 = vadd.s32 %v1065, 4294967256
    %v8509 = vlaneseq
    %v8510 = vshrl.u32 %v8509, 7
    %v8511 = vsub.s32 %v8508, %v8510
    %v8512 = vrot.slane %v8412, %v8511
    %vm8513 = vcmask 392512
    %v8514 = vsel %vm8513, %v8512, %v8507
    %v8515 = vlaneseq
    %v8516 = vshrl.u32 %v8515, 7
    %v8517 = vsub.s32 %v8503, %v8516
    %v8518 = vrot.slane %v8415, %v8517
    %v8519 = vlaneseq
    %v8520 = vshrl.u32 %v8519, 7
    %v8521 = vsub.s32 %v8508, %v8520
    %v8522 = vrot.slane %v8418, %v8521
    %v8523 = vsel %vm8513, %v8522, %v8518
    %v8524 = vlaneseq
    %v8525 = vshrl.u32 %v8524, 7
    %v8526 = vsub.s32 %v8503, %v8525
    %v8527 = vrot.slane %v8421, %v8526
    %v8528 = vlaneseq
    %v8529 = vshrl.u32 %v8528, 7
    %v8530 = vsub.s32 %v8508, %v8529
    %v8531 = vrot.slane %v8424, %v8530
    %v8532 = vsel %vm8513, %v8531, %v8527
    %v8533 = vlaneseq
    %v8534 = vshrl.u32 %v8533, 7
    %v8535 = vsub.s32 %v8503, %v8534
    %v8536 = vrot.slane %v8427, %v8535
    %v8537 = vlaneseq
    %v8538 = vshrl.u32 %v8537, 7
    %v8539 = vsub.s32 %v8508, %v8538
    %v8540 = vrot.slane %v8430, %v8539
    %v8541 = vsel %vm8513, %v8540, %v8536
    %v8542 = vlaneseq
    %v8543 = vshrl.u32 %v8542, 7
    %v8544 = vsub.s32 %v8503, %v8543
    %v8545 = vrot.slane %v8433, %v8544
    %v8546 = vlaneseq
    %v8547 = vshrl.u32 %v8546, 7
    %v8548 = vsub.s32 %v8508, %v8547
    %v8549 = vrot.slane %v8436, %v8548
    %v8550 = vsel %vm8513, %v8549, %v8545
    %v8551 = vlaneseq
    %v8552 = vshrl.u32 %v8551, 7
    %v8553 = vsub.s32 %v8503, %v8552
    %v8554 = vrot.slane %v8439, %v8553
    %v8555 = vlaneseq
    %v8556 = vshrl.u32 %v8555, 7
    %v8557 = vsub.s32 %v8508, %v8556
    %v8558 = vrot.slane %v8442, %v8557
    %v8559 = vsel %vm8513, %v8558, %v8554
    %v8560 = vlaneseq
    %v8561 = vshrl.u32 %v8560, 7
    %v8562 = vsub.s32 %v8503, %v8561
    %v8563 = vrot.slane %v8445, %v8562
    %v8564 = vlaneseq
    %v8565 = vshrl.u32 %v8564, 7
    %v8566 = vsub.s32 %v8508, %v8565
    %v8567 = vrot.slane %v8448, %v8566
    %v8568 = vsel %vm8513, %v8567, %v8563
    %v8569 = vlaneseq
    %v8570 = vshrl.u32 %v8569, 7
    %v8571 = vsub.s32 %v8503, %v8570
    %v8572 = vrot.slane %v8451, %v8571
    %v8573 = vlaneseq
    %v8574 = vshrl.u32 %v8573, 7
    %v8575 = vsub.s32 %v8508, %v8574
    %v8576 = vrot.slane %v8454, %v8575
    %v8577 = vsel %vm8513, %v8576, %v8572
    %v8578 = vlaneseq
    %v8579 = vshrl.u32 %v8578, 7
    %v8580 = vsub.s32 %v8503, %v8579
    %v8581 = vrot.slane %v8457, %v8580
    %v8582 = vlaneseq
    %v8583 = vshrl.u32 %v8582, 7
    %v8584 = vsub.s32 %v8508, %v8583
    %v8585 = vrot.slane %v8460, %v8584
    %v8586 = vsel %vm8513, %v8585, %v8581
    %v8587 = vlaneseq
    %v8588 = vshrl.u32 %v8587, 7
    %v8589 = vsub.s32 %v8503, %v8588
    %v8590 = vrot.slane %v8463, %v8589
    %v8591 = vlaneseq
    %v8592 = vshrl.u32 %v8591, 7
    %v8593 = vsub.s32 %v8508, %v8592
    %v8594 = vrot.slane %v8466, %v8593
    %v8595 = vsel %vm8513, %v8594, %v8590
    %v8596 = vlaneseq
    %v8597 = vshrl.u32 %v8596, 7
    %v8598 = vsub.s32 %v8503, %v8597
    %v8599 = vrot.slane %v8469, %v8598
    %v8600 = vlaneseq
    %v8601 = vshrl.u32 %v8600, 7
    %v8602 = vsub.s32 %v8508, %v8601
    %v8603 = vrot.slane %v8472, %v8602
    %v8604 = vsel %vm8513, %v8603, %v8599
    %v8605 = vlaneseq
    %v8606 = vshrl.u32 %v8605, 7
    %v8607 = vsub.s32 %v8503, %v8606
    %v8608 = vrot.slane %v8475, %v8607
    %v8609 = vlaneseq
    %v8610 = vshrl.u32 %v8609, 7
    %v8611 = vsub.s32 %v8508, %v8610
    %v8612 = vrot.slane %v8478, %v8611
    %v8613 = vsel %vm8513, %v8612, %v8608
    %v8614 = vlaneseq
    %v8615 = vshrl.u32 %v8614, 7
    %v8616 = vsub.s32 %v8503, %v8615
    %v8617 = vrot.slane %v8481, %v8616
    %v8618 = vlaneseq
    %v8619 = vshrl.u32 %v8618, 7
    %v8620 = vsub.s32 %v8508, %v8619
    %v8621 = vrot.slane %v8484, %v8620
    %v8622 = vsel %vm8513, %v8621, %v8617
    %v8623 = vlaneseq
    %v8624 = vshrl.u32 %v8623, 7
    %v8625 = vsub.s32 %v8503, %v8624
    %v8626 = vrot.slane %v8487, %v8625
    %v8627 = vlaneseq
    %v8628 = vshrl.u32 %v8627, 7
    %v8629 = vsub.s32 %v8508, %v8628
    %v8630 = vrot.slane %v8490, %v8629
    %v8631 = vsel %vm8513, %v8630, %v8626
    %v8632 = vlaneseq
    %v8633 = vshrl.u32 %v8632, 7
    %v8634 = vsub.s32 %v8503, %v8633
    %v8635 = vrot.slane %v8493, %v8634
    %v8636 = vlaneseq
    %v8637 = vshrl.u32 %v8636, 7
    %v8638 = vsub.s32 %v8508, %v8637
    %v8639 = vrot.slane %v8496, %v8638
    %v8640 = vsel %vm8513, %v8639, %v8635
    %v8641 = vlaneseq
    %v8642 = vshrl.u32 %v8641, 7
    %v8643 = vsub.s32 %v8503, %v8642
    %v8644 = vrot.slane %v8499, %v8643
    %v8645 = vlaneseq
    %v8646 = vshrl.u32 %v8645, 7
    %v8647 = vsub.s32 %v8508, %v8646
    %v8648 = vrot.slane %v8502, %v8647
    %v8649 = vsel %vm8513, %v8648, %v8644
    %v8650 = vsel %vm1212, %v8523, %v8514
    %v8651 = vsel %vm1214, %v8532, %v8650
    %v8652 = vsel %vm1216, %v8541, %v8651
    %v8653 = vsel %vm1218, %v8550, %v8652
    %v8654 = vsel %vm1220, %v8559, %v8653
    %v8655 = vsel %vm1222, %v8568, %v8654
    %v8656 = vsel %vm1224, %v8577, %v8655
    %v8657 = vsel %vm1212, %v8595, %v8586
    %v8658 = vsel %vm1214, %v8604, %v8657
    %v8659 = vsel %vm1216, %v8613, %v8658
    %v8660 = vsel %vm1218, %v8622, %v8659
    %v8661 = vsel %vm1220, %v8631, %v8660
    %v8662 = vsel %vm1222, %v8640, %v8661
    %v8663 = vsel %vm1224, %v8649, %v8662
    %8698 = vset.pattern.permute.xlu0 3
    %8699 = vperm.xlu0 %8698, %v4356
    %v8700 = vpop.permute.xlu0 %8699
    %8701 = vset.pattern.permute.xlu0 3
    %8702 = vperm.xlu0 %8701, %v4357
    %v8703 = vpop.permute.xlu0 %8702
    %8704 = vset.pattern.permute.xlu0 3
    %8705 = vperm.xlu0 %8704, %v4358
    %v8706 = vpop.permute.xlu0 %8705
    %8707 = vset.pattern.permute.xlu0 3
    %8708 = vperm.xlu0 %8707, %v4359
    %v8709 = vpop.permute.xlu0 %8708
    %8710 = vset.pattern.permute.xlu0 3
    %8711 = vperm.xlu0 %8710, %v4360
    %v8712 = vpop.permute.xlu0 %8711
    %8713 = vset.pattern.permute.xlu0 3
    %8714 = vperm.xlu0 %8713, %v4361
    %v8715 = vpop.permute.xlu0 %8714
    %8716 = vset.pattern.permute.xlu0 3
    %8717 = vperm.xlu0 %8716, %v4362
    %v8718 = vpop.permute.xlu0 %8717
    %8719 = vset.pattern.permute.xlu0 3
    %8720 = vperm.xlu0 %8719, %v4363
    %v8721 = vpop.permute.xlu0 %8720
    %8722 = vset.pattern.permute.xlu0 3
    %8723 = vperm.xlu0 %8722, %v4364
    %v8724 = vpop.permute.xlu0 %8723
    %8725 = vset.pattern.permute.xlu0 3
    %8726 = vperm.xlu0 %8725, %v4365
    %v8727 = vpop.permute.xlu0 %8726
    %8728 = vset.pattern.permute.xlu0 3
    %8729 = vperm.xlu0 %8728, %v4366
    %v8730 = vpop.permute.xlu0 %8729
    %8731 = vset.pattern.permute.xlu0 3
    %8732 = vperm.xlu0 %8731, %v4367
    %v8733 = vpop.permute.xlu0 %8732
    %8734 = vset.pattern.permute.xlu0 3
    %8735 = vperm.xlu0 %8734, %v4368
    %v8736 = vpop.permute.xlu0 %8735
    %8737 = vset.pattern.permute.xlu0 3
    %8738 = vperm.xlu0 %8737, %v4369
    %v8739 = vpop.permute.xlu0 %8738
    %8740 = vset.pattern.permute.xlu0 3
    %8741 = vperm.xlu0 %8740, %v4370
    %v8742 = vpop.permute.xlu0 %8741
    %8743 = vset.pattern.permute.xlu0 3
    %8744 = vperm.xlu0 %8743, %v4371
    %v8745 = vpop.permute.xlu0 %8744
    %8746 = vset.pattern.permute.xlu0 3
    %8747 = vperm.xlu0 %8746, %v4372
    %v8748 = vpop.permute.xlu0 %8747
    %8749 = vset.pattern.permute.xlu0 3
    %8750 = vperm.xlu0 %8749, %v4373
    %v8751 = vpop.permute.xlu0 %8750
    %8752 = vset.pattern.permute.xlu0 3
    %8753 = vperm.xlu0 %8752, %v4374
    %v8754 = vpop.permute.xlu0 %8753
    %8755 = vset.pattern.permute.xlu0 3
    %8756 = vperm.xlu0 %8755, %v4375
    %v8757 = vpop.permute.xlu0 %8756
    %8758 = vset.pattern.permute.xlu0 3
    %8759 = vperm.xlu0 %8758, %v4376
    %v8760 = vpop.permute.xlu0 %8759
    %8761 = vset.pattern.permute.xlu0 3
    %8762 = vperm.xlu0 %8761, %v4377
    %v8763 = vpop.permute.xlu0 %8762
    %8764 = vset.pattern.permute.xlu0 3
    %8765 = vperm.xlu0 %8764, %v4378
    %v8766 = vpop.permute.xlu0 %8765
    %8767 = vset.pattern.permute.xlu0 3
    %8768 = vperm.xlu0 %8767, %v4379
    %v8769 = vpop.permute.xlu0 %8768
    %8770 = vset.pattern.permute.xlu0 3
    %8771 = vperm.xlu0 %8770, %v4380
    %v8772 = vpop.permute.xlu0 %8771
    %8773 = vset.pattern.permute.xlu0 3
    %8774 = vperm.xlu0 %8773, %v4381
    %v8775 = vpop.permute.xlu0 %8774
    %8776 = vset.pattern.permute.xlu0 3
    %8777 = vperm.xlu0 %8776, %v4382
    %v8778 = vpop.permute.xlu0 %8777
    %8779 = vset.pattern.permute.xlu0 3
    %8780 = vperm.xlu0 %8779, %v4383
    %v8781 = vpop.permute.xlu0 %8780
    %8782 = vset.pattern.permute.xlu0 3
    %8783 = vperm.xlu0 %8782, %v4384
    %v8784 = vpop.permute.xlu0 %8783
    %8785 = vset.pattern.permute.xlu0 3
    %8786 = vperm.xlu0 %8785, %v4385
    %v8787 = vpop.permute.xlu0 %8786
    %8788 = vset.pattern.permute.xlu0 3
    %8789 = vperm.xlu0 %8788, %v4386
    %v8790 = vpop.permute.xlu0 %8789
    %8791 = vset.pattern.permute.xlu0 3
    %8792 = vperm.xlu0 %8791, %v4387
    %v8793 = vpop.permute.xlu0 %8792
    %v8794 = vadd.s32 %v1065, 4294967248
    %v8795 = vlaneseq
    %v8796 = vshrl.u32 %v8795, 7
    %v8797 = vsub.s32 %v8794, %v8796
    %v8798 = vrot.slane %v8700, %v8797
    %v8799 = vadd.s32 %v1065, 4294967240
    %v8800 = vlaneseq
    %v8801 = vshrl.u32 %v8800, 7
    %v8802 = vsub.s32 %v8799, %v8801
    %v8803 = vrot.slane %v8703, %v8802
    %vm8804 = vcmask 523712
    %v8805 = vsel %vm8804, %v8803, %v8798
    %v8806 = vlaneseq
    %v8807 = vshrl.u32 %v8806, 7
    %v8808 = vsub.s32 %v8794, %v8807
    %v8809 = vrot.slane %v8706, %v8808
    %v8810 = vlaneseq
    %v8811 = vshrl.u32 %v8810, 7
    %v8812 = vsub.s32 %v8799, %v8811
    %v8813 = vrot.slane %v8709, %v8812
    %v8814 = vsel %vm8804, %v8813, %v8809
    %v8815 = vlaneseq
    %v8816 = vshrl.u32 %v8815, 7
    %v8817 = vsub.s32 %v8794, %v8816
    %v8818 = vrot.slane %v8712, %v8817
    %v8819 = vlaneseq
    %v8820 = vshrl.u32 %v8819, 7
    %v8821 = vsub.s32 %v8799, %v8820
    %v8822 = vrot.slane %v8715, %v8821
    %v8823 = vsel %vm8804, %v8822, %v8818
    %v8824 = vlaneseq
    %v8825 = vshrl.u32 %v8824, 7
    %v8826 = vsub.s32 %v8794, %v8825
    %v8827 = vrot.slane %v8718, %v8826
    %v8828 = vlaneseq
    %v8829 = vshrl.u32 %v8828, 7
    %v8830 = vsub.s32 %v8799, %v8829
    %v8831 = vrot.slane %v8721, %v8830
    %v8832 = vsel %vm8804, %v8831, %v8827
    %v8833 = vlaneseq
    %v8834 = vshrl.u32 %v8833, 7
    %v8835 = vsub.s32 %v8794, %v8834
    %v8836 = vrot.slane %v8724, %v8835
    %v8837 = vlaneseq
    %v8838 = vshrl.u32 %v8837, 7
    %v8839 = vsub.s32 %v8799, %v8838
    %v8840 = vrot.slane %v8727, %v8839
    %v8841 = vsel %vm8804, %v8840, %v8836
    %v8842 = vlaneseq
    %v8843 = vshrl.u32 %v8842, 7
    %v8844 = vsub.s32 %v8794, %v8843
    %v8845 = vrot.slane %v8730, %v8844
    %v8846 = vlaneseq
    %v8847 = vshrl.u32 %v8846, 7
    %v8848 = vsub.s32 %v8799, %v8847
    %v8849 = vrot.slane %v8733, %v8848
    %v8850 = vsel %vm8804, %v8849, %v8845
    %v8851 = vlaneseq
    %v8852 = vshrl.u32 %v8851, 7
    %v8853 = vsub.s32 %v8794, %v8852
    %v8854 = vrot.slane %v8736, %v8853
    %v8855 = vlaneseq
    %v8856 = vshrl.u32 %v8855, 7
    %v8857 = vsub.s32 %v8799, %v8856
    %v8858 = vrot.slane %v8739, %v8857
    %v8859 = vsel %vm8804, %v8858, %v8854
    %v8860 = vlaneseq
    %v8861 = vshrl.u32 %v8860, 7
    %v8862 = vsub.s32 %v8794, %v8861
    %v8863 = vrot.slane %v8742, %v8862
    %v8864 = vlaneseq
    %v8865 = vshrl.u32 %v8864, 7
    %v8866 = vsub.s32 %v8799, %v8865
    %v8867 = vrot.slane %v8745, %v8866
    %v8868 = vsel %vm8804, %v8867, %v8863
    %v8869 = vlaneseq
    %v8870 = vshrl.u32 %v8869, 7
    %v8871 = vsub.s32 %v8794, %v8870
    %v8872 = vrot.slane %v8748, %v8871
    %v8873 = vlaneseq
    %v8874 = vshrl.u32 %v8873, 7
    %v8875 = vsub.s32 %v8799, %v8874
    %v8876 = vrot.slane %v8751, %v8875
    %v8877 = vsel %vm8804, %v8876, %v8872
    %v8878 = vlaneseq
    %v8879 = vshrl.u32 %v8878, 7
    %v8880 = vsub.s32 %v8794, %v8879
    %v8881 = vrot.slane %v8754, %v8880
    %v8882 = vlaneseq
    %v8883 = vshrl.u32 %v8882, 7
    %v8884 = vsub.s32 %v8799, %v8883
    %v8885 = vrot.slane %v8757, %v8884
    %v8886 = vsel %vm8804, %v8885, %v8881
    %v8887 = vlaneseq
    %v8888 = vshrl.u32 %v8887, 7
    %v8889 = vsub.s32 %v8794, %v8888
    %v8890 = vrot.slane %v8760, %v8889
    %v8891 = vlaneseq
    %v8892 = vshrl.u32 %v8891, 7
    %v8893 = vsub.s32 %v8799, %v8892
    %v8894 = vrot.slane %v8763, %v8893
    %v8895 = vsel %vm8804, %v8894, %v8890
    %v8896 = vlaneseq
    %v8897 = vshrl.u32 %v8896, 7
    %v8898 = vsub.s32 %v8794, %v8897
    %v8899 = vrot.slane %v8766, %v8898
    %v8900 = vlaneseq
    %v8901 = vshrl.u32 %v8900, 7
    %v8902 = vsub.s32 %v8799, %v8901
    %v8903 = vrot.slane %v8769, %v8902
    %v8904 = vsel %vm8804, %v8903, %v8899
    %v8905 = vlaneseq
    %v8906 = vshrl.u32 %v8905, 7
    %v8907 = vsub.s32 %v8794, %v8906
    %v8908 = vrot.slane %v8772, %v8907
    %v8909 = vlaneseq
    %v8910 = vshrl.u32 %v8909, 7
    %v8911 = vsub.s32 %v8799, %v8910
    %v8912 = vrot.slane %v8775, %v8911
    %v8913 = vsel %vm8804, %v8912, %v8908
    %v8914 = vlaneseq
    %v8915 = vshrl.u32 %v8914, 7
    %v8916 = vsub.s32 %v8794, %v8915
    %v8917 = vrot.slane %v8778, %v8916
    %v8918 = vlaneseq
    %v8919 = vshrl.u32 %v8918, 7
    %v8920 = vsub.s32 %v8799, %v8919
    %v8921 = vrot.slane %v8781, %v8920
    %v8922 = vsel %vm8804, %v8921, %v8917
    %v8923 = vlaneseq
    %v8924 = vshrl.u32 %v8923, 7
    %v8925 = vsub.s32 %v8794, %v8924
    %v8926 = vrot.slane %v8784, %v8925
    %v8927 = vlaneseq
    %v8928 = vshrl.u32 %v8927, 7
    %v8929 = vsub.s32 %v8799, %v8928
    %v8930 = vrot.slane %v8787, %v8929
    %v8931 = vsel %vm8804, %v8930, %v8926
    %v8932 = vlaneseq
    %v8933 = vshrl.u32 %v8932, 7
    %v8934 = vsub.s32 %v8794, %v8933
    %v8935 = vrot.slane %v8790, %v8934
    %v8936 = vlaneseq
    %v8937 = vshrl.u32 %v8936, 7
    %v8938 = vsub.s32 %v8799, %v8937
    %v8939 = vrot.slane %v8793, %v8938
    %v8940 = vsel %vm8804, %v8939, %v8935
    %v8941 = vsel %vm1212, %v8814, %v8805
    %v8942 = vsel %vm1214, %v8823, %v8941
    %v8943 = vsel %vm1216, %v8832, %v8942
    %v8944 = vsel %vm1218, %v8841, %v8943
    %v8945 = vsel %vm1220, %v8850, %v8944
    %v8946 = vsel %vm1222, %v8859, %v8945
    %v8947 = vsel %vm1224, %v8868, %v8946
    %v8948 = vsel %vm1212, %v8886, %v8877
    %v8949 = vsel %vm1214, %v8895, %v8948
    %v8950 = vsel %vm1216, %v8904, %v8949
    %v8951 = vsel %vm1218, %v8913, %v8950
    %v8952 = vsel %vm1220, %v8922, %v8951
    %v8953 = vsel %vm1222, %v8931, %v8952
    %v8954 = vsel %vm1224, %v8940, %v8953
    %8989 = vset.pattern.permute.xlu0 4
    %8990 = vperm.xlu0 %8989, %v5208
    %v8991 = vpop.permute.xlu0 %8990
    %8992 = vset.pattern.permute.xlu0 4
    %8993 = vperm.xlu0 %8992, %v5209
    %v8994 = vpop.permute.xlu0 %8993
    %8995 = vset.pattern.permute.xlu0 4
    %8996 = vperm.xlu0 %8995, %v5210
    %v8997 = vpop.permute.xlu0 %8996
    %8998 = vset.pattern.permute.xlu0 4
    %8999 = vperm.xlu0 %8998, %v5211
    %v9000 = vpop.permute.xlu0 %8999
    %9001 = vset.pattern.permute.xlu0 4
    %9002 = vperm.xlu0 %9001, %v5212
    %v9003 = vpop.permute.xlu0 %9002
    %9004 = vset.pattern.permute.xlu0 4
    %9005 = vperm.xlu0 %9004, %v5213
    %v9006 = vpop.permute.xlu0 %9005
    %9007 = vset.pattern.permute.xlu0 4
    %9008 = vperm.xlu0 %9007, %v5214
    %v9009 = vpop.permute.xlu0 %9008
    %9010 = vset.pattern.permute.xlu0 4
    %9011 = vperm.xlu0 %9010, %v5215
    %v9012 = vpop.permute.xlu0 %9011
    %9013 = vset.pattern.permute.xlu0 4
    %9014 = vperm.xlu0 %9013, %v5216
    %v9015 = vpop.permute.xlu0 %9014
    %9016 = vset.pattern.permute.xlu0 4
    %9017 = vperm.xlu0 %9016, %v5217
    %v9018 = vpop.permute.xlu0 %9017
    %9019 = vset.pattern.permute.xlu0 4
    %9020 = vperm.xlu0 %9019, %v5218
    %v9021 = vpop.permute.xlu0 %9020
    %9022 = vset.pattern.permute.xlu0 4
    %9023 = vperm.xlu0 %9022, %v5219
    %v9024 = vpop.permute.xlu0 %9023
    %9025 = vset.pattern.permute.xlu0 4
    %9026 = vperm.xlu0 %9025, %v5220
    %v9027 = vpop.permute.xlu0 %9026
    %9028 = vset.pattern.permute.xlu0 4
    %9029 = vperm.xlu0 %9028, %v5221
    %v9030 = vpop.permute.xlu0 %9029
    %9031 = vset.pattern.permute.xlu0 4
    %9032 = vperm.xlu0 %9031, %v5222
    %v9033 = vpop.permute.xlu0 %9032
    %9034 = vset.pattern.permute.xlu0 4
    %9035 = vperm.xlu0 %9034, %v5223
    %v9036 = vpop.permute.xlu0 %9035
    %9037 = vset.pattern.permute.xlu0 4
    %9038 = vperm.xlu0 %9037, %v5224
    %v9039 = vpop.permute.xlu0 %9038
    %9040 = vset.pattern.permute.xlu0 4
    %9041 = vperm.xlu0 %9040, %v5225
    %v9042 = vpop.permute.xlu0 %9041
    %9043 = vset.pattern.permute.xlu0 4
    %9044 = vperm.xlu0 %9043, %v5226
    %v9045 = vpop.permute.xlu0 %9044
    %9046 = vset.pattern.permute.xlu0 4
    %9047 = vperm.xlu0 %9046, %v5227
    %v9048 = vpop.permute.xlu0 %9047
    %9049 = vset.pattern.permute.xlu0 4
    %9050 = vperm.xlu0 %9049, %v5228
    %v9051 = vpop.permute.xlu0 %9050
    %9052 = vset.pattern.permute.xlu0 4
    %9053 = vperm.xlu0 %9052, %v5229
    %v9054 = vpop.permute.xlu0 %9053
    %9055 = vset.pattern.permute.xlu0 4
    %9056 = vperm.xlu0 %9055, %v5230
    %v9057 = vpop.permute.xlu0 %9056
    %9058 = vset.pattern.permute.xlu0 4
    %9059 = vperm.xlu0 %9058, %v5231
    %v9060 = vpop.permute.xlu0 %9059
    %9061 = vset.pattern.permute.xlu0 4
    %9062 = vperm.xlu0 %9061, %v5232
    %v9063 = vpop.permute.xlu0 %9062
    %9064 = vset.pattern.permute.xlu0 4
    %9065 = vperm.xlu0 %9064, %v5233
    %v9066 = vpop.permute.xlu0 %9065
    %9067 = vset.pattern.permute.xlu0 4
    %9068 = vperm.xlu0 %9067, %v5234
    %v9069 = vpop.permute.xlu0 %9068
    %9070 = vset.pattern.permute.xlu0 4
    %9071 = vperm.xlu0 %9070, %v5235
    %v9072 = vpop.permute.xlu0 %9071
    %9073 = vset.pattern.permute.xlu0 4
    %9074 = vperm.xlu0 %9073, %v5236
    %v9075 = vpop.permute.xlu0 %9074
    %9076 = vset.pattern.permute.xlu0 4
    %9077 = vperm.xlu0 %9076, %v5237
    %v9078 = vpop.permute.xlu0 %9077
    %9079 = vset.pattern.permute.xlu0 4
    %9080 = vperm.xlu0 %9079, %v5238
    %v9081 = vpop.permute.xlu0 %9080
    %9082 = vset.pattern.permute.xlu0 4
    %9083 = vperm.xlu0 %9082, %v5239
    %v9084 = vpop.permute.xlu0 %9083
    %v9085 = vadd.s32 %v1065, 4294967232
    %v9086 = vlaneseq
    %v9087 = vshrl.u32 %v9086, 7
    %v9088 = vsub.s32 %v9085, %v9087
    %v9089 = vrot.slane %v8991, %v9088
    %v9090 = vadd.s32 %v1065, 4294967224
    %v9091 = vlaneseq
    %v9092 = vshrl.u32 %v9091, 7
    %v9093 = vsub.s32 %v9090, %v9092
    %v9094 = vrot.slane %v8994, %v9093
    %vm9095 = vcmask 654912
    %v9096 = vsel %vm9095, %v9094, %v9089
    %v9097 = vlaneseq
    %v9098 = vshrl.u32 %v9097, 7
    %v9099 = vsub.s32 %v9085, %v9098
    %v9100 = vrot.slane %v8997, %v9099
    %v9101 = vlaneseq
    %v9102 = vshrl.u32 %v9101, 7
    %v9103 = vsub.s32 %v9090, %v9102
    %v9104 = vrot.slane %v9000, %v9103
    %v9105 = vsel %vm9095, %v9104, %v9100
    %v9106 = vlaneseq
    %v9107 = vshrl.u32 %v9106, 7
    %v9108 = vsub.s32 %v9085, %v9107
    %v9109 = vrot.slane %v9003, %v9108
    %v9110 = vlaneseq
    %v9111 = vshrl.u32 %v9110, 7
    %v9112 = vsub.s32 %v9090, %v9111
    %v9113 = vrot.slane %v9006, %v9112
    %v9114 = vsel %vm9095, %v9113, %v9109
    %v9115 = vlaneseq
    %v9116 = vshrl.u32 %v9115, 7
    %v9117 = vsub.s32 %v9085, %v9116
    %v9118 = vrot.slane %v9009, %v9117
    %v9119 = vlaneseq
    %v9120 = vshrl.u32 %v9119, 7
    %v9121 = vsub.s32 %v9090, %v9120
    %v9122 = vrot.slane %v9012, %v9121
    %v9123 = vsel %vm9095, %v9122, %v9118
    %v9124 = vlaneseq
    %v9125 = vshrl.u32 %v9124, 7
    %v9126 = vsub.s32 %v9085, %v9125
    %v9127 = vrot.slane %v9015, %v9126
    %v9128 = vlaneseq
    %v9129 = vshrl.u32 %v9128, 7
    %v9130 = vsub.s32 %v9090, %v9129
    %v9131 = vrot.slane %v9018, %v9130
    %v9132 = vsel %vm9095, %v9131, %v9127
    %v9133 = vlaneseq
    %v9134 = vshrl.u32 %v9133, 7
    %v9135 = vsub.s32 %v9085, %v9134
    %v9136 = vrot.slane %v9021, %v9135
    %v9137 = vlaneseq
    %v9138 = vshrl.u32 %v9137, 7
    %v9139 = vsub.s32 %v9090, %v9138
    %v9140 = vrot.slane %v9024, %v9139
    %v9141 = vsel %vm9095, %v9140, %v9136
    %v9142 = vlaneseq
    %v9143 = vshrl.u32 %v9142, 7
    %v9144 = vsub.s32 %v9085, %v9143
    %v9145 = vrot.slane %v9027, %v9144
    %v9146 = vlaneseq
    %v9147 = vshrl.u32 %v9146, 7
    %v9148 = vsub.s32 %v9090, %v9147
    %v9149 = vrot.slane %v9030, %v9148
    %v9150 = vsel %vm9095, %v9149, %v9145
    %v9151 = vlaneseq
    %v9152 = vshrl.u32 %v9151, 7
    %v9153 = vsub.s32 %v9085, %v9152
    %v9154 = vrot.slane %v9033, %v9153
    %v9155 = vlaneseq
    %v9156 = vshrl.u32 %v9155, 7
    %v9157 = vsub.s32 %v9090, %v9156
    %v9158 = vrot.slane %v9036, %v9157
    %v9159 = vsel %vm9095, %v9158, %v9154
    %v9160 = vlaneseq
    %v9161 = vshrl.u32 %v9160, 7
    %v9162 = vsub.s32 %v9085, %v9161
    %v9163 = vrot.slane %v9039, %v9162
    %v9164 = vlaneseq
    %v9165 = vshrl.u32 %v9164, 7
    %v9166 = vsub.s32 %v9090, %v9165
    %v9167 = vrot.slane %v9042, %v9166
    %v9168 = vsel %vm9095, %v9167, %v9163
    %v9169 = vlaneseq
    %v9170 = vshrl.u32 %v9169, 7
    %v9171 = vsub.s32 %v9085, %v9170
    %v9172 = vrot.slane %v9045, %v9171
    %v9173 = vlaneseq
    %v9174 = vshrl.u32 %v9173, 7
    %v9175 = vsub.s32 %v9090, %v9174
    %v9176 = vrot.slane %v9048, %v9175
    %v9177 = vsel %vm9095, %v9176, %v9172
    %v9178 = vlaneseq
    %v9179 = vshrl.u32 %v9178, 7
    %v9180 = vsub.s32 %v9085, %v9179
    %v9181 = vrot.slane %v9051, %v9180
    %v9182 = vlaneseq
    %v9183 = vshrl.u32 %v9182, 7
    %v9184 = vsub.s32 %v9090, %v9183
    %v9185 = vrot.slane %v9054, %v9184
    %v9186 = vsel %vm9095, %v9185, %v9181
    %v9187 = vlaneseq
    %v9188 = vshrl.u32 %v9187, 7
    %v9189 = vsub.s32 %v9085, %v9188
    %v9190 = vrot.slane %v9057, %v9189
    %v9191 = vlaneseq
    %v9192 = vshrl.u32 %v9191, 7
    %v9193 = vsub.s32 %v9090, %v9192
    %v9194 = vrot.slane %v9060, %v9193
    %v9195 = vsel %vm9095, %v9194, %v9190
    %v9196 = vlaneseq
    %v9197 = vshrl.u32 %v9196, 7
    %v9198 = vsub.s32 %v9085, %v9197
    %v9199 = vrot.slane %v9063, %v9198
    %v9200 = vlaneseq
    %v9201 = vshrl.u32 %v9200, 7
    %v9202 = vsub.s32 %v9090, %v9201
    %v9203 = vrot.slane %v9066, %v9202
    %v9204 = vsel %vm9095, %v9203, %v9199
    %v9205 = vlaneseq
    %v9206 = vshrl.u32 %v9205, 7
    %v9207 = vsub.s32 %v9085, %v9206
    %v9208 = vrot.slane %v9069, %v9207
    %v9209 = vlaneseq
    %v9210 = vshrl.u32 %v9209, 7
    %v9211 = vsub.s32 %v9090, %v9210
    %v9212 = vrot.slane %v9072, %v9211
    %v9213 = vsel %vm9095, %v9212, %v9208
    %v9214 = vlaneseq
    %v9215 = vshrl.u32 %v9214, 7
    %v9216 = vsub.s32 %v9085, %v9215
    %v9217 = vrot.slane %v9075, %v9216
    %v9218 = vlaneseq
    %v9219 = vshrl.u32 %v9218, 7
    %v9220 = vsub.s32 %v9090, %v9219
    %v9221 = vrot.slane %v9078, %v9220
    %v9222 = vsel %vm9095, %v9221, %v9217
    %v9223 = vlaneseq
    %v9224 = vshrl.u32 %v9223, 7
    %v9225 = vsub.s32 %v9085, %v9224
    %v9226 = vrot.slane %v9081, %v9225
    %v9227 = vlaneseq
    %v9228 = vshrl.u32 %v9227, 7
    %v9229 = vsub.s32 %v9090, %v9228
    %v9230 = vrot.slane %v9084, %v9229
    %v9231 = vsel %vm9095, %v9230, %v9226
    %v9232 = vsel %vm1212, %v9105, %v9096
    %v9233 = vsel %vm1214, %v9114, %v9232
    %v9234 = vsel %vm1216, %v9123, %v9233
    %v9235 = vsel %vm1218, %v9132, %v9234
    %v9236 = vsel %vm1220, %v9141, %v9235
    %v9237 = vsel %vm1222, %v9150, %v9236
    %v9238 = vsel %vm1224, %v9159, %v9237
    %v9239 = vsel %vm1212, %v9177, %v9168
    %v9240 = vsel %vm1214, %v9186, %v9239
    %v9241 = vsel %vm1216, %v9195, %v9240
    %v9242 = vsel %vm1218, %v9204, %v9241
    %v9243 = vsel %vm1220, %v9213, %v9242
    %v9244 = vsel %vm1222, %v9222, %v9243
    %v9245 = vsel %vm1224, %v9231, %v9244
    %9280 = vset.pattern.permute.xlu0 5
    %9281 = vperm.xlu0 %9280, %v6060
    %v9282 = vpop.permute.xlu0 %9281
    %9283 = vset.pattern.permute.xlu0 5
    %9284 = vperm.xlu0 %9283, %v6061
    %v9285 = vpop.permute.xlu0 %9284
    %9286 = vset.pattern.permute.xlu0 5
    %9287 = vperm.xlu0 %9286, %v6062
    %v9288 = vpop.permute.xlu0 %9287
    %9289 = vset.pattern.permute.xlu0 5
    %9290 = vperm.xlu0 %9289, %v6063
    %v9291 = vpop.permute.xlu0 %9290
    %9292 = vset.pattern.permute.xlu0 5
    %9293 = vperm.xlu0 %9292, %v6064
    %v9294 = vpop.permute.xlu0 %9293
    %9295 = vset.pattern.permute.xlu0 5
    %9296 = vperm.xlu0 %9295, %v6065
    %v9297 = vpop.permute.xlu0 %9296
    %9298 = vset.pattern.permute.xlu0 5
    %9299 = vperm.xlu0 %9298, %v6066
    %v9300 = vpop.permute.xlu0 %9299
    %9301 = vset.pattern.permute.xlu0 5
    %9302 = vperm.xlu0 %9301, %v6067
    %v9303 = vpop.permute.xlu0 %9302
    %9304 = vset.pattern.permute.xlu0 5
    %9305 = vperm.xlu0 %9304, %v6068
    %v9306 = vpop.permute.xlu0 %9305
    %9307 = vset.pattern.permute.xlu0 5
    %9308 = vperm.xlu0 %9307, %v6069
    %v9309 = vpop.permute.xlu0 %9308
    %9310 = vset.pattern.permute.xlu0 5
    %9311 = vperm.xlu0 %9310, %v6070
    %v9312 = vpop.permute.xlu0 %9311
    %9313 = vset.pattern.permute.xlu0 5
    %9314 = vperm.xlu0 %9313, %v6071
    %v9315 = vpop.permute.xlu0 %9314
    %9316 = vset.pattern.permute.xlu0 5
    %9317 = vperm.xlu0 %9316, %v6072
    %v9318 = vpop.permute.xlu0 %9317
    %9319 = vset.pattern.permute.xlu0 5
    %9320 = vperm.xlu0 %9319, %v6073
    %v9321 = vpop.permute.xlu0 %9320
    %9322 = vset.pattern.permute.xlu0 5
    %9323 = vperm.xlu0 %9322, %v6074
    %v9324 = vpop.permute.xlu0 %9323
    %9325 = vset.pattern.permute.xlu0 5
    %9326 = vperm.xlu0 %9325, %v6075
    %v9327 = vpop.permute.xlu0 %9326
    %9328 = vset.pattern.permute.xlu0 5
    %9329 = vperm.xlu0 %9328, %v6076
    %v9330 = vpop.permute.xlu0 %9329
    %9331 = vset.pattern.permute.xlu0 5
    %9332 = vperm.xlu0 %9331, %v6077
    %v9333 = vpop.permute.xlu0 %9332
    %9334 = vset.pattern.permute.xlu0 5
    %9335 = vperm.xlu0 %9334, %v6078
    %v9336 = vpop.permute.xlu0 %9335
    %9337 = vset.pattern.permute.xlu0 5
    %9338 = vperm.xlu0 %9337, %v6079
    %v9339 = vpop.permute.xlu0 %9338
    %9340 = vset.pattern.permute.xlu0 5
    %9341 = vperm.xlu0 %9340, %v6080
    %v9342 = vpop.permute.xlu0 %9341
    %9343 = vset.pattern.permute.xlu0 5
    %9344 = vperm.xlu0 %9343, %v6081
    %v9345 = vpop.permute.xlu0 %9344
    %9346 = vset.pattern.permute.xlu0 5
    %9347 = vperm.xlu0 %9346, %v6082
    %v9348 = vpop.permute.xlu0 %9347
    %9349 = vset.pattern.permute.xlu0 5
    %9350 = vperm.xlu0 %9349, %v6083
    %v9351 = vpop.permute.xlu0 %9350
    %9352 = vset.pattern.permute.xlu0 5
    %9353 = vperm.xlu0 %9352, %v6084
    %v9354 = vpop.permute.xlu0 %9353
    %9355 = vset.pattern.permute.xlu0 5
    %9356 = vperm.xlu0 %9355, %v6085
    %v9357 = vpop.permute.xlu0 %9356
    %9358 = vset.pattern.permute.xlu0 5
    %9359 = vperm.xlu0 %9358, %v6086
    %v9360 = vpop.permute.xlu0 %9359
    %9361 = vset.pattern.permute.xlu0 5
    %9362 = vperm.xlu0 %9361, %v6087
    %v9363 = vpop.permute.xlu0 %9362
    %9364 = vset.pattern.permute.xlu0 5
    %9365 = vperm.xlu0 %9364, %v6088
    %v9366 = vpop.permute.xlu0 %9365
    %9367 = vset.pattern.permute.xlu0 5
    %9368 = vperm.xlu0 %9367, %v6089
    %v9369 = vpop.permute.xlu0 %9368
    %9370 = vset.pattern.permute.xlu0 5
    %9371 = vperm.xlu0 %9370, %v6090
    %v9372 = vpop.permute.xlu0 %9371
    %9373 = vset.pattern.permute.xlu0 5
    %9374 = vperm.xlu0 %9373, %v6091
    %v9375 = vpop.permute.xlu0 %9374
    %v9376 = vadd.s32 %v1065, 4294967216
    %v9377 = vlaneseq
    %v9378 = vshrl.u32 %v9377, 7
    %v9379 = vsub.s32 %v9376, %v9378
    %v9380 = vrot.slane %v9282, %v9379
    %v9381 = vadd.s32 %v1065, 4294967208
    %v9382 = vlaneseq
    %v9383 = vshrl.u32 %v9382, 7
    %v9384 = vsub.s32 %v9381, %v9383
    %v9385 = vrot.slane %v9285, %v9384
    %vm9386 = vcmask 786112
    %v9387 = vsel %vm9386, %v9385, %v9380
    %v9388 = vlaneseq
    %v9389 = vshrl.u32 %v9388, 7
    %v9390 = vsub.s32 %v9376, %v9389
    %v9391 = vrot.slane %v9288, %v9390
    %v9392 = vlaneseq
    %v9393 = vshrl.u32 %v9392, 7
    %v9394 = vsub.s32 %v9381, %v9393
    %v9395 = vrot.slane %v9291, %v9394
    %v9396 = vsel %vm9386, %v9395, %v9391
    %v9397 = vlaneseq
    %v9398 = vshrl.u32 %v9397, 7
    %v9399 = vsub.s32 %v9376, %v9398
    %v9400 = vrot.slane %v9294, %v9399
    %v9401 = vlaneseq
    %v9402 = vshrl.u32 %v9401, 7
    %v9403 = vsub.s32 %v9381, %v9402
    %v9404 = vrot.slane %v9297, %v9403
    %v9405 = vsel %vm9386, %v9404, %v9400
    %v9406 = vlaneseq
    %v9407 = vshrl.u32 %v9406, 7
    %v9408 = vsub.s32 %v9376, %v9407
    %v9409 = vrot.slane %v9300, %v9408
    %v9410 = vlaneseq
    %v9411 = vshrl.u32 %v9410, 7
    %v9412 = vsub.s32 %v9381, %v9411
    %v9413 = vrot.slane %v9303, %v9412
    %v9414 = vsel %vm9386, %v9413, %v9409
    %v9415 = vlaneseq
    %v9416 = vshrl.u32 %v9415, 7
    %v9417 = vsub.s32 %v9376, %v9416
    %v9418 = vrot.slane %v9306, %v9417
    %v9419 = vlaneseq
    %v9420 = vshrl.u32 %v9419, 7
    %v9421 = vsub.s32 %v9381, %v9420
    %v9422 = vrot.slane %v9309, %v9421
    %v9423 = vsel %vm9386, %v9422, %v9418
    %v9424 = vlaneseq
    %v9425 = vshrl.u32 %v9424, 7
    %v9426 = vsub.s32 %v9376, %v9425
    %v9427 = vrot.slane %v9312, %v9426
    %v9428 = vlaneseq
    %v9429 = vshrl.u32 %v9428, 7
    %v9430 = vsub.s32 %v9381, %v9429
    %v9431 = vrot.slane %v9315, %v9430
    %v9432 = vsel %vm9386, %v9431, %v9427
    %v9433 = vlaneseq
    %v9434 = vshrl.u32 %v9433, 7
    %v9435 = vsub.s32 %v9376, %v9434
    %v9436 = vrot.slane %v9318, %v9435
    %v9437 = vlaneseq
    %v9438 = vshrl.u32 %v9437, 7
    %v9439 = vsub.s32 %v9381, %v9438
    %v9440 = vrot.slane %v9321, %v9439
    %v9441 = vsel %vm9386, %v9440, %v9436
    %v9442 = vlaneseq
    %v9443 = vshrl.u32 %v9442, 7
    %v9444 = vsub.s32 %v9376, %v9443
    %v9445 = vrot.slane %v9324, %v9444
    %v9446 = vlaneseq
    %v9447 = vshrl.u32 %v9446, 7
    %v9448 = vsub.s32 %v9381, %v9447
    %v9449 = vrot.slane %v9327, %v9448
    %v9450 = vsel %vm9386, %v9449, %v9445
    %v9451 = vlaneseq
    %v9452 = vshrl.u32 %v9451, 7
    %v9453 = vsub.s32 %v9376, %v9452
    %v9454 = vrot.slane %v9330, %v9453
    %v9455 = vlaneseq
    %v9456 = vshrl.u32 %v9455, 7
    %v9457 = vsub.s32 %v9381, %v9456
    %v9458 = vrot.slane %v9333, %v9457
    %v9459 = vsel %vm9386, %v9458, %v9454
    %v9460 = vlaneseq
    %v9461 = vshrl.u32 %v9460, 7
    %v9462 = vsub.s32 %v9376, %v9461
    %v9463 = vrot.slane %v9336, %v9462
    %v9464 = vlaneseq
    %v9465 = vshrl.u32 %v9464, 7
    %v9466 = vsub.s32 %v9381, %v9465
    %v9467 = vrot.slane %v9339, %v9466
    %v9468 = vsel %vm9386, %v9467, %v9463
    %v9469 = vlaneseq
    %v9470 = vshrl.u32 %v9469, 7
    %v9471 = vsub.s32 %v9376, %v9470
    %v9472 = vrot.slane %v9342, %v9471
    %v9473 = vlaneseq
    %v9474 = vshrl.u32 %v9473, 7
    %v9475 = vsub.s32 %v9381, %v9474
    %v9476 = vrot.slane %v9345, %v9475
    %v9477 = vsel %vm9386, %v9476, %v9472
    %v9478 = vlaneseq
    %v9479 = vshrl.u32 %v9478, 7
    %v9480 = vsub.s32 %v9376, %v9479
    %v9481 = vrot.slane %v9348, %v9480
    %v9482 = vlaneseq
    %v9483 = vshrl.u32 %v9482, 7
    %v9484 = vsub.s32 %v9381, %v9483
    %v9485 = vrot.slane %v9351, %v9484
    %v9486 = vsel %vm9386, %v9485, %v9481
    %v9487 = vlaneseq
    %v9488 = vshrl.u32 %v9487, 7
    %v9489 = vsub.s32 %v9376, %v9488
    %v9490 = vrot.slane %v9354, %v9489
    %v9491 = vlaneseq
    %v9492 = vshrl.u32 %v9491, 7
    %v9493 = vsub.s32 %v9381, %v9492
    %v9494 = vrot.slane %v9357, %v9493
    %v9495 = vsel %vm9386, %v9494, %v9490
    %v9496 = vlaneseq
    %v9497 = vshrl.u32 %v9496, 7
    %v9498 = vsub.s32 %v9376, %v9497
    %v9499 = vrot.slane %v9360, %v9498
    %v9500 = vlaneseq
    %v9501 = vshrl.u32 %v9500, 7
    %v9502 = vsub.s32 %v9381, %v9501
    %v9503 = vrot.slane %v9363, %v9502
    %v9504 = vsel %vm9386, %v9503, %v9499
    %v9505 = vlaneseq
    %v9506 = vshrl.u32 %v9505, 7
    %v9507 = vsub.s32 %v9376, %v9506
    %v9508 = vrot.slane %v9366, %v9507
    %v9509 = vlaneseq
    %v9510 = vshrl.u32 %v9509, 7
    %v9511 = vsub.s32 %v9381, %v9510
    %v9512 = vrot.slane %v9369, %v9511
    %v9513 = vsel %vm9386, %v9512, %v9508
    %v9514 = vlaneseq
    %v9515 = vshrl.u32 %v9514, 7
    %v9516 = vsub.s32 %v9376, %v9515
    %v9517 = vrot.slane %v9372, %v9516
    %v9518 = vlaneseq
    %v9519 = vshrl.u32 %v9518, 7
    %v9520 = vsub.s32 %v9381, %v9519
    %v9521 = vrot.slane %v9375, %v9520
    %v9522 = vsel %vm9386, %v9521, %v9517
    %v9523 = vsel %vm1212, %v9396, %v9387
    %v9524 = vsel %vm1214, %v9405, %v9523
    %v9525 = vsel %vm1216, %v9414, %v9524
    %v9526 = vsel %vm1218, %v9423, %v9525
    %v9527 = vsel %vm1220, %v9432, %v9526
    %v9528 = vsel %vm1222, %v9441, %v9527
    %v9529 = vsel %vm1224, %v9450, %v9528
    %v9530 = vsel %vm1212, %v9468, %v9459
    %v9531 = vsel %vm1214, %v9477, %v9530
    %v9532 = vsel %vm1216, %v9486, %v9531
    %v9533 = vsel %vm1218, %v9495, %v9532
    %v9534 = vsel %vm1220, %v9504, %v9533
    %v9535 = vsel %vm1222, %v9513, %v9534
    %v9536 = vsel %vm1224, %v9522, %v9535
    %9571 = vset.pattern.permute.xlu0 6
    %9572 = vperm.xlu0 %9571, %v6912
    %v9573 = vpop.permute.xlu0 %9572
    %9574 = vset.pattern.permute.xlu0 6
    %9575 = vperm.xlu0 %9574, %v6913
    %v9576 = vpop.permute.xlu0 %9575
    %9577 = vset.pattern.permute.xlu0 6
    %9578 = vperm.xlu0 %9577, %v6914
    %v9579 = vpop.permute.xlu0 %9578
    %9580 = vset.pattern.permute.xlu0 6
    %9581 = vperm.xlu0 %9580, %v6915
    %v9582 = vpop.permute.xlu0 %9581
    %9583 = vset.pattern.permute.xlu0 6
    %9584 = vperm.xlu0 %9583, %v6916
    %v9585 = vpop.permute.xlu0 %9584
    %9586 = vset.pattern.permute.xlu0 6
    %9587 = vperm.xlu0 %9586, %v6917
    %v9588 = vpop.permute.xlu0 %9587
    %9589 = vset.pattern.permute.xlu0 6
    %9590 = vperm.xlu0 %9589, %v6918
    %v9591 = vpop.permute.xlu0 %9590
    %9592 = vset.pattern.permute.xlu0 6
    %9593 = vperm.xlu0 %9592, %v6919
    %v9594 = vpop.permute.xlu0 %9593
    %9595 = vset.pattern.permute.xlu0 6
    %9596 = vperm.xlu0 %9595, %v6920
    %v9597 = vpop.permute.xlu0 %9596
    %9598 = vset.pattern.permute.xlu0 6
    %9599 = vperm.xlu0 %9598, %v6921
    %v9600 = vpop.permute.xlu0 %9599
    %9601 = vset.pattern.permute.xlu0 6
    %9602 = vperm.xlu0 %9601, %v6922
    %v9603 = vpop.permute.xlu0 %9602
    %9604 = vset.pattern.permute.xlu0 6
    %9605 = vperm.xlu0 %9604, %v6923
    %v9606 = vpop.permute.xlu0 %9605
    %9607 = vset.pattern.permute.xlu0 6
    %9608 = vperm.xlu0 %9607, %v6924
    %v9609 = vpop.permute.xlu0 %9608
    %9610 = vset.pattern.permute.xlu0 6
    %9611 = vperm.xlu0 %9610, %v6925
    %v9612 = vpop.permute.xlu0 %9611
    %9613 = vset.pattern.permute.xlu0 6
    %9614 = vperm.xlu0 %9613, %v6926
    %v9615 = vpop.permute.xlu0 %9614
    %9616 = vset.pattern.permute.xlu0 6
    %9617 = vperm.xlu0 %9616, %v6927
    %v9618 = vpop.permute.xlu0 %9617
    %9619 = vset.pattern.permute.xlu0 6
    %9620 = vperm.xlu0 %9619, %v6928
    %v9621 = vpop.permute.xlu0 %9620
    %9622 = vset.pattern.permute.xlu0 6
    %9623 = vperm.xlu0 %9622, %v6929
    %v9624 = vpop.permute.xlu0 %9623
    %9625 = vset.pattern.permute.xlu0 6
    %9626 = vperm.xlu0 %9625, %v6930
    %v9627 = vpop.permute.xlu0 %9626
    %9628 = vset.pattern.permute.xlu0 6
    %9629 = vperm.xlu0 %9628, %v6931
    %v9630 = vpop.permute.xlu0 %9629
    %9631 = vset.pattern.permute.xlu0 6
    %9632 = vperm.xlu0 %9631, %v6932
    %v9633 = vpop.permute.xlu0 %9632
    %9634 = vset.pattern.permute.xlu0 6
    %9635 = vperm.xlu0 %9634, %v6933
    %v9636 = vpop.permute.xlu0 %9635
    %9637 = vset.pattern.permute.xlu0 6
    %9638 = vperm.xlu0 %9637, %v6934
    %v9639 = vpop.permute.xlu0 %9638
    %9640 = vset.pattern.permute.xlu0 6
    %9641 = vperm.xlu0 %9640, %v6935
    %v9642 = vpop.permute.xlu0 %9641
    %9643 = vset.pattern.permute.xlu0 6
    %9644 = vperm.xlu0 %9643, %v6936
    %v9645 = vpop.permute.xlu0 %9644
    %9646 = vset.pattern.permute.xlu0 6
    %9647 = vperm.xlu0 %9646, %v6937
    %v9648 = vpop.permute.xlu0 %9647
    %9649 = vset.pattern.permute.xlu0 6
    %9650 = vperm.xlu0 %9649, %v6938
    %v9651 = vpop.permute.xlu0 %9650
    %9652 = vset.pattern.permute.xlu0 6
    %9653 = vperm.xlu0 %9652, %v6939
    %v9654 = vpop.permute.xlu0 %9653
    %9655 = vset.pattern.permute.xlu0 6
    %9656 = vperm.xlu0 %9655, %v6940
    %v9657 = vpop.permute.xlu0 %9656
    %9658 = vset.pattern.permute.xlu0 6
    %9659 = vperm.xlu0 %9658, %v6941
    %v9660 = vpop.permute.xlu0 %9659
    %9661 = vset.pattern.permute.xlu0 6
    %9662 = vperm.xlu0 %9661, %v6942
    %v9663 = vpop.permute.xlu0 %9662
    %9664 = vset.pattern.permute.xlu0 6
    %9665 = vperm.xlu0 %9664, %v6943
    %v9666 = vpop.permute.xlu0 %9665
    %v9667 = vadd.s32 %v1065, 4294967200
    %v9668 = vlaneseq
    %v9669 = vshrl.u32 %v9668, 7
    %v9670 = vsub.s32 %v9667, %v9669
    %v9671 = vrot.slane %v9573, %v9670
    %v9672 = vadd.s32 %v1065, 4294967192
    %v9673 = vlaneseq
    %v9674 = vshrl.u32 %v9673, 7
    %v9675 = vsub.s32 %v9672, %v9674
    %v9676 = vrot.slane %v9576, %v9675
    %vm9677 = vcmask 917312
    %v9678 = vsel %vm9677, %v9676, %v9671
    %v9679 = vlaneseq
    %v9680 = vshrl.u32 %v9679, 7
    %v9681 = vsub.s32 %v9667, %v9680
    %v9682 = vrot.slane %v9579, %v9681
    %v9683 = vlaneseq
    %v9684 = vshrl.u32 %v9683, 7
    %v9685 = vsub.s32 %v9672, %v9684
    %v9686 = vrot.slane %v9582, %v9685
    %v9687 = vsel %vm9677, %v9686, %v9682
    %v9688 = vlaneseq
    %v9689 = vshrl.u32 %v9688, 7
    %v9690 = vsub.s32 %v9667, %v9689
    %v9691 = vrot.slane %v9585, %v9690
    %v9692 = vlaneseq
    %v9693 = vshrl.u32 %v9692, 7
    %v9694 = vsub.s32 %v9672, %v9693
    %v9695 = vrot.slane %v9588, %v9694
    %v9696 = vsel %vm9677, %v9695, %v9691
    %v9697 = vlaneseq
    %v9698 = vshrl.u32 %v9697, 7
    %v9699 = vsub.s32 %v9667, %v9698
    %v9700 = vrot.slane %v9591, %v9699
    %v9701 = vlaneseq
    %v9702 = vshrl.u32 %v9701, 7
    %v9703 = vsub.s32 %v9672, %v9702
    %v9704 = vrot.slane %v9594, %v9703
    %v9705 = vsel %vm9677, %v9704, %v9700
    %v9706 = vlaneseq
    %v9707 = vshrl.u32 %v9706, 7
    %v9708 = vsub.s32 %v9667, %v9707
    %v9709 = vrot.slane %v9597, %v9708
    %v9710 = vlaneseq
    %v9711 = vshrl.u32 %v9710, 7
    %v9712 = vsub.s32 %v9672, %v9711
    %v9713 = vrot.slane %v9600, %v9712
    %v9714 = vsel %vm9677, %v9713, %v9709
    %v9715 = vlaneseq
    %v9716 = vshrl.u32 %v9715, 7
    %v9717 = vsub.s32 %v9667, %v9716
    %v9718 = vrot.slane %v9603, %v9717
    %v9719 = vlaneseq
    %v9720 = vshrl.u32 %v9719, 7
    %v9721 = vsub.s32 %v9672, %v9720
    %v9722 = vrot.slane %v9606, %v9721
    %v9723 = vsel %vm9677, %v9722, %v9718
    %v9724 = vlaneseq
    %v9725 = vshrl.u32 %v9724, 7
    %v9726 = vsub.s32 %v9667, %v9725
    %v9727 = vrot.slane %v9609, %v9726
    %v9728 = vlaneseq
    %v9729 = vshrl.u32 %v9728, 7
    %v9730 = vsub.s32 %v9672, %v9729
    %v9731 = vrot.slane %v9612, %v9730
    %v9732 = vsel %vm9677, %v9731, %v9727
    %v9733 = vlaneseq
    %v9734 = vshrl.u32 %v9733, 7
    %v9735 = vsub.s32 %v9667, %v9734
    %v9736 = vrot.slane %v9615, %v9735
    %v9737 = vlaneseq
    %v9738 = vshrl.u32 %v9737, 7
    %v9739 = vsub.s32 %v9672, %v9738
    %v9740 = vrot.slane %v9618, %v9739
    %v9741 = vsel %vm9677, %v9740, %v9736
    %v9742 = vlaneseq
    %v9743 = vshrl.u32 %v9742, 7
    %v9744 = vsub.s32 %v9667, %v9743
    %v9745 = vrot.slane %v9621, %v9744
    %v9746 = vlaneseq
    %v9747 = vshrl.u32 %v9746, 7
    %v9748 = vsub.s32 %v9672, %v9747
    %v9749 = vrot.slane %v9624, %v9748
    %v9750 = vsel %vm9677, %v9749, %v9745
    %v9751 = vlaneseq
    %v9752 = vshrl.u32 %v9751, 7
    %v9753 = vsub.s32 %v9667, %v9752
    %v9754 = vrot.slane %v9627, %v9753
    %v9755 = vlaneseq
    %v9756 = vshrl.u32 %v9755, 7
    %v9757 = vsub.s32 %v9672, %v9756
    %v9758 = vrot.slane %v9630, %v9757
    %v9759 = vsel %vm9677, %v9758, %v9754
    %v9760 = vlaneseq
    %v9761 = vshrl.u32 %v9760, 7
    %v9762 = vsub.s32 %v9667, %v9761
    %v9763 = vrot.slane %v9633, %v9762
    %v9764 = vlaneseq
    %v9765 = vshrl.u32 %v9764, 7
    %v9766 = vsub.s32 %v9672, %v9765
    %v9767 = vrot.slane %v9636, %v9766
    %v9768 = vsel %vm9677, %v9767, %v9763
    %v9769 = vlaneseq
    %v9770 = vshrl.u32 %v9769, 7
    %v9771 = vsub.s32 %v9667, %v9770
    %v9772 = vrot.slane %v9639, %v9771
    %v9773 = vlaneseq
    %v9774 = vshrl.u32 %v9773, 7
    %v9775 = vsub.s32 %v9672, %v9774
    %v9776 = vrot.slane %v9642, %v9775
    %v9777 = vsel %vm9677, %v9776, %v9772
    %v9778 = vlaneseq
    %v9779 = vshrl.u32 %v9778, 7
    %v9780 = vsub.s32 %v9667, %v9779
    %v9781 = vrot.slane %v9645, %v9780
    %v9782 = vlaneseq
    %v9783 = vshrl.u32 %v9782, 7
    %v9784 = vsub.s32 %v9672, %v9783
    %v9785 = vrot.slane %v9648, %v9784
    %v9786 = vsel %vm9677, %v9785, %v9781
    %v9787 = vlaneseq
    %v9788 = vshrl.u32 %v9787, 7
    %v9789 = vsub.s32 %v9667, %v9788
    %v9790 = vrot.slane %v9651, %v9789
    %v9791 = vlaneseq
    %v9792 = vshrl.u32 %v9791, 7
    %v9793 = vsub.s32 %v9672, %v9792
    %v9794 = vrot.slane %v9654, %v9793
    %v9795 = vsel %vm9677, %v9794, %v9790
    %v9796 = vlaneseq
    %v9797 = vshrl.u32 %v9796, 7
    %v9798 = vsub.s32 %v9667, %v9797
    %v9799 = vrot.slane %v9657, %v9798
    %v9800 = vlaneseq
    %v9801 = vshrl.u32 %v9800, 7
    %v9802 = vsub.s32 %v9672, %v9801
    %v9803 = vrot.slane %v9660, %v9802
    %v9804 = vsel %vm9677, %v9803, %v9799
    %v9805 = vlaneseq
    %v9806 = vshrl.u32 %v9805, 7
    %v9807 = vsub.s32 %v9667, %v9806
    %v9808 = vrot.slane %v9663, %v9807
    %v9809 = vlaneseq
    %v9810 = vshrl.u32 %v9809, 7
    %v9811 = vsub.s32 %v9672, %v9810
    %v9812 = vrot.slane %v9666, %v9811
    %v9813 = vsel %vm9677, %v9812, %v9808
    %v9814 = vsel %vm1212, %v9687, %v9678
    %v9815 = vsel %vm1214, %v9696, %v9814
    %v9816 = vsel %vm1216, %v9705, %v9815
    %v9817 = vsel %vm1218, %v9714, %v9816
    %v9818 = vsel %vm1220, %v9723, %v9817
    %v9819 = vsel %vm1222, %v9732, %v9818
    %v9820 = vsel %vm1224, %v9741, %v9819
    %v9821 = vsel %vm1212, %v9759, %v9750
    %v9822 = vsel %vm1214, %v9768, %v9821
    %v9823 = vsel %vm1216, %v9777, %v9822
    %v9824 = vsel %vm1218, %v9786, %v9823
    %v9825 = vsel %vm1220, %v9795, %v9824
    %v9826 = vsel %vm1222, %v9804, %v9825
    %v9827 = vsel %vm1224, %v9813, %v9826
    %9862 = vset.pattern.permute.xlu0 7
    %9863 = vperm.xlu0 %9862, %v7764
    %v9864 = vpop.permute.xlu0 %9863
    %9865 = vset.pattern.permute.xlu0 7
    %9866 = vperm.xlu0 %9865, %v7765
    %v9867 = vpop.permute.xlu0 %9866
    %9868 = vset.pattern.permute.xlu0 7
    %9869 = vperm.xlu0 %9868, %v7766
    %v9870 = vpop.permute.xlu0 %9869
    %9871 = vset.pattern.permute.xlu0 7
    %9872 = vperm.xlu0 %9871, %v7767
    %v9873 = vpop.permute.xlu0 %9872
    %9874 = vset.pattern.permute.xlu0 7
    %9875 = vperm.xlu0 %9874, %v7768
    %v9876 = vpop.permute.xlu0 %9875
    %9877 = vset.pattern.permute.xlu0 7
    %9878 = vperm.xlu0 %9877, %v7769
    %v9879 = vpop.permute.xlu0 %9878
    %9880 = vset.pattern.permute.xlu0 7
    %9881 = vperm.xlu0 %9880, %v7770
    %v9882 = vpop.permute.xlu0 %9881
    %9883 = vset.pattern.permute.xlu0 7
    %9884 = vperm.xlu0 %9883, %v7771
    %v9885 = vpop.permute.xlu0 %9884
    %9886 = vset.pattern.permute.xlu0 7
    %9887 = vperm.xlu0 %9886, %v7772
    %v9888 = vpop.permute.xlu0 %9887
    %9889 = vset.pattern.permute.xlu0 7
    %9890 = vperm.xlu0 %9889, %v7773
    %v9891 = vpop.permute.xlu0 %9890
    %9892 = vset.pattern.permute.xlu0 7
    %9893 = vperm.xlu0 %9892, %v7774
    %v9894 = vpop.permute.xlu0 %9893
    %9895 = vset.pattern.permute.xlu0 7
    %9896 = vperm.xlu0 %9895, %v7775
    %v9897 = vpop.permute.xlu0 %9896
    %9898 = vset.pattern.permute.xlu0 7
    %9899 = vperm.xlu0 %9898, %v7776
    %v9900 = vpop.permute.xlu0 %9899
    %9901 = vset.pattern.permute.xlu0 7
    %9902 = vperm.xlu0 %9901, %v7777
    %v9903 = vpop.permute.xlu0 %9902
    %9904 = vset.pattern.permute.xlu0 7
    %9905 = vperm.xlu0 %9904, %v7778
    %v9906 = vpop.permute.xlu0 %9905
    %9907 = vset.pattern.permute.xlu0 7
    %9908 = vperm.xlu0 %9907, %v7779
    %v9909 = vpop.permute.xlu0 %9908
    %9910 = vset.pattern.permute.xlu0 7
    %9911 = vperm.xlu0 %9910, %v7780
    %v9912 = vpop.permute.xlu0 %9911
    %9913 = vset.pattern.permute.xlu0 7
    %9914 = vperm.xlu0 %9913, %v7781
    %v9915 = vpop.permute.xlu0 %9914
    %9916 = vset.pattern.permute.xlu0 7
    %9917 = vperm.xlu0 %9916, %v7782
    %v9918 = vpop.permute.xlu0 %9917
    %9919 = vset.pattern.permute.xlu0 7
    %9920 = vperm.xlu0 %9919, %v7783
    %v9921 = vpop.permute.xlu0 %9920
    %9922 = vset.pattern.permute.xlu0 7
    %9923 = vperm.xlu0 %9922, %v7784
    %v9924 = vpop.permute.xlu0 %9923
    %9925 = vset.pattern.permute.xlu0 7
    %9926 = vperm.xlu0 %9925, %v7785
    %v9927 = vpop.permute.xlu0 %9926
    %9928 = vset.pattern.permute.xlu0 7
    %9929 = vperm.xlu0 %9928, %v7786
    %v9930 = vpop.permute.xlu0 %9929
    %9931 = vset.pattern.permute.xlu0 7
    %9932 = vperm.xlu0 %9931, %v7787
    %v9933 = vpop.permute.xlu0 %9932
    %9934 = vset.pattern.permute.xlu0 7
    %9935 = vperm.xlu0 %9934, %v7788
    %v9936 = vpop.permute.xlu0 %9935
    %9937 = vset.pattern.permute.xlu0 7
    %9938 = vperm.xlu0 %9937, %v7789
    %v9939 = vpop.permute.xlu0 %9938
    %9940 = vset.pattern.permute.xlu0 7
    %9941 = vperm.xlu0 %9940, %v7790
    %v9942 = vpop.permute.xlu0 %9941
    %9943 = vset.pattern.permute.xlu0 7
    %9944 = vperm.xlu0 %9943, %v7791
    %v9945 = vpop.permute.xlu0 %9944
    %9946 = vset.pattern.permute.xlu0 7
    %9947 = vperm.xlu0 %9946, %v7792
    %v9948 = vpop.permute.xlu0 %9947
    %9949 = vset.pattern.permute.xlu0 7
    %9950 = vperm.xlu0 %9949, %v7793
    %v9951 = vpop.permute.xlu0 %9950
    %9952 = vset.pattern.permute.xlu0 7
    %9953 = vperm.xlu0 %9952, %v7794
    %v9954 = vpop.permute.xlu0 %9953
    %9955 = vset.pattern.permute.xlu0 7
    %9956 = vperm.xlu0 %9955, %v7795
    %v9957 = vpop.permute.xlu0 %9956
    %v9958 = vadd.s32 %v1065, 4294967184
    %v9959 = vlaneseq
    %v9960 = vshrl.u32 %v9959, 7
    %v9961 = vsub.s32 %v9958, %v9960
    %v9962 = vrot.slane %v9864, %v9961
    %v9963 = vadd.s32 %v1065, 4294967176
    %v9964 = vlaneseq
    %v9965 = vshrl.u32 %v9964, 7
    %v9966 = vsub.s32 %v9963, %v9965
    %v9967 = vrot.slane %v9867, %v9966
    %vm9968 = vcmask 1048512
    %v9969 = vsel %vm9968, %v9967, %v9962
    %v9970 = vlaneseq
    %v9971 = vshrl.u32 %v9970, 7
    %v9972 = vsub.s32 %v9958, %v9971
    %v9973 = vrot.slane %v9870, %v9972
    %v9974 = vlaneseq
    %v9975 = vshrl.u32 %v9974, 7
    %v9976 = vsub.s32 %v9963, %v9975
    %v9977 = vrot.slane %v9873, %v9976
    %v9978 = vsel %vm9968, %v9977, %v9973
    %v9979 = vlaneseq
    %v9980 = vshrl.u32 %v9979, 7
    %v9981 = vsub.s32 %v9958, %v9980
    %v9982 = vrot.slane %v9876, %v9981
    %v9983 = vlaneseq
    %v9984 = vshrl.u32 %v9983, 7
    %v9985 = vsub.s32 %v9963, %v9984
    %v9986 = vrot.slane %v9879, %v9985
    %v9987 = vsel %vm9968, %v9986, %v9982
    %v9988 = vlaneseq
    %v9989 = vshrl.u32 %v9988, 7
    %v9990 = vsub.s32 %v9958, %v9989
    %v9991 = vrot.slane %v9882, %v9990
    %v9992 = vlaneseq
    %v9993 = vshrl.u32 %v9992, 7
    %v9994 = vsub.s32 %v9963, %v9993
    %v9995 = vrot.slane %v9885, %v9994
    %v9996 = vsel %vm9968, %v9995, %v9991
    %v9997 = vlaneseq
    %v9998 = vshrl.u32 %v9997, 7
    %v9999 = vsub.s32 %v9958, %v9998
    %v10000 = vrot.slane %v9888, %v9999
    %v10001 = vlaneseq
    %v10002 = vshrl.u32 %v10001, 7
    %v10003 = vsub.s32 %v9963, %v10002
    %v10004 = vrot.slane %v9891, %v10003
    %v10005 = vsel %vm9968, %v10004, %v10000
    %v10006 = vlaneseq
    %v10007 = vshrl.u32 %v10006, 7
    %v10008 = vsub.s32 %v9958, %v10007
    %v10009 = vrot.slane %v9894, %v10008
    %v10010 = vlaneseq
    %v10011 = vshrl.u32 %v10010, 7
    %v10012 = vsub.s32 %v9963, %v10011
    %v10013 = vrot.slane %v9897, %v10012
    %v10014 = vsel %vm9968, %v10013, %v10009
    %v10015 = vlaneseq
    %v10016 = vshrl.u32 %v10015, 7
    %v10017 = vsub.s32 %v9958, %v10016
    %v10018 = vrot.slane %v9900, %v10017
    %v10019 = vlaneseq
    %v10020 = vshrl.u32 %v10019, 7
    %v10021 = vsub.s32 %v9963, %v10020
    %v10022 = vrot.slane %v9903, %v10021
    %v10023 = vsel %vm9968, %v10022, %v10018
    %v10024 = vlaneseq
    %v10025 = vshrl.u32 %v10024, 7
    %v10026 = vsub.s32 %v9958, %v10025
    %v10027 = vrot.slane %v9906, %v10026
    %v10028 = vlaneseq
    %v10029 = vshrl.u32 %v10028, 7
    %v10030 = vsub.s32 %v9963, %v10029
    %v10031 = vrot.slane %v9909, %v10030
    %v10032 = vsel %vm9968, %v10031, %v10027
    %v10033 = vlaneseq
    %v10034 = vshrl.u32 %v10033, 7
    %v10035 = vsub.s32 %v9958, %v10034
    %v10036 = vrot.slane %v9912, %v10035
    %v10037 = vlaneseq
    %v10038 = vshrl.u32 %v10037, 7
    %v10039 = vsub.s32 %v9963, %v10038
    %v10040 = vrot.slane %v9915, %v10039
    %v10041 = vsel %vm9968, %v10040, %v10036
    %v10042 = vlaneseq
    %v10043 = vshrl.u32 %v10042, 7
    %v10044 = vsub.s32 %v9958, %v10043
    %v10045 = vrot.slane %v9918, %v10044
    %v10046 = vlaneseq
    %v10047 = vshrl.u32 %v10046, 7
    %v10048 = vsub.s32 %v9963, %v10047
    %v10049 = vrot.slane %v9921, %v10048
    %v10050 = vsel %vm9968, %v10049, %v10045
    %v10051 = vlaneseq
    %v10052 = vshrl.u32 %v10051, 7
    %v10053 = vsub.s32 %v9958, %v10052
    %v10054 = vrot.slane %v9924, %v10053
    %v10055 = vlaneseq
    %v10056 = vshrl.u32 %v10055, 7
    %v10057 = vsub.s32 %v9963, %v10056
    %v10058 = vrot.slane %v9927, %v10057
    %v10059 = vsel %vm9968, %v10058, %v10054
    %v10060 = vlaneseq
    %v10061 = vshrl.u32 %v10060, 7
    %v10062 = vsub.s32 %v9958, %v10061
    %v10063 = vrot.slane %v9930, %v10062
    %v10064 = vlaneseq
    %v10065 = vshrl.u32 %v10064, 7
    %v10066 = vsub.s32 %v9963, %v10065
    %v10067 = vrot.slane %v9933, %v10066
    %v10068 = vsel %vm9968, %v10067, %v10063
    %v10069 = vlaneseq
    %v10070 = vshrl.u32 %v10069, 7
    %v10071 = vsub.s32 %v9958, %v10070
    %v10072 = vrot.slane %v9936, %v10071
    %v10073 = vlaneseq
    %v10074 = vshrl.u32 %v10073, 7
    %v10075 = vsub.s32 %v9963, %v10074
    %v10076 = vrot.slane %v9939, %v10075
    %v10077 = vsel %vm9968, %v10076, %v10072
    %v10078 = vlaneseq
    %v10079 = vshrl.u32 %v10078, 7
    %v10080 = vsub.s32 %v9958, %v10079
    %v10081 = vrot.slane %v9942, %v10080
    %v10082 = vlaneseq
    %v10083 = vshrl.u32 %v10082, 7
    %v10084 = vsub.s32 %v9963, %v10083
    %v10085 = vrot.slane %v9945, %v10084
    %v10086 = vsel %vm9968, %v10085, %v10081
    %v10087 = vlaneseq
    %v10088 = vshrl.u32 %v10087, 7
    %v10089 = vsub.s32 %v9958, %v10088
    %v10090 = vrot.slane %v9948, %v10089
    %v10091 = vlaneseq
    %v10092 = vshrl.u32 %v10091, 7
    %v10093 = vsub.s32 %v9963, %v10092
    %v10094 = vrot.slane %v9951, %v10093
    %v10095 = vsel %vm9968, %v10094, %v10090
    %v10096 = vlaneseq
    %v10097 = vshrl.u32 %v10096, 7
    %v10098 = vsub.s32 %v9958, %v10097
    %v10099 = vrot.slane %v9954, %v10098
    %v10100 = vlaneseq
    %v10101 = vshrl.u32 %v10100, 7
    %v10102 = vsub.s32 %v9963, %v10101
    %v10103 = vrot.slane %v9957, %v10102
    %v10104 = vsel %vm9968, %v10103, %v10099
    %v10105 = vsel %vm1212, %v9978, %v9969
    %v10106 = vsel %vm1214, %v9987, %v10105
    %v10107 = vsel %vm1216, %v9996, %v10106
    %v10108 = vsel %vm1218, %v10005, %v10107
    %v10109 = vsel %vm1220, %v10014, %v10108
    %v10110 = vsel %vm1222, %v10023, %v10109
    %v10111 = vsel %vm1224, %v10032, %v10110
    %v10112 = vsel %vm1212, %v10050, %v10041
    %v10113 = vsel %vm1214, %v10059, %v10112
    %v10114 = vsel %vm1216, %v10068, %v10113
    %v10115 = vsel %vm1218, %v10077, %v10114
    %v10116 = vsel %vm1220, %v10086, %v10115
    %v10117 = vsel %vm1222, %v10095, %v10116
    %v10118 = vsel %vm1224, %v10104, %v10117
    %v10121 = vsel %vm1235, %v8074, %v8365
    %v10122 = vsel %vm1235, %v8081, %v8372
    %vm10123 = vcmask 261120
    %v10124 = vsel %vm10123, %v10121, %v8656
    %v10125 = vsel %vm10123, %v10122, %v8663
    %vm10126 = vcmask 392192
    %v10127 = vsel %vm10126, %v10124, %v8947
    %v10128 = vsel %vm10126, %v10125, %v8954
    %vm10129 = vcmask 523264
    %v10130 = vsel %vm10129, %v10127, %v9238
    %v10131 = vsel %vm10129, %v10128, %v9245
    %vm10132 = vcmask 654336
    %v10133 = vsel %vm10132, %v10130, %v9529
    %v10134 = vsel %vm10132, %v10131, %v9536
    %vm10135 = vcmask 785408
    %v10136 = vsel %vm10135, %v10133, %v9820
    %v10137 = vsel %vm10135, %v10134, %v9827
    %vm10138 = vcmask 916480
    %v10139 = vsel %vm10138, %v10136, %v10111
    %v10140 = vsel %vm10138, %v10137, %v10118
    %v10143 = vunpack.c.l.s4 1966171168
    %v10144 = vunpack.c.0.s8 %v10143
    %v10145 = vlaneseq
    %v10146 = vshrl.u32 %v10145, 7
    %v10147 = vsub.s32 %v10144, %v10146
    %v10148 = vrot.slane %v60, %v10147
    %v10149 = vcombine.high %v10148, %v10148
    %v10151 = vunpack.c.l.s4 1966171168
    %v10152 = vunpack.c.0.s8 %v10151
    %v10153 = vlaneseq
    %v10154 = vshrl.u32 %v10153, 7
    %v10155 = vsub.s32 %v10152, %v10154
    %v10156 = vrot.slane %v10148, %v10155
    %v10158 = vunpack.c.l.s4 1966171168
    %v10159 = vunpack.c.0.s8 %v10158
    %v10160 = vlaneseq
    %v10161 = vshrl.u32 %v10160, 7
    %v10162 = vsub.s32 %v10159, %v10161
    %v10163 = vrot.slane %v10149, %v10162
    %v10164 = vcombine.high %v10156, %v10156
    %v10165 = vcombine.high %v10163, %v10163
    %v10166 = vunpack.i.l.s16 %v10156
    %v10167 = vunpack.i.h.s16 %v10156
    %v10168 = vunpack.i.l.s16 %v10163
    %v10169 = vunpack.i.h.s16 %v10163
    %v10170 = vunpack.i.l.s16 %v10164
    %v10171 = vunpack.i.h.s16 %v10164
    %v10172 = vunpack.i.l.s16 %v10165
    %v10173 = vunpack.i.h.s16 %v10165
    %v10174 = vpack.c.bf16 %v148, %v144
    %v10175 = vpack.i.b16 %v10166, %v10166
    %v10176 = vpack.i.b16 %v10167, %v10167
    %v10177 = vpack.i.b16 %v10168, %v10168
    %v10178 = vpack.i.b16 %v10169, %v10169
    %v10179 = vpack.i.b16 %v10170, %v10170
    %v10180 = vpack.i.b16 %v10171, %v10171
    %v10181 = vpack.i.b16 %v10172, %v10172
    %v10182 = vpack.i.b16 %v10173, %v10173
    %v10183 = vlaneseq
    %v10184 = vshrl.u32 %v10183, 7
    %v10185 = vsub.s32 0, %v10184
    %v10186 = vrot.slane %v10175, %v10185
    %v10187 = vlaneseq
    %v10188 = vshrl.u32 %v10187, 7
    %v10189 = vsub.s32 0, %v10188
    %v10190 = vrot.slane %v10176, %v10189
    %v10191 = vlaneseq
    %v10192 = vshrl.u32 %v10191, 7
    %v10193 = vsub.s32 0, %v10192
    %v10194 = vrot.slane %v10177, %v10193
    %v10195 = vlaneseq
    %v10196 = vshrl.u32 %v10195, 7
    %v10197 = vsub.s32 0, %v10196
    %v10198 = vrot.slane %v10178, %v10197
    %v10199 = vlaneseq
    %v10200 = vshrl.u32 %v10199, 7
    %v10201 = vsub.s32 0, %v10200
    %v10202 = vrot.slane %v10179, %v10201
    %v10203 = vlaneseq
    %v10204 = vshrl.u32 %v10203, 7
    %v10205 = vsub.s32 0, %v10204
    %v10206 = vrot.slane %v10180, %v10205
    %v10207 = vlaneseq
    %v10208 = vshrl.u32 %v10207, 7
    %v10209 = vsub.s32 0, %v10208
    %v10210 = vrot.slane %v10181, %v10209
    %v10211 = vlaneseq
    %v10212 = vshrl.u32 %v10211, 7
    %v10213 = vsub.s32 0, %v10212
    %v10214 = vrot.slane %v10182, %v10213
    %v10216 = vpack.i.b16 %v10186, %v10186
    %v10218 = vlaneseq
    %v10219 = vshrl.u32 %v10218, 7
    %v10220 = vsub.s32 0, %v10219
    %v10221 = vrot.slane %v10216, %v10220
    %v10223 = vpack.i.b16 %v10190, %v10190
    %v10225 = vlaneseq
    %v10226 = vshrl.u32 %v10225, 7
    %v10227 = vsub.s32 0, %v10226
    %v10228 = vrot.slane %v10223, %v10227
    %v10230 = vpack.i.b16 %v10194, %v10194
    %v10232 = vlaneseq
    %v10233 = vshrl.u32 %v10232, 7
    %v10234 = vsub.s32 0, %v10233
    %v10235 = vrot.slane %v10230, %v10234
    %v10237 = vpack.i.b16 %v10198, %v10198
    %v10239 = vlaneseq
    %v10240 = vshrl.u32 %v10239, 7
    %v10241 = vsub.s32 0, %v10240
    %v10242 = vrot.slane %v10237, %v10241
    %v10244 = vpack.i.b16 %v10202, %v10202
    %v10246 = vlaneseq
    %v10247 = vshrl.u32 %v10246, 7
    %v10248 = vsub.s32 0, %v10247
    %v10249 = vrot.slane %v10244, %v10248
    %v10251 = vpack.i.b16 %v10206, %v10206
    %v10253 = vlaneseq
    %v10254 = vshrl.u32 %v10253, 7
    %v10255 = vsub.s32 0, %v10254
    %v10256 = vrot.slane %v10251, %v10255
    %v10258 = vpack.i.b16 %v10210, %v10210
    %v10260 = vlaneseq
    %v10261 = vshrl.u32 %v10260, 7
    %v10262 = vsub.s32 0, %v10261
    %v10263 = vrot.slane %v10258, %v10262
    %v10265 = vpack.i.b16 %v10214, %v10214
    %v10267 = vlaneseq
    %v10268 = vshrl.u32 %v10267, 7
    %v10269 = vsub.s32 0, %v10268
    %v10270 = vrot.slane %v10265, %v10269
    %v10271 = vmul.bf16 %v10221, %v10174
    %v10272 = vmul.bf16 %v10228, %v10174
    %v10273 = vmul.bf16 %v10235, %v10174
    %v10274 = vmul.bf16 %v10242, %v10174
    %v10275 = vmul.bf16 %v10249, %v10174
    %v10276 = vmul.bf16 %v10256, %v10174
    %v10277 = vmul.bf16 %v10263, %v10174
    %v10278 = vmul.bf16 %v10270, %v10174
    %v10279 = vpack.c.bf16 %v10140, %v10139
    %10280 = vmatprep.subr.bf16.mxu0 0
    %10281 = vmatpush1.bf16.msra.mxu0 %v10278
    %10282 = vmatprep.subr.bf16.mxu0 0
    %10283 = vmatpush1.bf16.msra.mxu0 %v10277
    %10284 = vmatprep.subr.bf16.mxu0 0
    %10285 = vmatpush1.bf16.msra.mxu0 %v10276
    %10286 = vmatprep.subr.bf16.mxu0 0
    %10287 = vmatpush1.bf16.msra.mxu0 %v10275
    %10288 = vmatprep.subr.bf16.mxu0 0
    %10289 = vmatpush1.bf16.msra.mxu0 %v10274
    %10290 = vmatprep.subr.bf16.mxu0 0
    %10291 = vmatpush1.bf16.msra.mxu0 %v10273
    %10292 = vmatprep.subr.bf16.mxu0 0
    %10293 = vmatpush1.bf16.msra.mxu0 %v10272
    %10294 = vmatprep.subr.bf16.mxu0 0
    %10295 = vmatpush1.bf16.msra.mxu0 %v10271
    %10296 = vmatprep.subr.bf16.mxu0 0
    %10297 = vmatpush2.bf16.msra.mxu0 0
    %10298 = vmatprep.subr.bf16.mxu0 0
    %10299 = vmatpush2.bf16.msra.mxu0 0
    %10300 = vmatprep.subr.bf16.mxu0 0
    %10301 = vmatpush2.bf16.msra.mxu0 0
    %10302 = vmatprep.subr.bf16.mxu0 0
    %10303 = vmatpush2.bf16.msra.mxu0 0
    %10304 = vmatprep.subr.bf16.mxu0 0
    %10305 = vmatpush2.bf16.msra.mxu0 0
    %10306 = vmatprep.subr.bf16.mxu0 0
    %10307 = vmatpush2.bf16.msra.mxu0 0
    %10308 = vmatprep.subr.bf16.mxu0 0
    %10309 = vmatpush2.bf16.msra.mxu0 0
    %10310 = vmatprep.subr.bf16.mxu0 0
    %10311 = vmatpush2.bf16.msra.mxu0 0
    %10312 = vmatprep.mubr.bf16.mxu0 0
    %10313 = vmatmul.mubr.bf16.gmra.mxu0 %v10279
    %v10314 = vpop.f32.mrf.mxu0
    %v10315 = vadd.f32 %v187, %v10314
    %v10316 = vpop.f32.mrf.mxu0
    %v10317 = vpop.f32.mrf.mxu0
    %v10318 = vadd.f32 %v190, %v10317
    %v10319 = vpop.f32.mrf.mxu0
    %10320 = vdwg.mxu0
    %v10321 = vmax.f32 %v10315, 0.0
    %v10322 = vmax.f32 %v10318, 0.0
    %v10323 = vld [vmem:[%s6] sm:$0xf]
    %v10324 = vld [vmem:[%s6 + $0x4] sm:$0xf]
    %v10325 = vld [vmem:[%s6 + $0x8] sm:$0xf]
    %v10326 = vld [vmem:[%s6 + $0xc] sm:$0xf]
    %v10327 = vld [vmem:[%s6 + $0x10] sm:$0xf]
    %v10328 = vld [vmem:[%s6 + $0x14] sm:$0xf]
    %v10329 = vld [vmem:[%s6 + $0x18] sm:$0xf]
    %v10330 = vld [vmem:[%s6 + $0x1c] sm:$0xf]
    %v10331 = vld [vmem:[%s6 + $0x20] sm:$0xf]
    %v10332 = vld [vmem:[%s6 + $0x24] sm:$0xf]
    %v10333 = vld [vmem:[%s6 + $0x28] sm:$0xf]
    %v10334 = vld [vmem:[%s6 + $0x2c] sm:$0xf]
    %v10335 = vld [vmem:[%s6 + $0x30] sm:$0xf]
    %v10336 = vld [vmem:[%s6 + $0x34] sm:$0xf]
    %v10337 = vld [vmem:[%s6 + $0x38] sm:$0xf]
    %v10338 = vld [vmem:[%s6 + $0x3c] sm:$0xf]
    %v10339 = vld [vmem:[%s7] sm:$0x1]
    %v10340 = vld [vmem:[%s8] sm:$0xf]
    %v10341 = vld [vmem:[%s8 + $0x4] sm:$0xf]
    %v10342 = vpack.c.bf16 %v10322, %v10321
    %v10344 = vlaneseq
    %v10345 = vshrl.u32 %v10344, 7
    %v10346 = vsub.s32 0, %v10345
    %v10347 = vrot.slane %v10339, %v10346
    %v10365 = vunpack.c.l.b16 %v10323
    %v10366 = vunpack.c.l.b16 %v10324
    %v10367 = vunpack.c.l.b16 %v10325
    %v10368 = vunpack.c.l.b16 %v10326
    %v10369 = vunpack.c.l.b16 %v10327
    %v10370 = vunpack.c.l.b16 %v10328
    %v10371 = vunpack.c.l.b16 %v10329
    %v10372 = vunpack.c.l.b16 %v10330
    %v10373 = vunpack.c.l.b16 %v10331
    %v10374 = vunpack.c.l.b16 %v10332
    %v10375 = vunpack.c.l.b16 %v10333
    %v10376 = vunpack.c.l.b16 %v10334
    %v10377 = vunpack.c.l.b16 %v10335
    %v10378 = vunpack.c.l.b16 %v10336
    %v10379 = vunpack.c.l.b16 %v10337
    %v10380 = vunpack.c.l.b16 %v10338
    %v10381 = vpack.c.b16 %v10366, %v10365
    %v10382 = vpack.c.b16 %v10368, %v10367
    %v10383 = vpack.c.b16 %v10370, %v10369
    %v10384 = vpack.c.b16 %v10372, %v10371
    %v10385 = vpack.c.b16 %v10374, %v10373
    %v10386 = vpack.c.b16 %v10376, %v10375
    %v10387 = vpack.c.b16 %v10378, %v10377
    %v10388 = vpack.c.b16 %v10380, %v10379
    %10397 = vmatprep.subr.bf16.mxu0 0
    %10398 = vmatpush1.bf16.msra.mxu0 %v10388
    %10399 = vmatprep.subr.bf16.mxu0 0
    %10400 = vmatpush1.bf16.msra.mxu0 %v10387
    %10401 = vmatprep.subr.bf16.mxu0 0
    %10402 = vmatpush1.bf16.msra.mxu0 %v10386
    %10403 = vmatprep.subr.bf16.mxu0 0
    %10404 = vmatpush1.bf16.msra.mxu0 %v10385
    %10405 = vmatprep.subr.bf16.mxu0 0
    %10406 = vmatpush1.bf16.msra.mxu0 %v10384
    %10407 = vmatprep.subr.bf16.mxu0 0
    %10408 = vmatpush1.bf16.msra.mxu0 %v10383
    %10409 = vmatprep.subr.bf16.mxu0 0
    %10410 = vmatpush1.bf16.msra.mxu0 %v10382
    %10411 = vmatprep.subr.bf16.mxu0 0
    %10412 = vmatpush1.bf16.msra.mxu0 %v10381
    %10413 = vmatprep.subr.bf16.mxu0 0
    %10414 = vmatpush2.bf16.msra.mxu0 0
    %10415 = vmatprep.subr.bf16.mxu0 0
    %10416 = vmatpush2.bf16.msra.mxu0 0
    %10417 = vmatprep.subr.bf16.mxu0 0
    %10418 = vmatpush2.bf16.msra.mxu0 0
    %10419 = vmatprep.subr.bf16.mxu0 0
    %10420 = vmatpush2.bf16.msra.mxu0 0
    %10421 = vmatprep.subr.bf16.mxu0 0
    %10422 = vmatpush2.bf16.msra.mxu0 0
    %10423 = vmatprep.subr.bf16.mxu0 0
    %10424 = vmatpush2.bf16.msra.mxu0 0
    %10425 = vmatprep.subr.bf16.mxu0 0
    %10426 = vmatpush2.bf16.msra.mxu0 0
    %10427 = vmatprep.subr.bf16.mxu0 0
    %10428 = vmatpush2.bf16.msra.mxu0 0
    %10429 = vmatprep.mubr.bf16.mxu0 0
    %10430 = vmatmul.mubr.bf16.gmra.mxu0 %v10342
    %v10431 = vpop.f32.mrf.mxu0
    %v10432 = vadd.f32 %v10347, %v10431
    %v10433 = vpop.f32.mrf.mxu0
    %v10434 = vpop.f32.mrf.mxu0
    %v10435 = vadd.f32 %v10347, %v10434
    %v10436 = vpop.f32.mrf.mxu0
    %10437 = vdwg.mxu0
    %v10440 = vcombine.high %v10432, %v10432
    %v10442 = vunpack.c.l.s4 1966171168
    %v10443 = vunpack.c.0.s8 %v10442
    %v10444 = vlaneseq
    %v10445 = vshrl.u32 %v10444, 7
    %v10446 = vsub.s32 %v10443, %v10445
    %v10447 = vrot.slane %v10432, %v10446
    %v10449 = vunpack.c.l.s4 1966171168
    %v10450 = vunpack.c.0.s8 %v10449
    %v10451 = vlaneseq
    %v10452 = vshrl.u32 %v10451, 7
    %v10453 = vsub.s32 %v10450, %v10452
    %v10454 = vrot.slane %v10440, %v10453
    %v10455 = vcombine.high %v10447, %v10447
    %v10456 = vcombine.high %v10454, %v10454
    %v10458 = vunpack.c.l.s4 1966171168
    %v10459 = vunpack.c.0.s8 %v10458
    %v10460 = vlaneseq
    %v10461 = vshrl.u32 %v10460, 7
    %v10462 = vsub.s32 %v10459, %v10461
    %v10463 = vrot.slane %v10447, %v10462
    %v10465 = vunpack.c.l.s4 1966171168
    %v10466 = vunpack.c.0.s8 %v10465
    %v10467 = vlaneseq
    %v10468 = vshrl.u32 %v10467, 7
    %v10469 = vsub.s32 %v10466, %v10468
    %v10470 = vrot.slane %v10454, %v10469
    %v10472 = vunpack.c.l.s4 1966171168
    %v10473 = vunpack.c.0.s8 %v10472
    %v10474 = vlaneseq
    %v10475 = vshrl.u32 %v10474, 7
    %v10476 = vsub.s32 %v10473, %v10475
    %v10477 = vrot.slane %v10455, %v10476
    %v10479 = vunpack.c.l.s4 1966171168
    %v10480 = vunpack.c.0.s8 %v10479
    %v10481 = vlaneseq
    %v10482 = vshrl.u32 %v10481, 7
    %v10483 = vsub.s32 %v10480, %v10482
    %v10484 = vrot.slane %v10456, %v10483
    %v10485 = vcombine.high %v10463, %v10463
    %v10486 = vcombine.high %v10470, %v10470
    %v10487 = vcombine.high %v10477, %v10477
    %v10488 = vcombine.high %v10484, %v10484
    %v10489 = vcombine.high %v10435, %v10435
    %v10491 = vunpack.c.l.s4 1966171168
    %v10492 = vunpack.c.0.s8 %v10491
    %v10493 = vlaneseq
    %v10494 = vshrl.u32 %v10493, 7
    %v10495 = vsub.s32 %v10492, %v10494
    %v10496 = vrot.slane %v10435, %v10495
    %v10498 = vunpack.c.l.s4 1966171168
    %v10499 = vunpack.c.0.s8 %v10498
    %v10500 = vlaneseq
    %v10501 = vshrl.u32 %v10500, 7
    %v10502 = vsub.s32 %v10499, %v10501
    %v10503 = vrot.slane %v10489, %v10502
    %v10504 = vcombine.high %v10496, %v10496
    %v10505 = vcombine.high %v10503, %v10503
    %v10507 = vunpack.c.l.s4 1966171168
    %v10508 = vunpack.c.0.s8 %v10507
    %v10509 = vlaneseq
    %v10510 = vshrl.u32 %v10509, 7
    %v10511 = vsub.s32 %v10508, %v10510
    %v10512 = vrot.slane %v10496, %v10511
    %v10514 = vunpack.c.l.s4 1966171168
    %v10515 = vunpack.c.0.s8 %v10514
    %v10516 = vlaneseq
    %v10517 = vshrl.u32 %v10516, 7
    %v10518 = vsub.s32 %v10515, %v10517
    %v10519 = vrot.slane %v10503, %v10518
    %v10521 = vunpack.c.l.s4 1966171168
    %v10522 = vunpack.c.0.s8 %v10521
    %v10523 = vlaneseq
    %v10524 = vshrl.u32 %v10523, 7
    %v10525 = vsub.s32 %v10522, %v10524
    %v10526 = vrot.slane %v10504, %v10525
    %v10528 = vunpack.c.l.s4 1966171168
    %v10529 = vunpack.c.0.s8 %v10528
    %v10530 = vlaneseq
    %v10531 = vshrl.u32 %v10530, 7
    %v10532 = vsub.s32 %v10529, %v10531
    %v10533 = vrot.slane %v10505, %v10532
    %v10534 = vcombine.high %v10512, %v10512
    %v10535 = vcombine.high %v10519, %v10519
    %v10536 = vcombine.high %v10526, %v10526
    %v10537 = vcombine.high %v10533, %v10533
    %v10538 = vlaneseq
    %v10539 = vshrl.u32 %v10538, 7
    %v10540 = vsub.s32 0, %v10539
    %v10541 = vrot.slane %v10463, %v10540
    %v10542 = vlaneseq
    %v10543 = vshrl.u32 %v10542, 7
    %v10544 = vsub.s32 0, %v10543
    %v10545 = vrot.slane %v10477, %v10544
    %v10546 = vlaneseq
    %v10547 = vshrl.u32 %v10546, 7
    %v10548 = vsub.s32 0, %v10547
    %v10549 = vrot.slane %v10485, %v10548
    %v10550 = vlaneseq
    %v10551 = vshrl.u32 %v10550, 7
    %v10552 = vsub.s32 0, %v10551
    %v10553 = vrot.slane %v10487, %v10552
    %v10554 = vlaneseq
    %v10555 = vshrl.u32 %v10554, 7
    %v10556 = vsub.s32 0, %v10555
    %v10557 = vrot.slane %v10470, %v10556
    %v10558 = vlaneseq
    %v10559 = vshrl.u32 %v10558, 7
    %v10560 = vsub.s32 0, %v10559
    %v10561 = vrot.slane %v10484, %v10560
    %v10562 = vlaneseq
    %v10563 = vshrl.u32 %v10562, 7
    %v10564 = vsub.s32 0, %v10563
    %v10565 = vrot.slane %v10486, %v10564
    %v10566 = vlaneseq
    %v10567 = vshrl.u32 %v10566, 7
    %v10568 = vsub.s32 0, %v10567
    %v10569 = vrot.slane %v10488, %v10568
    %v10570 = vlaneseq
    %v10571 = vshrl.u32 %v10570, 7
    %v10572 = vsub.s32 0, %v10571
    %v10573 = vrot.slane %v10512, %v10572
    %v10574 = vlaneseq
    %v10575 = vshrl.u32 %v10574, 7
    %v10576 = vsub.s32 0, %v10575
    %v10577 = vrot.slane %v10526, %v10576
    %v10578 = vlaneseq
    %v10579 = vshrl.u32 %v10578, 7
    %v10580 = vsub.s32 0, %v10579
    %v10581 = vrot.slane %v10534, %v10580
    %v10582 = vlaneseq
    %v10583 = vshrl.u32 %v10582, 7
    %v10584 = vsub.s32 0, %v10583
    %v10585 = vrot.slane %v10536, %v10584
    %v10586 = vlaneseq
    %v10587 = vshrl.u32 %v10586, 7
    %v10588 = vsub.s32 0, %v10587
    %v10589 = vrot.slane %v10519, %v10588
    %v10590 = vlaneseq
    %v10591 = vshrl.u32 %v10590, 7
    %v10592 = vsub.s32 0, %v10591
    %v10593 = vrot.slane %v10533, %v10592
    %v10594 = vlaneseq
    %v10595 = vshrl.u32 %v10594, 7
    %v10596 = vsub.s32 0, %v10595
    %v10597 = vrot.slane %v10535, %v10596
    %v10598 = vlaneseq
    %v10599 = vshrl.u32 %v10598, 7
    %v10600 = vsub.s32 0, %v10599
    %v10601 = vrot.slane %v10537, %v10600
    %10618 = vrot.lane.b32.xlu0 %v10432, 16
    %v10619 = vpop.permute.xlu0 %10618
    %10620 = vrot.lane.b32.xlu0 %v10435, 16
    %v10621 = vpop.permute.xlu0 %10620
    %v10624 = vadd.f32 %v10541, %v10619
    %v10625 = vadd.f32 %v10541, %v10621
    %v10626 = vadd.f32 %v10545, %v10619
    %v10627 = vadd.f32 %v10545, %v10621
    %v10628 = vadd.f32 %v10549, %v10619
    %v10629 = vadd.f32 %v10549, %v10621
    %v10630 = vadd.f32 %v10553, %v10619
    %v10631 = vadd.f32 %v10553, %v10621
    %v10632 = vadd.f32 %v10557, %v10619
    %v10633 = vadd.f32 %v10557, %v10621
    %v10634 = vadd.f32 %v10561, %v10619
    %v10635 = vadd.f32 %v10561, %v10621
    %v10636 = vadd.f32 %v10565, %v10619
    %v10637 = vadd.f32 %v10565, %v10621
    %v10638 = vadd.f32 %v10569, %v10619
    %v10639 = vadd.f32 %v10569, %v10621
    %v10640 = vadd.f32 %v10573, %v10619
    %v10641 = vadd.f32 %v10573, %v10621
    %v10642 = vadd.f32 %v10577, %v10619
    %v10643 = vadd.f32 %v10577, %v10621
    %v10644 = vadd.f32 %v10581, %v10619
    %v10645 = vadd.f32 %v10581, %v10621
    %v10646 = vadd.f32 %v10585, %v10619
    %v10647 = vadd.f32 %v10585, %v10621
    %v10648 = vadd.f32 %v10589, %v10619
    %v10649 = vadd.f32 %v10589, %v10621
    %v10650 = vadd.f32 %v10593, %v10619
    %v10651 = vadd.f32 %v10593, %v10621
    %v10652 = vadd.f32 %v10597, %v10619
    %v10653 = vadd.f32 %v10597, %v10621
    %v10654 = vadd.f32 %v10601, %v10619
    %v10655 = vadd.f32 %v10601, %v10621
    %v10656 = vmul.f32 %v10624, 0.2
    %v10657 = vmul.f32 %v10625, 0.2
    %v10658 = vmul.f32 %v10626, 0.2
    %v10659 = vmul.f32 %v10627, 0.2
    %v10660 = vmul.f32 %v10628, 0.2
    %v10661 = vmul.f32 %v10629, 0.2
    %v10662 = vmul.f32 %v10630, 0.2
    %v10663 = vmul.f32 %v10631, 0.2
    %v10664 = vmul.f32 %v10632, 0.2
    %v10665 = vmul.f32 %v10633, 0.2
    %v10666 = vmul.f32 %v10634, 0.2
    %v10667 = vmul.f32 %v10635, 0.2
    %v10668 = vmul.f32 %v10636, 0.2
    %v10669 = vmul.f32 %v10637, 0.2
    %v10670 = vmul.f32 %v10638, 0.2
    %v10671 = vmul.f32 %v10639, 0.2
    %v10672 = vmul.f32 %v10640, 0.2
    %v10673 = vmul.f32 %v10641, 0.2
    %v10674 = vmul.f32 %v10642, 0.2
    %v10675 = vmul.f32 %v10643, 0.2
    %v10676 = vmul.f32 %v10644, 0.2
    %v10677 = vmul.f32 %v10645, 0.2
    %v10678 = vmul.f32 %v10646, 0.2
    %v10679 = vmul.f32 %v10647, 0.2
    %v10680 = vmul.f32 %v10648, 0.2
    %v10681 = vmul.f32 %v10649, 0.2
    %v10682 = vmul.f32 %v10650, 0.2
    %v10683 = vmul.f32 %v10651, 0.2
    %v10684 = vmul.f32 %v10652, 0.2
    %v10685 = vmul.f32 %v10653, 0.2
    %v10686 = vmul.f32 %v10654, 0.2
    %v10687 = vmul.f32 %v10655, 0.2
    %v10688 = vmax.f32 %v10624, %v10656
    %v10689 = vmax.f32 %v10625, %v10657
    %v10690 = vmax.f32 %v10626, %v10658
    %v10691 = vmax.f32 %v10627, %v10659
    %v10692 = vmax.f32 %v10628, %v10660
    %v10693 = vmax.f32 %v10629, %v10661
    %v10694 = vmax.f32 %v10630, %v10662
    %v10695 = vmax.f32 %v10631, %v10663
    %v10696 = vmax.f32 %v10632, %v10664
    %v10697 = vmax.f32 %v10633, %v10665
    %v10698 = vmax.f32 %v10634, %v10666
    %v10699 = vmax.f32 %v10635, %v10667
    %v10700 = vmax.f32 %v10636, %v10668
    %v10701 = vmax.f32 %v10637, %v10669
    %v10702 = vmax.f32 %v10638, %v10670
    %v10703 = vmax.f32 %v10639, %v10671
    %v10704 = vmax.f32 %v10640, %v10672
    %v10705 = vmax.f32 %v10641, %v10673
    %v10706 = vmax.f32 %v10642, %v10674
    %v10707 = vmax.f32 %v10643, %v10675
    %v10708 = vmax.f32 %v10644, %v10676
    %v10709 = vmax.f32 %v10645, %v10677
    %v10710 = vmax.f32 %v10646, %v10678
    %v10711 = vmax.f32 %v10647, %v10679
    %v10712 = vmax.f32 %v10648, %v10680
    %v10713 = vmax.f32 %v10649, %v10681
    %v10714 = vmax.f32 %v10650, %v10682
    %v10715 = vmax.f32 %v10651, %v10683
    %v10716 = vmax.f32 %v10652, %v10684
    %v10717 = vmax.f32 %v10653, %v10685
    %v10718 = vmax.f32 %v10654, %v10686
    %v10719 = vmax.f32 %v10655, %v10687
    %v10720 = vpack.c.bf16 %v10689, %v10688
    %v10721 = vpack.c.bf16 %v10691, %v10690
    %v10722 = vpack.c.bf16 %v10693, %v10692
    %v10723 = vpack.c.bf16 %v10695, %v10694
    %v10724 = vpack.c.bf16 %v10697, %v10696
    %v10725 = vpack.c.bf16 %v10699, %v10698
    %v10726 = vpack.c.bf16 %v10701, %v10700
    %v10727 = vpack.c.bf16 %v10703, %v10702
    %v10728 = vpack.c.bf16 %v10705, %v10704
    %v10729 = vpack.c.bf16 %v10707, %v10706
    %v10730 = vpack.c.bf16 %v10709, %v10708
    %v10731 = vpack.c.bf16 %v10711, %v10710
    %v10732 = vpack.c.bf16 %v10713, %v10712
    %v10733 = vpack.c.bf16 %v10715, %v10714
    %v10734 = vpack.c.bf16 %v10717, %v10716
    %v10735 = vpack.c.bf16 %v10719, %v10718
    %10752 = vrot.lane.b32.xlu0 %v10720, 112
    %v10753 = vpop.permute.xlu0 %10752
    %10754 = vrot.lane.b32.xlu0 %v10721, 112
    %v10755 = vpop.permute.xlu0 %10754
    %10756 = vrot.lane.b32.xlu0 %v10722, 112
    %v10757 = vpop.permute.xlu0 %10756
    %10758 = vrot.lane.b32.xlu0 %v10723, 112
    %v10759 = vpop.permute.xlu0 %10758
    %10760 = vrot.lane.b32.xlu0 %v10724, 112
    %v10761 = vpop.permute.xlu0 %10760
    %10762 = vrot.lane.b32.xlu0 %v10725, 112
    %v10763 = vpop.permute.xlu0 %10762
    %10764 = vrot.lane.b32.xlu0 %v10726, 112
    %v10765 = vpop.permute.xlu0 %10764
    %10766 = vrot.lane.b32.xlu0 %v10727, 112
    %v10767 = vpop.permute.xlu0 %10766
    %10768 = vrot.lane.b32.xlu0 %v10728, 112
    %v10769 = vpop.permute.xlu0 %10768
    %10770 = vrot.lane.b32.xlu0 %v10729, 112
    %v10771 = vpop.permute.xlu0 %10770
    %10772 = vrot.lane.b32.xlu0 %v10730, 112
    %v10773 = vpop.permute.xlu0 %10772
    %10774 = vrot.lane.b32.xlu0 %v10731, 112
    %v10775 = vpop.permute.xlu0 %10774
    %10776 = vrot.lane.b32.xlu0 %v10732, 112
    %v10777 = vpop.permute.xlu0 %10776
    %10778 = vrot.lane.b32.xlu0 %v10733, 112
    %v10779 = vpop.permute.xlu0 %10778
    %10780 = vrot.lane.b32.xlu0 %v10734, 112
    %v10781 = vpop.permute.xlu0 %10780
    %10782 = vrot.lane.b32.xlu0 %v10735, 112
    %v10783 = vpop.permute.xlu0 %10782
    %v10786 = vunpack.c.l.b16 %v10340
    %v10787 = vunpack.c.l.b16 %v10341
    %v10788 = vpack.c.b16 %v10787, %v10786
    %v10791 = vsel %vm1235, %v10753, 0
    %v10794 = vsel %vm1235, %v10755, 0
    %v10797 = vsel %vm1235, %v10757, 0
    %v10800 = vsel %vm1235, %v10759, 0
    %v10803 = vsel %vm1235, %v10761, 0
    %v10806 = vsel %vm1235, %v10763, 0
    %v10809 = vsel %vm1235, %v10765, 0
    %v10812 = vsel %vm1235, %v10767, 0
    %v10815 = vsel %vm1235, %v10769, 0
    %v10818 = vsel %vm1235, %v10771, 0
    %v10821 = vsel %vm1235, %v10773, 0
    %v10824 = vsel %vm1235, %v10775, 0
    %v10827 = vsel %vm1235, %v10777, 0
    %v10830 = vsel %vm1235, %v10779, 0
    %v10833 = vsel %vm1235, %v10781, 0
    %v10836 = vsel %vm1235, %v10783, 0
    %10838 = vmatprep.subr.bf16.mxu0 0
    %10839 = vmatpush1.bf16.msra.mxu0 0
    %10840 = vmatprep.subr.bf16.mxu0 0
    %10841 = vmatpush1.bf16.msra.mxu0 0
    %10842 = vmatprep.subr.bf16.mxu0 0
    %10843 = vmatpush1.bf16.msra.mxu0 0
    %10844 = vmatprep.subr.bf16.mxu0 0
    %10845 = vmatpush1.bf16.msra.mxu0 0
    %10846 = vmatprep.subr.bf16.mxu0 0
    %10847 = vmatpush1.bf16.msra.mxu0 0
    %10848 = vmatprep.subr.bf16.mxu0 0
    %10849 = vmatpush1.bf16.msra.mxu0 0
    %10850 = vmatprep.subr.bf16.mxu0 0
    %10851 = vmatpush1.bf16.msra.mxu0 0
    %10852 = vmatprep.subr.bf16.mxu0 0
    %10853 = vmatpush1.bf16.msra.mxu0 %v10788
    %10854 = vmatprep.subr.bf16.mxu0 0
    %10855 = vmatpush2.bf16.msra.mxu0 0
    %10856 = vmatprep.subr.bf16.mxu0 0
    %10857 = vmatpush2.bf16.msra.mxu0 0
    %10858 = vmatprep.subr.bf16.mxu0 0
    %10859 = vmatpush2.bf16.msra.mxu0 0
    %10860 = vmatprep.subr.bf16.mxu0 0
    %10861 = vmatpush2.bf16.msra.mxu0 0
    %10862 = vmatprep.subr.bf16.mxu0 0
    %10863 = vmatpush2.bf16.msra.mxu0 0
    %10864 = vmatprep.subr.bf16.mxu0 0
    %10865 = vmatpush2.bf16.msra.mxu0 0
    %10866 = vmatprep.subr.bf16.mxu0 0
    %10867 = vmatpush2.bf16.msra.mxu0 0
    %10868 = vmatprep.subr.bf16.mxu0 0
    %10869 = vmatpush2.bf16.msra.mxu0 0
    %10870 = vmatprep.mubr.bf16.mxu0 0
    %10871 = vmatmul.mubr.bf16.gmra.mxu0 %v10791
    %v10872 = vpop.f32.mrf.mxu0
    %v10873 = vadd.f32 0.0, %v10872
    %v10874 = vpop.f32.mrf.mxu0
    %v10875 = vpop.f32.mrf.mxu0
    %v10876 = vadd.f32 0.0, %v10875
    %v10877 = vpop.f32.mrf.mxu0
    %10878 = vmatprep.mubr.bf16.mxu0 0
    %10879 = vmatmul.mubr.bf16.gmra.mxu0 %v10794
    %v10880 = vpop.f32.mrf.mxu0
    %v10881 = vadd.f32 0.0, %v10880
    %v10882 = vpop.f32.mrf.mxu0
    %v10883 = vpop.f32.mrf.mxu0
    %v10884 = vadd.f32 0.0, %v10883
    %v10885 = vpop.f32.mrf.mxu0
    %10886 = vmatprep.mubr.bf16.mxu0 0
    %10887 = vmatmul.mubr.bf16.gmra.mxu0 %v10797
    %v10888 = vpop.f32.mrf.mxu0
    %v10889 = vadd.f32 0.0, %v10888
    %v10890 = vpop.f32.mrf.mxu0
    %v10891 = vpop.f32.mrf.mxu0
    %v10892 = vadd.f32 0.0, %v10891
    %v10893 = vpop.f32.mrf.mxu0
    %10894 = vmatprep.mubr.bf16.mxu0 0
    %10895 = vmatmul.mubr.bf16.gmra.mxu0 %v10800
    %v10896 = vpop.f32.mrf.mxu0
    %v10897 = vadd.f32 0.0, %v10896
    %v10898 = vpop.f32.mrf.mxu0
    %v10899 = vpop.f32.mrf.mxu0
    %v10900 = vadd.f32 0.0, %v10899
    %v10901 = vpop.f32.mrf.mxu0
    %10902 = vmatprep.mubr.bf16.mxu0 0
    %10903 = vmatmul.mubr.bf16.gmra.mxu0 %v10803
    %v10904 = vpop.f32.mrf.mxu0
    %v10905 = vadd.f32 0.0, %v10904
    %v10906 = vpop.f32.mrf.mxu0
    %v10907 = vpop.f32.mrf.mxu0
    %v10908 = vadd.f32 0.0, %v10907
    %v10909 = vpop.f32.mrf.mxu0
    %10910 = vmatprep.mubr.bf16.mxu0 0
    %10911 = vmatmul.mubr.bf16.gmra.mxu0 %v10806
    %v10912 = vpop.f32.mrf.mxu0
    %v10913 = vadd.f32 0.0, %v10912
    %v10914 = vpop.f32.mrf.mxu0
    %v10915 = vpop.f32.mrf.mxu0
    %v10916 = vadd.f32 0.0, %v10915
    %v10917 = vpop.f32.mrf.mxu0
    %10918 = vmatprep.mubr.bf16.mxu0 0
    %10919 = vmatmul.mubr.bf16.gmra.mxu0 %v10809
    %v10920 = vpop.f32.mrf.mxu0
    %v10921 = vadd.f32 0.0, %v10920
    %v10922 = vpop.f32.mrf.mxu0
    %v10923 = vpop.f32.mrf.mxu0
    %v10924 = vadd.f32 0.0, %v10923
    %v10925 = vpop.f32.mrf.mxu0
    %10926 = vmatprep.mubr.bf16.mxu0 0
    %10927 = vmatmul.mubr.bf16.gmra.mxu0 %v10812
    %v10928 = vpop.f32.mrf.mxu0
    %v10929 = vadd.f32 0.0, %v10928
    %v10930 = vpop.f32.mrf.mxu0
    %v10931 = vpop.f32.mrf.mxu0
    %v10932 = vadd.f32 0.0, %v10931
    %v10933 = vpop.f32.mrf.mxu0
    %10934 = vmatprep.mubr.bf16.mxu0 0
    %10935 = vmatmul.mubr.bf16.gmra.mxu0 %v10815
    %v10936 = vpop.f32.mrf.mxu0
    %v10937 = vadd.f32 0.0, %v10936
    %v10938 = vpop.f32.mrf.mxu0
    %v10939 = vpop.f32.mrf.mxu0
    %v10940 = vadd.f32 0.0, %v10939
    %v10941 = vpop.f32.mrf.mxu0
    %10942 = vmatprep.mubr.bf16.mxu0 0
    %10943 = vmatmul.mubr.bf16.gmra.mxu0 %v10818
    %v10944 = vpop.f32.mrf.mxu0
    %v10945 = vadd.f32 0.0, %v10944
    %v10946 = vpop.f32.mrf.mxu0
    %v10947 = vpop.f32.mrf.mxu0
    %v10948 = vadd.f32 0.0, %v10947
    %v10949 = vpop.f32.mrf.mxu0
    %10950 = vmatprep.mubr.bf16.mxu0 0
    %10951 = vmatmul.mubr.bf16.gmra.mxu0 %v10821
    %v10952 = vpop.f32.mrf.mxu0
    %v10953 = vadd.f32 0.0, %v10952
    %v10954 = vpop.f32.mrf.mxu0
    %v10955 = vpop.f32.mrf.mxu0
    %v10956 = vadd.f32 0.0, %v10955
    %v10957 = vpop.f32.mrf.mxu0
    %10958 = vmatprep.mubr.bf16.mxu0 0
    %10959 = vmatmul.mubr.bf16.gmra.mxu0 %v10824
    %v10960 = vpop.f32.mrf.mxu0
    %v10961 = vadd.f32 0.0, %v10960
    %v10962 = vpop.f32.mrf.mxu0
    %v10963 = vpop.f32.mrf.mxu0
    %v10964 = vadd.f32 0.0, %v10963
    %v10965 = vpop.f32.mrf.mxu0
    %10966 = vmatprep.mubr.bf16.mxu0 0
    %10967 = vmatmul.mubr.bf16.gmra.mxu0 %v10827
    %v10968 = vpop.f32.mrf.mxu0
    %v10969 = vadd.f32 0.0, %v10968
    %v10970 = vpop.f32.mrf.mxu0
    %v10971 = vpop.f32.mrf.mxu0
    %v10972 = vadd.f32 0.0, %v10971
    %v10973 = vpop.f32.mrf.mxu0
    %10974 = vmatprep.mubr.bf16.mxu0 0
    %10975 = vmatmul.mubr.bf16.gmra.mxu0 %v10830
    %v10976 = vpop.f32.mrf.mxu0
    %v10977 = vadd.f32 0.0, %v10976
    %v10978 = vpop.f32.mrf.mxu0
    %v10979 = vpop.f32.mrf.mxu0
    %v10980 = vadd.f32 0.0, %v10979
    %v10981 = vpop.f32.mrf.mxu0
    %10982 = vmatprep.mubr.bf16.mxu0 0
    %10983 = vmatmul.mubr.bf16.gmra.mxu0 %v10833
    %v10984 = vpop.f32.mrf.mxu0
    %v10985 = vadd.f32 0.0, %v10984
    %v10986 = vpop.f32.mrf.mxu0
    %v10987 = vpop.f32.mrf.mxu0
    %v10988 = vadd.f32 0.0, %v10987
    %v10989 = vpop.f32.mrf.mxu0
    %10990 = vmatprep.mubr.bf16.mxu0 0
    %10991 = vmatmul.mubr.bf16.gmra.mxu0 %v10836
    %v10992 = vpop.f32.mrf.mxu0
    %v10993 = vadd.f32 0.0, %v10992
    %v10994 = vpop.f32.mrf.mxu0
    %v10995 = vpop.f32.mrf.mxu0
    %v10996 = vadd.f32 0.0, %v10995
    %v10997 = vpop.f32.mrf.mxu0
    %10998 = vdwg.mxu0
    %v10999 = vadd.f32 %v10873, %v702
    %v11000 = vadd.f32 %v10876, %v706
    %v11001 = vadd.f32 %v10881, %v713
    %v11002 = vadd.f32 %v10884, %v717
    %v11003 = vadd.f32 %v10889, %v724
    %v11004 = vadd.f32 %v10892, %v728
    %v11005 = vadd.f32 %v10897, %v735
    %v11006 = vadd.f32 %v10900, %v739
    %v11007 = vadd.f32 %v10905, %v746
    %v11008 = vadd.f32 %v10908, %v750
    %v11009 = vadd.f32 %v10913, %v757
    %v11010 = vadd.f32 %v10916, %v761
    %v11011 = vadd.f32 %v10921, %v768
    %v11012 = vadd.f32 %v10924, %v772
    %v11013 = vadd.f32 %v10929, %v779
    %v11014 = vadd.f32 %v10932, %v783
    %v11015 = vadd.f32 %v10937, %v790
    %v11016 = vadd.f32 %v10940, %v794
    %v11017 = vadd.f32 %v10945, %v801
    %v11018 = vadd.f32 %v10948, %v805
    %v11019 = vadd.f32 %v10953, %v812
    %v11020 = vadd.f32 %v10956, %v816
    %v11021 = vadd.f32 %v10961, %v823
    %v11022 = vadd.f32 %v10964, %v827
    %v11023 = vadd.f32 %v10969, %v834
    %v11024 = vadd.f32 %v10972, %v838
    %v11025 = vadd.f32 %v10977, %v845
    %v11026 = vadd.f32 %v10980, %v849
    %v11027 = vadd.f32 %v10985, %v856
    %v11028 = vadd.f32 %v10988, %v860
    %v11029 = vadd.f32 %v10993, %v867
    %v11030 = vadd.f32 %v10996, %v871
    %11063 = vset.pattern.permute.xlu0 0
    %11064 = vperm.xlu0 %11063, %v10999
    %v11065 = vpop.permute.xlu0 %11064
    %11066 = vset.pattern.permute.xlu0 0
    %11067 = vperm.xlu0 %11066, %v11000
    %v11068 = vpop.permute.xlu0 %11067
    %11069 = vset.pattern.permute.xlu0 0
    %11070 = vperm.xlu0 %11069, %v11001
    %v11071 = vpop.permute.xlu0 %11070
    %11072 = vset.pattern.permute.xlu0 0
    %11073 = vperm.xlu0 %11072, %v11002
    %v11074 = vpop.permute.xlu0 %11073
    %11075 = vset.pattern.permute.xlu0 0
    %11076 = vperm.xlu0 %11075, %v11003
    %v11077 = vpop.permute.xlu0 %11076
    %11078 = vset.pattern.permute.xlu0 0
    %11079 = vperm.xlu0 %11078, %v11004
    %v11080 = vpop.permute.xlu0 %11079
    %11081 = vset.pattern.permute.xlu0 0
    %11082 = vperm.xlu0 %11081, %v11005
    %v11083 = vpop.permute.xlu0 %11082
    %11084 = vset.pattern.permute.xlu0 0
    %11085 = vperm.xlu0 %11084, %v11006
    %v11086 = vpop.permute.xlu0 %11085
    %11087 = vset.pattern.permute.xlu0 0
    %11088 = vperm.xlu0 %11087, %v11007
    %v11089 = vpop.permute.xlu0 %11088
    %11090 = vset.pattern.permute.xlu0 0
    %11091 = vperm.xlu0 %11090, %v11008
    %v11092 = vpop.permute.xlu0 %11091
    %11093 = vset.pattern.permute.xlu0 0
    %11094 = vperm.xlu0 %11093, %v11009
    %v11095 = vpop.permute.xlu0 %11094
    %11096 = vset.pattern.permute.xlu0 0
    %11097 = vperm.xlu0 %11096, %v11010
    %v11098 = vpop.permute.xlu0 %11097
    %11099 = vset.pattern.permute.xlu0 0
    %11100 = vperm.xlu0 %11099, %v11011
    %v11101 = vpop.permute.xlu0 %11100
    %11102 = vset.pattern.permute.xlu0 0
    %11103 = vperm.xlu0 %11102, %v11012
    %v11104 = vpop.permute.xlu0 %11103
    %11105 = vset.pattern.permute.xlu0 0
    %11106 = vperm.xlu0 %11105, %v11013
    %v11107 = vpop.permute.xlu0 %11106
    %11108 = vset.pattern.permute.xlu0 0
    %11109 = vperm.xlu0 %11108, %v11014
    %v11110 = vpop.permute.xlu0 %11109
    %11111 = vset.pattern.permute.xlu0 0
    %11112 = vperm.xlu0 %11111, %v11015
    %v11113 = vpop.permute.xlu0 %11112
    %11114 = vset.pattern.permute.xlu0 0
    %11115 = vperm.xlu0 %11114, %v11016
    %v11116 = vpop.permute.xlu0 %11115
    %11117 = vset.pattern.permute.xlu0 0
    %11118 = vperm.xlu0 %11117, %v11017
    %v11119 = vpop.permute.xlu0 %11118
    %11120 = vset.pattern.permute.xlu0 0
    %11121 = vperm.xlu0 %11120, %v11018
    %v11122 = vpop.permute.xlu0 %11121
    %11123 = vset.pattern.permute.xlu0 0
    %11124 = vperm.xlu0 %11123, %v11019
    %v11125 = vpop.permute.xlu0 %11124
    %11126 = vset.pattern.permute.xlu0 0
    %11127 = vperm.xlu0 %11126, %v11020
    %v11128 = vpop.permute.xlu0 %11127
    %11129 = vset.pattern.permute.xlu0 0
    %11130 = vperm.xlu0 %11129, %v11021
    %v11131 = vpop.permute.xlu0 %11130
    %11132 = vset.pattern.permute.xlu0 0
    %11133 = vperm.xlu0 %11132, %v11022
    %v11134 = vpop.permute.xlu0 %11133
    %11135 = vset.pattern.permute.xlu0 0
    %11136 = vperm.xlu0 %11135, %v11023
    %v11137 = vpop.permute.xlu0 %11136
    %11138 = vset.pattern.permute.xlu0 0
    %11139 = vperm.xlu0 %11138, %v11024
    %v11140 = vpop.permute.xlu0 %11139
    %11141 = vset.pattern.permute.xlu0 0
    %11142 = vperm.xlu0 %11141, %v11025
    %v11143 = vpop.permute.xlu0 %11142
    %11144 = vset.pattern.permute.xlu0 0
    %11145 = vperm.xlu0 %11144, %v11026
    %v11146 = vpop.permute.xlu0 %11145
    %11147 = vset.pattern.permute.xlu0 0
    %11148 = vperm.xlu0 %11147, %v11027
    %v11149 = vpop.permute.xlu0 %11148
    %11150 = vset.pattern.permute.xlu0 0
    %11151 = vperm.xlu0 %11150, %v11028
    %v11152 = vpop.permute.xlu0 %11151
    %11153 = vset.pattern.permute.xlu0 0
    %11154 = vperm.xlu0 %11153, %v11029
    %v11155 = vpop.permute.xlu0 %11154
    %11156 = vset.pattern.permute.xlu0 0
    %11157 = vperm.xlu0 %11156, %v11030
    %v11158 = vpop.permute.xlu0 %11157
    %v11159 = vlaneseq
    %v11160 = vshrl.u32 %v11159, 7
    %v11161 = vsub.s32 %v1065, %v11160
    %v11162 = vrot.slane %v11065, %v11161
    %v11163 = vlaneseq
    %v11164 = vshrl.u32 %v11163, 7
    %v11165 = vsub.s32 %v1070, %v11164
    %v11166 = vrot.slane %v11068, %v11165
    %v11167 = vsel %vm1075, %v11166, %v11162
    %v11168 = vlaneseq
    %v11169 = vshrl.u32 %v11168, 7
    %v11170 = vsub.s32 %v1065, %v11169
    %v11171 = vrot.slane %v11071, %v11170
    %v11172 = vlaneseq
    %v11173 = vshrl.u32 %v11172, 7
    %v11174 = vsub.s32 %v1070, %v11173
    %v11175 = vrot.slane %v11074, %v11174
    %v11176 = vsel %vm1075, %v11175, %v11171
    %v11177 = vlaneseq
    %v11178 = vshrl.u32 %v11177, 7
    %v11179 = vsub.s32 %v1065, %v11178
    %v11180 = vrot.slane %v11077, %v11179
    %v11181 = vlaneseq
    %v11182 = vshrl.u32 %v11181, 7
    %v11183 = vsub.s32 %v1070, %v11182
    %v11184 = vrot.slane %v11080, %v11183
    %v11185 = vsel %vm1075, %v11184, %v11180
    %v11186 = vlaneseq
    %v11187 = vshrl.u32 %v11186, 7
    %v11188 = vsub.s32 %v1065, %v11187
    %v11189 = vrot.slane %v11083, %v11188
    %v11190 = vlaneseq
    %v11191 = vshrl.u32 %v11190, 7
    %v11192 = vsub.s32 %v1070, %v11191
    %v11193 = vrot.slane %v11086, %v11192
    %v11194 = vsel %vm1075, %v11193, %v11189
    %v11195 = vlaneseq
    %v11196 = vshrl.u32 %v11195, 7
    %v11197 = vsub.s32 %v1065, %v11196
    %v11198 = vrot.slane %v11089, %v11197
    %v11199 = vlaneseq
    %v11200 = vshrl.u32 %v11199, 7
    %v11201 = vsub.s32 %v1070, %v11200
    %v11202 = vrot.slane %v11092, %v11201
    %v11203 = vsel %vm1075, %v11202, %v11198
    %v11204 = vlaneseq
    %v11205 = vshrl.u32 %v11204, 7
    %v11206 = vsub.s32 %v1065, %v11205
    %v11207 = vrot.slane %v11095, %v11206
    %v11208 = vlaneseq
    %v11209 = vshrl.u32 %v11208, 7
    %v11210 = vsub.s32 %v1070, %v11209
    %v11211 = vrot.slane %v11098, %v11210
    %v11212 = vsel %vm1075, %v11211, %v11207
    %v11213 = vlaneseq
    %v11214 = vshrl.u32 %v11213, 7
    %v11215 = vsub.s32 %v1065, %v11214
    %v11216 = vrot.slane %v11101, %v11215
    %v11217 = vlaneseq
    %v11218 = vshrl.u32 %v11217, 7
    %v11219 = vsub.s32 %v1070, %v11218
    %v11220 = vrot.slane %v11104, %v11219
    %v11221 = vsel %vm1075, %v11220, %v11216
    %v11222 = vlaneseq
    %v11223 = vshrl.u32 %v11222, 7
    %v11224 = vsub.s32 %v1065, %v11223
    %v11225 = vrot.slane %v11107, %v11224
    %v11226 = vlaneseq
    %v11227 = vshrl.u32 %v11226, 7
    %v11228 = vsub.s32 %v1070, %v11227
    %v11229 = vrot.slane %v11110, %v11228
    %v11230 = vsel %vm1075, %v11229, %v11225
    %v11231 = vlaneseq
    %v11232 = vshrl.u32 %v11231, 7
    %v11233 = vsub.s32 %v1065, %v11232
    %v11234 = vrot.slane %v11113, %v11233
    %v11235 = vlaneseq
    %v11236 = vshrl.u32 %v11235, 7
    %v11237 = vsub.s32 %v1070, %v11236
    %v11238 = vrot.slane %v11116, %v11237
    %v11239 = vsel %vm1075, %v11238, %v11234
    %v11240 = vlaneseq
    %v11241 = vshrl.u32 %v11240, 7
    %v11242 = vsub.s32 %v1065, %v11241
    %v11243 = vrot.slane %v11119, %v11242
    %v11244 = vlaneseq
    %v11245 = vshrl.u32 %v11244, 7
    %v11246 = vsub.s32 %v1070, %v11245
    %v11247 = vrot.slane %v11122, %v11246
    %v11248 = vsel %vm1075, %v11247, %v11243
    %v11249 = vlaneseq
    %v11250 = vshrl.u32 %v11249, 7
    %v11251 = vsub.s32 %v1065, %v11250
    %v11252 = vrot.slane %v11125, %v11251
    %v11253 = vlaneseq
    %v11254 = vshrl.u32 %v11253, 7
    %v11255 = vsub.s32 %v1070, %v11254
    %v11256 = vrot.slane %v11128, %v11255
    %v11257 = vsel %vm1075, %v11256, %v11252
    %v11258 = vlaneseq
    %v11259 = vshrl.u32 %v11258, 7
    %v11260 = vsub.s32 %v1065, %v11259
    %v11261 = vrot.slane %v11131, %v11260
    %v11262 = vlaneseq
    %v11263 = vshrl.u32 %v11262, 7
    %v11264 = vsub.s32 %v1070, %v11263
    %v11265 = vrot.slane %v11134, %v11264
    %v11266 = vsel %vm1075, %v11265, %v11261
    %v11267 = vlaneseq
    %v11268 = vshrl.u32 %v11267, 7
    %v11269 = vsub.s32 %v1065, %v11268
    %v11270 = vrot.slane %v11137, %v11269
    %v11271 = vlaneseq
    %v11272 = vshrl.u32 %v11271, 7
    %v11273 = vsub.s32 %v1070, %v11272
    %v11274 = vrot.slane %v11140, %v11273
    %v11275 = vsel %vm1075, %v11274, %v11270
    %v11276 = vlaneseq
    %v11277 = vshrl.u32 %v11276, 7
    %v11278 = vsub.s32 %v1065, %v11277
    %v11279 = vrot.slane %v11143, %v11278
    %v11280 = vlaneseq
    %v11281 = vshrl.u32 %v11280, 7
    %v11282 = vsub.s32 %v1070, %v11281
    %v11283 = vrot.slane %v11146, %v11282
    %v11284 = vsel %vm1075, %v11283, %v11279
    %v11285 = vlaneseq
    %v11286 = vshrl.u32 %v11285, 7
    %v11287 = vsub.s32 %v1065, %v11286
    %v11288 = vrot.slane %v11149, %v11287
    %v11289 = vlaneseq
    %v11290 = vshrl.u32 %v11289, 7
    %v11291 = vsub.s32 %v1070, %v11290
    %v11292 = vrot.slane %v11152, %v11291
    %v11293 = vsel %vm1075, %v11292, %v11288
    %v11294 = vlaneseq
    %v11295 = vshrl.u32 %v11294, 7
    %v11296 = vsub.s32 %v1065, %v11295
    %v11297 = vrot.slane %v11155, %v11296
    %v11298 = vlaneseq
    %v11299 = vshrl.u32 %v11298, 7
    %v11300 = vsub.s32 %v1070, %v11299
    %v11301 = vrot.slane %v11158, %v11300
    %v11302 = vsel %vm1075, %v11301, %v11297
    %v11303 = vsel %vm1212, %v11176, %v11167
    %v11304 = vsel %vm1214, %v11185, %v11303
    %v11305 = vsel %vm1216, %v11194, %v11304
    %v11306 = vsel %vm1218, %v11203, %v11305
    %v11307 = vsel %vm1220, %v11212, %v11306
    %v11308 = vsel %vm1222, %v11221, %v11307
    %v11309 = vsel %vm1224, %v11230, %v11308
    %v11310 = vsel %vm1212, %v11248, %v11239
    %v11311 = vsel %vm1214, %v11257, %v11310
    %v11312 = vsel %vm1216, %v11266, %v11311
    %v11313 = vsel %vm1218, %v11275, %v11312
    %v11314 = vsel %vm1220, %v11284, %v11313
    %v11315 = vsel %vm1222, %v11293, %v11314
    %v11316 = vsel %vm1224, %v11302, %v11315
    %v11319 = vsel %vm1235, %v11309, -inf
    %11320 = vmax.xlane.f32.xlu0 %v11319
    %v11321 = vpop.xlane.xlu0 %11320
    %v11322 = vsel %vm1235, %v11316, -inf
    %11323 = vmax.xlane.f32.xlu0 %v11322
    %v11324 = vpop.xlane.xlu0 %11323
    %v11327 = vlaneseq
    %v11328 = vshrl.u32 %v11327, 7
    %v11329 = vsub.s32 0, %v11328
    %v11330 = vrot.slane %v11321, %v11329
    %v11331 = vlaneseq
    %v11332 = vshrl.u32 %v11331, 7
    %v11333 = vsub.s32 1, %v11332
    %v11334 = vrot.slane %v11321, %v11333
    %v11335 = vlaneseq
    %v11336 = vshrl.u32 %v11335, 7
    %v11337 = vsub.s32 2, %v11336
    %v11338 = vrot.slane %v11321, %v11337
    %v11339 = vlaneseq
    %v11340 = vshrl.u32 %v11339, 7
    %v11341 = vsub.s32 3, %v11340
    %v11342 = vrot.slane %v11321, %v11341
    %v11343 = vlaneseq
    %v11344 = vshrl.u32 %v11343, 7
    %v11345 = vsub.s32 4, %v11344
    %v11346 = vrot.slane %v11321, %v11345
    %v11347 = vlaneseq
    %v11348 = vshrl.u32 %v11347, 7
    %v11349 = vsub.s32 5, %v11348
    %v11350 = vrot.slane %v11321, %v11349
    %v11351 = vlaneseq
    %v11352 = vshrl.u32 %v11351, 7
    %v11353 = vsub.s32 6, %v11352
    %v11354 = vrot.slane %v11321, %v11353
    %v11355 = vlaneseq
    %v11356 = vshrl.u32 %v11355, 7
    %v11357 = vsub.s32 7, %v11356
    %v11358 = vrot.slane %v11321, %v11357
    %v11359 = vlaneseq
    %v11360 = vshrl.u32 %v11359, 7
    %v11361 = vsub.s32 0, %v11360
    %v11362 = vrot.slane %v11324, %v11361
    %v11363 = vlaneseq
    %v11364 = vshrl.u32 %v11363, 7
    %v11365 = vsub.s32 1, %v11364
    %v11366 = vrot.slane %v11324, %v11365
    %v11367 = vlaneseq
    %v11368 = vshrl.u32 %v11367, 7
    %v11369 = vsub.s32 2, %v11368
    %v11370 = vrot.slane %v11324, %v11369
    %v11371 = vlaneseq
    %v11372 = vshrl.u32 %v11371, 7
    %v11373 = vsub.s32 3, %v11372
    %v11374 = vrot.slane %v11324, %v11373
    %v11375 = vlaneseq
    %v11376 = vshrl.u32 %v11375, 7
    %v11377 = vsub.s32 4, %v11376
    %v11378 = vrot.slane %v11324, %v11377
    %v11379 = vlaneseq
    %v11380 = vshrl.u32 %v11379, 7
    %v11381 = vsub.s32 5, %v11380
    %v11382 = vrot.slane %v11324, %v11381
    %v11383 = vlaneseq
    %v11384 = vshrl.u32 %v11383, 7
    %v11385 = vsub.s32 6, %v11384
    %v11386 = vrot.slane %v11324, %v11385
    %v11387 = vlaneseq
    %v11388 = vshrl.u32 %v11387, 7
    %v11389 = vsub.s32 7, %v11388
    %v11390 = vrot.slane %v11324, %v11389
    %v11407 = vsub.f32 %v10999, %v11330
    %v11408 = vsub.f32 %v11000, %v11330
    %v11409 = vsub.f32 %v11001, %v11334
    %v11410 = vsub.f32 %v11002, %v11334
    %v11411 = vsub.f32 %v11003, %v11338
    %v11412 = vsub.f32 %v11004, %v11338
    %v11413 = vsub.f32 %v11005, %v11342
    %v11414 = vsub.f32 %v11006, %v11342
    %v11415 = vsub.f32 %v11007, %v11346
    %v11416 = vsub.f32 %v11008, %v11346
    %v11417 = vsub.f32 %v11009, %v11350
    %v11418 = vsub.f32 %v11010, %v11350
    %v11419 = vsub.f32 %v11011, %v11354
    %v11420 = vsub.f32 %v11012, %v11354
    %v11421 = vsub.f32 %v11013, %v11358
    %v11422 = vsub.f32 %v11014, %v11358
    %v11423 = vsub.f32 %v11015, %v11362
    %v11424 = vsub.f32 %v11016, %v11362
    %v11425 = vsub.f32 %v11017, %v11366
    %v11426 = vsub.f32 %v11018, %v11366
    %v11427 = vsub.f32 %v11019, %v11370
    %v11428 = vsub.f32 %v11020, %v11370
    %v11429 = vsub.f32 %v11021, %v11374
    %v11430 = vsub.f32 %v11022, %v11374
    %v11431 = vsub.f32 %v11023, %v11378
    %v11432 = vsub.f32 %v11024, %v11378
    %v11433 = vsub.f32 %v11025, %v11382
    %v11434 = vsub.f32 %v11026, %v11382
    %v11435 = vsub.f32 %v11027, %v11386
    %v11436 = vsub.f32 %v11028, %v11386
    %v11437 = vsub.f32 %v11029, %v11390
    %v11438 = vsub.f32 %v11030, %v11390
    %v11439 = vmul.f32 %v11407, 1.442695
    %v11440 = vpow.pop %v11439
    %v11441 = vmul.f32 %v11408, 1.442695
    %v11442 = vpow.pop %v11441
    %v11443 = vmul.f32 %v11409, 1.442695
    %v11444 = vpow.pop %v11443
    %v11445 = vmul.f32 %v11410, 1.442695
    %v11446 = vpow.pop %v11445
    %v11447 = vmul.f32 %v11411, 1.442695
    %v11448 = vpow.pop %v11447
    %v11449 = vmul.f32 %v11412, 1.442695
    %v11450 = vpow.pop %v11449
    %v11451 = vmul.f32 %v11413, 1.442695
    %v11452 = vpow.pop %v11451
    %v11453 = vmul.f32 %v11414, 1.442695
    %v11454 = vpow.pop %v11453
    %v11455 = vmul.f32 %v11415, 1.442695
    %v11456 = vpow.pop %v11455
    %v11457 = vmul.f32 %v11416, 1.442695
    %v11458 = vpow.pop %v11457
    %v11459 = vmul.f32 %v11417, 1.442695
    %v11460 = vpow.pop %v11459
    %v11461 = vmul.f32 %v11418, 1.442695
    %v11462 = vpow.pop %v11461
    %v11463 = vmul.f32 %v11419, 1.442695
    %v11464 = vpow.pop %v11463
    %v11465 = vmul.f32 %v11420, 1.442695
    %v11466 = vpow.pop %v11465
    %v11467 = vmul.f32 %v11421, 1.442695
    %v11468 = vpow.pop %v11467
    %v11469 = vmul.f32 %v11422, 1.442695
    %v11470 = vpow.pop %v11469
    %v11471 = vmul.f32 %v11423, 1.442695
    %v11472 = vpow.pop %v11471
    %v11473 = vmul.f32 %v11424, 1.442695
    %v11474 = vpow.pop %v11473
    %v11475 = vmul.f32 %v11425, 1.442695
    %v11476 = vpow.pop %v11475
    %v11477 = vmul.f32 %v11426, 1.442695
    %v11478 = vpow.pop %v11477
    %v11479 = vmul.f32 %v11427, 1.442695
    %v11480 = vpow.pop %v11479
    %v11481 = vmul.f32 %v11428, 1.442695
    %v11482 = vpow.pop %v11481
    %v11483 = vmul.f32 %v11429, 1.442695
    %v11484 = vpow.pop %v11483
    %v11485 = vmul.f32 %v11430, 1.442695
    %v11486 = vpow.pop %v11485
    %v11487 = vmul.f32 %v11431, 1.442695
    %v11488 = vpow.pop %v11487
    %v11489 = vmul.f32 %v11432, 1.442695
    %v11490 = vpow.pop %v11489
    %v11491 = vmul.f32 %v11433, 1.442695
    %v11492 = vpow.pop %v11491
    %v11493 = vmul.f32 %v11434, 1.442695
    %v11494 = vpow.pop %v11493
    %v11495 = vmul.f32 %v11435, 1.442695
    %v11496 = vpow.pop %v11495
    %v11497 = vmul.f32 %v11436, 1.442695
    %v11498 = vpow.pop %v11497
    %v11499 = vmul.f32 %v11437, 1.442695
    %v11500 = vpow.pop %v11499
    %v11501 = vmul.f32 %v11438, 1.442695
    %v11502 = vpow.pop %v11501
    %11535 = vset.pattern.permute.xlu0 0
    %11536 = vperm.xlu0 %11535, %v11440
    %v11537 = vpop.permute.xlu0 %11536
    %11538 = vset.pattern.permute.xlu0 0
    %11539 = vperm.xlu0 %11538, %v11442
    %v11540 = vpop.permute.xlu0 %11539
    %11541 = vset.pattern.permute.xlu0 0
    %11542 = vperm.xlu0 %11541, %v11444
    %v11543 = vpop.permute.xlu0 %11542
    %11544 = vset.pattern.permute.xlu0 0
    %11545 = vperm.xlu0 %11544, %v11446
    %v11546 = vpop.permute.xlu0 %11545
    %11547 = vset.pattern.permute.xlu0 0
    %11548 = vperm.xlu0 %11547, %v11448
    %v11549 = vpop.permute.xlu0 %11548
    %11550 = vset.pattern.permute.xlu0 0
    %11551 = vperm.xlu0 %11550, %v11450
    %v11552 = vpop.permute.xlu0 %11551
    %11553 = vset.pattern.permute.xlu0 0
    %11554 = vperm.xlu0 %11553, %v11452
    %v11555 = vpop.permute.xlu0 %11554
    %11556 = vset.pattern.permute.xlu0 0
    %11557 = vperm.xlu0 %11556, %v11454
    %v11558 = vpop.permute.xlu0 %11557
    %11559 = vset.pattern.permute.xlu0 0
    %11560 = vperm.xlu0 %11559, %v11456
    %v11561 = vpop.permute.xlu0 %11560
    %11562 = vset.pattern.permute.xlu0 0
    %11563 = vperm.xlu0 %11562, %v11458
    %v11564 = vpop.permute.xlu0 %11563
    %11565 = vset.pattern.permute.xlu0 0
    %11566 = vperm.xlu0 %11565, %v11460
    %v11567 = vpop.permute.xlu0 %11566
    %11568 = vset.pattern.permute.xlu0 0
    %11569 = vperm.xlu0 %11568, %v11462
    %v11570 = vpop.permute.xlu0 %11569
    %11571 = vset.pattern.permute.xlu0 0
    %11572 = vperm.xlu0 %11571, %v11464
    %v11573 = vpop.permute.xlu0 %11572
    %11574 = vset.pattern.permute.xlu0 0
    %11575 = vperm.xlu0 %11574, %v11466
    %v11576 = vpop.permute.xlu0 %11575
    %11577 = vset.pattern.permute.xlu0 0
    %11578 = vperm.xlu0 %11577, %v11468
    %v11579 = vpop.permute.xlu0 %11578
    %11580 = vset.pattern.permute.xlu0 0
    %11581 = vperm.xlu0 %11580, %v11470
    %v11582 = vpop.permute.xlu0 %11581
    %11583 = vset.pattern.permute.xlu0 0
    %11584 = vperm.xlu0 %11583, %v11472
    %v11585 = vpop.permute.xlu0 %11584
    %11586 = vset.pattern.permute.xlu0 0
    %11587 = vperm.xlu0 %11586, %v11474
    %v11588 = vpop.permute.xlu0 %11587
    %11589 = vset.pattern.permute.xlu0 0
    %11590 = vperm.xlu0 %11589, %v11476
    %v11591 = vpop.permute.xlu0 %11590
    %11592 = vset.pattern.permute.xlu0 0
    %11593 = vperm.xlu0 %11592, %v11478
    %v11594 = vpop.permute.xlu0 %11593
    %11595 = vset.pattern.permute.xlu0 0
    %11596 = vperm.xlu0 %11595, %v11480
    %v11597 = vpop.permute.xlu0 %11596
    %11598 = vset.pattern.permute.xlu0 0
    %11599 = vperm.xlu0 %11598, %v11482
    %v11600 = vpop.permute.xlu0 %11599
    %11601 = vset.pattern.permute.xlu0 0
    %11602 = vperm.xlu0 %11601, %v11484
    %v11603 = vpop.permute.xlu0 %11602
    %11604 = vset.pattern.permute.xlu0 0
    %11605 = vperm.xlu0 %11604, %v11486
    %v11606 = vpop.permute.xlu0 %11605
    %11607 = vset.pattern.permute.xlu0 0
    %11608 = vperm.xlu0 %11607, %v11488
    %v11609 = vpop.permute.xlu0 %11608
    %11610 = vset.pattern.permute.xlu0 0
    %11611 = vperm.xlu0 %11610, %v11490
    %v11612 = vpop.permute.xlu0 %11611
    %11613 = vset.pattern.permute.xlu0 0
    %11614 = vperm.xlu0 %11613, %v11492
    %v11615 = vpop.permute.xlu0 %11614
    %11616 = vset.pattern.permute.xlu0 0
    %11617 = vperm.xlu0 %11616, %v11494
    %v11618 = vpop.permute.xlu0 %11617
    %11619 = vset.pattern.permute.xlu0 0
    %11620 = vperm.xlu0 %11619, %v11496
    %v11621 = vpop.permute.xlu0 %11620
    %11622 = vset.pattern.permute.xlu0 0
    %11623 = vperm.xlu0 %11622, %v11498
    %v11624 = vpop.permute.xlu0 %11623
    %11625 = vset.pattern.permute.xlu0 0
    %11626 = vperm.xlu0 %11625, %v11500
    %v11627 = vpop.permute.xlu0 %11626
    %11628 = vset.pattern.permute.xlu0 0
    %11629 = vperm.xlu0 %11628, %v11502
    %v11630 = vpop.permute.xlu0 %11629
    %v11631 = vlaneseq
    %v11632 = vshrl.u32 %v11631, 7
    %v11633 = vsub.s32 %v1065, %v11632
    %v11634 = vrot.slane %v11537, %v11633
    %v11635 = vlaneseq
    %v11636 = vshrl.u32 %v11635, 7
    %v11637 = vsub.s32 %v1070, %v11636
    %v11638 = vrot.slane %v11540, %v11637
    %v11639 = vsel %vm1075, %v11638, %v11634
    %v11640 = vlaneseq
    %v11641 = vshrl.u32 %v11640, 7
    %v11642 = vsub.s32 %v1065, %v11641
    %v11643 = vrot.slane %v11543, %v11642
    %v11644 = vlaneseq
    %v11645 = vshrl.u32 %v11644, 7
    %v11646 = vsub.s32 %v1070, %v11645
    %v11647 = vrot.slane %v11546, %v11646
    %v11648 = vsel %vm1075, %v11647, %v11643
    %v11649 = vlaneseq
    %v11650 = vshrl.u32 %v11649, 7
    %v11651 = vsub.s32 %v1065, %v11650
    %v11652 = vrot.slane %v11549, %v11651
    %v11653 = vlaneseq
    %v11654 = vshrl.u32 %v11653, 7
    %v11655 = vsub.s32 %v1070, %v11654
    %v11656 = vrot.slane %v11552, %v11655
    %v11657 = vsel %vm1075, %v11656, %v11652
    %v11658 = vlaneseq
    %v11659 = vshrl.u32 %v11658, 7
    %v11660 = vsub.s32 %v1065, %v11659
    %v11661 = vrot.slane %v11555, %v11660
    %v11662 = vlaneseq
    %v11663 = vshrl.u32 %v11662, 7
    %v11664 = vsub.s32 %v1070, %v11663
    %v11665 = vrot.slane %v11558, %v11664
    %v11666 = vsel %vm1075, %v11665, %v11661
    %v11667 = vlaneseq
    %v11668 = vshrl.u32 %v11667, 7
    %v11669 = vsub.s32 %v1065, %v11668
    %v11670 = vrot.slane %v11561, %v11669
    %v11671 = vlaneseq
    %v11672 = vshrl.u32 %v11671, 7
    %v11673 = vsub.s32 %v1070, %v11672
    %v11674 = vrot.slane %v11564, %v11673
    %v11675 = vsel %vm1075, %v11674, %v11670
    %v11676 = vlaneseq
    %v11677 = vshrl.u32 %v11676, 7
    %v11678 = vsub.s32 %v1065, %v11677
    %v11679 = vrot.slane %v11567, %v11678
    %v11680 = vlaneseq
    %v11681 = vshrl.u32 %v11680, 7
    %v11682 = vsub.s32 %v1070, %v11681
    %v11683 = vrot.slane %v11570, %v11682
    %v11684 = vsel %vm1075, %v11683, %v11679
    %v11685 = vlaneseq
    %v11686 = vshrl.u32 %v11685, 7
    %v11687 = vsub.s32 %v1065, %v11686
    %v11688 = vrot.slane %v11573, %v11687
    %v11689 = vlaneseq
    %v11690 = vshrl.u32 %v11689, 7
    %v11691 = vsub.s32 %v1070, %v11690
    %v11692 = vrot.slane %v11576, %v11691
    %v11693 = vsel %vm1075, %v11692, %v11688
    %v11694 = vlaneseq
    %v11695 = vshrl.u32 %v11694, 7
    %v11696 = vsub.s32 %v1065, %v11695
    %v11697 = vrot.slane %v11579, %v11696
    %v11698 = vlaneseq
    %v11699 = vshrl.u32 %v11698, 7
    %v11700 = vsub.s32 %v1070, %v11699
    %v11701 = vrot.slane %v11582, %v11700
    %v11702 = vsel %vm1075, %v11701, %v11697
    %v11703 = vlaneseq
    %v11704 = vshrl.u32 %v11703, 7
    %v11705 = vsub.s32 %v1065, %v11704
    %v11706 = vrot.slane %v11585, %v11705
    %v11707 = vlaneseq
    %v11708 = vshrl.u32 %v11707, 7
    %v11709 = vsub.s32 %v1070, %v11708
    %v11710 = vrot.slane %v11588, %v11709
    %v11711 = vsel %vm1075, %v11710, %v11706
    %v11712 = vlaneseq
    %v11713 = vshrl.u32 %v11712, 7
    %v11714 = vsub.s32 %v1065, %v11713
    %v11715 = vrot.slane %v11591, %v11714
    %v11716 = vlaneseq
    %v11717 = vshrl.u32 %v11716, 7
    %v11718 = vsub.s32 %v1070, %v11717
    %v11719 = vrot.slane %v11594, %v11718
    %v11720 = vsel %vm1075, %v11719, %v11715
    %v11721 = vlaneseq
    %v11722 = vshrl.u32 %v11721, 7
    %v11723 = vsub.s32 %v1065, %v11722
    %v11724 = vrot.slane %v11597, %v11723
    %v11725 = vlaneseq
    %v11726 = vshrl.u32 %v11725, 7
    %v11727 = vsub.s32 %v1070, %v11726
    %v11728 = vrot.slane %v11600, %v11727
    %v11729 = vsel %vm1075, %v11728, %v11724
    %v11730 = vlaneseq
    %v11731 = vshrl.u32 %v11730, 7
    %v11732 = vsub.s32 %v1065, %v11731
    %v11733 = vrot.slane %v11603, %v11732
    %v11734 = vlaneseq
    %v11735 = vshrl.u32 %v11734, 7
    %v11736 = vsub.s32 %v1070, %v11735
    %v11737 = vrot.slane %v11606, %v11736
    %v11738 = vsel %vm1075, %v11737, %v11733
    %v11739 = vlaneseq
    %v11740 = vshrl.u32 %v11739, 7
    %v11741 = vsub.s32 %v1065, %v11740
    %v11742 = vrot.slane %v11609, %v11741
    %v11743 = vlaneseq
    %v11744 = vshrl.u32 %v11743, 7
    %v11745 = vsub.s32 %v1070, %v11744
    %v11746 = vrot.slane %v11612, %v11745
    %v11747 = vsel %vm1075, %v11746, %v11742
    %v11748 = vlaneseq
    %v11749 = vshrl.u32 %v11748, 7
    %v11750 = vsub.s32 %v1065, %v11749
    %v11751 = vrot.slane %v11615, %v11750
    %v11752 = vlaneseq
    %v11753 = vshrl.u32 %v11752, 7
    %v11754 = vsub.s32 %v1070, %v11753
    %v11755 = vrot.slane %v11618, %v11754
    %v11756 = vsel %vm1075, %v11755, %v11751
    %v11757 = vlaneseq
    %v11758 = vshrl.u32 %v11757, 7
    %v11759 = vsub.s32 %v1065, %v11758
    %v11760 = vrot.slane %v11621, %v11759
    %v11761 = vlaneseq
    %v11762 = vshrl.u32 %v11761, 7
    %v11763 = vsub.s32 %v1070, %v11762
    %v11764 = vrot.slane %v11624, %v11763
    %v11765 = vsel %vm1075, %v11764, %v11760
    %v11766 = vlaneseq
    %v11767 = vshrl.u32 %v11766, 7
    %v11768 = vsub.s32 %v1065, %v11767
    %v11769 = vrot.slane %v11627, %v11768
    %v11770 = vlaneseq
    %v11771 = vshrl.u32 %v11770, 7
    %v11772 = vsub.s32 %v1070, %v11771
    %v11773 = vrot.slane %v11630, %v11772
    %v11774 = vsel %vm1075, %v11773, %v11769
    %v11775 = vsel %vm1212, %v11648, %v11639
    %v11776 = vsel %vm1214, %v11657, %v11775
    %v11777 = vsel %vm1216, %v11666, %v11776
    %v11778 = vsel %vm1218, %v11675, %v11777
    %v11779 = vsel %vm1220, %v11684, %v11778
    %v11780 = vsel %vm1222, %v11693, %v11779
    %v11781 = vsel %vm1224, %v11702, %v11780
    %v11782 = vsel %vm1212, %v11720, %v11711
    %v11783 = vsel %vm1214, %v11729, %v11782
    %v11784 = vsel %vm1216, %v11738, %v11783
    %v11785 = vsel %vm1218, %v11747, %v11784
    %v11786 = vsel %vm1220, %v11756, %v11785
    %v11787 = vsel %vm1222, %v11765, %v11786
    %v11788 = vsel %vm1224, %v11774, %v11787
    %v11791 = vsel %vm1235, %v11781, 0.0
    %11792 = vadd.xlane.f32.xlu0 %v11791
    %v11793 = vpop.xlane.xlu0 %11792
    %v11794 = vsel %vm1235, %v11788, 0.0
    %11795 = vadd.xlane.f32.xlu0 %v11794
    %v11796 = vpop.xlane.xlu0 %11795
    %v11797 = vrcp.pop %v11793
    %v11798 = vmul.f32 1.0, %v11797
    %v11799 = vrcp.pop %v11796
    %v11800 = vmul.f32 1.0, %v11799
    %v11803 = vlaneseq
    %v11804 = vshrl.u32 %v11803, 7
    %v11805 = vsub.s32 0, %v11804
    %v11806 = vrot.slane %v11798, %v11805
    %v11807 = vlaneseq
    %v11808 = vshrl.u32 %v11807, 7
    %v11809 = vsub.s32 1, %v11808
    %v11810 = vrot.slane %v11798, %v11809
    %v11811 = vlaneseq
    %v11812 = vshrl.u32 %v11811, 7
    %v11813 = vsub.s32 2, %v11812
    %v11814 = vrot.slane %v11798, %v11813
    %v11815 = vlaneseq
    %v11816 = vshrl.u32 %v11815, 7
    %v11817 = vsub.s32 3, %v11816
    %v11818 = vrot.slane %v11798, %v11817
    %v11819 = vlaneseq
    %v11820 = vshrl.u32 %v11819, 7
    %v11821 = vsub.s32 4, %v11820
    %v11822 = vrot.slane %v11798, %v11821
    %v11823 = vlaneseq
    %v11824 = vshrl.u32 %v11823, 7
    %v11825 = vsub.s32 5, %v11824
    %v11826 = vrot.slane %v11798, %v11825
    %v11827 = vlaneseq
    %v11828 = vshrl.u32 %v11827, 7
    %v11829 = vsub.s32 6, %v11828
    %v11830 = vrot.slane %v11798, %v11829
    %v11831 = vlaneseq
    %v11832 = vshrl.u32 %v11831, 7
    %v11833 = vsub.s32 7, %v11832
    %v11834 = vrot.slane %v11798, %v11833
    %v11835 = vlaneseq
    %v11836 = vshrl.u32 %v11835, 7
    %v11837 = vsub.s32 0, %v11836
    %v11838 = vrot.slane %v11800, %v11837
    %v11839 = vlaneseq
    %v11840 = vshrl.u32 %v11839, 7
    %v11841 = vsub.s32 1, %v11840
    %v11842 = vrot.slane %v11800, %v11841
    %v11843 = vlaneseq
    %v11844 = vshrl.u32 %v11843, 7
    %v11845 = vsub.s32 2, %v11844
    %v11846 = vrot.slane %v11800, %v11845
    %v11847 = vlaneseq
    %v11848 = vshrl.u32 %v11847, 7
    %v11849 = vsub.s32 3, %v11848
    %v11850 = vrot.slane %v11800, %v11849
    %v11851 = vlaneseq
    %v11852 = vshrl.u32 %v11851, 7
    %v11853 = vsub.s32 4, %v11852
    %v11854 = vrot.slane %v11800, %v11853
    %v11855 = vlaneseq
    %v11856 = vshrl.u32 %v11855, 7
    %v11857 = vsub.s32 5, %v11856
    %v11858 = vrot.slane %v11800, %v11857
    %v11859 = vlaneseq
    %v11860 = vshrl.u32 %v11859, 7
    %v11861 = vsub.s32 6, %v11860
    %v11862 = vrot.slane %v11800, %v11861
    %v11863 = vlaneseq
    %v11864 = vshrl.u32 %v11863, 7
    %v11865 = vsub.s32 7, %v11864
    %v11866 = vrot.slane %v11800, %v11865
    %v11883 = vmul.f32 %v11440, %v11806
    %v11884 = vmul.f32 %v11442, %v11806
    %v11885 = vmul.f32 %v11444, %v11810
    %v11886 = vmul.f32 %v11446, %v11810
    %v11887 = vmul.f32 %v11448, %v11814
    %v11888 = vmul.f32 %v11450, %v11814
    %v11889 = vmul.f32 %v11452, %v11818
    %v11890 = vmul.f32 %v11454, %v11818
    %v11891 = vmul.f32 %v11456, %v11822
    %v11892 = vmul.f32 %v11458, %v11822
    %v11893 = vmul.f32 %v11460, %v11826
    %v11894 = vmul.f32 %v11462, %v11826
    %v11895 = vmul.f32 %v11464, %v11830
    %v11896 = vmul.f32 %v11466, %v11830
    %v11897 = vmul.f32 %v11468, %v11834
    %v11898 = vmul.f32 %v11470, %v11834
    %v11899 = vmul.f32 %v11472, %v11838
    %v11900 = vmul.f32 %v11474, %v11838
    %v11901 = vmul.f32 %v11476, %v11842
    %v11902 = vmul.f32 %v11478, %v11842
    %v11903 = vmul.f32 %v11480, %v11846
    %v11904 = vmul.f32 %v11482, %v11846
    %v11905 = vmul.f32 %v11484, %v11850
    %v11906 = vmul.f32 %v11486, %v11850
    %v11907 = vmul.f32 %v11488, %v11854
    %v11908 = vmul.f32 %v11490, %v11854
    %v11909 = vmul.f32 %v11492, %v11858
    %v11910 = vmul.f32 %v11494, %v11858
    %v11911 = vmul.f32 %v11496, %v11862
    %v11912 = vmul.f32 %v11498, %v11862
    %v11913 = vmul.f32 %v11500, %v11866
    %v11914 = vmul.f32 %v11502, %v11866
    %v11915 = vpack.c.bf16 %v10435, %v10432
    %v11916 = vpack.c.bf16 %v11884, %v11883
    %v11917 = vpack.c.bf16 %v11886, %v11885
    %v11918 = vpack.c.bf16 %v11888, %v11887
    %v11919 = vpack.c.bf16 %v11890, %v11889
    %v11920 = vpack.c.bf16 %v11892, %v11891
    %v11921 = vpack.c.bf16 %v11894, %v11893
    %v11922 = vpack.c.bf16 %v11896, %v11895
    %v11923 = vpack.c.bf16 %v11898, %v11897
    %v11924 = vpack.c.bf16 %v11900, %v11899
    %v11925 = vpack.c.bf16 %v11902, %v11901
    %v11926 = vpack.c.bf16 %v11904, %v11903
    %v11927 = vpack.c.bf16 %v11906, %v11905
    %v11928 = vpack.c.bf16 %v11908, %v11907
    %v11929 = vpack.c.bf16 %v11910, %v11909
    %v11930 = vpack.c.bf16 %v11912, %v11911
    %v11931 = vpack.c.bf16 %v11914, %v11913
    %v11948 = vunpack.c.l.b16 %v11916
    %v11949 = vunpack.c.h.b16 %v11916
    %v11950 = vunpack.c.l.b16 %v11917
    %v11951 = vunpack.c.h.b16 %v11917
    %v11952 = vunpack.c.l.b16 %v11918
    %v11953 = vunpack.c.h.b16 %v11918
    %v11954 = vunpack.c.l.b16 %v11919
    %v11955 = vunpack.c.h.b16 %v11919
    %v11956 = vunpack.c.l.b16 %v11920
    %v11957 = vunpack.c.h.b16 %v11920
    %v11958 = vunpack.c.l.b16 %v11921
    %v11959 = vunpack.c.h.b16 %v11921
    %v11960 = vunpack.c.l.b16 %v11922
    %v11961 = vunpack.c.h.b16 %v11922
    %v11962 = vunpack.c.l.b16 %v11923
    %v11963 = vunpack.c.h.b16 %v11923
    %v11964 = vunpack.c.l.b16 %v11924
    %v11965 = vunpack.c.h.b16 %v11924
    %v11966 = vunpack.c.l.b16 %v11925
    %v11967 = vunpack.c.h.b16 %v11925
    %v11968 = vunpack.c.l.b16 %v11926
    %v11969 = vunpack.c.h.b16 %v11926
    %v11970 = vunpack.c.l.b16 %v11927
    %v11971 = vunpack.c.h.b16 %v11927
    %v11972 = vunpack.c.l.b16 %v11928
    %v11973 = vunpack.c.h.b16 %v11928
    %v11974 = vunpack.c.l.b16 %v11929
    %v11975 = vunpack.c.h.b16 %v11929
    %v11976 = vunpack.c.l.b16 %v11930
    %v11977 = vunpack.c.h.b16 %v11930
    %v11978 = vunpack.c.l.b16 %v11931
    %v11979 = vunpack.c.h.b16 %v11931
    %11980 = vset.pattern.permute.xlu0 0
    %11981 = vperm.xlu0 %11980, %v11948
    %v11982 = vpop.permute.xlu0 %11981
    %11983 = vset.pattern.permute.xlu0 0
    %11984 = vperm.xlu0 %11983, %v11949
    %v11985 = vpop.permute.xlu0 %11984
    %11986 = vset.pattern.permute.xlu0 0
    %11987 = vperm.xlu0 %11986, %v11950
    %v11988 = vpop.permute.xlu0 %11987
    %11989 = vset.pattern.permute.xlu0 0
    %11990 = vperm.xlu0 %11989, %v11951
    %v11991 = vpop.permute.xlu0 %11990
    %11992 = vset.pattern.permute.xlu0 0
    %11993 = vperm.xlu0 %11992, %v11952
    %v11994 = vpop.permute.xlu0 %11993
    %11995 = vset.pattern.permute.xlu0 0
    %11996 = vperm.xlu0 %11995, %v11953
    %v11997 = vpop.permute.xlu0 %11996
    %11998 = vset.pattern.permute.xlu0 0
    %11999 = vperm.xlu0 %11998, %v11954
    %v12000 = vpop.permute.xlu0 %11999
    %12001 = vset.pattern.permute.xlu0 0
    %12002 = vperm.xlu0 %12001, %v11955
    %v12003 = vpop.permute.xlu0 %12002
    %12004 = vset.pattern.permute.xlu0 0
    %12005 = vperm.xlu0 %12004, %v11956
    %v12006 = vpop.permute.xlu0 %12005
    %12007 = vset.pattern.permute.xlu0 0
    %12008 = vperm.xlu0 %12007, %v11957
    %v12009 = vpop.permute.xlu0 %12008
    %12010 = vset.pattern.permute.xlu0 0
    %12011 = vperm.xlu0 %12010, %v11958
    %v12012 = vpop.permute.xlu0 %12011
    %12013 = vset.pattern.permute.xlu0 0
    %12014 = vperm.xlu0 %12013, %v11959
    %v12015 = vpop.permute.xlu0 %12014
    %12016 = vset.pattern.permute.xlu0 0
    %12017 = vperm.xlu0 %12016, %v11960
    %v12018 = vpop.permute.xlu0 %12017
    %12019 = vset.pattern.permute.xlu0 0
    %12020 = vperm.xlu0 %12019, %v11961
    %v12021 = vpop.permute.xlu0 %12020
    %12022 = vset.pattern.permute.xlu0 0
    %12023 = vperm.xlu0 %12022, %v11962
    %v12024 = vpop.permute.xlu0 %12023
    %12025 = vset.pattern.permute.xlu0 0
    %12026 = vperm.xlu0 %12025, %v11963
    %v12027 = vpop.permute.xlu0 %12026
    %12028 = vset.pattern.permute.xlu0 0
    %12029 = vperm.xlu0 %12028, %v11964
    %v12030 = vpop.permute.xlu0 %12029
    %12031 = vset.pattern.permute.xlu0 0
    %12032 = vperm.xlu0 %12031, %v11965
    %v12033 = vpop.permute.xlu0 %12032
    %12034 = vset.pattern.permute.xlu0 0
    %12035 = vperm.xlu0 %12034, %v11966
    %v12036 = vpop.permute.xlu0 %12035
    %12037 = vset.pattern.permute.xlu0 0
    %12038 = vperm.xlu0 %12037, %v11967
    %v12039 = vpop.permute.xlu0 %12038
    %12040 = vset.pattern.permute.xlu0 0
    %12041 = vperm.xlu0 %12040, %v11968
    %v12042 = vpop.permute.xlu0 %12041
    %12043 = vset.pattern.permute.xlu0 0
    %12044 = vperm.xlu0 %12043, %v11969
    %v12045 = vpop.permute.xlu0 %12044
    %12046 = vset.pattern.permute.xlu0 0
    %12047 = vperm.xlu0 %12046, %v11970
    %v12048 = vpop.permute.xlu0 %12047
    %12049 = vset.pattern.permute.xlu0 0
    %12050 = vperm.xlu0 %12049, %v11971
    %v12051 = vpop.permute.xlu0 %12050
    %12052 = vset.pattern.permute.xlu0 0
    %12053 = vperm.xlu0 %12052, %v11972
    %v12054 = vpop.permute.xlu0 %12053
    %12055 = vset.pattern.permute.xlu0 0
    %12056 = vperm.xlu0 %12055, %v11973
    %v12057 = vpop.permute.xlu0 %12056
    %12058 = vset.pattern.permute.xlu0 0
    %12059 = vperm.xlu0 %12058, %v11974
    %v12060 = vpop.permute.xlu0 %12059
    %12061 = vset.pattern.permute.xlu0 0
    %12062 = vperm.xlu0 %12061, %v11975
    %v12063 = vpop.permute.xlu0 %12062
    %12064 = vset.pattern.permute.xlu0 0
    %12065 = vperm.xlu0 %12064, %v11976
    %v12066 = vpop.permute.xlu0 %12065
    %12067 = vset.pattern.permute.xlu0 0
    %12068 = vperm.xlu0 %12067, %v11977
    %v12069 = vpop.permute.xlu0 %12068
    %12070 = vset.pattern.permute.xlu0 0
    %12071 = vperm.xlu0 %12070, %v11978
    %v12072 = vpop.permute.xlu0 %12071
    %12073 = vset.pattern.permute.xlu0 0
    %12074 = vperm.xlu0 %12073, %v11979
    %v12075 = vpop.permute.xlu0 %12074
    %v12076 = vlaneseq
    %v12077 = vshrl.u32 %v12076, 7
    %v12078 = vsub.s32 %v1065, %v12077
    %v12079 = vrot.slane %v11982, %v12078
    %v12080 = vlaneseq
    %v12081 = vshrl.u32 %v12080, 7
    %v12082 = vsub.s32 %v1070, %v12081
    %v12083 = vrot.slane %v11985, %v12082
    %v12084 = vsel %vm1075, %v12083, %v12079
    %v12085 = vlaneseq
    %v12086 = vshrl.u32 %v12085, 7
    %v12087 = vsub.s32 %v1065, %v12086
    %v12088 = vrot.slane %v11988, %v12087
    %v12089 = vlaneseq
    %v12090 = vshrl.u32 %v12089, 7
    %v12091 = vsub.s32 %v1070, %v12090
    %v12092 = vrot.slane %v11991, %v12091
    %v12093 = vsel %vm1075, %v12092, %v12088
    %v12094 = vlaneseq
    %v12095 = vshrl.u32 %v12094, 7
    %v12096 = vsub.s32 %v1065, %v12095
    %v12097 = vrot.slane %v11994, %v12096
    %v12098 = vlaneseq
    %v12099 = vshrl.u32 %v12098, 7
    %v12100 = vsub.s32 %v1070, %v12099
    %v12101 = vrot.slane %v11997, %v12100
    %v12102 = vsel %vm1075, %v12101, %v12097
    %v12103 = vlaneseq
    %v12104 = vshrl.u32 %v12103, 7
    %v12105 = vsub.s32 %v1065, %v12104
    %v12106 = vrot.slane %v12000, %v12105
    %v12107 = vlaneseq
    %v12108 = vshrl.u32 %v12107, 7
    %v12109 = vsub.s32 %v1070, %v12108
    %v12110 = vrot.slane %v12003, %v12109
    %v12111 = vsel %vm1075, %v12110, %v12106
    %v12112 = vlaneseq
    %v12113 = vshrl.u32 %v12112, 7
    %v12114 = vsub.s32 %v1065, %v12113
    %v12115 = vrot.slane %v12006, %v12114
    %v12116 = vlaneseq
    %v12117 = vshrl.u32 %v12116, 7
    %v12118 = vsub.s32 %v1070, %v12117
    %v12119 = vrot.slane %v12009, %v12118
    %v12120 = vsel %vm1075, %v12119, %v12115
    %v12121 = vlaneseq
    %v12122 = vshrl.u32 %v12121, 7
    %v12123 = vsub.s32 %v1065, %v12122
    %v12124 = vrot.slane %v12012, %v12123
    %v12125 = vlaneseq
    %v12126 = vshrl.u32 %v12125, 7
    %v12127 = vsub.s32 %v1070, %v12126
    %v12128 = vrot.slane %v12015, %v12127
    %v12129 = vsel %vm1075, %v12128, %v12124
    %v12130 = vlaneseq
    %v12131 = vshrl.u32 %v12130, 7
    %v12132 = vsub.s32 %v1065, %v12131
    %v12133 = vrot.slane %v12018, %v12132
    %v12134 = vlaneseq
    %v12135 = vshrl.u32 %v12134, 7
    %v12136 = vsub.s32 %v1070, %v12135
    %v12137 = vrot.slane %v12021, %v12136
    %v12138 = vsel %vm1075, %v12137, %v12133
    %v12139 = vlaneseq
    %v12140 = vshrl.u32 %v12139, 7
    %v12141 = vsub.s32 %v1065, %v12140
    %v12142 = vrot.slane %v12024, %v12141
    %v12143 = vlaneseq
    %v12144 = vshrl.u32 %v12143, 7
    %v12145 = vsub.s32 %v1070, %v12144
    %v12146 = vrot.slane %v12027, %v12145
    %v12147 = vsel %vm1075, %v12146, %v12142
    %v12148 = vlaneseq
    %v12149 = vshrl.u32 %v12148, 7
    %v12150 = vsub.s32 %v1065, %v12149
    %v12151 = vrot.slane %v12030, %v12150
    %v12152 = vlaneseq
    %v12153 = vshrl.u32 %v12152, 7
    %v12154 = vsub.s32 %v1070, %v12153
    %v12155 = vrot.slane %v12033, %v12154
    %v12156 = vsel %vm1075, %v12155, %v12151
    %v12157 = vlaneseq
    %v12158 = vshrl.u32 %v12157, 7
    %v12159 = vsub.s32 %v1065, %v12158
    %v12160 = vrot.slane %v12036, %v12159
    %v12161 = vlaneseq
    %v12162 = vshrl.u32 %v12161, 7
    %v12163 = vsub.s32 %v1070, %v12162
    %v12164 = vrot.slane %v12039, %v12163
    %v12165 = vsel %vm1075, %v12164, %v12160
    %v12166 = vlaneseq
    %v12167 = vshrl.u32 %v12166, 7
    %v12168 = vsub.s32 %v1065, %v12167
    %v12169 = vrot.slane %v12042, %v12168
    %v12170 = vlaneseq
    %v12171 = vshrl.u32 %v12170, 7
    %v12172 = vsub.s32 %v1070, %v12171
    %v12173 = vrot.slane %v12045, %v12172
    %v12174 = vsel %vm1075, %v12173, %v12169
    %v12175 = vlaneseq
    %v12176 = vshrl.u32 %v12175, 7
    %v12177 = vsub.s32 %v1065, %v12176
    %v12178 = vrot.slane %v12048, %v12177
    %v12179 = vlaneseq
    %v12180 = vshrl.u32 %v12179, 7
    %v12181 = vsub.s32 %v1070, %v12180
    %v12182 = vrot.slane %v12051, %v12181
    %v12183 = vsel %vm1075, %v12182, %v12178
    %v12184 = vlaneseq
    %v12185 = vshrl.u32 %v12184, 7
    %v12186 = vsub.s32 %v1065, %v12185
    %v12187 = vrot.slane %v12054, %v12186
    %v12188 = vlaneseq
    %v12189 = vshrl.u32 %v12188, 7
    %v12190 = vsub.s32 %v1070, %v12189
    %v12191 = vrot.slane %v12057, %v12190
    %v12192 = vsel %vm1075, %v12191, %v12187
    %v12193 = vlaneseq
    %v12194 = vshrl.u32 %v12193, 7
    %v12195 = vsub.s32 %v1065, %v12194
    %v12196 = vrot.slane %v12060, %v12195
    %v12197 = vlaneseq
    %v12198 = vshrl.u32 %v12197, 7
    %v12199 = vsub.s32 %v1070, %v12198
    %v12200 = vrot.slane %v12063, %v12199
    %v12201 = vsel %vm1075, %v12200, %v12196
    %v12202 = vlaneseq
    %v12203 = vshrl.u32 %v12202, 7
    %v12204 = vsub.s32 %v1065, %v12203
    %v12205 = vrot.slane %v12066, %v12204
    %v12206 = vlaneseq
    %v12207 = vshrl.u32 %v12206, 7
    %v12208 = vsub.s32 %v1070, %v12207
    %v12209 = vrot.slane %v12069, %v12208
    %v12210 = vsel %vm1075, %v12209, %v12205
    %v12211 = vlaneseq
    %v12212 = vshrl.u32 %v12211, 7
    %v12213 = vsub.s32 %v1065, %v12212
    %v12214 = vrot.slane %v12072, %v12213
    %v12215 = vlaneseq
    %v12216 = vshrl.u32 %v12215, 7
    %v12217 = vsub.s32 %v1070, %v12216
    %v12218 = vrot.slane %v12075, %v12217
    %v12219 = vsel %vm1075, %v12218, %v12214
    %v12220 = vsel %vm1212, %v12093, %v12084
    %v12221 = vsel %vm1214, %v12102, %v12220
    %v12222 = vsel %vm1216, %v12111, %v12221
    %v12223 = vsel %vm1218, %v12120, %v12222
    %v12224 = vsel %vm1220, %v12129, %v12223
    %v12225 = vsel %vm1222, %v12138, %v12224
    %v12226 = vsel %vm1224, %v12147, %v12225
    %v12227 = vsel %vm1212, %v12165, %v12156
    %v12228 = vsel %vm1214, %v12174, %v12227
    %v12229 = vsel %vm1216, %v12183, %v12228
    %v12230 = vsel %vm1218, %v12192, %v12229
    %v12231 = vsel %vm1220, %v12201, %v12230
    %v12232 = vsel %vm1222, %v12210, %v12231
    %v12233 = vsel %vm1224, %v12219, %v12232
    %v12234 = vpack.c.b16 %v12233, %v12226
    %12235 = vrot.lane.b32.xlu0 %v10432, 96
    %v12236 = vpop.permute.xlu0 %12235
    %12237 = vrot.lane.b32.xlu0 %v10435, 96
    %v12238 = vpop.permute.xlu0 %12237
    %v12242 = vsel %vm1235, %v12234, 0
    %12244 = vmatprep.subr.bf16.mxu0 0
    %12245 = vmatpush1.bf16.msra.mxu0 0
    %12246 = vmatprep.subr.bf16.mxu0 0
    %12247 = vmatpush1.bf16.msra.mxu0 0
    %12248 = vmatprep.subr.bf16.mxu0 0
    %12249 = vmatpush1.bf16.msra.mxu0 0
    %12250 = vmatprep.subr.bf16.mxu0 0
    %12251 = vmatpush1.bf16.msra.mxu0 0
    %12252 = vmatprep.subr.bf16.mxu0 0
    %12253 = vmatpush1.bf16.msra.mxu0 0
    %12254 = vmatprep.subr.bf16.mxu0 0
    %12255 = vmatpush1.bf16.msra.mxu0 0
    %12256 = vmatprep.subr.bf16.mxu0 0
    %12257 = vmatpush1.bf16.msra.mxu0 0
    %12258 = vmatprep.subr.bf16.mxu0 0
    %12259 = vmatpush1.bf16.msra.mxu0 %v11915
    %12260 = vmatprep.subr.bf16.mxu0 0
    %12261 = vmatpush2.bf16.msra.mxu0 0
    %12262 = vmatprep.subr.bf16.mxu0 0
    %12263 = vmatpush2.bf16.msra.mxu0 0
    %12264 = vmatprep.subr.bf16.mxu0 0
    %12265 = vmatpush2.bf16.msra.mxu0 0
    %12266 = vmatprep.subr.bf16.mxu0 0
    %12267 = vmatpush2.bf16.msra.mxu0 0
    %12268 = vmatprep.subr.bf16.mxu0 0
    %12269 = vmatpush2.bf16.msra.mxu0 0
    %12270 = vmatprep.subr.bf16.mxu0 0
    %12271 = vmatpush2.bf16.msra.mxu0 0
    %12272 = vmatprep.subr.bf16.mxu0 0
    %12273 = vmatpush2.bf16.msra.mxu0 0
    %12274 = vmatprep.subr.bf16.mxu0 0
    %12275 = vmatpush2.bf16.msra.mxu0 0
    %12276 = vmatprep.mubr.bf16.mxu0 0
    %12277 = vmatmul.mubr.bf16.gmra.mxu0 %v12242
    %v12278 = vpop.f32.mrf.mxu0
    %v12279 = vadd.f32 %v12236, %v12278
    %v12280 = vpop.f32.mrf.mxu0
    %v12281 = vpop.f32.mrf.mxu0
    %v12282 = vadd.f32 %v12238, %v12281
    %v12283 = vpop.f32.mrf.mxu0
    %12284 = vdwg.mxu0
    %12285 = vst.msk [vmem:[#allocation2] sm:$0xff] %vm1235, %v12279
    %12286 = vst.msk [vmem:[#allocation2 + $0x8] sm:$0xff] %vm1235, %v12282
    // Predicated region
    $region38: #{tpu_custom_call.1} parent=1 // pred_check
      _
    $region39: #{tpu_custom_call.1} parent=1 // pred_check_branch
      %12288 = sbr.rel (0) target = $region41
    $region40: #{tpu_custom_call.1} parent=1 // pred_region
      %s12290 = ssub.s32 256, 256
      %12291 = vsyncadd [#allocation3], %s12290
      %s12292 = sshll.u32 [#allocation2], 4
      %s12293 = int_to_ptr.vmem [resolvable:$true] %s12292
      %12298 = dma.vmem_to_hbm [thread:$0]  %s12293, 256, %s9, [#allocation3], 128, 128, 8
    $region41: #{tpu_custom_call.1} parent=1 // pred_fallthru
      _
    // Predicated region
    $region42: #{tpu_custom_call.1} parent=1 // pred_check
      _
    $region43: #{tpu_custom_call.1} parent=1 // pred_check_branch
      %12300 = sbr.rel (0) target = $region45
    $region44: #{tpu_custom_call.1} parent=1 // pred_region
      %12301 = dma.done [#allocation3], 256
    $region45: #{tpu_custom_call.1} parent=1 // pred_fallthru
      _
    %12302 = vsyncpa [#allocation3], 1

</llo_original>
